<compile_context>
chip_gen: v5e
topology: v5e:2x2
jax: 0.10.0
libtpu: 0.0.40
codegen_flags: <defaults>
</compile_context>

<pallas_src>
import functools

import jax
import jax.numpy as jnp
from jax.experimental import pallas as pl
from jax.experimental.pallas import tpu as pltpu

_MXU_DT = jnp.bfloat16                 # MXU operand dtype (f32 accumulation)
_VMEM_LIMIT = 32 * 1024 * 1024         # scoped VMEM cap (safe on v5e/v6e/v7x)

# Default tile *targets*; pickers round down to a legal divisor.
_DEF_ROW_TILE = 4096                   # rows for start conv / epilogue tiles
_DEF_NB_TILE = 128                     # (node,batch) blocks per kernel-A tile
_DEF_BTR_TILE = 2048                   # lanes (B*T0*R) per kernel-B tile


def _cparams(semantics):
    return pltpu.CompilerParams(dimension_semantics=semantics,
                                vmem_limit_bytes=_VMEM_LIMIT)


# ------------------------------ tile pickers -------------------------------

def _pick_row_tile(M, target):
    """Largest divisor of M that is a multiple of 8 and <= target (else full M)."""
    for t in range(min(M, max(target, 8)), 7, -1):
        if M % t == 0 and t % 8 == 0:
            return t
    return M


def _pick_nb_tile(NB, T0, target):
    """Largest divisor of NB <= target whose row count nb*T0 is a multiple of 8."""
    for t in range(min(NB, max(target, 1)), 0, -1):
        if NB % t == 0 and (t * T0) % 8 == 0:
            return t
    return NB


def _pick_lane_tile(L, target):
    """Largest divisor of L that is a multiple of 128 and <= target (else full L)."""
    for t in range(min(L, max(target, 128)), 127, -1):
        if L % t == 0 and t % 128 == 0:
            return t
    return L


# ----------------------------- Pallas kernels ------------------------------

def _start_conv_kernel(x_ref, w_ref, b_ref, o_ref):
    o_ref[...] = (jnp.dot(x_ref[...].astype(_MXU_DT), w_ref[...],
                          preferred_element_type=jnp.float32) + b_ref[...])


def _start_conv(x2, w, b, *, row_tile):
    M, cin = x2.shape
    R = w.shape[1]
    tm = _pick_row_tile(M, row_tile)
    return pl.pallas_call(
        _start_conv_kernel,
        out_shape=jax.ShapeDtypeStruct((M, R), jnp.float32),
        grid=(M // tm,),
        in_specs=[
            pl.BlockSpec((tm, cin), lambda i: (i, 0)),
            pl.BlockSpec(w.shape, lambda i: (0, 0)),
            pl.BlockSpec(b.shape, lambda i: (0, 0)),
        ],
        out_specs=pl.BlockSpec((tm, R), lambda i: (i, 0)),
        compiler_params=_cparams(("parallel",)),
    )(x2, w, b)


def _adp_adj_kernel(v2t_ref, v1t_ref, adpt_ref):
    # adp = softmax(relu(E1 @ E2), dim=1);  adp^T = colsoftmax(relu(E2^T @ E1^T))
    a = jnp.dot(v2t_ref[...], v1t_ref[...], preferred_element_type=jnp.float32)
    a = jnp.maximum(a, 0.0)
    m = jnp.max(a, axis=0, keepdims=True)
    e = jnp.exp(a - m)
    adpt_ref[...] = (e / jnp.sum(e, axis=0, keepdims=True)).astype(adpt_ref.dtype)


def _adp_adj(v2t, v1t, num_nodes):
    return pl.pallas_call(
        _adp_adj_kernel,
        out_shape=jax.ShapeDtypeStruct((num_nodes, num_nodes), _MXU_DT),
        grid=(1,),
        in_specs=[pl.BlockSpec(v2t.shape, lambda i: (0, 0)),
                  pl.BlockSpec(v1t.shape, lambda i: (0, 0))],
        out_specs=pl.BlockSpec((num_nodes, num_nodes), lambda i: (0, 0)),
        compiler_params=_cparams(("arbitrary",)),
    )(v2t, v1t)


def _layer_a_kernel(*refs, d, n_hops, dil_ch, skip_ch, res_ch, first):
    """Per row-tile: dilated (1,2) conv (one stacked-tap matmul), gating, skip 1x1
    + skip accumulation, GCN hop-0 + residual, per-hop GCN channel pre-mixes."""
    if first:
        (x_ref, wfg_ref, bfg_ref, wbig_ref, bbig_ref,
         skip_out_ref, base_ref, hops_ref) = refs
        skip_ref = None
    else:
        (x_ref, skip_ref, wfg_ref, bfg_ref, wbig_ref, bbig_ref,
         skip_out_ref, base_ref, hops_ref) = refs

    Mt = x_ref.shape[0]
    Mv = Mt - d                                   # last d rows of the tile have no t+d partner
    xl = x_ref[pl.ds(0, Mv), :]                   # x[..., t]
    xr = x_ref[pl.ds(d, Mv), :]                   # x[..., t + d]  (also the clipped residual)

    # single stacked-tap matmul: [xl | xr] @ [[w_tap0]; [w_tap1]]
    xcat = jnp.concatenate([xl, xr], axis=1).astype(_MXU_DT)          # (Mv, 2R)
    fg = (jnp.dot(xcat, wfg_ref[...], preferred_element_type=jnp.float32)
          + bfg_ref[...])                          # (Mv, 2*dil_ch): [filter | gate]
    g = jnp.tanh(fg[:, :dil_ch]) * jax.nn.sigmoid(fg[:, dil_ch:])

    # one wide matmul: columns = [skip | gcn hop-0 | hop pre-mixes]
    big = (jnp.dot(g.astype(_MXU_DT), wbig_ref[...], preferred_element_type=jnp.float32)
           + bbig_ref[...])

    # skip accumulation: skip_new[t] = s[t] + skip_prev[t + d]  (layer 0: just s[t])
    s_new = big[:, :skip_ch]
    if not first:
        s_new = s_new + skip_ref[pl.ds(d, Mv), :]
    skip_out_ref[pl.ds(0, Mv), :] = s_new
    # GCN identity term + gcn bias (folded in bbig) + clipped residual
    base_ref[pl.ds(0, Mv), :] = big[:, skip_ch:skip_ch + res_ch] + xr
    off = skip_ch + res_ch
    for m in range(n_hops):
        hops_ref[m, pl.ds(0, Mv), :] = (
            big[:, off + m * res_ch:off + (m + 1) * res_ch].astype(_MXU_DT))

    # keep the d tail rows of the tile finite (garbage rows, never read as valid)
    skip_out_ref[pl.ds(Mv, d), :] = jnp.zeros((d, skip_ch), jnp.float32)
    base_ref[pl.ds(Mv, d), :] = jnp.zeros((d, res_ch), jnp.float32)
    ztail = jnp.zeros((d, res_ch), _MXU_DT)
    for m in range(n_hops):
        hops_ref[m, pl.ds(Mv, d), :] = ztail


def _layer_a(x2, skip2, lp, *, d, n_hops, dil_ch, skip_ch, res_ch, nb_tile, T0, first):
    M = x2.shape[0]
    NB = M // T0
    nbt = _pick_nb_tile(NB, T0, nb_tile)
    tm = nbt * T0                                  # tiles are whole (node,batch) blocks
    grid = (NB // nbt,)
    kern = functools.partial(_layer_a_kernel, d=d, n_hops=n_hops,
                             dil_ch=dil_ch, skip_ch=skip_ch, res_ch=res_ch, first=first)

    x_spec = pl.BlockSpec((tm, res_ch), lambda i: (i, 0))
    skip_spec = pl.BlockSpec((tm, skip_ch), lambda i: (i, 0))
    w_specs = [pl.BlockSpec(lp["wfg"].shape, lambda i: (0, 0)),
               pl.BlockSpec(lp["bfg"].shape, lambda i: (0, 0)),
               pl.BlockSpec(lp["wbig"].shape, lambda i: (0, 0)),
               pl.BlockSpec(lp["bbig"].shape, lambda i: (0, 0))]

    out_shape = (jax.ShapeDtypeStruct((M, skip_ch), jnp.float32),
                 jax.ShapeDtypeStruct((M, res_ch), jnp.float32),
                 jax.ShapeDtypeStruct((n_hops, M, res_ch), _MXU_DT))
    out_specs = (skip_spec,
                 pl.BlockSpec((tm, res_ch), lambda i: (i, 0)),
                 pl.BlockSpec((n_hops, tm, res_ch), lambda i: (0, i, 0)))

    if first:
        in_specs = [x_spec] + w_specs
        args = (x2, lp["wfg"], lp["bfg"], lp["wbig"], lp["bbig"])
        aliases = {}
    else:
        in_specs = [x_spec, skip_spec] + w_specs
        args = (x2, skip2, lp["wfg"], lp["bfg"], lp["wbig"], lp["bbig"])
        aliases = {1: 0}                           # accumulate skip in place (halo-free tiles)

    return pl.pallas_call(
        kern,
        out_shape=out_shape,
        grid=grid,
        in_specs=in_specs,
        out_specs=out_specs,
        input_output_aliases=aliases,
        compiler_params=_cparams(("parallel",)),
    )(*args)


def _layer_b_kernel(at_ref, base_ref, hops_ref, scale_ref, shift_ref, x_out_ref,
                    *, n_sup, order):
    """Lane-tiled graph diffusion out = A^T @ X (X = (N, lanes)), Horner hop
    accumulation, residual already folded into base, eval-mode BatchNorm affine."""
    acc = base_ref[...]
    for k in range(n_sup):
        a = at_ref[k]                              # (N, N) bf16
        # Horner: sum_j A^(j+1) @ p_j  =  A @ (p_0 + A @ (p_1 + ...))
        h = hops_ref[order * k + order - 1]        # bf16
        for j in range(order - 2, -1, -1):
            h = hops_ref[order * k + j] + jnp.dot(
                a, h.astype(_MXU_DT), preferred_element_type=jnp.float32)
        acc = acc + jnp.dot(a, h.astype(_MXU_DT), preferred_element_type=jnp.float32)
    x_out_ref[...] = acc * scale_ref[...] + shift_ref[...]


def _layer_b(at_all, base2, hops2, scale_t, shift_t, *, n_sup, order, btr_tile):
    K, num_nodes, _ = at_all.shape
    n_hops, _, btr = hops2.shape
    tl = _pick_lane_tile(btr, btr_tile)
    kern = functools.partial(_layer_b_kernel, n_sup=n_sup, order=order)
    return pl.pallas_call(
        kern,
        out_shape=jax.ShapeDtypeStruct((num_nodes, btr), jnp.float32),
        grid=(btr // tl,),
        in_specs=[
            pl.BlockSpec((K, num_nodes, num_nodes), lambda j: (0, 0, 0)),
            pl.BlockSpec((num_nodes, tl), lambda j: (0, j)),
            pl.BlockSpec((n_hops, num_nodes, tl), lambda j: (0, 0, j)),
            pl.BlockSpec((1, tl), lambda j: (0, j)),
            pl.BlockSpec((1, tl), lambda j: (0, j)),
        ],
        out_specs=pl.BlockSpec((num_nodes, tl), lambda j: (0, j)),
        compiler_params=_cparams(("parallel",)),
    )(at_all, base2, hops2, scale_t, shift_t)


def _epilogue_kernel(skip_ref, w1_ref, b1_ref, w2_ref, b2_ref, o_ref):
    h = jnp.maximum(skip_ref[...], 0.0)
    h = jnp.dot(h.astype(_MXU_DT), w1_ref[...],
                preferred_element_type=jnp.float32) + b1_ref[...]
    h = jnp.maximum(h, 0.0)
    o_ref[...] = jnp.dot(h.astype(_MXU_DT), w2_ref[...],
                         preferred_element_type=jnp.float32) + b2_ref[...]


def _epilogue(skip2, w1, b1, w2, b2, *, row_tile):
    M, S = skip2.shape
    cout = w2.shape[1]
    tm = _pick_row_tile(M, row_tile)
    return pl.pallas_call(
        _epilogue_kernel,
        out_shape=jax.ShapeDtypeStruct((M, cout), jnp.float32),
        grid=(M // tm,),
        in_specs=[
            pl.BlockSpec((tm, S), lambda i: (i, 0)),
            pl.BlockSpec(w1.shape, lambda i: (0, 0)),
            pl.BlockSpec(b1.shape, lambda i: (0, 0)),
            pl.BlockSpec(w2.shape, lambda i: (0, 0)),
            pl.BlockSpec(b2.shape, lambda i: (0, 0)),
        ],
        out_specs=pl.BlockSpec((tm, cout), lambda i: (i, 0)),
        compiler_params=_cparams(("parallel",)),
    )(skip2, w1, b1, w2, b2)


# --------------------------- parameter packing -----------------------------

def _pack_params(params, cfg, B, T0):
    """Pack PyTorch-style per-module weights into the fused-kernel slabs."""
    R = cfg["residual_channels"]
    D = cfg["dilation_channels"]
    K = cfg["supports_len"]
    order = cfg["order"]
    n_hops = order * K
    rep = B * T0

    pk = {
        "start_w": params["start_w"].astype(_MXU_DT),
        "start_b": params["start_b"].reshape(1, -1).astype(jnp.float32),
        "v1t": params["nodevec1"].T.astype(jnp.float32),      # (10, N)
        "v2t": params["nodevec2"].T.astype(jnp.float32),      # (N, 10)
        "supports_T": jnp.stack([a.T for a in params["supports"]]).astype(_MXU_DT),
        "end1_w": params["end1_w"].astype(_MXU_DT),
        "end1_b": params["end1_b"].reshape(1, -1).astype(jnp.float32),
        "end2_w": params["end2_w"].astype(_MXU_DT),
        "end2_b": params["end2_b"].reshape(1, -1).astype(jnp.float32),
    }

    layers = []
    for lp in params["layer_params"]:
        # TODO(synk): verify PyTorch Conv2d (Cout, Cin, 1, 2) tap ordering
        # (tap 0 -> x[t], tap 1 -> x[t+dilation]) when loading real checkpoints.
        wfg = jnp.concatenate([
            jnp.concatenate([lp["filter_w0"], lp["gate_w0"]], axis=1),   # tap 0 rows
            jnp.concatenate([lp["filter_w1"], lp["gate_w1"]], axis=1),   # tap 1 rows
        ], axis=0).astype(_MXU_DT)                                       # (2R, 2D)
        bfg = jnp.concatenate([lp["filter_b"], lp["gate_b"]]).reshape(1, -1).astype(jnp.float32)

        gw = lp["gcn_w"]                                      # ((n_hops + 1) * D, R)
        hop_w = jnp.transpose(gw[D:].reshape(n_hops, D, R), (1, 0, 2)).reshape(D, n_hops * R)
        wbig = jnp.concatenate([lp["skip_w"], gw[:D], hop_w], axis=1).astype(_MXU_DT)
        bbig = jnp.concatenate([lp["skip_b"], lp["gcn_b"],
                                jnp.zeros((n_hops * R,), jnp.float32)]).reshape(1, -1)

        scale = lp["bn_gamma"] / jnp.sqrt(lp["bn_var"] + 1e-5)   # eval-mode BN
        shift = lp["bn_beta"] - lp["bn_mean"] * scale
        layers.append(dict(
            wfg=wfg, bfg=bfg, wbig=wbig, bbig=bbig.astype(jnp.float32),
            bn_scale_t=jnp.tile(scale, rep).reshape(1, -1).astype(jnp.float32),
            bn_shift_t=jnp.tile(shift, rep).reshape(1, -1).astype(jnp.float32),
        ))
    pk["layers"] = layers
    return pk


# ------------------------------ forward pass -------------------------------

def graph_wavenet_forward(params, inp, cfg, *, nb_tile=_DEF_NB_TILE,
                          btr_tile=_DEF_BTR_TILE, row_tile=_DEF_ROW_TILE):
    """inp: (B, T, num_nodes, in_dim) -- the PyTorch forward's input before its
    permute(0, 3, 2, 1).  Returns (B, out_dim, num_nodes, T_out)."""
    B, T, num_nodes, cin = inp.shape
    rf = cfg["receptive_field"]
    T0 = max(T, rf)
    R = cfg["residual_channels"]
    D = cfg["dilation_channels"]
    S = cfg["skip_channels"]
    order = cfg["order"]
    K = cfg["supports_len"]
    n_hops = order * K
    M = num_nodes * B * T0
    btr = B * T0 * R

    # (B, T, N, Cin) -> node-major channel-last (N, B, T0, Cin); left-pad time.
    x = jnp.transpose(inp, (2, 0, 1, 3)).astype(jnp.float32)
    if T < rf:
        x = jnp.pad(x, ((0, 0), (0, 0), (rf - T, 0), (0, 0)))
    x2 = x.reshape(M, cin)

    pk = _pack_params(params, cfg, B, T0)

    x2 = _start_conv(x2, pk["start_w"], pk["start_b"], row_tile=row_tile)
    adp_t = _adp_adj(pk["v2t"], pk["v1t"], num_nodes)
    at_all = jnp.concatenate([pk["supports_T"], adp_t[None]], axis=0)   # (K, N, N) bf16

    skip2 = None
    cur_t = T0
    idx = 0
    for _blk in range(cfg["blocks"]):
        dilation = 1
        for _lyr in range(cfg["layers"]):
            lp = pk["layers"][idx]
            skip2, base2, hops2 = _layer_a(
                x2, skip2, lp, d=dilation, n_hops=n_hops,
                dil_ch=D, skip_ch=S, res_ch=R, nb_tile=nb_tile, T0=T0,
                first=(idx == 0))
            xo = _layer_b(
                at_all,
                base2.reshape(num_nodes, btr),            # contiguous reshapes (free)
                hops2.reshape(n_hops, num_nodes, btr),
                lp["bn_scale_t"], lp["bn_shift_t"],
                n_sup=K, order=order, btr_tile=btr_tile)
            x2 = xo.reshape(M, R)
            cur_t -= dilation
            dilation *= 2
            idx += 1

    out2 = _epilogue(skip2, pk["end1_w"], pk["end1_b"], pk["end2_w"], pk["end2_b"],
                     row_tile=row_tile)
    cout = cfg["out_dim"]
    out = out2.reshape(num_nodes, B, T0, cout)[:, :, :cur_t, :]
    return jnp.transpose(out, (1, 3, 0, 2))               # (B, out_dim, N, T_out)


# --------------------------- parameter creation ----------------------------

def init_params(key, cfg):
    keys = iter(jax.random.split(key, 256))

    def nrm(shape, scale=0.1):
        return jax.random.normal(next(keys), shape, jnp.float32) * scale

    R = cfg["residual_channels"]
    D = cfg["dilation_channels"]
    S = cfg["skip_channels"]
    E = cfg["end_channels"]
    cin, cout = cfg["in_dim"], cfg["out_dim"]
    num_nodes = cfg["num_nodes"]
    sl = cfg["supports_len"]

    params = {
        "start_w": nrm((cin, R)),
        "start_b": nrm((R,)),
        "nodevec1": jax.random.normal(next(keys), (num_nodes, 10), jnp.float32),
        "nodevec2": jax.random.normal(next(keys), (10, num_nodes), jnp.float32),
    }

    sups = []
    for _ in range(cfg["num_supports"]):
        a = jnp.abs(jax.random.normal(next(keys), (num_nodes, num_nodes), jnp.float32)) + 0.01
        sups.append(a / jnp.sum(a, axis=1, keepdims=True))
    params["supports"] = sups

    layer_params = []
    for _ in range(cfg["blocks"] * cfg["layers"]):
        lp = {
            "filter_w0": nrm((R, D)), "filter_w1": nrm((R, D)), "filter_b": nrm((D,)),
            "gate_w0": nrm((R, D)), "gate_w1": nrm((R, D)), "gate_b": nrm((D,)),
            "skip_w": nrm((D, S)), "skip_b": nrm((S,)),
            "gcn_w": nrm(((cfg["order"] * sl + 1) * D, R)), "gcn_b": nrm((R,)),
            "bn_gamma": jnp.ones((R,), jnp.float32) + nrm((R,), 0.01),
            "bn_beta": nrm((R,), 0.01),
            "bn_mean": jnp.zeros((R,), jnp.float32),
            "bn_var": jnp.ones((R,), jnp.float32),
        }
        layer_params.append(lp)
    params["layer_params"] = layer_params

    params["end1_w"] = nrm((S, E))
    params["end1_b"] = nrm((E,))
    params["end2_w"] = nrm((E, cout))
    params["end2_b"] = nrm((cout,))
    return params


# --------------------- pure-JAX reference (eval mode) ----------------------

def _reference_forward(params, inp, cfg):
    """Torch-faithful jnp reference (f32, shrinking time axis)."""
    x = jnp.transpose(inp, (0, 3, 2, 1)).astype(jnp.float32)   # (B, cin, N, T)
    rf = cfg["receptive_field"]
    T = x.shape[-1]
    if T < rf:
        x = jnp.pad(x, ((0, 0), (0, 0), (0, 0), (rf - T, 0)))

    def conv1x1(h, w, b):
        return jnp.einsum('bcnt,cr->brnt', h, w) + b[None, :, None, None]

    x = conv1x1(x, params["start_w"], params["start_b"])
    adp = jax.nn.softmax(jnp.maximum(params["nodevec1"] @ params["nodevec2"], 0.0), axis=1)
    supports = list(params["supports"]) + [adp]
    order = cfg["order"]

    skip = None
    idx = 0
    for _b in range(cfg["blocks"]):
        dil = 1
        for _l in range(cfg["layers"]):
            lp = params["layer_params"][idx]
            residual = x
            L = x.shape[-1] - dil
            xl, xr = x[..., :L], x[..., dil:dil + L]
            filt = (jnp.einsum('bcnt,cd->bdnt', xl, lp["filter_w0"])
                    + jnp.einsum('bcnt,cd->bdnt', xr, lp["filter_w1"])
                    + lp["filter_b"][None, :, None, None])
            gate = (jnp.einsum('bcnt,cd->bdnt', xl, lp["gate_w0"])
                    + jnp.einsum('bcnt,cd->bdnt', xr, lp["gate_w1"])
                    + lp["gate_b"][None, :, None, None])
            g = jnp.tanh(filt) * jax.nn.sigmoid(gate)
            s = conv1x1(g, lp["skip_w"], lp["skip_b"])
            skip = s if skip is None else s + skip[..., -s.shape[-1]:]

            outs = [g]
            for a in supports:
                x1 = jnp.einsum('bcvt,vw->bcwt', g, a)
                outs.append(x1)
                for _k in range(2, order + 1):
                    x2_ = jnp.einsum('bcvt,vw->bcwt', x1, a)
                    outs.append(x2_)
                    x1 = x2_
            h = jnp.concatenate(outs, axis=1)
            h = jnp.einsum('bcnt,cr->brnt', h, lp["gcn_w"]) + lp["gcn_b"][None, :, None, None]
            x = h + residual[..., -h.shape[-1]:]

            scale = lp["bn_gamma"] / jnp.sqrt(lp["bn_var"] + 1e-5)
            shift = lp["bn_beta"] - lp["bn_mean"] * scale
            x = x * scale[None, :, None, None] + shift[None, :, None, None]
            dil *= 2
            idx += 1

    y = jnp.maximum(skip, 0.0)
    y = jnp.maximum(conv1x1(y, params["end1_w"], params["end1_b"]), 0.0)
    return conv1x1(y, params["end2_w"], params["end2_b"])


# --------------------------------- main ------------------------------------

if __name__ == "__main__":
    cfg = dict(
        num_nodes=8,
        in_dim=2,
        out_dim=4,
        residual_channels=16,
        dilation_channels=16,
        skip_channels=32,
        end_channels=64,
        kernel_size=2,
        blocks=2,
        layers=2,
        order=2,
        num_supports=2,
    )
    cfg["supports_len"] = cfg["num_supports"] + 1   # + adaptive adjacency

    # receptive_field, exactly as computed in the PyTorch __init__
    rf = 1
    for _ in range(cfg["blocks"]):
        add_scope = cfg["kernel_size"] - 1
        for _ in range(cfg["layers"]):
            rf += add_scope
            add_scope *= 2
    cfg["receptive_field"] = rf

    key = jax.random.PRNGKey(0)
    pkey, xkey = jax.random.split(key)
    params = init_params(pkey, cfg)

    B, T = 2, 8  # input: (B, T, num_nodes, in_dim)
    x = jax.random.normal(xkey, (B, T, cfg["num_nodes"], cfg["in_dim"]), jnp.float32)

    # Small tile targets so the demo exercises multi-step, pipelined, parallel grids.
    fwd = jax.jit(functools.partial(graph_wavenet_forward, cfg=cfg,
                                    nb_tile=8, btr_tile=128, row_tile=64))
    out = jax.block_until_ready(fwd(params, x))

    T_eff = max(T, rf)
    T_out = T_eff - (rf - 1)
    assert out.shape == (B, cfg["out_dim"], cfg["num_nodes"], T_out), out.shape
    assert bool(jnp.all(jnp.isfinite(out)))

    ref = _reference_forward(params, x, cfg)
    assert ref.shape == out.shape, (ref.shape, out.shape)
    assert bool(jnp.allclose(out, ref, atol=0.1, rtol=0.1)), float(jnp.max(jnp.abs(out - ref)))
    print("KERNEL_OK")
</pallas_src>

<mosaic_0001>
module attributes {stable_mosaic.version = 11 : i64} {
  func.func @_start_conv_kernel(%arg0: i32, %arg1: memref<64x2xf32, #tpu.memory_space<vmem>>, %arg2: memref<2x16xbf16, #tpu.memory_space<vmem>>, %arg3: memref<1x16xf32, #tpu.memory_space<vmem>>, %arg4: memref<64x16xf32, #tpu.memory_space<vmem>>) attributes {dimension_semantics = [#tpu.dimension_semantics<parallel>], iteration_bounds = array<i64: 2>, scalar_prefetch = 0 : i64, scratch_operands = 0 : i64, tpu.core_type = #tpu.core_type<tc>, window_params = [{transform_indices = @transform_0, window_bounds = array<i64: 64, 2>}, {pipeline_mode = #tpu.pipeline_mode<synchronous>, transform_indices = @transform_1, window_bounds = array<i64: 2, 16>}, {pipeline_mode = #tpu.pipeline_mode<synchronous>, transform_indices = @transform_2, window_bounds = array<i64: 1, 16>}, {transform_indices = @transform_3, window_bounds = array<i64: 64, 16>}]} {
    %c0 = arith.constant 0 : index
    %c0_0 = arith.constant 0 : index
    %0 = vector.load %arg1[%c0, %c0_0] : memref<64x2xf32, #tpu.memory_space<vmem>>, vector<64x2xf32>
    %1 = arith.truncf %0 : vector<64x2xf32> to vector<64x2xbf16>
    %c0_1 = arith.constant 0 : index
    %c0_2 = arith.constant 0 : index
    %2 = vector.load %arg2[%c0_1, %c0_2] : memref<2x16xbf16, #tpu.memory_space<vmem>>, vector<2x16xbf16>
    %cst = arith.constant dense<0.000000e+00> : vector<64x16xf32>
    %3 = tpu.matmul %1, %2, %cst {dimension_numbers = #tpu.dot_dimension_numbers<[1], [0], [0], [1], [0, 0, 1, 1], [], []>} : vector<64x2xbf16>, vector<2x16xbf16>, vector<64x16xf32> -> vector<64x16xf32>
    %c0_3 = arith.constant 0 : index
    %c0_4 = arith.constant 0 : index
    %4 = vector.load %arg3[%c0_3, %c0_4] : memref<1x16xf32, #tpu.memory_space<vmem>>, vector<1x16xf32>
    %5 = vector.broadcast %4 : vector<1x16xf32> to vector<64x16xf32>
    %6 = arith.addf %3, %5 : vector<64x16xf32>
    %c0_5 = arith.constant 0 : index
    %c0_6 = arith.constant 0 : index
    %7 = vector.load %arg4[%c0_5, %c0_6] : memref<64x16xf32, #tpu.memory_space<vmem>>, vector<64x16xf32>
    tpu.vector_store %arg4[%c0_5, %c0_6], %6 {strides = array<i32>} : memref<64x16xf32, #tpu.memory_space<vmem>>, vector<64x16xf32>,
    return
  }
  func.func @transform_0(%arg0: i32) -> (i32, i32) {
    %c0_i32 = arith.constant 0 : i32
    %c0_i32_0 = arith.constant 0 : i32
    return %arg0, %c0_i32 : i32, i32
  }
  func.func @transform_1(%arg0: i32) -> (i32, i32) {
    %c0_i32 = arith.constant 0 : i32
    %c0_i32_0 = arith.constant 0 : i32
    %c0_i32_1 = arith.constant 0 : i32
    return %c0_i32, %c0_i32_0 : i32, i32
  }
  func.func @transform_2(%arg0: i32) -> (i32, i32) {
    %c0_i32 = arith.constant 0 : i32
    %c0_i32_0 = arith.constant 0 : i32
    %c0_i32_1 = arith.constant 0 : i32
    return %c0_i32, %c0_i32_0 : i32, i32
  }
  func.func @transform_3(%arg0: i32) -> (i32, i32) {
    %c0_i32 = arith.constant 0 : i32
    %c0_i32_0 = arith.constant 0 : i32
    return %arg0, %c0_i32 : i32, i32
  }
}

module attributes {stable_mosaic.version = 11 : i64} {
  func.func @_layer_a_kernel(%arg0: i32, %arg1: memref<64x16xf32, #tpu.memory_space<vmem>>, %arg2: memref<32x32xbf16, #tpu.memory_space<vmem>>, %arg3: memref<1x32xf32, #tpu.memory_space<vmem>>, %arg4: memref<16x144xbf16, #tpu.memory_space<vmem>>, %arg5: memref<1x144xf32, #tpu.memory_space<vmem>>, %arg6: memref<64x32xf32, #tpu.memory_space<vmem>>, %arg7: memref<64x16xf32, #tpu.memory_space<vmem>>, %arg8: memref<6x64x16xbf16, #tpu.memory_space<vmem>>) attributes {dimension_semantics = [#tpu.dimension_semantics<parallel>], iteration_bounds = array<i64: 2>, scalar_prefetch = 0 : i64, scratch_operands = 0 : i64, tpu.core_type = #tpu.core_type<tc>, window_params = [{transform_indices = @transform_0, window_bounds = array<i64: 64, 16>}, {pipeline_mode = #tpu.pipeline_mode<synchronous>, transform_indices = @transform_1, window_bounds = array<i64: 32, 32>}, {pipeline_mode = #tpu.pipeline_mode<synchronous>, transform_indices = @transform_2, window_bounds = array<i64: 1, 32>}, {pipeline_mode = #tpu.pipeline_mode<synchronous>, transform_indices = @transform_3, window_bounds = array<i64: 16, 144>}, {pipeline_mode = #tpu.pipeline_mode<synchronous>, transform_indices = @transform_4, window_bounds = array<i64: 1, 144>}, {transform_indices = @transform_5, window_bounds = array<i64: 64, 32>}, {transform_indices = @transform_6, window_bounds = array<i64: 64, 16>}, {transform_indices = @transform_7, window_bounds = array<i64: 6, 64, 16>}]} {
    %c0 = arith.constant 0 : index
    %c0_0 = arith.constant 0 : index
    %0 = vector.load %arg1[%c0, %c0_0] : memref<64x16xf32, #tpu.memory_space<vmem>>, vector<63x16xf32>
    %c1 = arith.constant 1 : index
    %c0_1 = arith.constant 0 : index
    %1 = vector.load %arg1[%c1, %c0_1] : memref<64x16xf32, #tpu.memory_space<vmem>>, vector<63x16xf32>
    %2 = tpu.concatenate %0, %1 in 1 : vector<63x16xf32>, vector<63x16xf32> -> vector<63x32xf32>
    %3 = arith.truncf %2 : vector<63x32xf32> to vector<63x32xbf16>
    %c0_2 = arith.constant 0 : index
    %c0_3 = arith.constant 0 : index
    %4 = vector.load %arg2[%c0_2, %c0_3] : memref<32x32xbf16, #tpu.memory_space<vmem>>, vector<32x32xbf16>
    %cst = arith.constant dense<0.000000e+00> : vector<63x32xf32>
    %5 = tpu.matmul %3, %4, %cst {dimension_numbers = #tpu.dot_dimension_numbers<[1], [0], [0], [1], [0, 0, 1, 1], [], []>} : vector<63x32xbf16>, vector<32x32xbf16>, vector<63x32xf32> -> vector<63x32xf32>
    %c0_4 = arith.constant 0 : index
    %c0_5 = arith.constant 0 : index
    %6 = vector.load %arg3[%c0_4, %c0_5] : memref<1x32xf32, #tpu.memory_space<vmem>>, vector<1x32xf32>
    %7 = vector.broadcast %6 : vector<1x32xf32> to vector<63x32xf32>
    %8 = arith.addf %5, %7 : vector<63x32xf32>
    %9 = vector.extract_strided_slice %8 {offsets = [0, 0], sizes = [63, 16], strides = [1, 1]} : vector<63x32xf32> to vector<63x16xf32>
    %10 = math.tanh %9 : vector<63x16xf32>
    %11 = vector.extract_strided_slice %8 {offsets = [0, 16], sizes = [63, 16], strides = [1, 1]} : vector<63x32xf32> to vector<63x16xf32>
    %12 = arith.negf %11 : vector<63x16xf32>
    %13 = math.exp %12 : vector<63x16xf32>
    %cst_6 = arith.constant 1.000000e+00 : f32
    %14 = vector.broadcast %cst_6 : f32 to vector<63x16xf32>
    %15 = arith.addf %14, %13 : vector<63x16xf32>
    %16 = arith.divf %14, %15 : vector<63x16xf32>
    %17 = arith.mulf %10, %16 : vector<63x16xf32>
    %18 = arith.truncf %17 : vector<63x16xf32> to vector<63x16xbf16>
    %c0_7 = arith.constant 0 : index
    %c0_8 = arith.constant 0 : index
    %19 = vector.load %arg4[%c0_7, %c0_8] : memref<16x144xbf16, #tpu.memory_space<vmem>>, vector<16x144xbf16>
    %cst_9 = arith.constant dense<0.000000e+00> : vector<63x144xf32>
    %20 = tpu.matmul %18, %19, %cst_9 {dimension_numbers = #tpu.dot_dimension_numbers<[1], [0], [0], [1], [0, 0, 1, 1], [], []>} : vector<63x16xbf16>, vector<16x144xbf16>, vector<63x144xf32> -> vector<63x144xf32>
    %c0_10 = arith.constant 0 : index
    %c0_11 = arith.constant 0 : index
    %21 = vector.load %arg5[%c0_10, %c0_11] : memref<1x144xf32, #tpu.memory_space<vmem>>, vector<1x144xf32>
    %22 = vector.broadcast %21 : vector<1x144xf32> to vector<63x144xf32>
    %23 = arith.addf %20, %22 : vector<63x144xf32>
    %24 = vector.extract_strided_slice %23 {offsets = [0, 0], sizes = [63, 32], strides = [1, 1]} : vector<63x144xf32> to vector<63x32xf32>
    %c0_12 = arith.constant 0 : index
    %c0_13 = arith.constant 0 : index
    %25 = vector.load %arg6[%c0_12, %c0_13] : memref<64x32xf32, #tpu.memory_space<vmem>>, vector<63x32xf32>
    tpu.vector_store %arg6[%c0_12, %c0_13], %24 {strides = array<i32>} : memref<64x32xf32, #tpu.memory_space<vmem>>, vector<63x32xf32>,
    %26 = vector.extract_strided_slice %23 {offsets = [0, 32], sizes = [63, 16], strides = [1, 1]} : vector<63x144xf32> to vector<63x16xf32>
    %27 = arith.addf %26, %1 : vector<63x16xf32>
    %c0_14 = arith.constant 0 : index
    %c0_15 = arith.constant 0 : index
    %28 = vector.load %arg7[%c0_14, %c0_15] : memref<64x16xf32, #tpu.memory_space<vmem>>, vector<63x16xf32>
    tpu.vector_store %arg7[%c0_14, %c0_15], %27 {strides = array<i32>} : memref<64x16xf32, #tpu.memory_space<vmem>>, vector<63x16xf32>,
    %29 = vector.extract_strided_slice %23 {offsets = [0, 48], sizes = [63, 16], strides = [1, 1]} : vector<63x144xf32> to vector<63x16xf32>
    %30 = arith.truncf %29 : vector<63x16xf32> to vector<63x16xbf16>
    %c0_16 = arith.constant 0 : index
    %c0_17 = arith.constant 0 : index
    %c0_18 = arith.constant 0 : index
    %31 = vector.load %arg8[%c0_16, %c0_17, %c0_18] : memref<6x64x16xbf16, #tpu.memory_space<vmem>>, vector<1x63x16xbf16>
    %32 = vector.shape_cast %31 : vector<1x63x16xbf16> to vector<63x16xbf16>
    %33 = vector.shape_cast %30 : vector<63x16xbf16> to vector<1x63x16xbf16>
    tpu.vector_store %arg8[%c0_16, %c0_17, %c0_18], %33 {strides = array<i32>} : memref<6x64x16xbf16, #tpu.memory_space<vmem>>, vector<1x63x16xbf16>,
    %34 = vector.extract_strided_slice %23 {offsets = [0, 64], sizes = [63, 16], strides = [1, 1]} : vector<63x144xf32> to vector<63x16xf32>
    %35 = arith.truncf %34 : vector<63x16xf32> to vector<63x16xbf16>
    %c1_19 = arith.constant 1 : index
    %c0_20 = arith.constant 0 : index
    %c0_21 = arith.constant 0 : index
    %36 = vector.load %arg8[%c1_19, %c0_20, %c0_21] : memref<6x64x16xbf16, #tpu.memory_space<vmem>>, vector<1x63x16xbf16>
    %37 = vector.shape_cast %36 : vector<1x63x16xbf16> to vector<63x16xbf16>
    %38 = vector.shape_cast %35 : vector<63x16xbf16> to vector<1x63x16xbf16>
    tpu.vector_store %arg8[%c1_19, %c0_20, %c0_21], %38 {strides = array<i32>} : memref<6x64x16xbf16, #tpu.memory_space<vmem>>, vector<1x63x16xbf16>,
    %39 = vector.extract_strided_slice %23 {offsets = [0, 80], sizes = [63, 16], strides = [1, 1]} : vector<63x144xf32> to vector<63x16xf32>
    %40 = arith.truncf %39 : vector<63x16xf32> to vector<63x16xbf16>
    %c2 = arith.constant 2 : index
    %c0_22 = arith.constant 0 : index
    %c0_23 = arith.constant 0 : index
    %41 = vector.load %arg8[%c2, %c0_22, %c0_23] : memref<6x64x16xbf16, #tpu.memory_space<vmem>>, vector<1x63x16xbf16>
    %42 = vector.shape_cast %41 : vector<1x63x16xbf16> to vector<63x16xbf16>
    %43 = vector.shape_cast %40 : vector<63x16xbf16> to vector<1x63x16xbf16>
    tpu.vector_store %arg8[%c2, %c0_22, %c0_23], %43 {strides = array<i32>} : memref<6x64x16xbf16, #tpu.memory_space<vmem>>, vector<1x63x16xbf16>,
    %44 = vector.extract_strided_slice %23 {offsets = [0, 96], sizes = [63, 16], strides = [1, 1]} : vector<63x144xf32> to vector<63x16xf32>
    %45 = arith.truncf %44 : vector<63x16xf32> to vector<63x16xbf16>
    %c3 = arith.constant 3 : index
    %c0_24 = arith.constant 0 : index
    %c0_25 = arith.constant 0 : index
    %46 = vector.load %arg8[%c3, %c0_24, %c0_25] : memref<6x64x16xbf16, #tpu.memory_space<vmem>>, vector<1x63x16xbf16>
    %47 = vector.shape_cast %46 : vector<1x63x16xbf16> to vector<63x16xbf16>
    %48 = vector.shape_cast %45 : vector<63x16xbf16> to vector<1x63x16xbf16>
    tpu.vector_store %arg8[%c3, %c0_24, %c0_25], %48 {strides = array<i32>} : memref<6x64x16xbf16, #tpu.memory_space<vmem>>, vector<1x63x16xbf16>,
    %49 = vector.extract_strided_slice %23 {offsets = [0, 112], sizes = [63, 16], strides = [1, 1]} : vector<63x144xf32> to vector<63x16xf32>
    %50 = arith.truncf %49 : vector<63x16xf32> to vector<63x16xbf16>
    %c4 = arith.constant 4 : index
    %c0_26 = arith.constant 0 : index
    %c0_27 = arith.constant 0 : index
    %51 = vector.load %arg8[%c4, %c0_26, %c0_27] : memref<6x64x16xbf16, #tpu.memory_space<vmem>>, vector<1x63x16xbf16>
    %52 = vector.shape_cast %51 : vector<1x63x16xbf16> to vector<63x16xbf16>
    %53 = vector.shape_cast %50 : vector<63x16xbf16> to vector<1x63x16xbf16>
    tpu.vector_store %arg8[%c4, %c0_26, %c0_27], %53 {strides = array<i32>} : memref<6x64x16xbf16, #tpu.memory_space<vmem>>, vector<1x63x16xbf16>,
    %54 = vector.extract_strided_slice %23 {offsets = [0, 128], sizes = [63, 16], strides = [1, 1]} : vector<63x144xf32> to vector<63x16xf32>
    %55 = arith.truncf %54 : vector<63x16xf32> to vector<63x16xbf16>
    %c5 = arith.constant 5 : index
    %c0_28 = arith.constant 0 : index
    %c0_29 = arith.constant 0 : index
    %56 = vector.load %arg8[%c5, %c0_28, %c0_29] : memref<6x64x16xbf16, #tpu.memory_space<vmem>>, vector<1x63x16xbf16>
    %57 = vector.shape_cast %56 : vector<1x63x16xbf16> to vector<63x16xbf16>
    %58 = vector.shape_cast %55 : vector<63x16xbf16> to vector<1x63x16xbf16>
    tpu.vector_store %arg8[%c5, %c0_28, %c0_29], %58 {strides = array<i32>} : memref<6x64x16xbf16, #tpu.memory_space<vmem>>, vector<1x63x16xbf16>,
    %cst_30 = arith.constant 0.000000e+00 : f32
    %59 = vector.broadcast %cst_30 : f32 to vector<1x32xf32>
    %c63 = arith.constant 63 : index
    %c0_31 = arith.constant 0 : index
    %60 = vector.load %arg6[%c63, %c0_31] : memref<64x32xf32, #tpu.memory_space<vmem>>, vector<1x32xf32>
    tpu.vector_store %arg6[%c63, %c0_31], %59 {strides = array<i32>} : memref<64x32xf32, #tpu.memory_space<vmem>>, vector<1x32xf32>,
    %cst_32 = arith.constant 0.000000e+00 : f32
    %61 = vector.broadcast %cst_32 : f32 to vector<1x16xf32>
    %c63_33 = arith.constant 63 : index
    %c0_34 = arith.constant 0 : index
    %62 = vector.load %arg7[%c63_33, %c0_34] : memref<64x16xf32, #tpu.memory_space<vmem>>, vector<1x16xf32>
    tpu.vector_store %arg7[%c63_33, %c0_34], %61 {strides = array<i32>} : memref<64x16xf32, #tpu.memory_space<vmem>>, vector<1x16xf32>,
    %cst_35 = arith.constant 0.000000e+00 : bf16
    %63 = vector.broadcast %cst_35 : bf16 to vector<1x16xbf16>
    %c0_36 = arith.constant 0 : index
    %c63_37 = arith.constant 63 : index
    %c0_38 = arith.constant 0 : index
    %64 = vector.load %arg8[%c0_36, %c63_37, %c0_38] : memref<6x64x16xbf16, #tpu.memory_space<vmem>>, vector<1x1x16xbf16>
    %65 = vector.shape_cast %64 : vector<1x1x16xbf16> to vector<1x16xbf16>
    %66 = vector.shape_cast %63 : vector<1x16xbf16> to vector<1x1x16xbf16>
    tpu.vector_store %arg8[%c0_36, %c63_37, %c0_38], %66 {strides = array<i32>} : memref<6x64x16xbf16, #tpu.memory_space<vmem>>, vector<1x1x16xbf16>,
    %c1_39 = arith.constant 1 : index
    %c63_40 = arith.constant 63 : index
    %c0_41 = arith.constant 0 : index
    %67 = vector.load %arg8[%c1_39, %c63_40, %c0_41] : memref<6x64x16xbf16, #tpu.memory_space<vmem>>, vector<1x1x16xbf16>
    %68 = vector.shape_cast %67 : vector<1x1x16xbf16> to vector<1x16xbf16>
    %69 = vector.shape_cast %63 : vector<1x16xbf16> to vector<1x1x16xbf16>
    tpu.vector_store %arg8[%c1_39, %c63_40, %c0_41], %69 {strides = array<i32>} : memref<6x64x16xbf16, #tpu.memory_space<vmem>>, vector<1x1x16xbf16>,
    %c2_42 = arith.constant 2 : index
    %c63_43 = arith.constant 63 : index
    %c0_44 = arith.constant 0 : index
    %70 = vector.load %arg8[%c2_42, %c63_43, %c0_44] : memref<6x64x16xbf16, #tpu.memory_space<vmem>>, vector<1x1x16xbf16>
    %71 = vector.shape_cast %70 : vector<1x1x16xbf16> to vector<1x16xbf16>
    %72 = vector.shape_cast %63 : vector<1x16xbf16> to vector<1x1x16xbf16>
    tpu.vector_store %arg8[%c2_42, %c63_43, %c0_44], %72 {strides = array<i32>} : memref<6x64x16xbf16, #tpu.memory_space<vmem>>, vector<1x1x16xbf16>,
    %c3_45 = arith.constant 3 : index
    %c63_46 = arith.constant 63 : index
    %c0_47 = arith.constant 0 : index
    %73 = vector.load %arg8[%c3_45, %c63_46, %c0_47] : memref<6x64x16xbf16, #tpu.memory_space<vmem>>, vector<1x1x16xbf16>
    %74 = vector.shape_cast %73 : vector<1x1x16xbf16> to vector<1x16xbf16>
    %75 = vector.shape_cast %63 : vector<1x16xbf16> to vector<1x1x16xbf16>
    tpu.vector_store %arg8[%c3_45, %c63_46, %c0_47], %75 {strides = array<i32>} : memref<6x64x16xbf16, #tpu.memory_space<vmem>>, vector<1x1x16xbf16>,
    %c4_48 = arith.constant 4 : index
    %c63_49 = arith.constant 63 : index
    %c0_50 = arith.constant 0 : index
    %76 = vector.load %arg8[%c4_48, %c63_49, %c0_50] : memref<6x64x16xbf16, #tpu.memory_space<vmem>>, vector<1x1x16xbf16>
    %77 = vector.shape_cast %76 : vector<1x1x16xbf16> to vector<1x16xbf16>
    %78 = vector.shape_cast %63 : vector<1x16xbf16> to vector<1x1x16xbf16>
    tpu.vector_store %arg8[%c4_48, %c63_49, %c0_50], %78 {strides = array<i32>} : memref<6x64x16xbf16, #tpu.memory_space<vmem>>, vector<1x1x16xbf16>,
    %c5_51 = arith.constant 5 : index
    %c63_52 = arith.constant 63 : index
    %c0_53 = arith.constant 0 : index
    %79 = vector.load %arg8[%c5_51, %c63_52, %c0_53] : memref<6x64x16xbf16, #tpu.memory_space<vmem>>, vector<1x1x16xbf16>
    %80 = vector.shape_cast %79 : vector<1x1x16xbf16> to vector<1x16xbf16>
    %81 = vector.shape_cast %63 : vector<1x16xbf16> to vector<1x1x16xbf16>
    tpu.vector_store %arg8[%c5_51, %c63_52, %c0_53], %81 {strides = array<i32>} : memref<6x64x16xbf16, #tpu.memory_space<vmem>>, vector<1x1x16xbf16>,
    return
  }
  func.func @transform_0(%arg0: i32) -> (i32, i32) {
    %c0_i32 = arith.constant 0 : i32
    %c0_i32_0 = arith.constant 0 : i32
    return %arg0, %c0_i32 : i32, i32
  }
  func.func @transform_1(%arg0: i32) -> (i32, i32) {
    %c0_i32 = arith.constant 0 : i32
    %c0_i32_0 = arith.constant 0 : i32
    %c0_i32_1 = arith.constant 0 : i32
    return %c0_i32, %c0_i32_0 : i32, i32
  }
  func.func @transform_2(%arg0: i32) -> (i32, i32) {
    %c0_i32 = arith.constant 0 : i32
    %c0_i32_0 = arith.constant 0 : i32
    %c0_i32_1 = arith.constant 0 : i32
    return %c0_i32, %c0_i32_0 : i32, i32
  }
  func.func @transform_3(%arg0: i32) -> (i32, i32) {
    %c0_i32 = arith.constant 0 : i32
    %c0_i32_0 = arith.constant 0 : i32
    %c0_i32_1 = arith.constant 0 : i32
    return %c0_i32, %c0_i32_0 : i32, i32
  }
  func.func @transform_4(%arg0: i32) -> (i32, i32) {
    %c0_i32 = arith.constant 0 : i32
    %c0_i32_0 = arith.constant 0 : i32
    %c0_i32_1 = arith.constant 0 : i32
    return %c0_i32, %c0_i32_0 : i32, i32
  }
  func.func @transform_5(%arg0: i32) -> (i32, i32) {
    %c0_i32 = arith.constant 0 : i32
    %c0_i32_0 = arith.constant 0 : i32
    return %arg0, %c0_i32 : i32, i32
  }
  func.func @transform_6(%arg0: i32) -> (i32, i32) {
    %c0_i32 = arith.constant 0 : i32
    %c0_i32_0 = arith.constant 0 : i32
    return %arg0, %c0_i32 : i32, i32
  }
  func.func @transform_7(%arg0: i32) -> (i32, i32, i32) {
    %c0_i32 = arith.constant 0 : i32
    %c0_i32_0 = arith.constant 0 : i32
    %c0_i32_1 = arith.constant 0 : i32
    return %c0_i32, %arg0, %c0_i32_0 : i32, i32, i32
  }
}

module attributes {stable_mosaic.version = 11 : i64} {
  func.func @_adp_adj_kernel(%arg0: i32, %arg1: memref<8x10xf32, #tpu.memory_space<vmem>>, %arg2: memref<10x8xf32, #tpu.memory_space<vmem>>, %arg3: memref<8x8xbf16, #tpu.memory_space<vmem>>) attributes {dimension_semantics = [#tpu.dimension_semantics<arbitrary>], iteration_bounds = array<i64: 1>, scalar_prefetch = 0 : i64, scratch_operands = 0 : i64, tpu.core_type = #tpu.core_type<tc>, window_params = [{pipeline_mode = #tpu.pipeline_mode<synchronous>, transform_indices = @transform_0, window_bounds = array<i64: 8, 10>}, {pipeline_mode = #tpu.pipeline_mode<synchronous>, transform_indices = @transform_1, window_bounds = array<i64: 10, 8>}, {pipeline_mode = #tpu.pipeline_mode<synchronous>, transform_indices = @transform_2, window_bounds = array<i64: 8, 8>}]} {
    %c0 = arith.constant 0 : index
    %c0_0 = arith.constant 0 : index
    %0 = vector.load %arg1[%c0, %c0_0] : memref<8x10xf32, #tpu.memory_space<vmem>>, vector<8x10xf32>
    %c0_1 = arith.constant 0 : index
    %c0_2 = arith.constant 0 : index
    %1 = vector.load %arg2[%c0_1, %c0_2] : memref<10x8xf32, #tpu.memory_space<vmem>>, vector<10x8xf32>
    %cst = arith.constant dense<0.000000e+00> : vector<8x8xf32>
    %2 = tpu.matmul %0, %1, %cst {dimension_numbers = #tpu.dot_dimension_numbers<[1], [0], [0], [1], [0, 0, 1, 1], [], []>} : vector<8x10xf32>, vector<10x8xf32>, vector<8x8xf32> -> vector<8x8xf32>
    %cst_3 = arith.constant 0.000000e+00 : f32
    %3 = vector.broadcast %cst_3 : f32 to vector<8x8xf32>
    %4 = arith.maximumf %2, %3 : vector<8x8xf32>
    %cst_4 = arith.constant dense<0xFF800000> : vector<8xf32>
    %5 = vector.multi_reduction <maximumf>, %4, %cst_4 [0] : vector<8x8xf32> to vector<8xf32>
    %6 = vector.shape_cast %5 : vector<8xf32> to vector<1x8xf32>
    %7 = vector.broadcast %6 : vector<1x8xf32> to vector<8x8xf32>
    %8 = arith.subf %4, %7 : vector<8x8xf32>
    %9 = math.exp %8 : vector<8x8xf32>
    %cst_5 = arith.constant dense<0.000000e+00> : vector<8xf32>
    %10 = vector.multi_reduction <add>, %9, %cst_5 [0] : vector<8x8xf32> to vector<8xf32>
    %11 = vector.shape_cast %10 : vector<8xf32> to vector<1x8xf32>
    %12 = vector.broadcast %11 : vector<1x8xf32> to vector<8x8xf32>
    %13 = arith.divf %9, %12 : vector<8x8xf32>
    %14 = arith.truncf %13 : vector<8x8xf32> to vector<8x8xbf16>
    %c0_6 = arith.constant 0 : index
    %c0_7 = arith.constant 0 : index
    %15 = vector.load %arg3[%c0_6, %c0_7] : memref<8x8xbf16, #tpu.memory_space<vmem>>, vector<8x8xbf16>
    tpu.vector_store %arg3[%c0_6, %c0_7], %14 {strides = array<i32>} : memref<8x8xbf16, #tpu.memory_space<vmem>>, vector<8x8xbf16>,
    return
  }
  func.func @transform_0(%arg0: i32) -> (i32, i32) {
    %c0_i32 = arith.constant 0 : i32
    %c0_i32_0 = arith.constant 0 : i32
    %c0_i32_1 = arith.constant 0 : i32
    return %c0_i32, %c0_i32_0 : i32, i32
  }
  func.func @transform_1(%arg0: i32) -> (i32, i32) {
    %c0_i32 = arith.constant 0 : i32
    %c0_i32_0 = arith.constant 0 : i32
    %c0_i32_1 = arith.constant 0 : i32
    return %c0_i32, %c0_i32_0 : i32, i32
  }
  func.func @transform_2(%arg0: i32) -> (i32, i32) {
    %c0_i32 = arith.constant 0 : i32
    %c0_i32_0 = arith.constant 0 : i32
    %c0_i32_1 = arith.constant 0 : i32
    return %c0_i32, %c0_i32_0 : i32, i32
  }
}

module attributes {stable_mosaic.version = 11 : i64} {
  func.func @_layer_b_kernel(%arg0: i32, %arg1: memref<3x8x8xbf16, #tpu.memory_space<vmem>>, %arg2: memref<8x128xf32, #tpu.memory_space<vmem>>, %arg3: memref<6x8x128xbf16, #tpu.memory_space<vmem>>, %arg4: memref<1x128xf32, #tpu.memory_space<vmem>>, %arg5: memref<1x128xf32, #tpu.memory_space<vmem>>, %arg6: memref<8x128xf32, #tpu.memory_space<vmem>>) attributes {dimension_semantics = [#tpu.dimension_semantics<parallel>], iteration_bounds = array<i64: 2>, scalar_prefetch = 0 : i64, scratch_operands = 0 : i64, tpu.core_type = #tpu.core_type<tc>, window_params = [{pipeline_mode = #tpu.pipeline_mode<synchronous>, transform_indices = @transform_0, window_bounds = array<i64: 3, 8, 8>}, {transform_indices = @transform_1, window_bounds = array<i64: 8, 128>}, {transform_indices = @transform_2, window_bounds = array<i64: 6, 8, 128>}, {transform_indices = @transform_3, window_bounds = array<i64: 1, 128>}, {transform_indices = @transform_4, window_bounds = array<i64: 1, 128>}, {transform_indices = @transform_5, window_bounds = array<i64: 8, 128>}]} {
    %c0 = arith.constant 0 : index
    %c0_0 = arith.constant 0 : index
    %0 = vector.load %arg2[%c0, %c0_0] : memref<8x128xf32, #tpu.memory_space<vmem>>, vector<8x128xf32>
    %c0_1 = arith.constant 0 : index
    %c0_2 = arith.constant 0 : index
    %c0_3 = arith.constant 0 : index
    %1 = vector.load %arg1[%c0_1, %c0_2, %c0_3] : memref<3x8x8xbf16, #tpu.memory_space<vmem>>, vector<1x8x8xbf16>
    %2 = vector.shape_cast %1 : vector<1x8x8xbf16> to vector<8x8xbf16>
    %c1 = arith.constant 1 : index
    %c0_4 = arith.constant 0 : index
    %c0_5 = arith.constant 0 : index
    %3 = vector.load %arg3[%c1, %c0_4, %c0_5] : memref<6x8x128xbf16, #tpu.memory_space<vmem>>, vector<1x8x128xbf16>
    %4 = vector.shape_cast %3 : vector<1x8x128xbf16> to vector<8x128xbf16>
    %c0_6 = arith.constant 0 : index
    %c0_7 = arith.constant 0 : index
    %c0_8 = arith.constant 0 : index
    %5 = vector.load %arg3[%c0_6, %c0_7, %c0_8] : memref<6x8x128xbf16, #tpu.memory_space<vmem>>, vector<1x8x128xbf16>
    %6 = vector.shape_cast %5 : vector<1x8x128xbf16> to vector<8x128xbf16>
    %cst = arith.constant dense<0.000000e+00> : vector<8x128xf32>
    %7 = tpu.matmul %2, %4, %cst {dimension_numbers = #tpu.dot_dimension_numbers<[1], [0], [0], [1], [0, 0, 1, 1], [], []>} : vector<8x8xbf16>, vector<8x128xbf16>, vector<8x128xf32> -> vector<8x128xf32>
    %8 = arith.extf %6 : vector<8x128xbf16> to vector<8x128xf32>
    %9 = arith.addf %8, %7 : vector<8x128xf32>
    %10 = arith.truncf %9 : vector<8x128xf32> to vector<8x128xbf16>
    %cst_9 = arith.constant dense<0.000000e+00> : vector<8x128xf32>
    %11 = tpu.matmul %2, %10, %cst_9 {dimension_numbers = #tpu.dot_dimension_numbers<[1], [0], [0], [1], [0, 0, 1, 1], [], []>} : vector<8x8xbf16>, vector<8x128xbf16>, vector<8x128xf32> -> vector<8x128xf32>
    %12 = arith.addf %0, %11 : vector<8x128xf32>
    %c1_10 = arith.constant 1 : index
    %c0_11 = arith.constant 0 : index
    %c0_12 = arith.constant 0 : index
    %13 = vector.load %arg1[%c1_10, %c0_11, %c0_12] : memref<3x8x8xbf16, #tpu.memory_space<vmem>>, vector<1x8x8xbf16>
    %14 = vector.shape_cast %13 : vector<1x8x8xbf16> to vector<8x8xbf16>
    %c3 = arith.constant 3 : index
    %c0_13 = arith.constant 0 : index
    %c0_14 = arith.constant 0 : index
    %15 = vector.load %arg3[%c3, %c0_13, %c0_14] : memref<6x8x128xbf16, #tpu.memory_space<vmem>>, vector<1x8x128xbf16>
    %16 = vector.shape_cast %15 : vector<1x8x128xbf16> to vector<8x128xbf16>
    %c2 = arith.constant 2 : index
    %c0_15 = arith.constant 0 : index
    %c0_16 = arith.constant 0 : index
    %17 = vector.load %arg3[%c2, %c0_15, %c0_16] : memref<6x8x128xbf16, #tpu.memory_space<vmem>>, vector<1x8x128xbf16>
    %18 = vector.shape_cast %17 : vector<1x8x128xbf16> to vector<8x128xbf16>
    %cst_17 = arith.constant dense<0.000000e+00> : vector<8x128xf32>
    %19 = tpu.matmul %14, %16, %cst_17 {dimension_numbers = #tpu.dot_dimension_numbers<[1], [0], [0], [1], [0, 0, 1, 1], [], []>} : vector<8x8xbf16>, vector<8x128xbf16>, vector<8x128xf32> -> vector<8x128xf32>
    %20 = arith.extf %18 : vector<8x128xbf16> to vector<8x128xf32>
    %21 = arith.addf %20, %19 : vector<8x128xf32>
    %22 = arith.truncf %21 : vector<8x128xf32> to vector<8x128xbf16>
    %cst_18 = arith.constant dense<0.000000e+00> : vector<8x128xf32>
    %23 = tpu.matmul %14, %22, %cst_18 {dimension_numbers = #tpu.dot_dimension_numbers<[1], [0], [0], [1], [0, 0, 1, 1], [], []>} : vector<8x8xbf16>, vector<8x128xbf16>, vector<8x128xf32> -> vector<8x128xf32>
    %24 = arith.addf %12, %23 : vector<8x128xf32>
    %c2_19 = arith.constant 2 : index
    %c0_20 = arith.constant 0 : index
    %c0_21 = arith.constant 0 : index
    %25 = vector.load %arg1[%c2_19, %c0_20, %c0_21] : memref<3x8x8xbf16, #tpu.memory_space<vmem>>, vector<1x8x8xbf16>
    %26 = vector.shape_cast %25 : vector<1x8x8xbf16> to vector<8x8xbf16>
    %c5 = arith.constant 5 : index
    %c0_22 = arith.constant 0 : index
    %c0_23 = arith.constant 0 : index
    %27 = vector.load %arg3[%c5, %c0_22, %c0_23] : memref<6x8x128xbf16, #tpu.memory_space<vmem>>, vector<1x8x128xbf16>
    %28 = vector.shape_cast %27 : vector<1x8x128xbf16> to vector<8x128xbf16>
    %c4 = arith.constant 4 : index
    %c0_24 = arith.constant 0 : index
    %c0_25 = arith.constant 0 : index
    %29 = vector.load %arg3[%c4, %c0_24, %c0_25] : memref<6x8x128xbf16, #tpu.memory_space<vmem>>, vector<1x8x128xbf16>
    %30 = vector.shape_cast %29 : vector<1x8x128xbf16> to vector<8x128xbf16>
    %cst_26 = arith.constant dense<0.000000e+00> : vector<8x128xf32>
    %31 = tpu.matmul %26, %28, %cst_26 {dimension_numbers = #tpu.dot_dimension_numbers<[1], [0], [0], [1], [0, 0, 1, 1], [], []>} : vector<8x8xbf16>, vector<8x128xbf16>, vector<8x128xf32> -> vector<8x128xf32>
    %32 = arith.extf %30 : vector<8x128xbf16> to vector<8x128xf32>
    %33 = arith.addf %32, %31 : vector<8x128xf32>
    %34 = arith.truncf %33 : vector<8x128xf32> to vector<8x128xbf16>
    %cst_27 = arith.constant dense<0.000000e+00> : vector<8x128xf32>
    %35 = tpu.matmul %26, %34, %cst_27 {dimension_numbers = #tpu.dot_dimension_numbers<[1], [0], [0], [1], [0, 0, 1, 1], [], []>} : vector<8x8xbf16>, vector<8x128xbf16>, vector<8x128xf32> -> vector<8x128xf32>
    %36 = arith.addf %24, %35 : vector<8x128xf32>
    %c0_28 = arith.constant 0 : index
    %c0_29 = arith.constant 0 : index
    %37 = vector.load %arg4[%c0_28, %c0_29] : memref<1x128xf32, #tpu.memory_space<vmem>>, vector<1x128xf32>
    %38 = vector.broadcast %37 : vector<1x128xf32> to vector<8x128xf32>
    %39 = arith.mulf %36, %38 : vector<8x128xf32>
    %c0_30 = arith.constant 0 : index
    %c0_31 = arith.constant 0 : index
    %40 = vector.load %arg5[%c0_30, %c0_31] : memref<1x128xf32, #tpu.memory_space<vmem>>, vector<1x128xf32>
    %41 = vector.broadcast %40 : vector<1x128xf32> to vector<8x128xf32>
    %42 = arith.addf %39, %41 : vector<8x128xf32>
    %c0_32 = arith.constant 0 : index
    %c0_33 = arith.constant 0 : index
    %43 = vector.load %arg6[%c0_32, %c0_33] : memref<8x128xf32, #tpu.memory_space<vmem>>, vector<8x128xf32>
    tpu.vector_store %arg6[%c0_32, %c0_33], %42 {strides = array<i32>} : memref<8x128xf32, #tpu.memory_space<vmem>>, vector<8x128xf32>,
    return
  }
  func.func @transform_0(%arg0: i32) -> (i32, i32, i32) {
    %c0_i32 = arith.constant 0 : i32
    %c0_i32_0 = arith.constant 0 : i32
    %c0_i32_1 = arith.constant 0 : i32
    %c0_i32_2 = arith.constant 0 : i32
    return %c0_i32, %c0_i32_0, %c0_i32_1 : i32, i32, i32
  }
  func.func @transform_1(%arg0: i32) -> (i32, i32) {
    %c0_i32 = arith.constant 0 : i32
    %c0_i32_0 = arith.constant 0 : i32
    return %c0_i32, %arg0 : i32, i32
  }
  func.func @transform_2(%arg0: i32) -> (i32, i32, i32) {
    %c0_i32 = arith.constant 0 : i32
    %c0_i32_0 = arith.constant 0 : i32
    %c0_i32_1 = arith.constant 0 : i32
    return %c0_i32, %c0_i32_0, %arg0 : i32, i32, i32
  }
  func.func @transform_3(%arg0: i32) -> (i32, i32) {
    %c0_i32 = arith.constant 0 : i32
    %c0_i32_0 = arith.constant 0 : i32
    return %c0_i32, %arg0 : i32, i32
  }
  func.func @transform_4(%arg0: i32) -> (i32, i32) {
    %c0_i32 = arith.constant 0 : i32
    %c0_i32_0 = arith.constant 0 : i32
    return %c0_i32, %arg0 : i32, i32
  }
  func.func @transform_5(%arg0: i32) -> (i32, i32) {
    %c0_i32 = arith.constant 0 : i32
    %c0_i32_0 = arith.constant 0 : i32
    return %c0_i32, %arg0 : i32, i32
  }
}

module attributes {stable_mosaic.version = 11 : i64} {
  func.func @_layer_a_kernel(%arg0: i32, %arg1: memref<64x16xf32, #tpu.memory_space<vmem>>, %arg2: memref<64x32xf32, #tpu.memory_space<vmem>>, %arg3: memref<32x32xbf16, #tpu.memory_space<vmem>>, %arg4: memref<1x32xf32, #tpu.memory_space<vmem>>, %arg5: memref<16x144xbf16, #tpu.memory_space<vmem>>, %arg6: memref<1x144xf32, #tpu.memory_space<vmem>>, %arg7: memref<64x32xf32, #tpu.memory_space<vmem>>, %arg8: memref<64x16xf32, #tpu.memory_space<vmem>>, %arg9: memref<6x64x16xbf16, #tpu.memory_space<vmem>>) attributes {dimension_semantics = [#tpu.dimension_semantics<parallel>], iteration_bounds = array<i64: 2>, scalar_prefetch = 0 : i64, scratch_operands = 0 : i64, tpu.core_type = #tpu.core_type<tc>, window_params = [{transform_indices = @transform_0, window_bounds = array<i64: 64, 16>}, {transform_indices = @transform_1, window_bounds = array<i64: 64, 32>}, {pipeline_mode = #tpu.pipeline_mode<synchronous>, transform_indices = @transform_2, window_bounds = array<i64: 32, 32>}, {pipeline_mode = #tpu.pipeline_mode<synchronous>, transform_indices = @transform_3, window_bounds = array<i64: 1, 32>}, {pipeline_mode = #tpu.pipeline_mode<synchronous>, transform_indices = @transform_4, window_bounds = array<i64: 16, 144>}, {pipeline_mode = #tpu.pipeline_mode<synchronous>, transform_indices = @transform_5, window_bounds = array<i64: 1, 144>}, {transform_indices = @transform_6, window_bounds = array<i64: 64, 32>}, {transform_indices = @transform_7, window_bounds = array<i64: 64, 16>}, {transform_indices = @transform_8, window_bounds = array<i64: 6, 64, 16>}]} {
    %c0 = arith.constant 0 : index
    %c0_0 = arith.constant 0 : index
    %0 = vector.load %arg1[%c0, %c0_0] : memref<64x16xf32, #tpu.memory_space<vmem>>, vector<63x16xf32>
    %c1 = arith.constant 1 : index
    %c0_1 = arith.constant 0 : index
    %1 = vector.load %arg1[%c1, %c0_1] : memref<64x16xf32, #tpu.memory_space<vmem>>, vector<63x16xf32>
    %2 = tpu.concatenate %0, %1 in 1 : vector<63x16xf32>, vector<63x16xf32> -> vector<63x32xf32>
    %3 = arith.truncf %2 : vector<63x32xf32> to vector<63x32xbf16>
    %c0_2 = arith.constant 0 : index
    %c0_3 = arith.constant 0 : index
    %4 = vector.load %arg3[%c0_2, %c0_3] : memref<32x32xbf16, #tpu.memory_space<vmem>>, vector<32x32xbf16>
    %cst = arith.constant dense<0.000000e+00> : vector<63x32xf32>
    %5 = tpu.matmul %3, %4, %cst {dimension_numbers = #tpu.dot_dimension_numbers<[1], [0], [0], [1], [0, 0, 1, 1], [], []>} : vector<63x32xbf16>, vector<32x32xbf16>, vector<63x32xf32> -> vector<63x32xf32>
    %c0_4 = arith.constant 0 : index
    %c0_5 = arith.constant 0 : index
    %6 = vector.load %arg4[%c0_4, %c0_5] : memref<1x32xf32, #tpu.memory_space<vmem>>, vector<1x32xf32>
    %7 = vector.broadcast %6 : vector<1x32xf32> to vector<63x32xf32>
    %8 = arith.addf %5, %7 : vector<63x32xf32>
    %9 = vector.extract_strided_slice %8 {offsets = [0, 0], sizes = [63, 16], strides = [1, 1]} : vector<63x32xf32> to vector<63x16xf32>
    %10 = math.tanh %9 : vector<63x16xf32>
    %11 = vector.extract_strided_slice %8 {offsets = [0, 16], sizes = [63, 16], strides = [1, 1]} : vector<63x32xf32> to vector<63x16xf32>
    %12 = arith.negf %11 : vector<63x16xf32>
    %13 = math.exp %12 : vector<63x16xf32>
    %cst_6 = arith.constant 1.000000e+00 : f32
    %14 = vector.broadcast %cst_6 : f32 to vector<63x16xf32>
    %15 = arith.addf %14, %13 : vector<63x16xf32>
    %16 = arith.divf %14, %15 : vector<63x16xf32>
    %17 = arith.mulf %10, %16 : vector<63x16xf32>
    %18 = arith.truncf %17 : vector<63x16xf32> to vector<63x16xbf16>
    %c0_7 = arith.constant 0 : index
    %c0_8 = arith.constant 0 : index
    %19 = vector.load %arg5[%c0_7, %c0_8] : memref<16x144xbf16, #tpu.memory_space<vmem>>, vector<16x144xbf16>
    %cst_9 = arith.constant dense<0.000000e+00> : vector<63x144xf32>
    %20 = tpu.matmul %18, %19, %cst_9 {dimension_numbers = #tpu.dot_dimension_numbers<[1], [0], [0], [1], [0, 0, 1, 1], [], []>} : vector<63x16xbf16>, vector<16x144xbf16>, vector<63x144xf32> -> vector<63x144xf32>
    %c0_10 = arith.constant 0 : index
    %c0_11 = arith.constant 0 : index
    %21 = vector.load %arg6[%c0_10, %c0_11] : memref<1x144xf32, #tpu.memory_space<vmem>>, vector<1x144xf32>
    %22 = vector.broadcast %21 : vector<1x144xf32> to vector<63x144xf32>
    %23 = arith.addf %20, %22 : vector<63x144xf32>
    %24 = vector.extract_strided_slice %23 {offsets = [0, 0], sizes = [63, 32], strides = [1, 1]} : vector<63x144xf32> to vector<63x32xf32>
    %c1_12 = arith.constant 1 : index
    %c0_13 = arith.constant 0 : index
    %25 = vector.load %arg2[%c1_12, %c0_13] : memref<64x32xf32, #tpu.memory_space<vmem>>, vector<63x32xf32>
    %26 = arith.addf %24, %25 : vector<63x32xf32>
    %c0_14 = arith.constant 0 : index
    %c0_15 = arith.constant 0 : index
    %27 = vector.load %arg7[%c0_14, %c0_15] : memref<64x32xf32, #tpu.memory_space<vmem>>, vector<63x32xf32>
    tpu.vector_store %arg7[%c0_14, %c0_15], %26 {strides = array<i32>} : memref<64x32xf32, #tpu.memory_space<vmem>>, vector<63x32xf32>,
    %28 = vector.extract_strided_slice %23 {offsets = [0, 32], sizes = [63, 16], strides = [1, 1]} : vector<63x144xf32> to vector<63x16xf32>
    %29 = arith.addf %28, %1 : vector<63x16xf32>
    %c0_16 = arith.constant 0 : index
    %c0_17 = arith.constant 0 : index
    %30 = vector.load %arg8[%c0_16, %c0_17] : memref<64x16xf32, #tpu.memory_space<vmem>>, vector<63x16xf32>
    tpu.vector_store %arg8[%c0_16, %c0_17], %29 {strides = array<i32>} : memref<64x16xf32, #tpu.memory_space<vmem>>, vector<63x16xf32>,
    %31 = vector.extract_strided_slice %23 {offsets = [0, 48], sizes = [63, 16], strides = [1, 1]} : vector<63x144xf32> to vector<63x16xf32>
    %32 = arith.truncf %31 : vector<63x16xf32> to vector<63x16xbf16>
    %c0_18 = arith.constant 0 : index
    %c0_19 = arith.constant 0 : index
    %c0_20 = arith.constant 0 : index
    %33 = vector.load %arg9[%c0_18, %c0_19, %c0_20] : memref<6x64x16xbf16, #tpu.memory_space<vmem>>, vector<1x63x16xbf16>
    %34 = vector.shape_cast %33 : vector<1x63x16xbf16> to vector<63x16xbf16>
    %35 = vector.shape_cast %32 : vector<63x16xbf16> to vector<1x63x16xbf16>
    tpu.vector_store %arg9[%c0_18, %c0_19, %c0_20], %35 {strides = array<i32>} : memref<6x64x16xbf16, #tpu.memory_space<vmem>>, vector<1x63x16xbf16>,
    %36 = vector.extract_strided_slice %23 {offsets = [0, 64], sizes = [63, 16], strides = [1, 1]} : vector<63x144xf32> to vector<63x16xf32>
    %37 = arith.truncf %36 : vector<63x16xf32> to vector<63x16xbf16>
    %c1_21 = arith.constant 1 : index
    %c0_22 = arith.constant 0 : index
    %c0_23 = arith.constant 0 : index
    %38 = vector.load %arg9[%c1_21, %c0_22, %c0_23] : memref<6x64x16xbf16, #tpu.memory_space<vmem>>, vector<1x63x16xbf16>
    %39 = vector.shape_cast %38 : vector<1x63x16xbf16> to vector<63x16xbf16>
    %40 = vector.shape_cast %37 : vector<63x16xbf16> to vector<1x63x16xbf16>
    tpu.vector_store %arg9[%c1_21, %c0_22, %c0_23], %40 {strides = array<i32>} : memref<6x64x16xbf16, #tpu.memory_space<vmem>>, vector<1x63x16xbf16>,
    %41 = vector.extract_strided_slice %23 {offsets = [0, 80], sizes = [63, 16], strides = [1, 1]} : vector<63x144xf32> to vector<63x16xf32>
    %42 = arith.truncf %41 : vector<63x16xf32> to vector<63x16xbf16>
    %c2 = arith.constant 2 : index
    %c0_24 = arith.constant 0 : index
    %c0_25 = arith.constant 0 : index
    %43 = vector.load %arg9[%c2, %c0_24, %c0_25] : memref<6x64x16xbf16, #tpu.memory_space<vmem>>, vector<1x63x16xbf16>
    %44 = vector.shape_cast %43 : vector<1x63x16xbf16> to vector<63x16xbf16>
    %45 = vector.shape_cast %42 : vector<63x16xbf16> to vector<1x63x16xbf16>
    tpu.vector_store %arg9[%c2, %c0_24, %c0_25], %45 {strides = array<i32>} : memref<6x64x16xbf16, #tpu.memory_space<vmem>>, vector<1x63x16xbf16>,
    %46 = vector.extract_strided_slice %23 {offsets = [0, 96], sizes = [63, 16], strides = [1, 1]} : vector<63x144xf32> to vector<63x16xf32>
    %47 = arith.truncf %46 : vector<63x16xf32> to vector<63x16xbf16>
    %c3 = arith.constant 3 : index
    %c0_26 = arith.constant 0 : index
    %c0_27 = arith.constant 0 : index
    %48 = vector.load %arg9[%c3, %c0_26, %c0_27] : memref<6x64x16xbf16, #tpu.memory_space<vmem>>, vector<1x63x16xbf16>
    %49 = vector.shape_cast %48 : vector<1x63x16xbf16> to vector<63x16xbf16>
    %50 = vector.shape_cast %47 : vector<63x16xbf16> to vector<1x63x16xbf16>
    tpu.vector_store %arg9[%c3, %c0_26, %c0_27], %50 {strides = array<i32>} : memref<6x64x16xbf16, #tpu.memory_space<vmem>>, vector<1x63x16xbf16>,
    %51 = vector.extract_strided_slice %23 {offsets = [0, 112], sizes = [63, 16], strides = [1, 1]} : vector<63x144xf32> to vector<63x16xf32>
    %52 = arith.truncf %51 : vector<63x16xf32> to vector<63x16xbf16>
    %c4 = arith.constant 4 : index
    %c0_28 = arith.constant 0 : index
    %c0_29 = arith.constant 0 : index
    %53 = vector.load %arg9[%c4, %c0_28, %c0_29] : memref<6x64x16xbf16, #tpu.memory_space<vmem>>, vector<1x63x16xbf16>
    %54 = vector.shape_cast %53 : vector<1x63x16xbf16> to vector<63x16xbf16>
    %55 = vector.shape_cast %52 : vector<63x16xbf16> to vector<1x63x16xbf16>
    tpu.vector_store %arg9[%c4, %c0_28, %c0_29], %55 {strides = array<i32>} : memref<6x64x16xbf16, #tpu.memory_space<vmem>>, vector<1x63x16xbf16>,
    %56 = vector.extract_strided_slice %23 {offsets = [0, 128], sizes = [63, 16], strides = [1, 1]} : vector<63x144xf32> to vector<63x16xf32>
    %57 = arith.truncf %56 : vector<63x16xf32> to vector<63x16xbf16>
    %c5 = arith.constant 5 : index
    %c0_30 = arith.constant 0 : index
    %c0_31 = arith.constant 0 : index
    %58 = vector.load %arg9[%c5, %c0_30, %c0_31] : memref<6x64x16xbf16, #tpu.memory_space<vmem>>, vector<1x63x16xbf16>
    %59 = vector.shape_cast %58 : vector<1x63x16xbf16> to vector<63x16xbf16>
    %60 = vector.shape_cast %57 : vector<63x16xbf16> to vector<1x63x16xbf16>
    tpu.vector_store %arg9[%c5, %c0_30, %c0_31], %60 {strides = array<i32>} : memref<6x64x16xbf16, #tpu.memory_space<vmem>>, vector<1x63x16xbf16>,
    %cst_32 = arith.constant 0.000000e+00 : f32
    %61 = vector.broadcast %cst_32 : f32 to vector<1x32xf32>
    %c63 = arith.constant 63 : index
    %c0_33 = arith.constant 0 : index
    %62 = vector.load %arg7[%c63, %c0_33] : memref<64x32xf32, #tpu.memory_space<vmem>>, vector<1x32xf32>
    tpu.vector_store %arg7[%c63, %c0_33], %61 {strides = array<i32>} : memref<64x32xf32, #tpu.memory_space<vmem>>, vector<1x32xf32>,
    %cst_34 = arith.constant 0.000000e+00 : f32
    %63 = vector.broadcast %cst_34 : f32 to vector<1x16xf32>
    %c63_35 = arith.constant 63 : index
    %c0_36 = arith.constant 0 : index
    %64 = vector.load %arg8[%c63_35, %c0_36] : memref<64x16xf32, #tpu.memory_space<vmem>>, vector<1x16xf32>
    tpu.vector_store %arg8[%c63_35, %c0_36], %63 {strides = array<i32>} : memref<64x16xf32, #tpu.memory_space<vmem>>, vector<1x16xf32>,
    %cst_37 = arith.constant 0.000000e+00 : bf16
    %65 = vector.broadcast %cst_37 : bf16 to vector<1x16xbf16>
    %c0_38 = arith.constant 0 : index
    %c63_39 = arith.constant 63 : index
    %c0_40 = arith.constant 0 : index
    %66 = vector.load %arg9[%c0_38, %c63_39, %c0_40] : memref<6x64x16xbf16, #tpu.memory_space<vmem>>, vector<1x1x16xbf16>
    %67 = vector.shape_cast %66 : vector<1x1x16xbf16> to vector<1x16xbf16>
    %68 = vector.shape_cast %65 : vector<1x16xbf16> to vector<1x1x16xbf16>
    tpu.vector_store %arg9[%c0_38, %c63_39, %c0_40], %68 {strides = array<i32>} : memref<6x64x16xbf16, #tpu.memory_space<vmem>>, vector<1x1x16xbf16>,
    %c1_41 = arith.constant 1 : index
    %c63_42 = arith.constant 63 : index
    %c0_43 = arith.constant 0 : index
    %69 = vector.load %arg9[%c1_41, %c63_42, %c0_43] : memref<6x64x16xbf16, #tpu.memory_space<vmem>>, vector<1x1x16xbf16>
    %70 = vector.shape_cast %69 : vector<1x1x16xbf16> to vector<1x16xbf16>
    %71 = vector.shape_cast %65 : vector<1x16xbf16> to vector<1x1x16xbf16>
    tpu.vector_store %arg9[%c1_41, %c63_42, %c0_43], %71 {strides = array<i32>} : memref<6x64x16xbf16, #tpu.memory_space<vmem>>, vector<1x1x16xbf16>,
    %c2_44 = arith.constant 2 : index
    %c63_45 = arith.constant 63 : index
    %c0_46 = arith.constant 0 : index
    %72 = vector.load %arg9[%c2_44, %c63_45, %c0_46] : memref<6x64x16xbf16, #tpu.memory_space<vmem>>, vector<1x1x16xbf16>
    %73 = vector.shape_cast %72 : vector<1x1x16xbf16> to vector<1x16xbf16>
    %74 = vector.shape_cast %65 : vector<1x16xbf16> to vector<1x1x16xbf16>
    tpu.vector_store %arg9[%c2_44, %c63_45, %c0_46], %74 {strides = array<i32>} : memref<6x64x16xbf16, #tpu.memory_space<vmem>>, vector<1x1x16xbf16>,
    %c3_47 = arith.constant 3 : index
    %c63_48 = arith.constant 63 : index
    %c0_49 = arith.constant 0 : index
    %75 = vector.load %arg9[%c3_47, %c63_48, %c0_49] : memref<6x64x16xbf16, #tpu.memory_space<vmem>>, vector<1x1x16xbf16>
    %76 = vector.shape_cast %75 : vector<1x1x16xbf16> to vector<1x16xbf16>
    %77 = vector.shape_cast %65 : vector<1x16xbf16> to vector<1x1x16xbf16>
    tpu.vector_store %arg9[%c3_47, %c63_48, %c0_49], %77 {strides = array<i32>} : memref<6x64x16xbf16, #tpu.memory_space<vmem>>, vector<1x1x16xbf16>,
    %c4_50 = arith.constant 4 : index
    %c63_51 = arith.constant 63 : index
    %c0_52 = arith.constant 0 : index
    %78 = vector.load %arg9[%c4_50, %c63_51, %c0_52] : memref<6x64x16xbf16, #tpu.memory_space<vmem>>, vector<1x1x16xbf16>
    %79 = vector.shape_cast %78 : vector<1x1x16xbf16> to vector<1x16xbf16>
    %80 = vector.shape_cast %65 : vector<1x16xbf16> to vector<1x1x16xbf16>
    tpu.vector_store %arg9[%c4_50, %c63_51, %c0_52], %80 {strides = array<i32>} : memref<6x64x16xbf16, #tpu.memory_space<vmem>>, vector<1x1x16xbf16>,
    %c5_53 = arith.constant 5 : index
    %c63_54 = arith.constant 63 : index
    %c0_55 = arith.constant 0 : index
    %81 = vector.load %arg9[%c5_53, %c63_54, %c0_55] : memref<6x64x16xbf16, #tpu.memory_space<vmem>>, vector<1x1x16xbf16>
    %82 = vector.shape_cast %81 : vector<1x1x16xbf16> to vector<1x16xbf16>
    %83 = vector.shape_cast %65 : vector<1x16xbf16> to vector<1x1x16xbf16>
    tpu.vector_store %arg9[%c5_53, %c63_54, %c0_55], %83 {strides = array<i32>} : memref<6x64x16xbf16, #tpu.memory_space<vmem>>, vector<1x1x16xbf16>,
    return
  }
  func.func @transform_0(%arg0: i32) -> (i32, i32) {
    %c0_i32 = arith.constant 0 : i32
    %c0_i32_0 = arith.constant 0 : i32
    return %arg0, %c0_i32 : i32, i32
  }
  func.func @transform_1(%arg0: i32) -> (i32, i32) {
    %c0_i32 = arith.constant 0 : i32
    %c0_i32_0 = arith.constant 0 : i32
    return %arg0, %c0_i32 : i32, i32
  }
  func.func @transform_2(%arg0: i32) -> (i32, i32) {
    %c0_i32 = arith.constant 0 : i32
    %c0_i32_0 = arith.constant 0 : i32
    %c0_i32_1 = arith.constant 0 : i32
    return %c0_i32, %c0_i32_0 : i32, i32
  }
  func.func @transform_3(%arg0: i32) -> (i32, i32) {
    %c0_i32 = arith.constant 0 : i32
    %c0_i32_0 = arith.constant 0 : i32
    %c0_i32_1 = arith.constant 0 : i32
    return %c0_i32, %c0_i32_0 : i32, i32
  }
  func.func @transform_4(%arg0: i32) -> (i32, i32) {
    %c0_i32 = arith.constant 0 : i32
    %c0_i32_0 = arith.constant 0 : i32
    %c0_i32_1 = arith.constant 0 : i32
    return %c0_i32, %c0_i32_0 : i32, i32
  }
  func.func @transform_5(%arg0: i32) -> (i32, i32) {
    %c0_i32 = arith.constant 0 : i32
    %c0_i32_0 = arith.constant 0 : i32
    %c0_i32_1 = arith.constant 0 : i32
    return %c0_i32, %c0_i32_0 : i32, i32
  }
  func.func @transform_6(%arg0: i32) -> (i32, i32) {
    %c0_i32 = arith.constant 0 : i32
    %c0_i32_0 = arith.constant 0 : i32
    return %arg0, %c0_i32 : i32, i32
  }
  func.func @transform_7(%arg0: i32) -> (i32, i32) {
    %c0_i32 = arith.constant 0 : i32
    %c0_i32_0 = arith.constant 0 : i32
    return %arg0, %c0_i32 : i32, i32
  }
  func.func @transform_8(%arg0: i32) -> (i32, i32, i32) {
    %c0_i32 = arith.constant 0 : i32
    %c0_i32_0 = arith.constant 0 : i32
    %c0_i32_1 = arith.constant 0 : i32
    return %c0_i32, %arg0, %c0_i32_0 : i32, i32, i32
  }
}

module attributes {stable_mosaic.version = 11 : i64} {
  func.func @_layer_a_kernel(%arg0: i32, %arg1: memref<64x16xf32, #tpu.memory_space<vmem>>, %arg2: memref<64x32xf32, #tpu.memory_space<vmem>>, %arg3: memref<32x32xbf16, #tpu.memory_space<vmem>>, %arg4: memref<1x32xf32, #tpu.memory_space<vmem>>, %arg5: memref<16x144xbf16, #tpu.memory_space<vmem>>, %arg6: memref<1x144xf32, #tpu.memory_space<vmem>>, %arg7: memref<64x32xf32, #tpu.memory_space<vmem>>, %arg8: memref<64x16xf32, #tpu.memory_space<vmem>>, %arg9: memref<6x64x16xbf16, #tpu.memory_space<vmem>>) attributes {dimension_semantics = [#tpu.dimension_semantics<parallel>], iteration_bounds = array<i64: 2>, scalar_prefetch = 0 : i64, scratch_operands = 0 : i64, tpu.core_type = #tpu.core_type<tc>, window_params = [{transform_indices = @transform_0, window_bounds = array<i64: 64, 16>}, {transform_indices = @transform_1, window_bounds = array<i64: 64, 32>}, {pipeline_mode = #tpu.pipeline_mode<synchronous>, transform_indices = @transform_2, window_bounds = array<i64: 32, 32>}, {pipeline_mode = #tpu.pipeline_mode<synchronous>, transform_indices = @transform_3, window_bounds = array<i64: 1, 32>}, {pipeline_mode = #tpu.pipeline_mode<synchronous>, transform_indices = @transform_4, window_bounds = array<i64: 16, 144>}, {pipeline_mode = #tpu.pipeline_mode<synchronous>, transform_indices = @transform_5, window_bounds = array<i64: 1, 144>}, {transform_indices = @transform_6, window_bounds = array<i64: 64, 32>}, {transform_indices = @transform_7, window_bounds = array<i64: 64, 16>}, {transform_indices = @transform_8, window_bounds = array<i64: 6, 64, 16>}]} {
    %c0 = arith.constant 0 : index
    %c0_0 = arith.constant 0 : index
    %0 = vector.load %arg1[%c0, %c0_0] : memref<64x16xf32, #tpu.memory_space<vmem>>, vector<62x16xf32>
    %c2 = arith.constant 2 : index
    %c0_1 = arith.constant 0 : index
    %1 = vector.load %arg1[%c2, %c0_1] : memref<64x16xf32, #tpu.memory_space<vmem>>, vector<62x16xf32>
    %2 = tpu.concatenate %0, %1 in 1 : vector<62x16xf32>, vector<62x16xf32> -> vector<62x32xf32>
    %3 = arith.truncf %2 : vector<62x32xf32> to vector<62x32xbf16>
    %c0_2 = arith.constant 0 : index
    %c0_3 = arith.constant 0 : index
    %4 = vector.load %arg3[%c0_2, %c0_3] : memref<32x32xbf16, #tpu.memory_space<vmem>>, vector<32x32xbf16>
    %cst = arith.constant dense<0.000000e+00> : vector<62x32xf32>
    %5 = tpu.matmul %3, %4, %cst {dimension_numbers = #tpu.dot_dimension_numbers<[1], [0], [0], [1], [0, 0, 1, 1], [], []>} : vector<62x32xbf16>, vector<32x32xbf16>, vector<62x32xf32> -> vector<62x32xf32>
    %c0_4 = arith.constant 0 : index
    %c0_5 = arith.constant 0 : index
    %6 = vector.load %arg4[%c0_4, %c0_5] : memref<1x32xf32, #tpu.memory_space<vmem>>, vector<1x32xf32>
    %7 = vector.broadcast %6 : vector<1x32xf32> to vector<62x32xf32>
    %8 = arith.addf %5, %7 : vector<62x32xf32>
    %9 = vector.extract_strided_slice %8 {offsets = [0, 0], sizes = [62, 16], strides = [1, 1]} : vector<62x32xf32> to vector<62x16xf32>
    %10 = math.tanh %9 : vector<62x16xf32>
    %11 = vector.extract_strided_slice %8 {offsets = [0, 16], sizes = [62, 16], strides = [1, 1]} : vector<62x32xf32> to vector<62x16xf32>
    %12 = arith.negf %11 : vector<62x16xf32>
    %13 = math.exp %12 : vector<62x16xf32>
    %cst_6 = arith.constant 1.000000e+00 : f32
    %14 = vector.broadcast %cst_6 : f32 to vector<62x16xf32>
    %15 = arith.addf %14, %13 : vector<62x16xf32>
    %16 = arith.divf %14, %15 : vector<62x16xf32>
    %17 = arith.mulf %10, %16 : vector<62x16xf32>
    %18 = arith.truncf %17 : vector<62x16xf32> to vector<62x16xbf16>
    %c0_7 = arith.constant 0 : index
    %c0_8 = arith.constant 0 : index
    %19 = vector.load %arg5[%c0_7, %c0_8] : memref<16x144xbf16, #tpu.memory_space<vmem>>, vector<16x144xbf16>
    %cst_9 = arith.constant dense<0.000000e+00> : vector<62x144xf32>
    %20 = tpu.matmul %18, %19, %cst_9 {dimension_numbers = #tpu.dot_dimension_numbers<[1], [0], [0], [1], [0, 0, 1, 1], [], []>} : vector<62x16xbf16>, vector<16x144xbf16>, vector<62x144xf32> -> vector<62x144xf32>
    %c0_10 = arith.constant 0 : index
    %c0_11 = arith.constant 0 : index
    %21 = vector.load %arg6[%c0_10, %c0_11] : memref<1x144xf32, #tpu.memory_space<vmem>>, vector<1x144xf32>
    %22 = vector.broadcast %21 : vector<1x144xf32> to vector<62x144xf32>
    %23 = arith.addf %20, %22 : vector<62x144xf32>
    %24 = vector.extract_strided_slice %23 {offsets = [0, 0], sizes = [62, 32], strides = [1, 1]} : vector<62x144xf32> to vector<62x32xf32>
    %c2_12 = arith.constant 2 : index
    %c0_13 = arith.constant 0 : index
    %25 = vector.load %arg2[%c2_12, %c0_13] : memref<64x32xf32, #tpu.memory_space<vmem>>, vector<62x32xf32>
    %26 = arith.addf %24, %25 : vector<62x32xf32>
    %c0_14 = arith.constant 0 : index
    %c0_15 = arith.constant 0 : index
    %27 = vector.load %arg7[%c0_14, %c0_15] : memref<64x32xf32, #tpu.memory_space<vmem>>, vector<62x32xf32>
    tpu.vector_store %arg7[%c0_14, %c0_15], %26 {strides = array<i32>} : memref<64x32xf32, #tpu.memory_space<vmem>>, vector<62x32xf32>,
    %28 = vector.extract_strided_slice %23 {offsets = [0, 32], sizes = [62, 16], strides = [1, 1]} : vector<62x144xf32> to vector<62x16xf32>
    %29 = arith.addf %28, %1 : vector<62x16xf32>
    %c0_16 = arith.constant 0 : index
    %c0_17 = arith.constant 0 : index
    %30 = vector.load %arg8[%c0_16, %c0_17] : memref<64x16xf32, #tpu.memory_space<vmem>>, vector<62x16xf32>
    tpu.vector_store %arg8[%c0_16, %c0_17], %29 {strides = array<i32>} : memref<64x16xf32, #tpu.memory_space<vmem>>, vector<62x16xf32>,
    %31 = vector.extract_strided_slice %23 {offsets = [0, 48], sizes = [62, 16], strides = [1, 1]} : vector<62x144xf32> to vector<62x16xf32>
    %32 = arith.truncf %31 : vector<62x16xf32> to vector<62x16xbf16>
    %c0_18 = arith.constant 0 : index
    %c0_19 = arith.constant 0 : index
    %c0_20 = arith.constant 0 : index
    %33 = vector.load %arg9[%c0_18, %c0_19, %c0_20] : memref<6x64x16xbf16, #tpu.memory_space<vmem>>, vector<1x62x16xbf16>
    %34 = vector.shape_cast %33 : vector<1x62x16xbf16> to vector<62x16xbf16>
    %35 = vector.shape_cast %32 : vector<62x16xbf16> to vector<1x62x16xbf16>
    tpu.vector_store %arg9[%c0_18, %c0_19, %c0_20], %35 {strides = array<i32>} : memref<6x64x16xbf16, #tpu.memory_space<vmem>>, vector<1x62x16xbf16>,
    %36 = vector.extract_strided_slice %23 {offsets = [0, 64], sizes = [62, 16], strides = [1, 1]} : vector<62x144xf32> to vector<62x16xf32>
    %37 = arith.truncf %36 : vector<62x16xf32> to vector<62x16xbf16>
    %c1 = arith.constant 1 : index
    %c0_21 = arith.constant 0 : index
    %c0_22 = arith.constant 0 : index
    %38 = vector.load %arg9[%c1, %c0_21, %c0_22] : memref<6x64x16xbf16, #tpu.memory_space<vmem>>, vector<1x62x16xbf16>
    %39 = vector.shape_cast %38 : vector<1x62x16xbf16> to vector<62x16xbf16>
    %40 = vector.shape_cast %37 : vector<62x16xbf16> to vector<1x62x16xbf16>
    tpu.vector_store %arg9[%c1, %c0_21, %c0_22], %40 {strides = array<i32>} : memref<6x64x16xbf16, #tpu.memory_space<vmem>>, vector<1x62x16xbf16>,
    %41 = vector.extract_strided_slice %23 {offsets = [0, 80], sizes = [62, 16], strides = [1, 1]} : vector<62x144xf32> to vector<62x16xf32>
    %42 = arith.truncf %41 : vector<62x16xf32> to vector<62x16xbf16>
    %c2_23 = arith.constant 2 : index
    %c0_24 = arith.constant 0 : index
    %c0_25 = arith.constant 0 : index
    %43 = vector.load %arg9[%c2_23, %c0_24, %c0_25] : memref<6x64x16xbf16, #tpu.memory_space<vmem>>, vector<1x62x16xbf16>
    %44 = vector.shape_cast %43 : vector<1x62x16xbf16> to vector<62x16xbf16>
    %45 = vector.shape_cast %42 : vector<62x16xbf16> to vector<1x62x16xbf16>
    tpu.vector_store %arg9[%c2_23, %c0_24, %c0_25], %45 {strides = array<i32>} : memref<6x64x16xbf16, #tpu.memory_space<vmem>>, vector<1x62x16xbf16>,
    %46 = vector.extract_strided_slice %23 {offsets = [0, 96], sizes = [62, 16], strides = [1, 1]} : vector<62x144xf32> to vector<62x16xf32>
    %47 = arith.truncf %46 : vector<62x16xf32> to vector<62x16xbf16>
    %c3 = arith.constant 3 : index
    %c0_26 = arith.constant 0 : index
    %c0_27 = arith.constant 0 : index
    %48 = vector.load %arg9[%c3, %c0_26, %c0_27] : memref<6x64x16xbf16, #tpu.memory_space<vmem>>, vector<1x62x16xbf16>
    %49 = vector.shape_cast %48 : vector<1x62x16xbf16> to vector<62x16xbf16>
    %50 = vector.shape_cast %47 : vector<62x16xbf16> to vector<1x62x16xbf16>
    tpu.vector_store %arg9[%c3, %c0_26, %c0_27], %50 {strides = array<i32>} : memref<6x64x16xbf16, #tpu.memory_space<vmem>>, vector<1x62x16xbf16>,
    %51 = vector.extract_strided_slice %23 {offsets = [0, 112], sizes = [62, 16], strides = [1, 1]} : vector<62x144xf32> to vector<62x16xf32>
    %52 = arith.truncf %51 : vector<62x16xf32> to vector<62x16xbf16>
    %c4 = arith.constant 4 : index
    %c0_28 = arith.constant 0 : index
    %c0_29 = arith.constant 0 : index
    %53 = vector.load %arg9[%c4, %c0_28, %c0_29] : memref<6x64x16xbf16, #tpu.memory_space<vmem>>, vector<1x62x16xbf16>
    %54 = vector.shape_cast %53 : vector<1x62x16xbf16> to vector<62x16xbf16>
    %55 = vector.shape_cast %52 : vector<62x16xbf16> to vector<1x62x16xbf16>
    tpu.vector_store %arg9[%c4, %c0_28, %c0_29], %55 {strides = array<i32>} : memref<6x64x16xbf16, #tpu.memory_space<vmem>>, vector<1x62x16xbf16>,
    %56 = vector.extract_strided_slice %23 {offsets = [0, 128], sizes = [62, 16], strides = [1, 1]} : vector<62x144xf32> to vector<62x16xf32>
    %57 = arith.truncf %56 : vector<62x16xf32> to vector<62x16xbf16>
    %c5 = arith.constant 5 : index
    %c0_30 = arith.constant 0 : index
    %c0_31 = arith.constant 0 : index
    %58 = vector.load %arg9[%c5, %c0_30, %c0_31] : memref<6x64x16xbf16, #tpu.memory_space<vmem>>, vector<1x62x16xbf16>
    %59 = vector.shape_cast %58 : vector<1x62x16xbf16> to vector<62x16xbf16>
    %60 = vector.shape_cast %57 : vector<62x16xbf16> to vector<1x62x16xbf16>
    tpu.vector_store %arg9[%c5, %c0_30, %c0_31], %60 {strides = array<i32>} : memref<6x64x16xbf16, #tpu.memory_space<vmem>>, vector<1x62x16xbf16>,
    %cst_32 = arith.constant 0.000000e+00 : f32
    %61 = vector.broadcast %cst_32 : f32 to vector<2x32xf32>
    %c62 = arith.constant 62 : index
    %c0_33 = arith.constant 0 : index
    %62 = vector.load %arg7[%c62, %c0_33] : memref<64x32xf32, #tpu.memory_space<vmem>>, vector<2x32xf32>
    tpu.vector_store %arg7[%c62, %c0_33], %61 {strides = array<i32>} : memref<64x32xf32, #tpu.memory_space<vmem>>, vector<2x32xf32>,
    %cst_34 = arith.constant 0.000000e+00 : f32
    %63 = vector.broadcast %cst_34 : f32 to vector<2x16xf32>
    %c62_35 = arith.constant 62 : index
    %c0_36 = arith.constant 0 : index
    %64 = vector.load %arg8[%c62_35, %c0_36] : memref<64x16xf32, #tpu.memory_space<vmem>>, vector<2x16xf32>
    tpu.vector_store %arg8[%c62_35, %c0_36], %63 {strides = array<i32>} : memref<64x16xf32, #tpu.memory_space<vmem>>, vector<2x16xf32>,
    %cst_37 = arith.constant 0.000000e+00 : bf16
    %65 = vector.broadcast %cst_37 : bf16 to vector<2x16xbf16>
    %c0_38 = arith.constant 0 : index
    %c62_39 = arith.constant 62 : index
    %c0_40 = arith.constant 0 : index
    %66 = vector.load %arg9[%c0_38, %c62_39, %c0_40] : memref<6x64x16xbf16, #tpu.memory_space<vmem>>, vector<1x2x16xbf16>
    %67 = vector.shape_cast %66 : vector<1x2x16xbf16> to vector<2x16xbf16>
    %68 = vector.shape_cast %65 : vector<2x16xbf16> to vector<1x2x16xbf16>
    tpu.vector_store %arg9[%c0_38, %c62_39, %c0_40], %68 {strides = array<i32>} : memref<6x64x16xbf16, #tpu.memory_space<vmem>>, vector<1x2x16xbf16>,
    %c1_41 = arith.constant 1 : index
    %c62_42 = arith.constant 62 : index
    %c0_43 = arith.constant 0 : index
    %69 = vector.load %arg9[%c1_41, %c62_42, %c0_43] : memref<6x64x16xbf16, #tpu.memory_space<vmem>>, vector<1x2x16xbf16>
    %70 = vector.shape_cast %69 : vector<1x2x16xbf16> to vector<2x16xbf16>
    %71 = vector.shape_cast %65 : vector<2x16xbf16> to vector<1x2x16xbf16>
    tpu.vector_store %arg9[%c1_41, %c62_42, %c0_43], %71 {strides = array<i32>} : memref<6x64x16xbf16, #tpu.memory_space<vmem>>, vector<1x2x16xbf16>,
    %c2_44 = arith.constant 2 : index
    %c62_45 = arith.constant 62 : index
    %c0_46 = arith.constant 0 : index
    %72 = vector.load %arg9[%c2_44, %c62_45, %c0_46] : memref<6x64x16xbf16, #tpu.memory_space<vmem>>, vector<1x2x16xbf16>
    %73 = vector.shape_cast %72 : vector<1x2x16xbf16> to vector<2x16xbf16>
    %74 = vector.shape_cast %65 : vector<2x16xbf16> to vector<1x2x16xbf16>
    tpu.vector_store %arg9[%c2_44, %c62_45, %c0_46], %74 {strides = array<i32>} : memref<6x64x16xbf16, #tpu.memory_space<vmem>>, vector<1x2x16xbf16>,
    %c3_47 = arith.constant 3 : index
    %c62_48 = arith.constant 62 : index
    %c0_49 = arith.constant 0 : index
    %75 = vector.load %arg9[%c3_47, %c62_48, %c0_49] : memref<6x64x16xbf16, #tpu.memory_space<vmem>>, vector<1x2x16xbf16>
    %76 = vector.shape_cast %75 : vector<1x2x16xbf16> to vector<2x16xbf16>
    %77 = vector.shape_cast %65 : vector<2x16xbf16> to vector<1x2x16xbf16>
    tpu.vector_store %arg9[%c3_47, %c62_48, %c0_49], %77 {strides = array<i32>} : memref<6x64x16xbf16, #tpu.memory_space<vmem>>, vector<1x2x16xbf16>,
    %c4_50 = arith.constant 4 : index
    %c62_51 = arith.constant 62 : index
    %c0_52 = arith.constant 0 : index
    %78 = vector.load %arg9[%c4_50, %c62_51, %c0_52] : memref<6x64x16xbf16, #tpu.memory_space<vmem>>, vector<1x2x16xbf16>
    %79 = vector.shape_cast %78 : vector<1x2x16xbf16> to vector<2x16xbf16>
    %80 = vector.shape_cast %65 : vector<2x16xbf16> to vector<1x2x16xbf16>
    tpu.vector_store %arg9[%c4_50, %c62_51, %c0_52], %80 {strides = array<i32>} : memref<6x64x16xbf16, #tpu.memory_space<vmem>>, vector<1x2x16xbf16>,
    %c5_53 = arith.constant 5 : index
    %c62_54 = arith.constant 62 : index
    %c0_55 = arith.constant 0 : index
    %81 = vector.load %arg9[%c5_53, %c62_54, %c0_55] : memref<6x64x16xbf16, #tpu.memory_space<vmem>>, vector<1x2x16xbf16>
    %82 = vector.shape_cast %81 : vector<1x2x16xbf16> to vector<2x16xbf16>
    %83 = vector.shape_cast %65 : vector<2x16xbf16> to vector<1x2x16xbf16>
    tpu.vector_store %arg9[%c5_53, %c62_54, %c0_55], %83 {strides = array<i32>} : memref<6x64x16xbf16, #tpu.memory_space<vmem>>, vector<1x2x16xbf16>,
    return
  }
  func.func @transform_0(%arg0: i32) -> (i32, i32) {
    %c0_i32 = arith.constant 0 : i32
    %c0_i32_0 = arith.constant 0 : i32
    return %arg0, %c0_i32 : i32, i32
  }
  func.func @transform_1(%arg0: i32) -> (i32, i32) {
    %c0_i32 = arith.constant 0 : i32
    %c0_i32_0 = arith.constant 0 : i32
    return %arg0, %c0_i32 : i32, i32
  }
  func.func @transform_2(%arg0: i32) -> (i32, i32) {
    %c0_i32 = arith.constant 0 : i32
    %c0_i32_0 = arith.constant 0 : i32
    %c0_i32_1 = arith.constant 0 : i32
    return %c0_i32, %c0_i32_0 : i32, i32
  }
  func.func @transform_3(%arg0: i32) -> (i32, i32) {
    %c0_i32 = arith.constant 0 : i32
    %c0_i32_0 = arith.constant 0 : i32
    %c0_i32_1 = arith.constant 0 : i32
    return %c0_i32, %c0_i32_0 : i32, i32
  }
  func.func @transform_4(%arg0: i32) -> (i32, i32) {
    %c0_i32 = arith.constant 0 : i32
    %c0_i32_0 = arith.constant 0 : i32
    %c0_i32_1 = arith.constant 0 : i32
    return %c0_i32, %c0_i32_0 : i32, i32
  }
  func.func @transform_5(%arg0: i32) -> (i32, i32) {
    %c0_i32 = arith.constant 0 : i32
    %c0_i32_0 = arith.constant 0 : i32
    %c0_i32_1 = arith.constant 0 : i32
    return %c0_i32, %c0_i32_0 : i32, i32
  }
  func.func @transform_6(%arg0: i32) -> (i32, i32) {
    %c0_i32 = arith.constant 0 : i32
    %c0_i32_0 = arith.constant 0 : i32
    return %arg0, %c0_i32 : i32, i32
  }
  func.func @transform_7(%arg0: i32) -> (i32, i32) {
    %c0_i32 = arith.constant 0 : i32
    %c0_i32_0 = arith.constant 0 : i32
    return %arg0, %c0_i32 : i32, i32
  }
  func.func @transform_8(%arg0: i32) -> (i32, i32, i32) {
    %c0_i32 = arith.constant 0 : i32
    %c0_i32_0 = arith.constant 0 : i32
    %c0_i32_1 = arith.constant 0 : i32
    return %c0_i32, %arg0, %c0_i32_0 : i32, i32, i32
  }
}

module attributes {stable_mosaic.version = 11 : i64} {
  func.func @_layer_a_kernel(%arg0: i32, %arg1: memref<64x16xf32, #tpu.memory_space<vmem>>, %arg2: memref<64x32xf32, #tpu.memory_space<vmem>>, %arg3: memref<32x32xbf16, #tpu.memory_space<vmem>>, %arg4: memref<1x32xf32, #tpu.memory_space<vmem>>, %arg5: memref<16x144xbf16, #tpu.memory_space<vmem>>, %arg6: memref<1x144xf32, #tpu.memory_space<vmem>>, %arg7: memref<64x32xf32, #tpu.memory_space<vmem>>, %arg8: memref<64x16xf32, #tpu.memory_space<vmem>>, %arg9: memref<6x64x16xbf16, #tpu.memory_space<vmem>>) attributes {dimension_semantics = [#tpu.dimension_semantics<parallel>], iteration_bounds = array<i64: 2>, scalar_prefetch = 0 : i64, scratch_operands = 0 : i64, tpu.core_type = #tpu.core_type<tc>, window_params = [{transform_indices = @transform_0, window_bounds = array<i64: 64, 16>}, {transform_indices = @transform_1, window_bounds = array<i64: 64, 32>}, {pipeline_mode = #tpu.pipeline_mode<synchronous>, transform_indices = @transform_2, window_bounds = array<i64: 32, 32>}, {pipeline_mode = #tpu.pipeline_mode<synchronous>, transform_indices = @transform_3, window_bounds = array<i64: 1, 32>}, {pipeline_mode = #tpu.pipeline_mode<synchronous>, transform_indices = @transform_4, window_bounds = array<i64: 16, 144>}, {pipeline_mode = #tpu.pipeline_mode<synchronous>, transform_indices = @transform_5, window_bounds = array<i64: 1, 144>}, {transform_indices = @transform_6, window_bounds = array<i64: 64, 32>}, {transform_indices = @transform_7, window_bounds = array<i64: 64, 16>}, {transform_indices = @transform_8, window_bounds = array<i64: 6, 64, 16>}]} {
    %c0 = arith.constant 0 : index
    %c0_0 = arith.constant 0 : index
    %0 = vector.load %arg1[%c0, %c0_0] : memref<64x16xf32, #tpu.memory_space<vmem>>, vector<62x16xf32>
    %c2 = arith.constant 2 : index
    %c0_1 = arith.constant 0 : index
    %1 = vector.load %arg1[%c2, %c0_1] : memref<64x16xf32, #tpu.memory_space<vmem>>, vector<62x16xf32>
    %2 = tpu.concatenate %0, %1 in 1 : vector<62x16xf32>, vector<62x16xf32> -> vector<62x32xf32>
    %3 = arith.truncf %2 : vector<62x32xf32> to vector<62x32xbf16>
    %c0_2 = arith.constant 0 : index
    %c0_3 = arith.constant 0 : index
    %4 = vector.load %arg3[%c0_2, %c0_3] : memref<32x32xbf16, #tpu.memory_space<vmem>>, vector<32x32xbf16>
    %cst = arith.constant dense<0.000000e+00> : vector<62x32xf32>
    %5 = tpu.matmul %3, %4, %cst {dimension_numbers = #tpu.dot_dimension_numbers<[1], [0], [0], [1], [0, 0, 1, 1], [], []>} : vector<62x32xbf16>, vector<32x32xbf16>, vector<62x32xf32> -> vector<62x32xf32>
    %c0_4 = arith.constant 0 : index
    %c0_5 = arith.constant 0 : index
    %6 = vector.load %arg4[%c0_4, %c0_5] : memref<1x32xf32, #tpu.memory_space<vmem>>, vector<1x32xf32>
    %7 = vector.broadcast %6 : vector<1x32xf32> to vector<62x32xf32>
    %8 = arith.addf %5, %7 : vector<62x32xf32>
    %9 = vector.extract_strided_slice %8 {offsets = [0, 0], sizes = [62, 16], strides = [1, 1]} : vector<62x32xf32> to vector<62x16xf32>
    %10 = math.tanh %9 : vector<62x16xf32>
    %11 = vector.extract_strided_slice %8 {offsets = [0, 16], sizes = [62, 16], strides = [1, 1]} : vector<62x32xf32> to vector<62x16xf32>
    %12 = arith.negf %11 : vector<62x16xf32>
    %13 = math.exp %12 : vector<62x16xf32>
    %cst_6 = arith.constant 1.000000e+00 : f32
    %14 = vector.broadcast %cst_6 : f32 to vector<62x16xf32>
    %15 = arith.addf %14, %13 : vector<62x16xf32>
    %16 = arith.divf %14, %15 : vector<62x16xf32>
    %17 = arith.mulf %10, %16 : vector<62x16xf32>
    %18 = arith.truncf %17 : vector<62x16xf32> to vector<62x16xbf16>
    %c0_7 = arith.constant 0 : index
    %c0_8 = arith.constant 0 : index
    %19 = vector.load %arg5[%c0_7, %c0_8] : memref<16x144xbf16, #tpu.memory_space<vmem>>, vector<16x144xbf16>
    %cst_9 = arith.constant dense<0.000000e+00> : vector<62x144xf32>
    %20 = tpu.matmul %18, %19, %cst_9 {dimension_numbers = #tpu.dot_dimension_numbers<[1], [0], [0], [1], [0, 0, 1, 1], [], []>} : vector<62x16xbf16>, vector<16x144xbf16>, vector<62x144xf32> -> vector<62x144xf32>
    %c0_10 = arith.constant 0 : index
    %c0_11 = arith.constant 0 : index
    %21 = vector.load %arg6[%c0_10, %c0_11] : memref<1x144xf32, #tpu.memory_space<vmem>>, vector<1x144xf32>
    %22 = vector.broadcast %21 : vector<1x144xf32> to vector<62x144xf32>
    %23 = arith.addf %20, %22 : vector<62x144xf32>
    %24 = vector.extract_strided_slice %23 {offsets = [0, 0], sizes = [62, 32], strides = [1, 1]} : vector<62x144xf32> to vector<62x32xf32>
    %c2_12 = arith.constant 2 : index
    %c0_13 = arith.constant 0 : index
    %25 = vector.load %arg2[%c2_12, %c0_13] : memref<64x32xf32, #tpu.memory_space<vmem>>, vector<62x32xf32>
    %26 = arith.addf %24, %25 : vector<62x32xf32>
    %c0_14 = arith.constant 0 : index
    %c0_15 = arith.constant 0 : index
    %27 = vector.load %arg7[%c0_14, %c0_15] : memref<64x32xf32, #tpu.memory_space<vmem>>, vector<62x32xf32>
    tpu.vector_store %arg7[%c0_14, %c0_15], %26 {strides = array<i32>} : memref<64x32xf32, #tpu.memory_space<vmem>>, vector<62x32xf32>,
    %28 = vector.extract_strided_slice %23 {offsets = [0, 32], sizes = [62, 16], strides = [1, 1]} : vector<62x144xf32> to vector<62x16xf32>
    %29 = arith.addf %28, %1 : vector<62x16xf32>
    %c0_16 = arith.constant 0 : index
    %c0_17 = arith.constant 0 : index
    %30 = vector.load %arg8[%c0_16, %c0_17] : memref<64x16xf32, #tpu.memory_space<vmem>>, vector<62x16xf32>
    tpu.vector_store %arg8[%c0_16, %c0_17], %29 {strides = array<i32>} : memref<64x16xf32, #tpu.memory_space<vmem>>, vector<62x16xf32>,
    %31 = vector.extract_strided_slice %23 {offsets = [0, 48], sizes = [62, 16], strides = [1, 1]} : vector<62x144xf32> to vector<62x16xf32>
    %32 = arith.truncf %31 : vector<62x16xf32> to vector<62x16xbf16>
    %c0_18 = arith.constant 0 : index
    %c0_19 = arith.constant 0 : index
    %c0_20 = arith.constant 0 : index
    %33 = vector.load %arg9[%c0_18, %c0_19, %c0_20] : memref<6x64x16xbf16, #tpu.memory_space<vmem>>, vector<1x62x16xbf16>
    %34 = vector.shape_cast %33 : vector<1x62x16xbf16> to vector<62x16xbf16>
    %35 = vector.shape_cast %32 : vector<62x16xbf16> to vector<1x62x16xbf16>
    tpu.vector_store %arg9[%c0_18, %c0_19, %c0_20], %35 {strides = array<i32>} : memref<6x64x16xbf16, #tpu.memory_space<vmem>>, vector<1x62x16xbf16>,
    %36 = vector.extract_strided_slice %23 {offsets = [0, 64], sizes = [62, 16], strides = [1, 1]} : vector<62x144xf32> to vector<62x16xf32>
    %37 = arith.truncf %36 : vector<62x16xf32> to vector<62x16xbf16>
    %c1 = arith.constant 1 : index
    %c0_21 = arith.constant 0 : index
    %c0_22 = arith.constant 0 : index
    %38 = vector.load %arg9[%c1, %c0_21, %c0_22] : memref<6x64x16xbf16, #tpu.memory_space<vmem>>, vector<1x62x16xbf16>
    %39 = vector.shape_cast %38 : vector<1x62x16xbf16> to vector<62x16xbf16>
    %40 = vector.shape_cast %37 : vector<62x16xbf16> to vector<1x62x16xbf16>
    tpu.vector_store %arg9[%c1, %c0_21, %c0_22], %40 {strides = array<i32>} : memref<6x64x16xbf16, #tpu.memory_space<vmem>>, vector<1x62x16xbf16>,
    %41 = vector.extract_strided_slice %23 {offsets = [0, 80], sizes = [62, 16], strides = [1, 1]} : vector<62x144xf32> to vector<62x16xf32>
    %42 = arith.truncf %41 : vector<62x16xf32> to vector<62x16xbf16>
    %c2_23 = arith.constant 2 : index
    %c0_24 = arith.constant 0 : index
    %c0_25 = arith.constant 0 : index
    %43 = vector.load %arg9[%c2_23, %c0_24, %c0_25] : memref<6x64x16xbf16, #tpu.memory_space<vmem>>, vector<1x62x16xbf16>
    %44 = vector.shape_cast %43 : vector<1x62x16xbf16> to vector<62x16xbf16>
    %45 = vector.shape_cast %42 : vector<62x16xbf16> to vector<1x62x16xbf16>
    tpu.vector_store %arg9[%c2_23, %c0_24, %c0_25], %45 {strides = array<i32>} : memref<6x64x16xbf16, #tpu.memory_space<vmem>>, vector<1x62x16xbf16>,
    %46 = vector.extract_strided_slice %23 {offsets = [0, 96], sizes = [62, 16], strides = [1, 1]} : vector<62x144xf32> to vector<62x16xf32>
    %47 = arith.truncf %46 : vector<62x16xf32> to vector<62x16xbf16>
    %c3 = arith.constant 3 : index
    %c0_26 = arith.constant 0 : index
    %c0_27 = arith.constant 0 : index
    %48 = vector.load %arg9[%c3, %c0_26, %c0_27] : memref<6x64x16xbf16, #tpu.memory_space<vmem>>, vector<1x62x16xbf16>
    %49 = vector.shape_cast %48 : vector<1x62x16xbf16> to vector<62x16xbf16>
    %50 = vector.shape_cast %47 : vector<62x16xbf16> to vector<1x62x16xbf16>
    tpu.vector_store %arg9[%c3, %c0_26, %c0_27], %50 {strides = array<i32>} : memref<6x64x16xbf16, #tpu.memory_space<vmem>>, vector<1x62x16xbf16>,
    %51 = vector.extract_strided_slice %23 {offsets = [0, 112], sizes = [62, 16], strides = [1, 1]} : vector<62x144xf32> to vector<62x16xf32>
    %52 = arith.truncf %51 : vector<62x16xf32> to vector<62x16xbf16>
    %c4 = arith.constant 4 : index
    %c0_28 = arith.constant 0 : index
    %c0_29 = arith.constant 0 : index
    %53 = vector.load %arg9[%c4, %c0_28, %c0_29] : memref<6x64x16xbf16, #tpu.memory_space<vmem>>, vector<1x62x16xbf16>
    %54 = vector.shape_cast %53 : vector<1x62x16xbf16> to vector<62x16xbf16>
    %55 = vector.shape_cast %52 : vector<62x16xbf16> to vector<1x62x16xbf16>
    tpu.vector_store %arg9[%c4, %c0_28, %c0_29], %55 {strides = array<i32>} : memref<6x64x16xbf16, #tpu.memory_space<vmem>>, vector<1x62x16xbf16>,
    %56 = vector.extract_strided_slice %23 {offsets = [0, 128], sizes = [62, 16], strides = [1, 1]} : vector<62x144xf32> to vector<62x16xf32>
    %57 = arith.truncf %56 : vector<62x16xf32> to vector<62x16xbf16>
    %c5 = arith.constant 5 : index
    %c0_30 = arith.constant 0 : index
    %c0_31 = arith.constant 0 : index
    %58 = vector.load %arg9[%c5, %c0_30, %c0_31] : memref<6x64x16xbf16, #tpu.memory_space<vmem>>, vector<1x62x16xbf16>
    %59 = vector.shape_cast %58 : vector<1x62x16xbf16> to vector<62x16xbf16>
    %60 = vector.shape_cast %57 : vector<62x16xbf16> to vector<1x62x16xbf16>
    tpu.vector_store %arg9[%c5, %c0_30, %c0_31], %60 {strides = array<i32>} : memref<6x64x16xbf16, #tpu.memory_space<vmem>>, vector<1x62x16xbf16>,
    %cst_32 = arith.constant 0.000000e+00 : f32
    %61 = vector.broadcast %cst_32 : f32 to vector<2x32xf32>
    %c62 = arith.constant 62 : index
    %c0_33 = arith.constant 0 : index
    %62 = vector.load %arg7[%c62, %c0_33] : memref<64x32xf32, #tpu.memory_space<vmem>>, vector<2x32xf32>
    tpu.vector_store %arg7[%c62, %c0_33], %61 {strides = array<i32>} : memref<64x32xf32, #tpu.memory_space<vmem>>, vector<2x32xf32>,
    %cst_34 = arith.constant 0.000000e+00 : f32
    %63 = vector.broadcast %cst_34 : f32 to vector<2x16xf32>
    %c62_35 = arith.constant 62 : index
    %c0_36 = arith.constant 0 : index
    %64 = vector.load %arg8[%c62_35, %c0_36] : memref<64x16xf32, #tpu.memory_space<vmem>>, vector<2x16xf32>
    tpu.vector_store %arg8[%c62_35, %c0_36], %63 {strides = array<i32>} : memref<64x16xf32, #tpu.memory_space<vmem>>, vector<2x16xf32>,
    %cst_37 = arith.constant 0.000000e+00 : bf16
    %65 = vector.broadcast %cst_37 : bf16 to vector<2x16xbf16>
    %c0_38 = arith.constant 0 : index
    %c62_39 = arith.constant 62 : index
    %c0_40 = arith.constant 0 : index
    %66 = vector.load %arg9[%c0_38, %c62_39, %c0_40] : memref<6x64x16xbf16, #tpu.memory_space<vmem>>, vector<1x2x16xbf16>
    %67 = vector.shape_cast %66 : vector<1x2x16xbf16> to vector<2x16xbf16>
    %68 = vector.shape_cast %65 : vector<2x16xbf16> to vector<1x2x16xbf16>
    tpu.vector_store %arg9[%c0_38, %c62_39, %c0_40], %68 {strides = array<i32>} : memref<6x64x16xbf16, #tpu.memory_space<vmem>>, vector<1x2x16xbf16>,
    %c1_41 = arith.constant 1 : index
    %c62_42 = arith.constant 62 : index
    %c0_43 = arith.constant 0 : index
    %69 = vector.load %arg9[%c1_41, %c62_42, %c0_43] : memref<6x64x16xbf16, #tpu.memory_space<vmem>>, vector<1x2x16xbf16>
    %70 = vector.shape_cast %69 : vector<1x2x16xbf16> to vector<2x16xbf16>
    %71 = vector.shape_cast %65 : vector<2x16xbf16> to vector<1x2x16xbf16>
    tpu.vector_store %arg9[%c1_41, %c62_42, %c0_43], %71 {strides = array<i32>} : memref<6x64x16xbf16, #tpu.memory_space<vmem>>, vector<1x2x16xbf16>,
    %c2_44 = arith.constant 2 : index
    %c62_45 = arith.constant 62 : index
    %c0_46 = arith.constant 0 : index
    %72 = vector.load %arg9[%c2_44, %c62_45, %c0_46] : memref<6x64x16xbf16, #tpu.memory_space<vmem>>, vector<1x2x16xbf16>
    %73 = vector.shape_cast %72 : vector<1x2x16xbf16> to vector<2x16xbf16>
    %74 = vector.shape_cast %65 : vector<2x16xbf16> to vector<1x2x16xbf16>
    tpu.vector_store %arg9[%c2_44, %c62_45, %c0_46], %74 {strides = array<i32>} : memref<6x64x16xbf16, #tpu.memory_space<vmem>>, vector<1x2x16xbf16>,
    %c3_47 = arith.constant 3 : index
    %c62_48 = arith.constant 62 : index
    %c0_49 = arith.constant 0 : index
    %75 = vector.load %arg9[%c3_47, %c62_48, %c0_49] : memref<6x64x16xbf16, #tpu.memory_space<vmem>>, vector<1x2x16xbf16>
    %76 = vector.shape_cast %75 : vector<1x2x16xbf16> to vector<2x16xbf16>
    %77 = vector.shape_cast %65 : vector<2x16xbf16> to vector<1x2x16xbf16>
    tpu.vector_store %arg9[%c3_47, %c62_48, %c0_49], %77 {strides = array<i32>} : memref<6x64x16xbf16, #tpu.memory_space<vmem>>, vector<1x2x16xbf16>,
    %c4_50 = arith.constant 4 : index
    %c62_51 = arith.constant 62 : index
    %c0_52 = arith.constant 0 : index
    %78 = vector.load %arg9[%c4_50, %c62_51, %c0_52] : memref<6x64x16xbf16, #tpu.memory_space<vmem>>, vector<1x2x16xbf16>
    %79 = vector.shape_cast %78 : vector<1x2x16xbf16> to vector<2x16xbf16>
    %80 = vector.shape_cast %65 : vector<2x16xbf16> to vector<1x2x16xbf16>
    tpu.vector_store %arg9[%c4_50, %c62_51, %c0_52], %80 {strides = array<i32>} : memref<6x64x16xbf16, #tpu.memory_space<vmem>>, vector<1x2x16xbf16>,
    %c5_53 = arith.constant 5 : index
    %c62_54 = arith.constant 62 : index
    %c0_55 = arith.constant 0 : index
    %81 = vector.load %arg9[%c5_53, %c62_54, %c0_55] : memref<6x64x16xbf16, #tpu.memory_space<vmem>>, vector<1x2x16xbf16>
    %82 = vector.shape_cast %81 : vector<1x2x16xbf16> to vector<2x16xbf16>
    %83 = vector.shape_cast %65 : vector<2x16xbf16> to vector<1x2x16xbf16>
    tpu.vector_store %arg9[%c5_53, %c62_54, %c0_55], %83 {strides = array<i32>} : memref<6x64x16xbf16, #tpu.memory_space<vmem>>, vector<1x2x16xbf16>,
    return
  }
  func.func @transform_0(%arg0: i32) -> (i32, i32) {
    %c0_i32 = arith.constant 0 : i32
    %c0_i32_0 = arith.constant 0 : i32
    return %arg0, %c0_i32 : i32, i32
  }
  func.func @transform_1(%arg0: i32) -> (i32, i32) {
    %c0_i32 = arith.constant 0 : i32
    %c0_i32_0 = arith.constant 0 : i32
    return %arg0, %c0_i32 : i32, i32
  }
  func.func @transform_2(%arg0: i32) -> (i32, i32) {
    %c0_i32 = arith.constant 0 : i32
    %c0_i32_0 = arith.constant 0 : i32
    %c0_i32_1 = arith.constant 0 : i32
    return %c0_i32, %c0_i32_0 : i32, i32
  }
  func.func @transform_3(%arg0: i32) -> (i32, i32) {
    %c0_i32 = arith.constant 0 : i32
    %c0_i32_0 = arith.constant 0 : i32
    %c0_i32_1 = arith.constant 0 : i32
    return %c0_i32, %c0_i32_0 : i32, i32
  }
  func.func @transform_4(%arg0: i32) -> (i32, i32) {
    %c0_i32 = arith.constant 0 : i32
    %c0_i32_0 = arith.constant 0 : i32
    %c0_i32_1 = arith.constant 0 : i32
    return %c0_i32, %c0_i32_0 : i32, i32
  }
  func.func @transform_5(%arg0: i32) -> (i32, i32) {
    %c0_i32 = arith.constant 0 : i32
    %c0_i32_0 = arith.constant 0 : i32
    %c0_i32_1 = arith.constant 0 : i32
    return %c0_i32, %c0_i32_0 : i32, i32
  }
  func.func @transform_6(%arg0: i32) -> (i32, i32) {
    %c0_i32 = arith.constant 0 : i32
    %c0_i32_0 = arith.constant 0 : i32
    return %arg0, %c0_i32 : i32, i32
  }
  func.func @transform_7(%arg0: i32) -> (i32, i32) {
    %c0_i32 = arith.constant 0 : i32
    %c0_i32_0 = arith.constant 0 : i32
    return %arg0, %c0_i32 : i32, i32
  }
  func.func @transform_8(%arg0: i32) -> (i32, i32, i32) {
    %c0_i32 = arith.constant 0 : i32
    %c0_i32_0 = arith.constant 0 : i32
    %c0_i32_1 = arith.constant 0 : i32
    return %c0_i32, %arg0, %c0_i32_0 : i32, i32, i32
  }
}

module attributes {stable_mosaic.version = 11 : i64} {
  func.func @_epilogue_kernel(%arg0: i32, %arg1: memref<64x32xf32, #tpu.memory_space<vmem>>, %arg2: memref<32x64xbf16, #tpu.memory_space<vmem>>, %arg3: memref<1x64xf32, #tpu.memory_space<vmem>>, %arg4: memref<64x4xbf16, #tpu.memory_space<vmem>>, %arg5: memref<1x4xf32, #tpu.memory_space<vmem>>, %arg6: memref<64x4xf32, #tpu.memory_space<vmem>>) attributes {dimension_semantics = [#tpu.dimension_semantics<parallel>], iteration_bounds = array<i64: 2>, scalar_prefetch = 0 : i64, scratch_operands = 0 : i64, tpu.core_type = #tpu.core_type<tc>, window_params = [{transform_indices = @transform_0, window_bounds = array<i64: 64, 32>}, {pipeline_mode = #tpu.pipeline_mode<synchronous>, transform_indices = @transform_1, window_bounds = array<i64: 32, 64>}, {pipeline_mode = #tpu.pipeline_mode<synchronous>, transform_indices = @transform_2, window_bounds = array<i64: 1, 64>}, {pipeline_mode = #tpu.pipeline_mode<synchronous>, transform_indices = @transform_3, window_bounds = array<i64: 64, 4>}, {pipeline_mode = #tpu.pipeline_mode<synchronous>, transform_indices = @transform_4, window_bounds = array<i64: 1, 4>}, {transform_indices = @transform_5, window_bounds = array<i64: 64, 4>}]} {
    %c0 = arith.constant 0 : index
    %c0_0 = arith.constant 0 : index
    %0 = vector.load %arg1[%c0, %c0_0] : memref<64x32xf32, #tpu.memory_space<vmem>>, vector<64x32xf32>
    %cst = arith.constant 0.000000e+00 : f32
    %1 = vector.broadcast %cst : f32 to vector<64x32xf32>
    %2 = arith.maximumf %0, %1 : vector<64x32xf32>
    %3 = arith.truncf %2 : vector<64x32xf32> to vector<64x32xbf16>
    %c0_1 = arith.constant 0 : index
    %c0_2 = arith.constant 0 : index
    %4 = vector.load %arg2[%c0_1, %c0_2] : memref<32x64xbf16, #tpu.memory_space<vmem>>, vector<32x64xbf16>
    %cst_3 = arith.constant dense<0.000000e+00> : vector<64x64xf32>
    %5 = tpu.matmul %3, %4, %cst_3 {dimension_numbers = #tpu.dot_dimension_numbers<[1], [0], [0], [1], [0, 0, 1, 1], [], []>} : vector<64x32xbf16>, vector<32x64xbf16>, vector<64x64xf32> -> vector<64x64xf32>
    %c0_4 = arith.constant 0 : index
    %c0_5 = arith.constant 0 : index
    %6 = vector.load %arg3[%c0_4, %c0_5] : memref<1x64xf32, #tpu.memory_space<vmem>>, vector<1x64xf32>
    %7 = vector.broadcast %6 : vector<1x64xf32> to vector<64x64xf32>
    %8 = arith.addf %5, %7 : vector<64x64xf32>
    %cst_6 = arith.constant 0.000000e+00 : f32
    %9 = vector.broadcast %cst_6 : f32 to vector<64x64xf32>
    %10 = arith.maximumf %8, %9 : vector<64x64xf32>
    %11 = arith.truncf %10 : vector<64x64xf32> to vector<64x64xbf16>
    %c0_7 = arith.constant 0 : index
    %c0_8 = arith.constant 0 : index
    %12 = vector.load %arg4[%c0_7, %c0_8] : memref<64x4xbf16, #tpu.memory_space<vmem>>, vector<64x4xbf16>
    %cst_9 = arith.constant dense<0.000000e+00> : vector<64x4xf32>
    %13 = tpu.matmul %11, %12, %cst_9 {dimension_numbers = #tpu.dot_dimension_numbers<[1], [0], [0], [1], [0, 0, 1, 1], [], []>} : vector<64x64xbf16>, vector<64x4xbf16>, vector<64x4xf32> -> vector<64x4xf32>
    %c0_10 = arith.constant 0 : index
    %c0_11 = arith.constant 0 : index
    %14 = vector.load %arg5[%c0_10, %c0_11] : memref<1x4xf32, #tpu.memory_space<vmem>>, vector<1x4xf32>
    %15 = vector.broadcast %14 : vector<1x4xf32> to vector<64x4xf32>
    %16 = arith.addf %13, %15 : vector<64x4xf32>
    %c0_12 = arith.constant 0 : index
    %c0_13 = arith.constant 0 : index
    %17 = vector.load %arg6[%c0_12, %c0_13] : memref<64x4xf32, #tpu.memory_space<vmem>>, vector<64x4xf32>
    tpu.vector_store %arg6[%c0_12, %c0_13], %16 {strides = array<i32>} : memref<64x4xf32, #tpu.memory_space<vmem>>, vector<64x4xf32>,
    return
  }
  func.func @transform_0(%arg0: i32) -> (i32, i32) {
    %c0_i32 = arith.constant 0 : i32
    %c0_i32_0 = arith.constant 0 : i32
    return %arg0, %c0_i32 : i32, i32
  }
  func.func @transform_1(%arg0: i32) -> (i32, i32) {
    %c0_i32 = arith.constant 0 : i32
    %c0_i32_0 = arith.constant 0 : i32
    %c0_i32_1 = arith.constant 0 : i32
    return %c0_i32, %c0_i32_0 : i32, i32
  }
  func.func @transform_2(%arg0: i32) -> (i32, i32) {
    %c0_i32 = arith.constant 0 : i32
    %c0_i32_0 = arith.constant 0 : i32
    %c0_i32_1 = arith.constant 0 : i32
    return %c0_i32, %c0_i32_0 : i32, i32
  }
  func.func @transform_3(%arg0: i32) -> (i32, i32) {
    %c0_i32 = arith.constant 0 : i32
    %c0_i32_0 = arith.constant 0 : i32
    %c0_i32_1 = arith.constant 0 : i32
    return %c0_i32, %c0_i32_0 : i32, i32
  }
  func.func @transform_4(%arg0: i32) -> (i32, i32) {
    %c0_i32 = arith.constant 0 : i32
    %c0_i32_0 = arith.constant 0 : i32
    %c0_i32_1 = arith.constant 0 : i32
    return %c0_i32, %c0_i32_0 : i32, i32
  }
  func.func @transform_5(%arg0: i32) -> (i32, i32) {
    %c0_i32 = arith.constant 0 : i32
    %c0_i32_0 = arith.constant 0 : i32
    return %arg0, %c0_i32 : i32, i32
  }
}

</mosaic_0001>

<llo_original>
// kernel: graph_wavenet_forward.11
$region0: #{graph_wavenet_forward.11}
  #allocation0 [shape = 'u32[]', space=smem, size = 0x4, offset = 0x4, fixed_abs, tag = 'smem constant byte address 0x4 - core index']
  #allocation1 [shape = 'u32[72,128]{1,0:T(1,128)}', space=vmem, size = 0x9000, scoped, tag = 'internal scratch']
  %s0 = inlined_call_operand.vmem [shape: f32[8,10], index: 0, kind: input, shape index: {}]
  %s1 = inlined_call_operand.vmem [shape: f32[10,8], index: 1, kind: input, shape index: {}]
  %s2 = inlined_call_operand.vmem [shape: bf16[8,8], index: 2, kind: output, shape index: {}]
  %s3 = sld [smem:[#allocation0]]
  $region18: #{graph_wavenet_forward.11} parent=0
    _
  %s5 = ssub.s32 1, %s3
  %s6 = scalar_select 0, %s5, %s3
  // Predicated region
  $region2: #{graph_wavenet_forward.11} parent=0 // pred_check
    _
  $region3: #{graph_wavenet_forward.11} parent=0 // pred_check_branch
    %8 = sbr.rel (0) target = $region5
  $region4: #{graph_wavenet_forward.11} parent=0 // pred_region
    _
  $region5: #{graph_wavenet_forward.11} parent=0 // pred_fallthru
    _
  // Predicated region
  $region6: #{graph_wavenet_forward.11} parent=0 // pred_check
    _
  $region7: #{graph_wavenet_forward.11} parent=0 // pred_check_branch
    %10 = sbr.rel (0) target = $region9
  $region8: #{graph_wavenet_forward.11} parent=0 // pred_region
    _
  $region9: #{graph_wavenet_forward.11} parent=0 // pred_fallthru
    _
  %v11 = vld [vmem:[%s0] sm:$0xff]
  %v12 = vld [vmem:[%s1] sm:$0xff]
  %v13 = vld [vmem:[%s1 + $0x8] sm:$0x3]
  %vm14 = vcmask 80896
  %v16 = vsel %vm14, %v11, 0
  %vm18 = vcmask 1041408
  %v20 = vsel %vm18, %v13, 0
  %22 = vmatpush.msra.mxu0 0.0
  %23 = vmatpush.msra.mxu0 0.0
  %24 = vmatpush.msra.mxu0 0.0
  %25 = vmatpush.msra.mxu0 0.0
  %26 = vmatpush.msra.mxu0 0.0
  %27 = vmatpush.msra.mxu0 0.0
  %28 = vmatpush.msra.mxu0 0.0
  %29 = vmatpush.msra.mxu0 0.0
  %30 = vmatpush.msra.mxu0 0.0
  %31 = vmatpush.msra.mxu0 0.0
  %32 = vmatpush.msra.mxu0 0.0
  %33 = vmatpush.msra.mxu0 0.0
  %34 = vmatpush.msra.mxu0 0.0
  %35 = vmatpush.msra.mxu0 0.0
  %36 = vmatpush.msra.mxu0 %v20
  %37 = vmatpush.msra.mxu0 %v12
  %38 = vmatmul.f32.gmra.mxu0 %v16
  %v39 = vpop.f32.mrf.mxu0
  %v40 = vadd.f32 0.0, %v39
  %41 = vdwg.mxu0
  %v42 = vmax.f32 %v40, 0.0
  %vm43 = vcmask 64512
  %v44 = vsel %vm43, %v42, -inf
  %v45 = vrot.slane %v44, 4
  %v46 = vmax.f32 %v44, %v45
  %v47 = vrot.slane %v46, 2
  %v48 = vmax.f32 %v46, %v47
  %v49 = vrot.slane %v48, 1
  %v50 = vmax.f32 %v48, %v49
  %v51 = vsub.f32 %v42, %v50
  %v52 = vmul.f32 %v51, 1.442695
  %v53 = vpow.pop %v52
  %v54 = vsel %vm43, %v53, 0.0
  %v55 = vrot.slane %v54, 4
  %v56 = vadd.f32 %v54, %v55
  %v57 = vrot.slane %v56, 2
  %v58 = vadd.f32 %v56, %v57
  %v59 = vrot.slane %v58, 1
  %v60 = vadd.f32 %v58, %v59
  %v61 = vrcp.pop %v60
  %v62 = vmul.f32 %v60, %v61
  %v63 = vsub.f32 1.0, %v62
  %v64 = vmul.f32 %v61, %v63
  %v65 = vadd.f32 %v61, %v64
  %vm66 = vweird.f32 %v60
  %vm67 = vweird.f32 %v61
  %vm68 = vmor %vm66, %vm67
  %v69 = vsel %vm68, %v61, %v65
  %v70 = vand.u32 2147483647, %v60
  %vm71 = vcmp.eq.f32.partialorder %v70, 8.507059e+37
  %v72 = vand.u32 %v60, 2147483648
  %v73 = vor.u32 1.1754944e-38, %v72
  %v74 = vsel %vm71, %v73, %v69
  %v75 = vmul.f32 %v53, %v74
  %v76 = vpack.c.bf16 %v75, %v75
  %vm77 = vcmask 60416
  %78 = vst.msk [vmem:[%s2] sm:$0xf] %vm77, %v76
  // Predicated region
  $region10: #{graph_wavenet_forward.11} parent=0 // pred_check
    _
  $region11: #{graph_wavenet_forward.11} parent=0 // pred_check_branch
    %80 = sbr.rel (0) target = $region13
  $region12: #{graph_wavenet_forward.11} parent=0 // pred_region
    _
  $region13: #{graph_wavenet_forward.11} parent=0 // pred_fallthru
    _
  // Predicated region
  $region14: #{graph_wavenet_forward.11} parent=0 // pred_check
    _
  $region15: #{graph_wavenet_forward.11} parent=0 // pred_check_branch
    %82 = sbr.rel (0) target = $region17
  $region16: #{graph_wavenet_forward.11} parent=0 // pred_region
    _
  $region17: #{graph_wavenet_forward.11} parent=0 // pred_fallthru
    _

// kernel: graph_wavenet_forward.10
$region0: #{graph_wavenet_forward.10}
  #allocation0 [shape = 'u32[]', space=smem, size = 0x4, offset = 0x4, fixed_abs, tag = 'smem constant byte address 0x4 - core index']
  #allocation1 [shape = 'u32[72,128]{1,0:T(1,128)}', space=vmem, size = 0x9000, scoped, tag = 'internal scratch']
  %s0 = inlined_call_operand.vmem [shape: f32[128,2], index: 0, kind: input, shape index: {}]
  %s1 = inlined_call_operand.vmem [shape: bf16[2,16], index: 1, kind: input, shape index: {}]
  %s2 = inlined_call_operand.vmem [shape: f32[1,16], index: 2, kind: input, shape index: {}]
  %s3 = inlined_call_operand.vmem [shape: f32[128,16], index: 3, kind: output, shape index: {}]
  %s4 = sld [smem:[#allocation0]]
  $region45: #{graph_wavenet_forward.10} parent=0
    _
  %s6 = ssub.s32 1, %s4
  %s7 = scalar_select 0, %s6, %s4
  loop: start=0, step=1, limit=4
  $region2: #{graph_wavenet_forward.10} parent=0 // loop_pre_header
    _
  $region3: #{graph_wavenet_forward.10} parent=0 // loop_header
    %s9 = sphi 0, %s13
    %p10 = scmp.ge.s32.totalorder %s9, 4
    %s19 = sphi 0, %s21
    %s22 = sphi 0, %s19
    %s23 = sphi 0, %s22
    %s39 = sphi 0, %s23
    %s43 = sphi 0, %s43
    %s45 = sphi 0, %s43
    %s46 = sphi 0, %s45
    %s60 = sphi 0, %s46
    %s64 = sphi 0, %s64
    %s66 = sphi 0, %s64
    %s67 = sphi 0, %s66
    %s81 = sphi 0, %s67
    %s87 = sphi 0, %s89
    %s90 = sphi 0, %s87
    %s91 = sphi 0, %s90
    %s107 = sphi 0, %s91
  $region4: #{graph_wavenet_forward.10} parent=0 // loop_header_branch
    %12 = sbr.rel (%p10) target = $region8
  $region5: #{graph_wavenet_forward.10} parent=0 // loop_body
    %s14 = ssub.s32 %s9, 1
    %s15 = ssub.s32 %s9, 2
    %s16 = sadd.s32 %s9, 1
    %s17 = ssub.s32 %s9, %s16
    %p18 = scmp.eq.s32.totalorder %s17, 0
    %s20 = sadd.s32 %s19, 1
    %s21 = scalar_select %p18, %s19, %s20
    %p24 = pneg %p18
    %p25 = scmp.eq.s32.totalorder %s9, 1
    %p26 = por %p24, %p25
    %p27 = scmp.ne.s32.totalorder %s19, %s22
    %p28 = scmp.eq.s32.totalorder %s9, 0
    %p29 = por %p27, %p28
    %p30 = scmp.ne.s32.totalorder %s19, %s22
    %p31 = scmp.eq.s32.totalorder %s14, 1
    %p32 = por %p30, %p31
    %p33 = scmp.ne.s32.totalorder %s22, %s23
    %p34 = scmp.eq.s32.totalorder %s14, 0
    %p35 = por %p33, %p34
    %p36 = scmp.ne.s32.totalorder %s22, %s23
    %p37 = scmp.eq.s32.totalorder %s15, 1
    %p38 = por %p36, %p37
    %p40 = scmp.ne.s32.totalorder %s23, %s39
    %p41 = scmp.eq.s32.totalorder %s15, 0
    %p42 = por %p40, %p41
    %s44 = sadd.s32 %s43, 1
    %p47 = scmp.eq.s32.totalorder %s9, 1
    %p48 = scmp.ne.s32.totalorder %s43, %s45
    %p49 = scmp.eq.s32.totalorder %s9, 0
    %p50 = por %p48, %p49
    %p51 = scmp.ne.s32.totalorder %s43, %s45
    %p52 = scmp.eq.s32.totalorder %s14, 1
    %p53 = por %p51, %p52
    %p54 = scmp.ne.s32.totalorder %s45, %s46
    %p55 = scmp.eq.s32.totalorder %s14, 0
    %p56 = por %p54, %p55
    %p57 = scmp.ne.s32.totalorder %s45, %s46
    %p58 = scmp.eq.s32.totalorder %s15, 1
    %p59 = por %p57, %p58
    %p61 = scmp.ne.s32.totalorder %s46, %s60
    %p62 = scmp.eq.s32.totalorder %s15, 0
    %p63 = por %p61, %p62
    %s65 = sadd.s32 %s64, 1
    %p68 = scmp.eq.s32.totalorder %s9, 1
    %p69 = scmp.ne.s32.totalorder %s64, %s66
    %p70 = scmp.eq.s32.totalorder %s9, 0
    %p71 = por %p69, %p70
    %p72 = scmp.ne.s32.totalorder %s64, %s66
    %p73 = scmp.eq.s32.totalorder %s14, 1
    %p74 = por %p72, %p73
    %p75 = scmp.ne.s32.totalorder %s66, %s67
    %p76 = scmp.eq.s32.totalorder %s14, 0
    %p77 = por %p75, %p76
    %p78 = scmp.ne.s32.totalorder %s66, %s67
    %p79 = scmp.eq.s32.totalorder %s15, 1
    %p80 = por %p78, %p79
    %p82 = scmp.ne.s32.totalorder %s67, %s81
    %p83 = scmp.eq.s32.totalorder %s15, 0
    %p84 = por %p82, %p83
    %s85 = ssub.s32 %s9, %s16
    %p86 = scmp.eq.s32.totalorder %s85, 0
    %s88 = sadd.s32 %s87, 1
    %s89 = scalar_select %p86, %s87, %s88
    %p92 = pneg %p86
    %p93 = scmp.eq.s32.totalorder %s9, 1
    %p94 = por %p92, %p93
    %p95 = scmp.ne.s32.totalorder %s87, %s90
    %p96 = scmp.eq.s32.totalorder %s9, 0
    %p97 = por %p95, %p96
    %p98 = scmp.ne.s32.totalorder %s87, %s90
    %p99 = scmp.eq.s32.totalorder %s14, 1
    %p100 = por %p98, %p99
    %p101 = scmp.ne.s32.totalorder %s90, %s91
    %p102 = scmp.eq.s32.totalorder %s14, 0
    %p103 = por %p101, %p102
    %p104 = scmp.ne.s32.totalorder %s90, %s91
    %p105 = scmp.eq.s32.totalorder %s15, 1
    %p106 = por %p104, %p105
    %p108 = scmp.ne.s32.totalorder %s91, %s107
    %p109 = scmp.eq.s32.totalorder %s15, 0
    %p110 = por %p108, %p109
    %p111 = scmp.le.s32.totalorder 1, %s9
    %p112 = scmp.lt.s32.totalorder %s9, 3
    %p113 = pnand %p111, %p112
    %p114 = pneg %p113
    // Predicated region
    $region9: #{graph_wavenet_forward.10} parent=5 // pred_check
      _
    $region10: #{graph_wavenet_forward.10} parent=5 // pred_check_branch
      %116 = sbr.rel (%p113) target = $region12
    $region11: #{graph_wavenet_forward.10} parent=5 // pred_region
      %s117 = ssub.s32 %s9, 1
      // Predicated region
      $region13: #{graph_wavenet_forward.10} parent=11 // pred_check
        %p118 = pneg %p56
      $region14: #{graph_wavenet_forward.10} parent=11 // pred_check_branch
        %120 = sbr.rel (%p118) target = $region16
      $region15: #{graph_wavenet_forward.10} parent=11 // pred_region
        _
      $region16: #{graph_wavenet_forward.10} parent=11 // pred_fallthru
        _
      // Predicated region
      $region17: #{graph_wavenet_forward.10} parent=11 // pred_check
        %p121 = pneg %p77
      $region18: #{graph_wavenet_forward.10} parent=11 // pred_check_branch
        %123 = sbr.rel (%p121) target = $region20
      $region19: #{graph_wavenet_forward.10} parent=11 // pred_region
        _
      $region20: #{graph_wavenet_forward.10} parent=11 // pred_fallthru
        _
    $region12: #{graph_wavenet_forward.10} parent=5 // pred_fallthru
      _
    %p124 = scmp.lt.s32.totalorder %s9, 2
    // Predicated region
    $region21: #{graph_wavenet_forward.10} parent=5 // pred_check
      %p125 = pneg %p124
    $region22: #{graph_wavenet_forward.10} parent=5 // pred_check_branch
      %127 = sbr.rel (%p125) target = $region24
    $region23: #{graph_wavenet_forward.10} parent=5 // pred_region
      // Predicated region
      $region25: #{graph_wavenet_forward.10} parent=23 // pred_check
        %p128 = pneg %p29
      $region26: #{graph_wavenet_forward.10} parent=23 // pred_check_branch
        %130 = sbr.rel (%p128) target = $region28
      $region27: #{graph_wavenet_forward.10} parent=23 // pred_region
        %s131 = smul.u32 8, %s9
        %p132 = scmp.lt.s32.totalorder %s131, 15
        %s133 = scalar_select %p132, %s131, 15
        %s134 = smul.addr %s133, 8
        %s135 = scalar_lea.vmem %s0, %s134
        %s136 = smul.u32 8, %s9
      $region28: #{graph_wavenet_forward.10} parent=23 // pred_fallthru
        _
    $region24: #{graph_wavenet_forward.10} parent=5 // pred_fallthru
      _
    %p137 = scmp.le.s32.totalorder 1, %s9
    %p138 = scmp.lt.s32.totalorder %s9, 3
    %p139 = pnand %p137, %p138
    %p140 = pneg %p139
    // Predicated region
    $region29: #{graph_wavenet_forward.10} parent=5 // pred_check
      _
    $region30: #{graph_wavenet_forward.10} parent=5 // pred_check_branch
      %142 = sbr.rel (%p139) target = $region32
    $region31: #{graph_wavenet_forward.10} parent=5 // pred_region
      %s143 = ssub.s32 %s9, 1
      %s144 = smul.u32 8, %s14
      %p145 = scmp.lt.s32.totalorder %s144, 15
      %s146 = scalar_select %p145, %s144, 15
      %s147 = smul.addr %s146, 8
      %s148 = scalar_lea.vmem %s0, %s147
      %p149 = pneg %p35
      %p150 = pneg %p32
      %p151 = pneg %p56
      %p152 = pneg %p53
      %p153 = pneg %p77
      %p154 = pneg %p74
      %p155 = pneg %p103
      %p156 = pneg %p100
      %s157 = smul.u32 8, %s14
      %p158 = scmp.lt.s32.totalorder %s157, 15
      %s159 = scalar_select %p158, %s157, 15
      %s160 = smul.addr %s159, 8
      %s161 = scalar_lea.vmem %s3, %s160
      %s162 = smul.u32 8, %s14
      %p163 = scmp.lt.s32.totalorder %s162, 15
      %s164 = scalar_select %p163, %s162, 15
      %s165 = smul.addr %s164, 8
      %s166 = scalar_lea.vmem %s0, %s165
      %s167 = smul.u32 8, %s14
      %s168 = smul.u32 8, %s14
      %p169 = scmp.lt.s32.totalorder %s168, 15
      %s170 = scalar_select %p169, %s168, 15
      %s171 = smul.addr %s170, 8
      %s172 = scalar_lea.vmem %s3, %s171
      %s173 = smul.u32 8, %s14
      %v175 = vld [vmem:[%s166] sm:$0xff]
      %v176 = vld [vmem:[%s166 + $0x8] sm:$0xff]
      %v177 = vld [vmem:[%s166 + $0x10] sm:$0xff]
      %v178 = vld [vmem:[%s166 + $0x18] sm:$0xff]
      %v179 = vld [vmem:[%s166 + $0x20] sm:$0xff]
      %v180 = vld [vmem:[%s166 + $0x28] sm:$0xff]
      %v181 = vld [vmem:[%s166 + $0x30] sm:$0xff]
      %v182 = vld [vmem:[%s166 + $0x38] sm:$0xff]
      %v183 = vpack.c.bf16 %v176, %v175
      %v184 = vpack.c.bf16 %v178, %v177
      %v185 = vpack.c.bf16 %v180, %v179
      %v186 = vpack.c.bf16 %v182, %v181
      %v187 = vld [vmem:[%s1] sm:$0x1]
      %v188 = vld [vmem:[%s2] sm:$0x1]
      %v190 = vperm.slane %v188, 0
      %vm192 = vcmask 15360
      %v194 = vsel %vm192, %v183, 0
      %v197 = vsel %vm192, %v184, 0
      %v200 = vsel %vm192, %v185, 0
      %v203 = vsel %vm192, %v186, 0
      %vm205 = vcmask 1040384
      %v207 = vsel %vm205, %v187, 0
      %209 = vmatpush.bf16.msra.mxu0 0
      %210 = vmatpush.bf16.msra.mxu0 0
      %211 = vmatpush.bf16.msra.mxu0 0
      %212 = vmatpush.bf16.msra.mxu0 0
      %213 = vmatpush.bf16.msra.mxu0 0
      %214 = vmatpush.bf16.msra.mxu0 0
      %215 = vmatpush.bf16.msra.mxu0 0
      %216 = vmatpush.bf16.msra.mxu0 %v207
      %217 = vmatmul.bf16.gmra.mxu0 %v194
      %v218 = vpop.f32.mrf.mxu0
      %v219 = vadd.f32 %v190, %v218
      %v220 = vpop.f32.mrf.mxu0
      %v221 = vadd.f32 %v190, %v220
      %222 = vmatmul.bf16.gmra.mxu0 %v197
      %v223 = vpop.f32.mrf.mxu0
      %v224 = vadd.f32 %v190, %v223
      %v225 = vpop.f32.mrf.mxu0
      %v226 = vadd.f32 %v190, %v225
      %227 = vmatmul.bf16.gmra.mxu0 %v200
      %v228 = vpop.f32.mrf.mxu0
      %v229 = vadd.f32 %v190, %v228
      %v230 = vpop.f32.mrf.mxu0
      %v231 = vadd.f32 %v190, %v230
      %232 = vmatmul.bf16.gmra.mxu0 %v203
      %v233 = vpop.f32.mrf.mxu0
      %v234 = vadd.f32 %v190, %v233
      %v235 = vpop.f32.mrf.mxu0
      %v236 = vadd.f32 %v190, %v235
      %237 = vdwg.mxu0
      %vm238 = vcmask 130048
      %239 = vst.msk [vmem:[%s172] sm:$0xff] %vm238, %v219
      %240 = vst.msk [vmem:[%s172 + $0x8] sm:$0xff] %vm238, %v221
      %241 = vst.msk [vmem:[%s172 + $0x10] sm:$0xff] %vm238, %v224
      %242 = vst.msk [vmem:[%s172 + $0x18] sm:$0xff] %vm238, %v226
      %243 = vst.msk [vmem:[%s172 + $0x20] sm:$0xff] %vm238, %v229
      %244 = vst.msk [vmem:[%s172 + $0x28] sm:$0xff] %vm238, %v231
      %245 = vst.msk [vmem:[%s172 + $0x30] sm:$0xff] %vm238, %v234
      %246 = vst.msk [vmem:[%s172 + $0x38] sm:$0xff] %vm238, %v236
      %s247 = smul.u32 8, %s14
      %p248 = scmp.lt.s32.totalorder %s247, 15
      %s249 = scalar_select %p248, %s247, 15
      %s250 = smul.addr %s249, 8
      %s251 = scalar_lea.vmem %s3, %s250
      // Predicated region
      $region33: #{graph_wavenet_forward.10} parent=31 // pred_check
        %p252 = pneg %p100
      $region34: #{graph_wavenet_forward.10} parent=31 // pred_check_branch
        %254 = sbr.rel (%p252) target = $region36
      $region35: #{graph_wavenet_forward.10} parent=31 // pred_region
        %s255 = smul.u32 8, %s14
      $region36: #{graph_wavenet_forward.10} parent=31 // pred_fallthru
        _
    $region32: #{graph_wavenet_forward.10} parent=5 // pred_fallthru
      _
    %p256 = scmp.le.s32.totalorder 2, %s9
    // Predicated region
    $region37: #{graph_wavenet_forward.10} parent=5 // pred_check
      %p257 = pneg %p256
    $region38: #{graph_wavenet_forward.10} parent=5 // pred_check_branch
      %259 = sbr.rel (%p257) target = $region40
    $region39: #{graph_wavenet_forward.10} parent=5 // pred_region
      %s260 = ssub.s32 %s9, 2
      // Predicated region
      $region41: #{graph_wavenet_forward.10} parent=39 // pred_check
        %p261 = pneg %p106
      $region42: #{graph_wavenet_forward.10} parent=39 // pred_check_branch
        %263 = sbr.rel (%p261) target = $region44
      $region43: #{graph_wavenet_forward.10} parent=39 // pred_region
        %s264 = smul.u32 8, %s15
        %p265 = scmp.lt.s32.totalorder %s264, 15
        %s266 = scalar_select %p265, %s264, 15
        %s267 = smul.addr %s266, 8
        %s268 = scalar_lea.vmem %s3, %s267
      $region44: #{graph_wavenet_forward.10} parent=39 // pred_fallthru
        _
    $region40: #{graph_wavenet_forward.10} parent=5 // pred_fallthru
      _
  $region6: #{graph_wavenet_forward.10} parent=0 // loop_footer
    %s13 = sadd.s32 1, %s9
  $region7: #{graph_wavenet_forward.10} parent=0 // loop_footer_branch
    %8 = sbr.rel target = $region3
  $region8: #{graph_wavenet_forward.10} parent=0 // loop_exit
    _

// kernel: tile.34
$region0: #{tile.34}
  %s0 = inlined_call_operand.vmem [shape: f32[16,16], index: 0, kind: input, shape index: {}]
  %s1 = inlined_call_operand.vmem [shape: f32[1,256], index: 1, kind: output, shape index: {}]
  $region1: #{tile.34} parent=0
    #allocation0 [shape = 'u8[8192]{0}', space=vmem, size = 0x2000, scoped, tag = 'scoped mem for output reshape']
    %s2 = smov 3
    %v3 = vld [vmem:[%s0] ss:$8 sm:%s2]
    %vm4 = vcmask 130048
    %5 = vst.msk [vmem:[#allocation0] ss:$8 sm:$0x3] %vm4, %v3
    %s6 = scalar_lea.vmem %s0, 7
    %s7 = smov 3
    %v8 = vld [vmem:[%s6] ss:$8 sm:%s7]
    %9 = vrot.lane.b32.xlu0 %v8, 112
    %v10 = vpop.permute.xlu0 %9
    %vm11 = vcmask 1048448
    %12 = vst.msk [vmem:[#allocation0] ss:$8 sm:$0x3] %vm11, %v10
    %s13 = scalar_lea.vmem %s0, 6
    %s14 = smov 3
    %v15 = vld [vmem:[%s13] ss:$8 sm:%s14]
    %16 = vrot.lane.b32.xlu0 %v15, 96
    %v17 = vpop.permute.xlu0 %16
    %vm18 = vcmask 917248
    %19 = vst.msk [vmem:[#allocation0] ss:$8 sm:$0x3] %vm18, %v17
    %s20 = scalar_lea.vmem %s0, 5
    %s21 = smov 3
    %v22 = vld [vmem:[%s20] ss:$8 sm:%s21]
    %23 = vrot.lane.b32.xlu0 %v22, 80
    %v24 = vpop.permute.xlu0 %23
    %vm25 = vcmask 786048
    %26 = vst.msk [vmem:[#allocation0] ss:$8 sm:$0x3] %vm25, %v24
    %s27 = scalar_lea.vmem %s0, 4
    %s28 = smov 3
    %v29 = vld [vmem:[%s27] ss:$8 sm:%s28]
    %30 = vrot.lane.b32.xlu0 %v29, 64
    %v31 = vpop.permute.xlu0 %30
    %vm32 = vcmask 654848
    %33 = vst.msk [vmem:[#allocation0] ss:$8 sm:$0x3] %vm32, %v31
    %s34 = scalar_lea.vmem %s0, 3
    %s35 = smov 3
    %v36 = vld [vmem:[%s34] ss:$8 sm:%s35]
    %37 = vrot.lane.b32.xlu0 %v36, 48
    %v38 = vpop.permute.xlu0 %37
    %vm39 = vcmask 523648
    %40 = vst.msk [vmem:[#allocation0] ss:$8 sm:$0x3] %vm39, %v38
    %s41 = scalar_lea.vmem %s0, 2
    %s42 = smov 3
    %v43 = vld [vmem:[%s41] ss:$8 sm:%s42]
    %44 = vrot.lane.b32.xlu0 %v43, 32
    %v45 = vpop.permute.xlu0 %44
    %vm46 = vcmask 392448
    %47 = vst.msk [vmem:[#allocation0] ss:$8 sm:$0x3] %vm46, %v45
    %s48 = scalar_lea.vmem %s0, 1
    %s49 = smov 3
    %v50 = vld [vmem:[%s48] ss:$8 sm:%s49]
    %51 = vrot.lane.b32.xlu0 %v50, 16
    %v52 = vpop.permute.xlu0 %51
    %vm53 = vcmask 261248
    %54 = vst.msk [vmem:[#allocation0] ss:$8 sm:$0x3] %vm53, %v52
    %s56 = ssub.s32 2, 1
    %v57 = vld [vmem:[#allocation0] sm:%s56]
    %s59 = ssub.s32 2, 1
    %60 = vst [vmem:[%s1] sm:%s59] %v57
    %s61 = scalar_lea.vmem [#allocation0], 8
    %v62 = vld [vmem:[%s61] sm:%s56]
    %s64 = ssub.s32 2, 1
    %s65 = scalar_lea.vmem %s1, 1
    %66 = vst [vmem:[%s65] sm:%s64] %v62

// kernel: tile.33
$region0: #{tile.33}
  #allocation0 [shape = 's32[1]{0}', space=sflag, size = 0x4, scoped, tag = 'scoped memory for tile.33']
  %s0 = inlined_call_operand.vmem [shape: f32[16], index: 0, kind: input, shape index: {}]
  %s1 = inlined_call_operand.vmem [shape: f32[16,16], index: 1, kind: output, shape index: {}]
  // Predicated region
  $region2: #{tile.33} parent=0 // pred_check
    _
  $region3: #{tile.33} parent=0 // pred_check_branch
    %3 = sbr.rel (0) target = $region5
  $region4: #{tile.33} parent=0 // pred_region
    _
  $region5: #{tile.33} parent=0 // pred_fallthru
    _
  %v4 = vld [vmem:[%s0] ss:$0 sm:$0xff]
  %5 = vst [vmem:[%s1] sm:$0xff] %v4
  %s6 = scalar_lea.vmem %s1, 8
  %7 = vst [vmem:[%s6] sm:$0xff] %v4

// kernel: graph_wavenet_forward.12
$region0: #{graph_wavenet_forward.12}
  #allocation0 [shape = 'u32[]', space=smem, size = 0x4, offset = 0x4, fixed_abs, tag = 'smem constant byte address 0x4 - core index']
  #allocation1 [shape = 'u32[72,128]{1,0:T(1,128)}', space=vmem, size = 0x9000, scoped, tag = 'internal scratch']
  %s0 = inlined_call_operand.vmem [shape: f32[128,16], index: 0, kind: input, shape index: {}]
  %s1 = inlined_call_operand.vmem [shape: bf16[32,32], index: 1, kind: input, shape index: {}]
  %s2 = inlined_call_operand.vmem [shape: f32[1,32], index: 2, kind: input, shape index: {}]
  %s3 = inlined_call_operand.vmem [shape: bf16[16,144], index: 3, kind: input, shape index: {}]
  %s4 = inlined_call_operand.vmem [shape: f32[1,144], index: 4, kind: input, shape index: {}]
  %s5 = inlined_call_operand.vmem [shape: f32[128,32], index: 5, kind: output, shape index: {0}]
  %s6 = inlined_call_operand.vmem [shape: f32[128,16], index: 6, kind: output, shape index: {1}]
  %s7 = inlined_call_operand.vmem [shape: bf16[6,128,16], index: 7, kind: output, shape index: {2}]
  %8 = xla_tuple %s5, %s6, %s7
  %s9 = sld [smem:[#allocation0]]
  $region106: #{graph_wavenet_forward.12} parent=0
    _
  %s11 = ssub.s32 1, %s9
  %s12 = scalar_select 0, %s11, %s9
  $region1: #{graph_wavenet_forward.12} parent=0
    #allocation2 [shape = 'u8[196608]{0}', space=vmem, size = 0x30000, scoped, tag = 'output window, operand 2']
    loop: start=0, step=1, limit=4
    $region2: #{graph_wavenet_forward.12} parent=1 // loop_pre_header
      _
    $region3: #{graph_wavenet_forward.12} parent=1 // loop_header
      %s14 = sphi 0, %s18
      %p15 = scmp.ge.s32.totalorder %s14, 4
      %s24 = sphi 0, %s26
      %s27 = sphi 0, %s24
      %s28 = sphi 0, %s27
      %s44 = sphi 0, %s28
      %s48 = sphi 0, %s48
      %s50 = sphi 0, %s48
      %s51 = sphi 0, %s50
      %s65 = sphi 0, %s51
      %s69 = sphi 0, %s69
      %s71 = sphi 0, %s69
      %s72 = sphi 0, %s71
      %s86 = sphi 0, %s72
      %s90 = sphi 0, %s90
      %s92 = sphi 0, %s90
      %s93 = sphi 0, %s92
      %s107 = sphi 0, %s93
      %s111 = sphi 0, %s111
      %s113 = sphi 0, %s111
      %s114 = sphi 0, %s113
      %s128 = sphi 0, %s114
      %s134 = sphi 0, %s136
      %s137 = sphi 0, %s134
      %s138 = sphi 0, %s137
      %s154 = sphi 0, %s138
      %s160 = sphi 0, %s162
      %s163 = sphi 0, %s160
      %s164 = sphi 0, %s163
      %s180 = sphi 0, %s164
      %s186 = sphi 0, %s188
      %s189 = sphi 0, %s186
      %s190 = sphi 0, %s189
      %s206 = sphi 0, %s190
    $region4: #{graph_wavenet_forward.12} parent=1 // loop_header_branch
      %17 = sbr.rel (%p15) target = $region8
    $region5: #{graph_wavenet_forward.12} parent=1 // loop_body
      %s19 = ssub.s32 %s14, 1
      %s20 = ssub.s32 %s14, 2
      %s21 = sadd.s32 %s14, 1
      %s22 = ssub.s32 %s14, %s21
      %p23 = scmp.eq.s32.totalorder %s22, 0
      %s25 = sadd.s32 %s24, 1
      %s26 = scalar_select %p23, %s24, %s25
      %p29 = pneg %p23
      %p30 = scmp.eq.s32.totalorder %s14, 1
      %p31 = por %p29, %p30
      %p32 = scmp.ne.s32.totalorder %s24, %s27
      %p33 = scmp.eq.s32.totalorder %s14, 0
      %p34 = por %p32, %p33
      %p35 = scmp.ne.s32.totalorder %s24, %s27
      %p36 = scmp.eq.s32.totalorder %s19, 1
      %p37 = por %p35, %p36
      %p38 = scmp.ne.s32.totalorder %s27, %s28
      %p39 = scmp.eq.s32.totalorder %s19, 0
      %p40 = por %p38, %p39
      %p41 = scmp.ne.s32.totalorder %s27, %s28
      %p42 = scmp.eq.s32.totalorder %s20, 1
      %p43 = por %p41, %p42
      %p45 = scmp.ne.s32.totalorder %s28, %s44
      %p46 = scmp.eq.s32.totalorder %s20, 0
      %p47 = por %p45, %p46
      %s49 = sadd.s32 %s48, 1
      %p52 = scmp.eq.s32.totalorder %s14, 1
      %p53 = scmp.ne.s32.totalorder %s48, %s50
      %p54 = scmp.eq.s32.totalorder %s14, 0
      %p55 = por %p53, %p54
      %p56 = scmp.ne.s32.totalorder %s48, %s50
      %p57 = scmp.eq.s32.totalorder %s19, 1
      %p58 = por %p56, %p57
      %p59 = scmp.ne.s32.totalorder %s50, %s51
      %p60 = scmp.eq.s32.totalorder %s19, 0
      %p61 = por %p59, %p60
      %p62 = scmp.ne.s32.totalorder %s50, %s51
      %p63 = scmp.eq.s32.totalorder %s20, 1
      %p64 = por %p62, %p63
      %p66 = scmp.ne.s32.totalorder %s51, %s65
      %p67 = scmp.eq.s32.totalorder %s20, 0
      %p68 = por %p66, %p67
      %s70 = sadd.s32 %s69, 1
      %p73 = scmp.eq.s32.totalorder %s14, 1
      %p74 = scmp.ne.s32.totalorder %s69, %s71
      %p75 = scmp.eq.s32.totalorder %s14, 0
      %p76 = por %p74, %p75
      %p77 = scmp.ne.s32.totalorder %s69, %s71
      %p78 = scmp.eq.s32.totalorder %s19, 1
      %p79 = por %p77, %p78
      %p80 = scmp.ne.s32.totalorder %s71, %s72
      %p81 = scmp.eq.s32.totalorder %s19, 0
      %p82 = por %p80, %p81
      %p83 = scmp.ne.s32.totalorder %s71, %s72
      %p84 = scmp.eq.s32.totalorder %s20, 1
      %p85 = por %p83, %p84
      %p87 = scmp.ne.s32.totalorder %s72, %s86
      %p88 = scmp.eq.s32.totalorder %s20, 0
      %p89 = por %p87, %p88
      %s91 = sadd.s32 %s90, 1
      %p94 = scmp.eq.s32.totalorder %s14, 1
      %p95 = scmp.ne.s32.totalorder %s90, %s92
      %p96 = scmp.eq.s32.totalorder %s14, 0
      %p97 = por %p95, %p96
      %p98 = scmp.ne.s32.totalorder %s90, %s92
      %p99 = scmp.eq.s32.totalorder %s19, 1
      %p100 = por %p98, %p99
      %p101 = scmp.ne.s32.totalorder %s92, %s93
      %p102 = scmp.eq.s32.totalorder %s19, 0
      %p103 = por %p101, %p102
      %p104 = scmp.ne.s32.totalorder %s92, %s93
      %p105 = scmp.eq.s32.totalorder %s20, 1
      %p106 = por %p104, %p105
      %p108 = scmp.ne.s32.totalorder %s93, %s107
      %p109 = scmp.eq.s32.totalorder %s20, 0
      %p110 = por %p108, %p109
      %s112 = sadd.s32 %s111, 1
      %p115 = scmp.eq.s32.totalorder %s14, 1
      %p116 = scmp.ne.s32.totalorder %s111, %s113
      %p117 = scmp.eq.s32.totalorder %s14, 0
      %p118 = por %p116, %p117
      %p119 = scmp.ne.s32.totalorder %s111, %s113
      %p120 = scmp.eq.s32.totalorder %s19, 1
      %p121 = por %p119, %p120
      %p122 = scmp.ne.s32.totalorder %s113, %s114
      %p123 = scmp.eq.s32.totalorder %s19, 0
      %p124 = por %p122, %p123
      %p125 = scmp.ne.s32.totalorder %s113, %s114
      %p126 = scmp.eq.s32.totalorder %s20, 1
      %p127 = por %p125, %p126
      %p129 = scmp.ne.s32.totalorder %s114, %s128
      %p130 = scmp.eq.s32.totalorder %s20, 0
      %p131 = por %p129, %p130
      %s132 = ssub.s32 %s14, %s21
      %p133 = scmp.eq.s32.totalorder %s132, 0
      %s135 = sadd.s32 %s134, 1
      %s136 = scalar_select %p133, %s134, %s135
      %p139 = pneg %p133
      %p140 = scmp.eq.s32.totalorder %s14, 1
      %p141 = por %p139, %p140
      %p142 = scmp.ne.s32.totalorder %s134, %s137
      %p143 = scmp.eq.s32.totalorder %s14, 0
      %p144 = por %p142, %p143
      %p145 = scmp.ne.s32.totalorder %s134, %s137
      %p146 = scmp.eq.s32.totalorder %s19, 1
      %p147 = por %p145, %p146
      %p148 = scmp.ne.s32.totalorder %s137, %s138
      %p149 = scmp.eq.s32.totalorder %s19, 0
      %p150 = por %p148, %p149
      %p151 = scmp.ne.s32.totalorder %s137, %s138
      %p152 = scmp.eq.s32.totalorder %s20, 1
      %p153 = por %p151, %p152
      %p155 = scmp.ne.s32.totalorder %s138, %s154
      %p156 = scmp.eq.s32.totalorder %s20, 0
      %p157 = por %p155, %p156
      %s158 = ssub.s32 %s14, %s21
      %p159 = scmp.eq.s32.totalorder %s158, 0
      %s161 = sadd.s32 %s160, 1
      %s162 = scalar_select %p159, %s160, %s161
      %p165 = pneg %p159
      %p166 = scmp.eq.s32.totalorder %s14, 1
      %p167 = por %p165, %p166
      %p168 = scmp.ne.s32.totalorder %s160, %s163
      %p169 = scmp.eq.s32.totalorder %s14, 0
      %p170 = por %p168, %p169
      %p171 = scmp.ne.s32.totalorder %s160, %s163
      %p172 = scmp.eq.s32.totalorder %s19, 1
      %p173 = por %p171, %p172
      %p174 = scmp.ne.s32.totalorder %s163, %s164
      %p175 = scmp.eq.s32.totalorder %s19, 0
      %p176 = por %p174, %p175
      %p177 = scmp.ne.s32.totalorder %s163, %s164
      %p178 = scmp.eq.s32.totalorder %s20, 1
      %p179 = por %p177, %p178
      %p181 = scmp.ne.s32.totalorder %s164, %s180
      %p182 = scmp.eq.s32.totalorder %s20, 0
      %p183 = por %p181, %p182
      %s184 = ssub.s32 %s14, %s21
      %p185 = scmp.eq.s32.totalorder %s184, 0
      %s187 = sadd.s32 %s186, 1
      %s188 = scalar_select %p185, %s186, %s187
      %p191 = pneg %p185
      %p192 = scmp.eq.s32.totalorder %s14, 1
      %p193 = por %p191, %p192
      %p194 = scmp.ne.s32.totalorder %s186, %s189
      %p195 = scmp.eq.s32.totalorder %s14, 0
      %p196 = por %p194, %p195
      %p197 = scmp.ne.s32.totalorder %s186, %s189
      %p198 = scmp.eq.s32.totalorder %s19, 1
      %p199 = por %p197, %p198
      %p200 = scmp.ne.s32.totalorder %s189, %s190
      %p201 = scmp.eq.s32.totalorder %s19, 0
      %p202 = por %p200, %p201
      %p203 = scmp.ne.s32.totalorder %s189, %s190
      %p204 = scmp.eq.s32.totalorder %s20, 1
      %p205 = por %p203, %p204
      %p207 = scmp.ne.s32.totalorder %s190, %s206
      %p208 = scmp.eq.s32.totalorder %s20, 0
      %p209 = por %p207, %p208
      %p210 = scmp.le.s32.totalorder 1, %s14
      %p211 = scmp.lt.s32.totalorder %s14, 3
      %p212 = pnand %p210, %p211
      %p213 = pneg %p212
      // Predicated region
      $region9: #{graph_wavenet_forward.12} parent=5 // pred_check
        _
      $region10: #{graph_wavenet_forward.12} parent=5 // pred_check_branch
        %215 = sbr.rel (%p212) target = $region12
      $region11: #{graph_wavenet_forward.12} parent=5 // pred_region
        %s216 = ssub.s32 %s14, 1
        // Predicated region
        $region13: #{graph_wavenet_forward.12} parent=11 // pred_check
          %p217 = pneg %p61
        $region14: #{graph_wavenet_forward.12} parent=11 // pred_check_branch
          %219 = sbr.rel (%p217) target = $region16
        $region15: #{graph_wavenet_forward.12} parent=11 // pred_region
          _
        $region16: #{graph_wavenet_forward.12} parent=11 // pred_fallthru
          _
        // Predicated region
        $region17: #{graph_wavenet_forward.12} parent=11 // pred_check
          %p220 = pneg %p82
        $region18: #{graph_wavenet_forward.12} parent=11 // pred_check_branch
          %222 = sbr.rel (%p220) target = $region20
        $region19: #{graph_wavenet_forward.12} parent=11 // pred_region
          _
        $region20: #{graph_wavenet_forward.12} parent=11 // pred_fallthru
          _
        // Predicated region
        $region21: #{graph_wavenet_forward.12} parent=11 // pred_check
          %p223 = pneg %p103
        $region22: #{graph_wavenet_forward.12} parent=11 // pred_check_branch
          %225 = sbr.rel (%p223) target = $region24
        $region23: #{graph_wavenet_forward.12} parent=11 // pred_region
          _
        $region24: #{graph_wavenet_forward.12} parent=11 // pred_fallthru
          _
        // Predicated region
        $region25: #{graph_wavenet_forward.12} parent=11 // pred_check
          %p226 = pneg %p124
        $region26: #{graph_wavenet_forward.12} parent=11 // pred_check_branch
          %228 = sbr.rel (%p226) target = $region28
        $region27: #{graph_wavenet_forward.12} parent=11 // pred_region
          _
        $region28: #{graph_wavenet_forward.12} parent=11 // pred_fallthru
          _
      $region12: #{graph_wavenet_forward.12} parent=5 // pred_fallthru
        _
      %p229 = scmp.lt.s32.totalorder %s14, 2
      // Predicated region
      $region29: #{graph_wavenet_forward.12} parent=5 // pred_check
        %p230 = pneg %p229
      $region30: #{graph_wavenet_forward.12} parent=5 // pred_check_branch
        %232 = sbr.rel (%p230) target = $region32
      $region31: #{graph_wavenet_forward.12} parent=5 // pred_region
        // Predicated region
        $region33: #{graph_wavenet_forward.12} parent=31 // pred_check
          %p233 = pneg %p34
        $region34: #{graph_wavenet_forward.12} parent=31 // pred_check_branch
          %235 = sbr.rel (%p233) target = $region36
        $region35: #{graph_wavenet_forward.12} parent=31 // pred_region
          %s236 = smul.u32 8, %s14
          %p237 = scmp.lt.s32.totalorder %s236, 15
          %s238 = scalar_select %p237, %s236, 15
          %s239 = smul.addr %s238, 8
          %s240 = scalar_lea.vmem %s0, %s239
          %s241 = smul.u32 8, %s14
        $region36: #{graph_wavenet_forward.12} parent=31 // pred_fallthru
          _
      $region32: #{graph_wavenet_forward.12} parent=5 // pred_fallthru
        _
      %p242 = scmp.le.s32.totalorder 1, %s14
      %p243 = scmp.lt.s32.totalorder %s14, 3
      %p244 = pnand %p242, %p243
      %p245 = pneg %p244
      // Predicated region
      $region37: #{graph_wavenet_forward.12} parent=5 // pred_check
        _
      $region38: #{graph_wavenet_forward.12} parent=5 // pred_check_branch
        %247 = sbr.rel (%p244) target = $region40
      $region39: #{graph_wavenet_forward.12} parent=5 // pred_region
        %s248 = ssub.s32 %s14, 1
        %s249 = smul.u32 8, %s19
        %p250 = scmp.lt.s32.totalorder %s249, 15
        %s251 = scalar_select %p250, %s249, 15
        %s252 = smul.addr %s251, 8
        %s253 = scalar_lea.vmem %s0, %s252
        %p254 = pneg %p40
        %p255 = pneg %p37
        %p256 = pneg %p61
        %p257 = pneg %p58
        %p258 = pneg %p82
        %p259 = pneg %p79
        %p260 = pneg %p103
        %p261 = pneg %p100
        %p262 = pneg %p124
        %p263 = pneg %p121
        %p264 = pneg %p150
        %p265 = pneg %p147
        %s266 = smul.u32 8, %s19
        %p267 = scmp.lt.s32.totalorder %s266, 15
        %s268 = scalar_select %p267, %s266, 15
        %s269 = smul.addr %s268, 8
        %s270 = scalar_lea.vmem %s5, %s269
        %p271 = pneg %p176
        %p272 = pneg %p173
        %s273 = smul.u32 8, %s19
        %p274 = scmp.lt.s32.totalorder %s273, 15
        %s275 = scalar_select %p274, %s273, 15
        %s276 = smul.addr %s275, 8
        %s277 = scalar_lea.vmem %s6, %s276
        %p278 = pneg %p202
        %p279 = pneg %p199
        %s280 = sand.u32 %s189, 1
        %s281 = sand.u32 %s189, 1
        %s282 = smul.addr %s281, 192
        %s283 = scalar_lea.vmem [#allocation2], %s282
        %s284 = smul.u32 8, %s19
        %p285 = scmp.lt.s32.totalorder %s284, 15
        %s286 = scalar_select %p285, %s284, 15
        %s287 = smul.addr %s286, 8
        %s288 = scalar_lea.vmem %s0, %s287
        %s289 = smul.u32 8, %s19
        %s290 = smul.u32 8, %s19
        %p291 = scmp.lt.s32.totalorder %s290, 15
        %s292 = scalar_select %p291, %s290, 15
        %s293 = smul.addr %s292, 8
        %s294 = scalar_lea.vmem %s5, %s293
        %s295 = smul.u32 8, %s19
        %s296 = smul.u32 8, %s19
        %p297 = scmp.lt.s32.totalorder %s296, 15
        %s298 = scalar_select %p297, %s296, 15
        %s299 = smul.addr %s298, 8
        %s300 = scalar_lea.vmem %s6, %s299
        %s301 = smul.u32 8, %s19
        %s302 = smul.u32 8, %s19
        %v304 = vld [vmem:[%s288] sm:$0xff]
        %v305 = vld [vmem:[%s288 + $0x8] sm:$0xff]
        %v306 = vld [vmem:[%s288 + $0x10] sm:$0xff]
        %v307 = vld [vmem:[%s288 + $0x18] sm:$0xff]
        %v308 = vld [vmem:[%s288 + $0x20] sm:$0xff]
        %v309 = vld [vmem:[%s288 + $0x28] sm:$0xff]
        %v310 = vld [vmem:[%s288 + $0x30] sm:$0xff]
        %v311 = vld [vmem:[%s288 + $0x38] sm:$0x7f]
        %v312 = vld [vmem:[%s288 + $0x1] sm:$0xff]
        %v313 = vld [vmem:[%s288 + $0x9] sm:$0xff]
        %v314 = vld [vmem:[%s288 + $0x11] sm:$0xff]
        %v315 = vld [vmem:[%s288 + $0x19] sm:$0xff]
        %v316 = vld [vmem:[%s288 + $0x21] sm:$0xff]
        %v317 = vld [vmem:[%s288 + $0x29] sm:$0xff]
        %v318 = vld [vmem:[%s288 + $0x31] sm:$0xff]
        %v319 = vld [vmem:[%s288 + $0x39] sm:$0x7f]
        %328 = vrot.lane.b32.xlu0 %v312, 16
        %v329 = vpop.permute.xlu0 %328
        %330 = vrot.lane.b32.xlu0 %v313, 16
        %v331 = vpop.permute.xlu0 %330
        %332 = vrot.lane.b32.xlu0 %v314, 16
        %v333 = vpop.permute.xlu0 %332
        %334 = vrot.lane.b32.xlu0 %v315, 16
        %v335 = vpop.permute.xlu0 %334
        %336 = vrot.lane.b32.xlu0 %v316, 16
        %v337 = vpop.permute.xlu0 %336
        %338 = vrot.lane.b32.xlu0 %v317, 16
        %v339 = vpop.permute.xlu0 %338
        %340 = vrot.lane.b32.xlu0 %v318, 16
        %v341 = vpop.permute.xlu0 %340
        %342 = vrot.lane.b32.xlu0 %v319, 16
        %v343 = vpop.permute.xlu0 %342
        %vm352 = vcmask 130048
        %v353 = vsel %vm352, %v304, %v329
        %v354 = vsel %vm352, %v305, %v331
        %v355 = vsel %vm352, %v306, %v333
        %v356 = vsel %vm352, %v307, %v335
        %v357 = vsel %vm352, %v308, %v337
        %v358 = vsel %vm352, %v309, %v339
        %v359 = vsel %vm352, %v310, %v341
        %v360 = vsel %vm352, %v311, %v343
        %v361 = vpack.c.bf16 %v354, %v353
        %v362 = vpack.c.bf16 %v356, %v355
        %v363 = vpack.c.bf16 %v358, %v357
        %v364 = vpack.c.bf16 %v360, %v359
        %v365 = vld [vmem:[%s1] sm:$0xf]
        %v366 = vld [vmem:[%s1 + $0x4] sm:$0xf]
        %v367 = vld [vmem:[%s1 + $0x8] sm:$0xf]
        %v368 = vld [vmem:[%s1 + $0xc] sm:$0xf]
        %v369 = vld [vmem:[%s2] sm:$0x1]
        %v371 = vperm.slane %v369, 0
        %v377 = vunpack.c.l.b16 %v365
        %v378 = vunpack.c.l.b16 %v366
        %v379 = vunpack.c.l.b16 %v367
        %v380 = vunpack.c.l.b16 %v368
        %v381 = vpack.c.b16 %v378, %v377
        %v382 = vpack.c.b16 %v380, %v379
        %vm385 = vcmask 261120
        %v387 = vsel %vm385, %v361, 0
        %v390 = vsel %vm385, %v362, 0
        %v393 = vsel %vm385, %v363, 0
        %v396 = vsel %vm385, %v364, 0
        %398 = vmatpush.bf16.msra.mxu0 0
        %399 = vmatpush.bf16.msra.mxu0 0
        %400 = vmatpush.bf16.msra.mxu0 0
        %401 = vmatpush.bf16.msra.mxu0 0
        %402 = vmatpush.bf16.msra.mxu0 0
        %403 = vmatpush.bf16.msra.mxu0 0
        %404 = vmatpush.bf16.msra.mxu0 %v382
        %405 = vmatpush.bf16.msra.mxu0 %v381
        %406 = vmatmul.bf16.gmra.mxu0 %v387
        %v407 = vpop.f32.mrf.mxu0
        %v408 = vadd.f32 %v371, %v407
        %v409 = vpop.f32.mrf.mxu0
        %v410 = vadd.f32 %v371, %v409
        %411 = vmatmul.bf16.gmra.mxu0 %v390
        %v412 = vpop.f32.mrf.mxu0
        %v413 = vadd.f32 %v371, %v412
        %v414 = vpop.f32.mrf.mxu0
        %v415 = vadd.f32 %v371, %v414
        %416 = vmatmul.bf16.gmra.mxu0 %v393
        %v417 = vpop.f32.mrf.mxu0
        %v418 = vadd.f32 %v371, %v417
        %v419 = vpop.f32.mrf.mxu0
        %v420 = vadd.f32 %v371, %v419
        %421 = vmatmul.bf16.gmra.mxu0 %v396
        %v422 = vpop.f32.mrf.mxu0
        %v423 = vadd.f32 %v371, %v422
        %v424 = vpop.f32.mrf.mxu0
        %v425 = vadd.f32 %v371, %v424
        %426 = vdwg.mxu0
        %v427 = vtanh.pop %v408
        %v428 = vtanh.pop %v410
        %v429 = vtanh.pop %v413
        %v430 = vtanh.pop %v415
        %v431 = vtanh.pop %v418
        %v432 = vtanh.pop %v420
        %v433 = vtanh.pop %v423
        %v434 = vtanh.pop %v425
        %v435 = vxor.u32 %v408, 2147483648
        %v436 = vxor.u32 %v410, 2147483648
        %v437 = vxor.u32 %v413, 2147483648
        %v438 = vxor.u32 %v415, 2147483648
        %v439 = vxor.u32 %v418, 2147483648
        %v440 = vxor.u32 %v420, 2147483648
        %v441 = vxor.u32 %v423, 2147483648
        %v442 = vxor.u32 %v425, 2147483648
        %v443 = vmul.f32 %v435, 1.442695
        %v444 = vpow.pop %v443
        %v445 = vmul.f32 %v436, 1.442695
        %v446 = vpow.pop %v445
        %v447 = vmul.f32 %v437, 1.442695
        %v448 = vpow.pop %v447
        %v449 = vmul.f32 %v438, 1.442695
        %v450 = vpow.pop %v449
        %v451 = vmul.f32 %v439, 1.442695
        %v452 = vpow.pop %v451
        %v453 = vmul.f32 %v440, 1.442695
        %v454 = vpow.pop %v453
        %v455 = vmul.f32 %v441, 1.442695
        %v456 = vpow.pop %v455
        %v457 = vmul.f32 %v442, 1.442695
        %v458 = vpow.pop %v457
        %v459 = vadd.f32 %v444, 1.0
        %v460 = vadd.f32 %v446, 1.0
        %v461 = vadd.f32 %v448, 1.0
        %v462 = vadd.f32 %v450, 1.0
        %v463 = vadd.f32 %v452, 1.0
        %v464 = vadd.f32 %v454, 1.0
        %v465 = vadd.f32 %v456, 1.0
        %v466 = vadd.f32 %v458, 1.0
        %v467 = vrcp.pop %v459
        %v468 = vmul.f32 %v459, %v467
        %v469 = vsub.f32 1.0, %v468
        %v470 = vmul.f32 %v467, %v469
        %v471 = vadd.f32 %v467, %v470
        %vm472 = vweird.f32 %v459
        %vm473 = vweird.f32 %v467
        %vm474 = vmor %vm472, %vm473
        %v475 = vsel %vm474, %v467, %v471
        %v476 = vand.u32 2147483647, %v459
        %vm477 = vcmp.eq.f32.partialorder %v476, 8.507059e+37
        %v478 = vand.u32 %v459, 2147483648
        %v479 = vor.u32 1.1754944e-38, %v478
        %v480 = vsel %vm477, %v479, %v475
        %v481 = vmul.f32 1.0, %v480
        %v482 = vrcp.pop %v460
        %v483 = vmul.f32 %v460, %v482
        %v484 = vsub.f32 1.0, %v483
        %v485 = vmul.f32 %v482, %v484
        %v486 = vadd.f32 %v482, %v485
        %vm487 = vweird.f32 %v460
        %vm488 = vweird.f32 %v482
        %vm489 = vmor %vm487, %vm488
        %v490 = vsel %vm489, %v482, %v486
        %v491 = vand.u32 2147483647, %v460
        %vm492 = vcmp.eq.f32.partialorder %v491, 8.507059e+37
        %v493 = vand.u32 %v460, 2147483648
        %v494 = vor.u32 1.1754944e-38, %v493
        %v495 = vsel %vm492, %v494, %v490
        %v496 = vmul.f32 1.0, %v495
        %v497 = vrcp.pop %v461
        %v498 = vmul.f32 %v461, %v497
        %v499 = vsub.f32 1.0, %v498
        %v500 = vmul.f32 %v497, %v499
        %v501 = vadd.f32 %v497, %v500
        %vm502 = vweird.f32 %v461
        %vm503 = vweird.f32 %v497
        %vm504 = vmor %vm502, %vm503
        %v505 = vsel %vm504, %v497, %v501
        %v506 = vand.u32 2147483647, %v461
        %vm507 = vcmp.eq.f32.partialorder %v506, 8.507059e+37
        %v508 = vand.u32 %v461, 2147483648
        %v509 = vor.u32 1.1754944e-38, %v508
        %v510 = vsel %vm507, %v509, %v505
        %v511 = vmul.f32 1.0, %v510
        %v512 = vrcp.pop %v462
        %v513 = vmul.f32 %v462, %v512
        %v514 = vsub.f32 1.0, %v513
        %v515 = vmul.f32 %v512, %v514
        %v516 = vadd.f32 %v512, %v515
        %vm517 = vweird.f32 %v462
        %vm518 = vweird.f32 %v512
        %vm519 = vmor %vm517, %vm518
        %v520 = vsel %vm519, %v512, %v516
        %v521 = vand.u32 2147483647, %v462
        %vm522 = vcmp.eq.f32.partialorder %v521, 8.507059e+37
        %v523 = vand.u32 %v462, 2147483648
        %v524 = vor.u32 1.1754944e-38, %v523
        %v525 = vsel %vm522, %v524, %v520
        %v526 = vmul.f32 1.0, %v525
        %v527 = vrcp.pop %v463
        %v528 = vmul.f32 %v463, %v527
        %v529 = vsub.f32 1.0, %v528
        %v530 = vmul.f32 %v527, %v529
        %v531 = vadd.f32 %v527, %v530
        %vm532 = vweird.f32 %v463
        %vm533 = vweird.f32 %v527
        %vm534 = vmor %vm532, %vm533
        %v535 = vsel %vm534, %v527, %v531
        %v536 = vand.u32 2147483647, %v463
        %vm537 = vcmp.eq.f32.partialorder %v536, 8.507059e+37
        %v538 = vand.u32 %v463, 2147483648
        %v539 = vor.u32 1.1754944e-38, %v538
        %v540 = vsel %vm537, %v539, %v535
        %v541 = vmul.f32 1.0, %v540
        %v542 = vrcp.pop %v464
        %v543 = vmul.f32 %v464, %v542
        %v544 = vsub.f32 1.0, %v543
        %v545 = vmul.f32 %v542, %v544
        %v546 = vadd.f32 %v542, %v545
        %vm547 = vweird.f32 %v464
        %vm548 = vweird.f32 %v542
        %vm549 = vmor %vm547, %vm548
        %v550 = vsel %vm549, %v542, %v546
        %v551 = vand.u32 2147483647, %v464
        %vm552 = vcmp.eq.f32.partialorder %v551, 8.507059e+37
        %v553 = vand.u32 %v464, 2147483648
        %v554 = vor.u32 1.1754944e-38, %v553
        %v555 = vsel %vm552, %v554, %v550
        %v556 = vmul.f32 1.0, %v555
        %v557 = vrcp.pop %v465
        %v558 = vmul.f32 %v465, %v557
        %v559 = vsub.f32 1.0, %v558
        %v560 = vmul.f32 %v557, %v559
        %v561 = vadd.f32 %v557, %v560
        %vm562 = vweird.f32 %v465
        %vm563 = vweird.f32 %v557
        %vm564 = vmor %vm562, %vm563
        %v565 = vsel %vm564, %v557, %v561
        %v566 = vand.u32 2147483647, %v465
        %vm567 = vcmp.eq.f32.partialorder %v566, 8.507059e+37
        %v568 = vand.u32 %v465, 2147483648
        %v569 = vor.u32 1.1754944e-38, %v568
        %v570 = vsel %vm567, %v569, %v565
        %v571 = vmul.f32 1.0, %v570
        %v572 = vrcp.pop %v466
        %v573 = vmul.f32 %v466, %v572
        %v574 = vsub.f32 1.0, %v573
        %v575 = vmul.f32 %v572, %v574
        %v576 = vadd.f32 %v572, %v575
        %vm577 = vweird.f32 %v466
        %vm578 = vweird.f32 %v572
        %vm579 = vmor %vm577, %vm578
        %v580 = vsel %vm579, %v572, %v576
        %v581 = vand.u32 2147483647, %v466
        %vm582 = vcmp.eq.f32.partialorder %v581, 8.507059e+37
        %v583 = vand.u32 %v466, 2147483648
        %v584 = vor.u32 1.1754944e-38, %v583
        %v585 = vsel %vm582, %v584, %v580
        %v586 = vmul.f32 1.0, %v585
        %595 = vrot.lane.b32.xlu0 %v481, 112
        %v596 = vpop.permute.xlu0 %595
        %597 = vrot.lane.b32.xlu0 %v496, 112
        %v598 = vpop.permute.xlu0 %597
        %599 = vrot.lane.b32.xlu0 %v511, 112
        %v600 = vpop.permute.xlu0 %599
        %601 = vrot.lane.b32.xlu0 %v526, 112
        %v602 = vpop.permute.xlu0 %601
        %603 = vrot.lane.b32.xlu0 %v541, 112
        %v604 = vpop.permute.xlu0 %603
        %605 = vrot.lane.b32.xlu0 %v556, 112
        %v606 = vpop.permute.xlu0 %605
        %607 = vrot.lane.b32.xlu0 %v571, 112
        %v608 = vpop.permute.xlu0 %607
        %609 = vrot.lane.b32.xlu0 %v586, 112
        %v610 = vpop.permute.xlu0 %609
        %v619 = vmul.f32 %v427, %v596
        %v620 = vmul.f32 %v428, %v598
        %v621 = vmul.f32 %v429, %v600
        %v622 = vmul.f32 %v430, %v602
        %v623 = vmul.f32 %v431, %v604
        %v624 = vmul.f32 %v432, %v606
        %v625 = vmul.f32 %v433, %v608
        %v626 = vmul.f32 %v434, %v610
        %v627 = vpack.c.bf16 %v620, %v619
        %v628 = vpack.c.bf16 %v622, %v621
        %v629 = vpack.c.bf16 %v624, %v623
        %v630 = vpack.c.bf16 %v626, %v625
        %v631 = vld [vmem:[%s3] sm:$0xff]
        %v632 = vld [vmem:[%s3 + $0x8] sm:$0xff]
        %v633 = vld [vmem:[%s4] sm:$0x3]
        %v635 = vperm.slane %v633, 0
        %v636 = vperm.slane %v633, 1
        %v641 = vunpack.c.l.b16 %v631
        %v642 = vunpack.c.h.b16 %v631
        %v643 = vunpack.c.l.b16 %v632
        %v644 = vunpack.c.h.b16 %v632
        %v645 = vpack.c.b16 %v643, %v641
        %v646 = vpack.c.b16 %v644, %v642
        %v650 = vsel %vm352, %v627, 0
        %v653 = vsel %vm352, %v628, 0
        %v656 = vsel %vm352, %v629, 0
        %v659 = vsel %vm352, %v630, 0
        %661 = vmatpush.bf16.msra.mxu0 0
        %662 = vmatpush.bf16.msra.mxu0 0
        %663 = vmatpush.bf16.msra.mxu0 0
        %664 = vmatpush.bf16.msra.mxu0 0
        %665 = vmatpush.bf16.msra.mxu0 0
        %666 = vmatpush.bf16.msra.mxu0 0
        %667 = vmatpush.bf16.msra.mxu0 0
        %668 = vmatpush.bf16.msra.mxu0 %v645
        %669 = vmatmul.bf16.gmra.mxu0 %v650
        %v670 = vpop.f32.mrf.mxu0
        %v671 = vadd.f32 %v635, %v670
        %v672 = vpop.f32.mrf.mxu0
        %v673 = vadd.f32 %v635, %v672
        %674 = vmatmul.bf16.gmra.mxu0 %v653
        %v675 = vpop.f32.mrf.mxu0
        %v676 = vadd.f32 %v635, %v675
        %v677 = vpop.f32.mrf.mxu0
        %v678 = vadd.f32 %v635, %v677
        %679 = vmatmul.bf16.gmra.mxu0 %v656
        %v680 = vpop.f32.mrf.mxu0
        %v681 = vadd.f32 %v635, %v680
        %v682 = vpop.f32.mrf.mxu0
        %v683 = vadd.f32 %v635, %v682
        %684 = vmatmul.bf16.gmra.mxu0 %v659
        %v685 = vpop.f32.mrf.mxu0
        %v686 = vadd.f32 %v635, %v685
        %v687 = vpop.f32.mrf.mxu0
        %v688 = vadd.f32 %v635, %v687
        %689 = vdwg.mxu0
        %690 = vmatpush.bf16.msra.mxu0 0
        %691 = vmatpush.bf16.msra.mxu0 0
        %692 = vmatpush.bf16.msra.mxu0 0
        %693 = vmatpush.bf16.msra.mxu0 0
        %694 = vmatpush.bf16.msra.mxu0 0
        %695 = vmatpush.bf16.msra.mxu0 0
        %696 = vmatpush.bf16.msra.mxu0 0
        %697 = vmatpush.bf16.msra.mxu0 %v646
        %698 = vmatmul.bf16.gmra.mxu0 %v650
        %v699 = vpop.f32.mrf.mxu0
        %v700 = vadd.f32 %v636, %v699
        %v701 = vpop.f32.mrf.mxu0
        %v702 = vadd.f32 %v636, %v701
        %703 = vmatmul.bf16.gmra.mxu0 %v653
        %v704 = vpop.f32.mrf.mxu0
        %v705 = vadd.f32 %v636, %v704
        %v706 = vpop.f32.mrf.mxu0
        %v707 = vadd.f32 %v636, %v706
        %708 = vmatmul.bf16.gmra.mxu0 %v656
        %v709 = vpop.f32.mrf.mxu0
        %v710 = vadd.f32 %v636, %v709
        %v711 = vpop.f32.mrf.mxu0
        %v712 = vadd.f32 %v636, %v711
        %713 = vmatmul.bf16.gmra.mxu0 %v659
        %v714 = vpop.f32.mrf.mxu0
        %v715 = vadd.f32 %v636, %v714
        %v716 = vpop.f32.mrf.mxu0
        %v717 = vadd.f32 %v636, %v716
        %718 = vdwg.mxu0
        %719 = vst.msk [vmem:[%s294] sm:$0xff] %vm385, %v671
        %720 = vst.msk [vmem:[%s294 + $0x8] sm:$0xff] %vm385, %v673
        %721 = vst.msk [vmem:[%s294 + $0x10] sm:$0xff] %vm385, %v676
        %722 = vst.msk [vmem:[%s294 + $0x18] sm:$0xff] %vm385, %v678
        %723 = vst.msk [vmem:[%s294 + $0x20] sm:$0xff] %vm385, %v681
        %724 = vst.msk [vmem:[%s294 + $0x28] sm:$0xff] %vm385, %v683
        %725 = vst.msk [vmem:[%s294 + $0x30] sm:$0xff] %vm385, %v686
        %vm726 = vcmask 260096
        %727 = vst.msk [vmem:[%s294 + $0x38] sm:$0x7f] %vm726, %v688
        %728 = vrot.lane.b32.xlu0 %v312, 32
        %v729 = vpop.permute.xlu0 %728
        %730 = vrot.lane.b32.xlu0 %v313, 32
        %v731 = vpop.permute.xlu0 %730
        %732 = vrot.lane.b32.xlu0 %v314, 32
        %v733 = vpop.permute.xlu0 %732
        %734 = vrot.lane.b32.xlu0 %v315, 32
        %v735 = vpop.permute.xlu0 %734
        %736 = vrot.lane.b32.xlu0 %v316, 32
        %v737 = vpop.permute.xlu0 %736
        %738 = vrot.lane.b32.xlu0 %v317, 32
        %v739 = vpop.permute.xlu0 %738
        %740 = vrot.lane.b32.xlu0 %v318, 32
        %v741 = vpop.permute.xlu0 %740
        %742 = vrot.lane.b32.xlu0 %v319, 32
        %v743 = vpop.permute.xlu0 %742
        %v752 = vadd.f32 %v671, %v729
        %v753 = vadd.f32 %v673, %v731
        %v754 = vadd.f32 %v676, %v733
        %v755 = vadd.f32 %v678, %v735
        %v756 = vadd.f32 %v681, %v737
        %v757 = vadd.f32 %v683, %v739
        %v758 = vadd.f32 %v686, %v741
        %v759 = vadd.f32 %v688, %v743
        %768 = vrot.lane.b32.xlu0 %v752, 96
        %v769 = vpop.permute.xlu0 %768
        %770 = vrot.lane.b32.xlu0 %v753, 96
        %v771 = vpop.permute.xlu0 %770
        %772 = vrot.lane.b32.xlu0 %v754, 96
        %v773 = vpop.permute.xlu0 %772
        %774 = vrot.lane.b32.xlu0 %v755, 96
        %v775 = vpop.permute.xlu0 %774
        %776 = vrot.lane.b32.xlu0 %v756, 96
        %v777 = vpop.permute.xlu0 %776
        %778 = vrot.lane.b32.xlu0 %v757, 96
        %v779 = vpop.permute.xlu0 %778
        %780 = vrot.lane.b32.xlu0 %v758, 96
        %v781 = vpop.permute.xlu0 %780
        %782 = vrot.lane.b32.xlu0 %v759, 96
        %v783 = vpop.permute.xlu0 %782
        %792 = vst.msk [vmem:[%s300] sm:$0xff] %vm352, %v769
        %793 = vst.msk [vmem:[%s300 + $0x8] sm:$0xff] %vm352, %v771
        %794 = vst.msk [vmem:[%s300 + $0x10] sm:$0xff] %vm352, %v773
        %795 = vst.msk [vmem:[%s300 + $0x18] sm:$0xff] %vm352, %v775
        %796 = vst.msk [vmem:[%s300 + $0x20] sm:$0xff] %vm352, %v777
        %797 = vst.msk [vmem:[%s300 + $0x28] sm:$0xff] %vm352, %v779
        %798 = vst.msk [vmem:[%s300 + $0x30] sm:$0xff] %vm352, %v781
        %vm799 = vcmask 129024
        %800 = vst.msk [vmem:[%s300 + $0x38] sm:$0x7f] %vm799, %v783
        %v801 = vpack.c.bf16 %v671, %v671
        %v802 = vpack.c.bf16 %v673, %v673
        %v803 = vpack.c.bf16 %v676, %v676
        %v804 = vpack.c.bf16 %v678, %v678
        %v805 = vpack.c.bf16 %v681, %v681
        %v806 = vpack.c.bf16 %v683, %v683
        %v807 = vpack.c.bf16 %v686, %v686
        %v808 = vpack.c.bf16 %v688, %v688
        %817 = vrot.lane.b32.xlu0 %v801, 80
        %v818 = vpop.permute.xlu0 %817
        %819 = vrot.lane.b32.xlu0 %v802, 80
        %v820 = vpop.permute.xlu0 %819
        %821 = vrot.lane.b32.xlu0 %v803, 80
        %v822 = vpop.permute.xlu0 %821
        %823 = vrot.lane.b32.xlu0 %v804, 80
        %v824 = vpop.permute.xlu0 %823
        %825 = vrot.lane.b32.xlu0 %v805, 80
        %v826 = vpop.permute.xlu0 %825
        %827 = vrot.lane.b32.xlu0 %v806, 80
        %v828 = vpop.permute.xlu0 %827
        %829 = vrot.lane.b32.xlu0 %v807, 80
        %v830 = vpop.permute.xlu0 %829
        %831 = vrot.lane.b32.xlu0 %v808, 80
        %v832 = vpop.permute.xlu0 %831
        %vm841 = vcmask 125952
        %842 = vst.msk [vmem:[%s283] sm:$0xf] %vm841, %v818
        %843 = vst.msk [vmem:[%s283 + $0x4] sm:$0xf] %vm841, %v820
        %844 = vst.msk [vmem:[%s283 + $0x8] sm:$0xf] %vm841, %v822
        %845 = vst.msk [vmem:[%s283 + $0xc] sm:$0xf] %vm841, %v824
        %846 = vst.msk [vmem:[%s283 + $0x10] sm:$0xf] %vm841, %v826
        %847 = vst.msk [vmem:[%s283 + $0x14] sm:$0xf] %vm841, %v828
        %848 = vst.msk [vmem:[%s283 + $0x18] sm:$0xf] %vm841, %v830
        %vm849 = vcmask 125952
        %vm850 = vsmask.f32 3328
        %vm851 = vmand %vm849, %vm850
        %v852 = vld [vmem:[%s283 + $0x1c] sm:$0xf]
        %v853 = vsel %vm851, %v832, %v852
        %854 = vst [vmem:[%s283 + $0x1c] sm:$0xf] %v853
        %855 = vrot.lane.b32.xlu0 %v801, 64
        %v856 = vpop.permute.xlu0 %855
        %857 = vrot.lane.b32.xlu0 %v802, 64
        %v858 = vpop.permute.xlu0 %857
        %859 = vrot.lane.b32.xlu0 %v803, 64
        %v860 = vpop.permute.xlu0 %859
        %861 = vrot.lane.b32.xlu0 %v804, 64
        %v862 = vpop.permute.xlu0 %861
        %863 = vrot.lane.b32.xlu0 %v805, 64
        %v864 = vpop.permute.xlu0 %863
        %865 = vrot.lane.b32.xlu0 %v806, 64
        %v866 = vpop.permute.xlu0 %865
        %867 = vrot.lane.b32.xlu0 %v807, 64
        %v868 = vpop.permute.xlu0 %867
        %869 = vrot.lane.b32.xlu0 %v808, 64
        %v870 = vpop.permute.xlu0 %869
        %s879 = scalar_lea.vmem %s283, 32 [#allocation2]
        %880 = vst.msk [vmem:[%s879] sm:$0xf] %vm841, %v856
        %881 = vst.msk [vmem:[%s879 + $0x4] sm:$0xf] %vm841, %v858
        %882 = vst.msk [vmem:[%s879 + $0x8] sm:$0xf] %vm841, %v860
        %883 = vst.msk [vmem:[%s879 + $0xc] sm:$0xf] %vm841, %v862
        %884 = vst.msk [vmem:[%s879 + $0x10] sm:$0xf] %vm841, %v864
        %885 = vst.msk [vmem:[%s879 + $0x14] sm:$0xf] %vm841, %v866
        %886 = vst.msk [vmem:[%s879 + $0x18] sm:$0xf] %vm841, %v868
        %v887 = vld [vmem:[%s879 + $0x1c] sm:$0xf]
        %v888 = vsel %vm851, %v870, %v887
        %889 = vst [vmem:[%s879 + $0x1c] sm:$0xf] %v888
        %890 = vrot.lane.b32.xlu0 %v801, 48
        %v891 = vpop.permute.xlu0 %890
        %892 = vrot.lane.b32.xlu0 %v802, 48
        %v893 = vpop.permute.xlu0 %892
        %894 = vrot.lane.b32.xlu0 %v803, 48
        %v895 = vpop.permute.xlu0 %894
        %896 = vrot.lane.b32.xlu0 %v804, 48
        %v897 = vpop.permute.xlu0 %896
        %898 = vrot.lane.b32.xlu0 %v805, 48
        %v899 = vpop.permute.xlu0 %898
        %900 = vrot.lane.b32.xlu0 %v806, 48
        %v901 = vpop.permute.xlu0 %900
        %902 = vrot.lane.b32.xlu0 %v807, 48
        %v903 = vpop.permute.xlu0 %902
        %904 = vrot.lane.b32.xlu0 %v808, 48
        %v905 = vpop.permute.xlu0 %904
        %s914 = scalar_lea.vmem %s283, 64 [#allocation2]
        %915 = vst.msk [vmem:[%s914] sm:$0xf] %vm841, %v891
        %916 = vst.msk [vmem:[%s914 + $0x4] sm:$0xf] %vm841, %v893
        %917 = vst.msk [vmem:[%s914 + $0x8] sm:$0xf] %vm841, %v895
        %918 = vst.msk [vmem:[%s914 + $0xc] sm:$0xf] %vm841, %v897
        %919 = vst.msk [vmem:[%s914 + $0x10] sm:$0xf] %vm841, %v899
        %920 = vst.msk [vmem:[%s914 + $0x14] sm:$0xf] %vm841, %v901
        %921 = vst.msk [vmem:[%s914 + $0x18] sm:$0xf] %vm841, %v903
        %v922 = vld [vmem:[%s914 + $0x1c] sm:$0xf]
        %v923 = vsel %vm851, %v905, %v922
        %924 = vst [vmem:[%s914 + $0x1c] sm:$0xf] %v923
        %925 = vrot.lane.b32.xlu0 %v801, 32
        %v926 = vpop.permute.xlu0 %925
        %927 = vrot.lane.b32.xlu0 %v802, 32
        %v928 = vpop.permute.xlu0 %927
        %929 = vrot.lane.b32.xlu0 %v803, 32
        %v930 = vpop.permute.xlu0 %929
        %931 = vrot.lane.b32.xlu0 %v804, 32
        %v932 = vpop.permute.xlu0 %931
        %933 = vrot.lane.b32.xlu0 %v805, 32
        %v934 = vpop.permute.xlu0 %933
        %935 = vrot.lane.b32.xlu0 %v806, 32
        %v936 = vpop.permute.xlu0 %935
        %937 = vrot.lane.b32.xlu0 %v807, 32
        %v938 = vpop.permute.xlu0 %937
        %939 = vrot.lane.b32.xlu0 %v808, 32
        %v940 = vpop.permute.xlu0 %939
        %s949 = scalar_lea.vmem %s283, 96 [#allocation2]
        %950 = vst.msk [vmem:[%s949] sm:$0xf] %vm841, %v926
        %951 = vst.msk [vmem:[%s949 + $0x4] sm:$0xf] %vm841, %v928
        %952 = vst.msk [vmem:[%s949 + $0x8] sm:$0xf] %vm841, %v930
        %953 = vst.msk [vmem:[%s949 + $0xc] sm:$0xf] %vm841, %v932
        %954 = vst.msk [vmem:[%s949 + $0x10] sm:$0xf] %vm841, %v934
        %955 = vst.msk [vmem:[%s949 + $0x14] sm:$0xf] %vm841, %v936
        %956 = vst.msk [vmem:[%s949 + $0x18] sm:$0xf] %vm841, %v938
        %v957 = vld [vmem:[%s949 + $0x1c] sm:$0xf]
        %v958 = vsel %vm851, %v940, %v957
        %959 = vst [vmem:[%s949 + $0x1c] sm:$0xf] %v958
        %960 = vrot.lane.b32.xlu0 %v801, 16
        %v961 = vpop.permute.xlu0 %960
        %962 = vrot.lane.b32.xlu0 %v802, 16
        %v963 = vpop.permute.xlu0 %962
        %964 = vrot.lane.b32.xlu0 %v803, 16
        %v965 = vpop.permute.xlu0 %964
        %966 = vrot.lane.b32.xlu0 %v804, 16
        %v967 = vpop.permute.xlu0 %966
        %968 = vrot.lane.b32.xlu0 %v805, 16
        %v969 = vpop.permute.xlu0 %968
        %970 = vrot.lane.b32.xlu0 %v806, 16
        %v971 = vpop.permute.xlu0 %970
        %972 = vrot.lane.b32.xlu0 %v807, 16
        %v973 = vpop.permute.xlu0 %972
        %974 = vrot.lane.b32.xlu0 %v808, 16
        %v975 = vpop.permute.xlu0 %974
        %s984 = scalar_lea.vmem %s283, 128 [#allocation2]
        %985 = vst.msk [vmem:[%s984] sm:$0xf] %vm841, %v961
        %986 = vst.msk [vmem:[%s984 + $0x4] sm:$0xf] %vm841, %v963
        %987 = vst.msk [vmem:[%s984 + $0x8] sm:$0xf] %vm841, %v965
        %988 = vst.msk [vmem:[%s984 + $0xc] sm:$0xf] %vm841, %v967
        %989 = vst.msk [vmem:[%s984 + $0x10] sm:$0xf] %vm841, %v969
        %990 = vst.msk [vmem:[%s984 + $0x14] sm:$0xf] %vm841, %v971
        %991 = vst.msk [vmem:[%s984 + $0x18] sm:$0xf] %vm841, %v973
        %v992 = vld [vmem:[%s984 + $0x1c] sm:$0xf]
        %v993 = vsel %vm851, %v975, %v992
        %994 = vst [vmem:[%s984 + $0x1c] sm:$0xf] %v993
        %v995 = vpack.c.bf16 %v700, %v700
        %v996 = vpack.c.bf16 %v702, %v702
        %v997 = vpack.c.bf16 %v705, %v705
        %v998 = vpack.c.bf16 %v707, %v707
        %v999 = vpack.c.bf16 %v710, %v710
        %v1000 = vpack.c.bf16 %v712, %v712
        %v1001 = vpack.c.bf16 %v715, %v715
        %v1002 = vpack.c.bf16 %v717, %v717
        %s1003 = scalar_lea.vmem %s283, 160 [#allocation2]
        %1004 = vst.msk [vmem:[%s1003] sm:$0xf] %vm841, %v995
        %1005 = vst.msk [vmem:[%s1003 + $0x4] sm:$0xf] %vm841, %v996
        %1006 = vst.msk [vmem:[%s1003 + $0x8] sm:$0xf] %vm841, %v997
        %1007 = vst.msk [vmem:[%s1003 + $0xc] sm:$0xf] %vm841, %v998
        %1008 = vst.msk [vmem:[%s1003 + $0x10] sm:$0xf] %vm841, %v999
        %1009 = vst.msk [vmem:[%s1003 + $0x14] sm:$0xf] %vm841, %v1000
        %1010 = vst.msk [vmem:[%s1003 + $0x18] sm:$0xf] %vm841, %v1001
        %v1011 = vld [vmem:[%s1003 + $0x1c] sm:$0xf]
        %v1012 = vsel %vm851, %v1002, %v1011
        %1013 = vst [vmem:[%s1003 + $0x1c] sm:$0xf] %v1012
        %vm1014 = vcmask 253952
        %1015 = vst.msk [vmem:[%s294 + $0x3f] sm:$0x1] %vm1014, 0.0
        %vm1016 = vcmask 122880
        %1017 = vst.msk [vmem:[%s300 + $0x3f] sm:$0x1] %vm1016, 0.0
        %vm1018 = vcmask 125955
        %vm1019 = vsmask.f32 7950
        %vm1020 = vmand %vm1018, %vm1019
        %v1021 = vld [vmem:[%s283 + $0x1c] sm:$0x8]
        %v1022 = vsel %vm1020, 0, %v1021
        %1023 = vst [vmem:[%s283 + $0x1c] sm:$0x8] %v1022
        %v1024 = vld [vmem:[%s879 + $0x1c] sm:$0x8]
        %v1025 = vsel %vm1020, 0, %v1024
        %1026 = vst [vmem:[%s879 + $0x1c] sm:$0x8] %v1025
        %v1027 = vld [vmem:[%s914 + $0x1c] sm:$0x8]
        %v1028 = vsel %vm1020, 0, %v1027
        %1029 = vst [vmem:[%s914 + $0x1c] sm:$0x8] %v1028
        %v1030 = vld [vmem:[%s949 + $0x1c] sm:$0x8]
        %v1031 = vsel %vm1020, 0, %v1030
        %1032 = vst [vmem:[%s949 + $0x1c] sm:$0x8] %v1031
        %v1033 = vld [vmem:[%s984 + $0x1c] sm:$0x8]
        %v1034 = vsel %vm1020, 0, %v1033
        %1035 = vst [vmem:[%s984 + $0x1c] sm:$0x8] %v1034
        %v1036 = vld [vmem:[%s1003 + $0x1c] sm:$0x8]
        %v1037 = vsel %vm1020, 0, %v1036
        %1038 = vst [vmem:[%s1003 + $0x1c] sm:$0x8] %v1037
        %s1039 = smul.u32 8, %s19
        %p1040 = scmp.lt.s32.totalorder %s1039, 15
        %s1041 = scalar_select %p1040, %s1039, 15
        %s1042 = smul.addr %s1041, 8
        %s1043 = scalar_lea.vmem %s5, %s1042
        %s1044 = smul.u32 8, %s19
        %p1045 = scmp.lt.s32.totalorder %s1044, 15
        %s1046 = scalar_select %p1045, %s1044, 15
        %s1047 = smul.addr %s1046, 8
        %s1048 = scalar_lea.vmem %s6, %s1047
        %s1049 = sand.u32 %s189, 1
        %s1050 = sand.u32 %s189, 1
        %s1051 = smul.addr %s1050, 192
        %s1052 = scalar_lea.vmem [#allocation2], %s1051
        // Predicated region
        $region41: #{graph_wavenet_forward.12} parent=39 // pred_check
          %p1053 = pneg %p147
        $region42: #{graph_wavenet_forward.12} parent=39 // pred_check_branch
          %1055 = sbr.rel (%p1053) target = $region44
        $region43: #{graph_wavenet_forward.12} parent=39 // pred_region
          %s1056 = smul.u32 8, %s19
        $region44: #{graph_wavenet_forward.12} parent=39 // pred_fallthru
          _
        // Predicated region
        $region45: #{graph_wavenet_forward.12} parent=39 // pred_check
          %p1057 = pneg %p173
        $region46: #{graph_wavenet_forward.12} parent=39 // pred_check_branch
          %1059 = sbr.rel (%p1057) target = $region48
        $region47: #{graph_wavenet_forward.12} parent=39 // pred_region
          %s1060 = smul.u32 8, %s19
        $region48: #{graph_wavenet_forward.12} parent=39 // pred_fallthru
          _
        // Predicated region
        $region49: #{graph_wavenet_forward.12} parent=39 // pred_check
          %p1061 = pneg %p199
        $region50: #{graph_wavenet_forward.12} parent=39 // pred_check_branch
          %1063 = sbr.rel (%p1061) target = $region52
        $region51: #{graph_wavenet_forward.12} parent=39 // pred_region
          %s1064 = smul.u32 8, %s19
          %s1065 = smul.addr %s1064, 4
          %s1066 = scalar_lea.vmem %s7, %s1065
          // Predicated region
          $region53: #{graph_wavenet_forward.12} parent=51 // pred_check
            _
          $region54: #{graph_wavenet_forward.12} parent=51 // pred_check_branch
            %1068 = sbr.rel (0) target = $region56
          $region55: #{graph_wavenet_forward.12} parent=51 // pred_region
            // Predicated region
            $region57: #{graph_wavenet_forward.12} parent=55 // pred_check
              _
            $region58: #{graph_wavenet_forward.12} parent=55 // pred_check_branch
              %1070 = sbr.rel target = $region60
            $region59: #{graph_wavenet_forward.12} parent=55 // pred_region
              // Predicated region
              $region72: #{graph_wavenet_forward.12} parent=59 // pred_check
                _
              $region73: #{graph_wavenet_forward.12} parent=59 // pred_check_branch
                %1180 = sbr.rel (0) target = $region75
              $region74: #{graph_wavenet_forward.12} parent=59 // pred_region
                loop: start=0, step=1, limit=1
                $region76: #{graph_wavenet_forward.12} parent=74 // loop_pre_header
                  _
                $region77: #{graph_wavenet_forward.12} parent=74 // loop_header
                  %s1182 = sphi 0, %s1186
                  %p1183 = scmp.ge.s32.totalorder %s1182, 1
                  %s1187 = sphi %s1052, %s1052
                  %s1188 = sphi %s1066, %s1066
                $region78: #{graph_wavenet_forward.12} parent=74 // loop_header_branch
                  %1185 = sbr.rel (%p1183) target = $region82
                $region79: #{graph_wavenet_forward.12} parent=74 // loop_body
                  _
                $region80: #{graph_wavenet_forward.12} parent=74 // loop_footer
                  %s1186 = sadd.s32 1, %s1182
                $region81: #{graph_wavenet_forward.12} parent=74 // loop_footer_branch
                  %1181 = sbr.rel target = $region77
                $region82: #{graph_wavenet_forward.12} parent=74 // loop_exit
                  _
                %s1190 = ssub.s32 16, 1
                loop: start=0, step=1, limit=1
                $region83: #{graph_wavenet_forward.12} parent=74 // loop_pre_header
                  _
                $region84: #{graph_wavenet_forward.12} parent=74 // loop_header
                  %s1192 = sphi 0, %s1196
                  %p1193 = scmp.ge.s32.totalorder %s1192, 1
                  %s1197 = sphi %s1052, %s1052
                  %s1198 = sphi %s1066, %s1066
                $region85: #{graph_wavenet_forward.12} parent=74 // loop_header_branch
                  %1195 = sbr.rel (%p1193) target = $region89
                $region86: #{graph_wavenet_forward.12} parent=74 // loop_body
                  %v1199 = vld [vmem:[%s1197] sm:%s1190]
                  %1200 = vst [vmem:[%s1198] sm:%s1190] %v1199
                  %v1201 = vld [vmem:[%s1197 + $0x4] sm:%s1190]
                  %1202 = vst [vmem:[%s1198 + $0x4] sm:%s1190] %v1201
                  %v1203 = vld [vmem:[%s1197 + $0x8] sm:%s1190]
                  %1204 = vst [vmem:[%s1198 + $0x8] sm:%s1190] %v1203
                  %v1205 = vld [vmem:[%s1197 + $0xc] sm:%s1190]
                  %1206 = vst [vmem:[%s1198 + $0xc] sm:%s1190] %v1205
                  %v1207 = vld [vmem:[%s1197 + $0x10] sm:%s1190]
                  %1208 = vst [vmem:[%s1198 + $0x10] sm:%s1190] %v1207
                  %v1209 = vld [vmem:[%s1197 + $0x14] sm:%s1190]
                  %1210 = vst [vmem:[%s1198 + $0x14] sm:%s1190] %v1209
                  %v1211 = vld [vmem:[%s1197 + $0x18] sm:%s1190]
                  %1212 = vst [vmem:[%s1198 + $0x18] sm:%s1190] %v1211
                  %v1213 = vld [vmem:[%s1197 + $0x1c] sm:%s1190]
                  %1214 = vst [vmem:[%s1198 + $0x1c] sm:%s1190] %v1213
                  %v1215 = vld [vmem:[%s1197 + $0x20] sm:%s1190]
                  %1216 = vst [vmem:[%s1198 + $0x40] sm:%s1190] %v1215
                  %v1217 = vld [vmem:[%s1197 + $0x24] sm:%s1190]
                  %1218 = vst [vmem:[%s1198 + $0x44] sm:%s1190] %v1217
                  %v1219 = vld [vmem:[%s1197 + $0x28] sm:%s1190]
                  %1220 = vst [vmem:[%s1198 + $0x48] sm:%s1190] %v1219
                  %v1221 = vld [vmem:[%s1197 + $0x2c] sm:%s1190]
                  %1222 = vst [vmem:[%s1198 + $0x4c] sm:%s1190] %v1221
                  %v1223 = vld [vmem:[%s1197 + $0x30] sm:%s1190]
                  %1224 = vst [vmem:[%s1198 + $0x50] sm:%s1190] %v1223
                  %v1225 = vld [vmem:[%s1197 + $0x34] sm:%s1190]
                  %1226 = vst [vmem:[%s1198 + $0x54] sm:%s1190] %v1225
                  %v1227 = vld [vmem:[%s1197 + $0x38] sm:%s1190]
                  %1228 = vst [vmem:[%s1198 + $0x58] sm:%s1190] %v1227
                  %v1229 = vld [vmem:[%s1197 + $0x3c] sm:%s1190]
                  %1230 = vst [vmem:[%s1198 + $0x5c] sm:%s1190] %v1229
                  %v1231 = vld [vmem:[%s1197 + $0x40] sm:%s1190]
                  %1232 = vst [vmem:[%s1198 + $0x80] sm:%s1190] %v1231
                  %v1233 = vld [vmem:[%s1197 + $0x44] sm:%s1190]
                  %1234 = vst [vmem:[%s1198 + $0x84] sm:%s1190] %v1233
                  %v1235 = vld [vmem:[%s1197 + $0x48] sm:%s1190]
                  %1236 = vst [vmem:[%s1198 + $0x88] sm:%s1190] %v1235
                  %v1237 = vld [vmem:[%s1197 + $0x4c] sm:%s1190]
                  %1238 = vst [vmem:[%s1198 + $0x8c] sm:%s1190] %v1237
                  %v1239 = vld [vmem:[%s1197 + $0x50] sm:%s1190]
                  %1240 = vst [vmem:[%s1198 + $0x90] sm:%s1190] %v1239
                  %v1241 = vld [vmem:[%s1197 + $0x54] sm:%s1190]
                  %1242 = vst [vmem:[%s1198 + $0x94] sm:%s1190] %v1241
                  %v1243 = vld [vmem:[%s1197 + $0x58] sm:%s1190]
                  %1244 = vst [vmem:[%s1198 + $0x98] sm:%s1190] %v1243
                  %v1245 = vld [vmem:[%s1197 + $0x5c] sm:%s1190]
                  %1246 = vst [vmem:[%s1198 + $0x9c] sm:%s1190] %v1245
                  %v1247 = vld [vmem:[%s1197 + $0x60] sm:%s1190]
                  %1248 = vst [vmem:[%s1198 + $0xc0] sm:%s1190] %v1247
                  %v1249 = vld [vmem:[%s1197 + $0x64] sm:%s1190]
                  %1250 = vst [vmem:[%s1198 + $0xc4] sm:%s1190] %v1249
                  %v1251 = vld [vmem:[%s1197 + $0x68] sm:%s1190]
                  %1252 = vst [vmem:[%s1198 + $0xc8] sm:%s1190] %v1251
                  %v1253 = vld [vmem:[%s1197 + $0x6c] sm:%s1190]
                  %1254 = vst [vmem:[%s1198 + $0xcc] sm:%s1190] %v1253
                  %v1255 = vld [vmem:[%s1197 + $0x70] sm:%s1190]
                  %1256 = vst [vmem:[%s1198 + $0xd0] sm:%s1190] %v1255
                  %v1257 = vld [vmem:[%s1197 + $0x74] sm:%s1190]
                  %1258 = vst [vmem:[%s1198 + $0xd4] sm:%s1190] %v1257
                  %v1259 = vld [vmem:[%s1197 + $0x78] sm:%s1190]
                  %1260 = vst [vmem:[%s1198 + $0xd8] sm:%s1190] %v1259
                  %v1261 = vld [vmem:[%s1197 + $0x7c] sm:%s1190]
                  %1262 = vst [vmem:[%s1198 + $0xdc] sm:%s1190] %v1261
                  %v1263 = vld [vmem:[%s1197 + $0x80] sm:%s1190]
                  %1264 = vst [vmem:[%s1198 + $0x100] sm:%s1190] %v1263
                  %v1265 = vld [vmem:[%s1197 + $0x84] sm:%s1190]
                  %1266 = vst [vmem:[%s1198 + $0x104] sm:%s1190] %v1265
                  %v1267 = vld [vmem:[%s1197 + $0x88] sm:%s1190]
                  %1268 = vst [vmem:[%s1198 + $0x108] sm:%s1190] %v1267
                  %v1269 = vld [vmem:[%s1197 + $0x8c] sm:%s1190]
                  %1270 = vst [vmem:[%s1198 + $0x10c] sm:%s1190] %v1269
                  %v1271 = vld [vmem:[%s1197 + $0x90] sm:%s1190]
                  %1272 = vst [vmem:[%s1198 + $0x110] sm:%s1190] %v1271
                  %v1273 = vld [vmem:[%s1197 + $0x94] sm:%s1190]
                  %1274 = vst [vmem:[%s1198 + $0x114] sm:%s1190] %v1273
                  %v1275 = vld [vmem:[%s1197 + $0x98] sm:%s1190]
                  %1276 = vst [vmem:[%s1198 + $0x118] sm:%s1190] %v1275
                  %v1277 = vld [vmem:[%s1197 + $0x9c] sm:%s1190]
                  %1278 = vst [vmem:[%s1198 + $0x11c] sm:%s1190] %v1277
                  %v1279 = vld [vmem:[%s1197 + $0xa0] sm:%s1190]
                  %1280 = vst [vmem:[%s1198 + $0x140] sm:%s1190] %v1279
                  %v1281 = vld [vmem:[%s1197 + $0xa4] sm:%s1190]
                  %1282 = vst [vmem:[%s1198 + $0x144] sm:%s1190] %v1281
                  %v1283 = vld [vmem:[%s1197 + $0xa8] sm:%s1190]
                  %1284 = vst [vmem:[%s1198 + $0x148] sm:%s1190] %v1283
                  %v1285 = vld [vmem:[%s1197 + $0xac] sm:%s1190]
                  %1286 = vst [vmem:[%s1198 + $0x14c] sm:%s1190] %v1285
                  %v1287 = vld [vmem:[%s1197 + $0xb0] sm:%s1190]
                  %1288 = vst [vmem:[%s1198 + $0x150] sm:%s1190] %v1287
                  %v1289 = vld [vmem:[%s1197 + $0xb4] sm:%s1190]
                  %1290 = vst [vmem:[%s1198 + $0x154] sm:%s1190] %v1289
                  %v1291 = vld [vmem:[%s1197 + $0xb8] sm:%s1190]
                  %1292 = vst [vmem:[%s1198 + $0x158] sm:%s1190] %v1291
                  %v1293 = vld [vmem:[%s1197 + $0xbc] sm:%s1190]
                  %1294 = vst [vmem:[%s1198 + $0x15c] sm:%s1190] %v1293
                $region87: #{graph_wavenet_forward.12} parent=74 // loop_footer
                  %s1196 = sadd.s32 1, %s1192
                $region88: #{graph_wavenet_forward.12} parent=74 // loop_footer_branch
                  %1191 = sbr.rel target = $region84
                $region89: #{graph_wavenet_forward.12} parent=74 // loop_exit
                  _
              $region75: #{graph_wavenet_forward.12} parent=59 // pred_fallthru
                _
            $region60: #{graph_wavenet_forward.12} parent=55 // pred_fallthru
              _
            // Predicated region
            $region61: #{graph_wavenet_forward.12} parent=55 // pred_check
              _
            $region62: #{graph_wavenet_forward.12} parent=55 // pred_check_branch
              %1072 = sbr.rel (0) target = $region64
            $region63: #{graph_wavenet_forward.12} parent=55 // pred_region
              %s1074 = ssub.s32 16, 1
              loop: start=0, step=1, limit=1
              $region65: #{graph_wavenet_forward.12} parent=63 // loop_pre_header
                _
              $region66: #{graph_wavenet_forward.12} parent=63 // loop_header
                %s1076 = sphi 0, %s1080
                %p1077 = scmp.ge.s32.totalorder %s1076, 1
                %s1081 = sphi %s1052, %s1052
                %s1082 = sphi %s1066, %s1066
              $region67: #{graph_wavenet_forward.12} parent=63 // loop_header_branch
                %1079 = sbr.rel (%p1077) target = $region71
              $region68: #{graph_wavenet_forward.12} parent=63 // loop_body
                %v1083 = vld [vmem:[%s1081] sm:%s1074]
                %1084 = vst [vmem:[%s1082] sm:%s1074] %v1083
                %v1085 = vld [vmem:[%s1081 + $0x4] sm:%s1074]
                %1086 = vst [vmem:[%s1082 + $0x4] sm:%s1074] %v1085
                %v1087 = vld [vmem:[%s1081 + $0x8] sm:%s1074]
                %1088 = vst [vmem:[%s1082 + $0x8] sm:%s1074] %v1087
                %v1089 = vld [vmem:[%s1081 + $0xc] sm:%s1074]
                %1090 = vst [vmem:[%s1082 + $0xc] sm:%s1074] %v1089
                %v1091 = vld [vmem:[%s1081 + $0x10] sm:%s1074]
                %1092 = vst [vmem:[%s1082 + $0x10] sm:%s1074] %v1091
                %v1093 = vld [vmem:[%s1081 + $0x14] sm:%s1074]
                %1094 = vst [vmem:[%s1082 + $0x14] sm:%s1074] %v1093
                %v1095 = vld [vmem:[%s1081 + $0x18] sm:%s1074]
                %1096 = vst [vmem:[%s1082 + $0x18] sm:%s1074] %v1095
                %v1097 = vld [vmem:[%s1081 + $0x1c] sm:%s1074]
                %1098 = vst [vmem:[%s1082 + $0x1c] sm:%s1074] %v1097
                %v1099 = vld [vmem:[%s1081 + $0x20] sm:%s1074]
                %1100 = vst [vmem:[%s1082 + $0x40] sm:%s1074] %v1099
                %v1101 = vld [vmem:[%s1081 + $0x24] sm:%s1074]
                %1102 = vst [vmem:[%s1082 + $0x44] sm:%s1074] %v1101
                %v1103 = vld [vmem:[%s1081 + $0x28] sm:%s1074]
                %1104 = vst [vmem:[%s1082 + $0x48] sm:%s1074] %v1103
                %v1105 = vld [vmem:[%s1081 + $0x2c] sm:%s1074]
                %1106 = vst [vmem:[%s1082 + $0x4c] sm:%s1074] %v1105
                %v1107 = vld [vmem:[%s1081 + $0x30] sm:%s1074]
                %1108 = vst [vmem:[%s1082 + $0x50] sm:%s1074] %v1107
                %v1109 = vld [vmem:[%s1081 + $0x34] sm:%s1074]
                %1110 = vst [vmem:[%s1082 + $0x54] sm:%s1074] %v1109
                %v1111 = vld [vmem:[%s1081 + $0x38] sm:%s1074]
                %1112 = vst [vmem:[%s1082 + $0x58] sm:%s1074] %v1111
                %v1113 = vld [vmem:[%s1081 + $0x3c] sm:%s1074]
                %1114 = vst [vmem:[%s1082 + $0x5c] sm:%s1074] %v1113
                %v1115 = vld [vmem:[%s1081 + $0x40] sm:%s1074]
                %1116 = vst [vmem:[%s1082 + $0x80] sm:%s1074] %v1115
                %v1117 = vld [vmem:[%s1081 + $0x44] sm:%s1074]
                %1118 = vst [vmem:[%s1082 + $0x84] sm:%s1074] %v1117
                %v1119 = vld [vmem:[%s1081 + $0x48] sm:%s1074]
                %1120 = vst [vmem:[%s1082 + $0x88] sm:%s1074] %v1119
                %v1121 = vld [vmem:[%s1081 + $0x4c] sm:%s1074]
                %1122 = vst [vmem:[%s1082 + $0x8c] sm:%s1074] %v1121
                %v1123 = vld [vmem:[%s1081 + $0x50] sm:%s1074]
                %1124 = vst [vmem:[%s1082 + $0x90] sm:%s1074] %v1123
                %v1125 = vld [vmem:[%s1081 + $0x54] sm:%s1074]
                %1126 = vst [vmem:[%s1082 + $0x94] sm:%s1074] %v1125
                %v1127 = vld [vmem:[%s1081 + $0x58] sm:%s1074]
                %1128 = vst [vmem:[%s1082 + $0x98] sm:%s1074] %v1127
                %v1129 = vld [vmem:[%s1081 + $0x5c] sm:%s1074]
                %1130 = vst [vmem:[%s1082 + $0x9c] sm:%s1074] %v1129
                %v1131 = vld [vmem:[%s1081 + $0x60] sm:%s1074]
                %1132 = vst [vmem:[%s1082 + $0xc0] sm:%s1074] %v1131
                %v1133 = vld [vmem:[%s1081 + $0x64] sm:%s1074]
                %1134 = vst [vmem:[%s1082 + $0xc4] sm:%s1074] %v1133
                %v1135 = vld [vmem:[%s1081 + $0x68] sm:%s1074]
                %1136 = vst [vmem:[%s1082 + $0xc8] sm:%s1074] %v1135
                %v1137 = vld [vmem:[%s1081 + $0x6c] sm:%s1074]
                %1138 = vst [vmem:[%s1082 + $0xcc] sm:%s1074] %v1137
                %v1139 = vld [vmem:[%s1081 + $0x70] sm:%s1074]
                %1140 = vst [vmem:[%s1082 + $0xd0] sm:%s1074] %v1139
                %v1141 = vld [vmem:[%s1081 + $0x74] sm:%s1074]
                %1142 = vst [vmem:[%s1082 + $0xd4] sm:%s1074] %v1141
                %v1143 = vld [vmem:[%s1081 + $0x78] sm:%s1074]
                %1144 = vst [vmem:[%s1082 + $0xd8] sm:%s1074] %v1143
                %v1145 = vld [vmem:[%s1081 + $0x7c] sm:%s1074]
                %1146 = vst [vmem:[%s1082 + $0xdc] sm:%s1074] %v1145
                %v1147 = vld [vmem:[%s1081 + $0x80] sm:%s1074]
                %1148 = vst [vmem:[%s1082 + $0x100] sm:%s1074] %v1147
                %v1149 = vld [vmem:[%s1081 + $0x84] sm:%s1074]
                %1150 = vst [vmem:[%s1082 + $0x104] sm:%s1074] %v1149
                %v1151 = vld [vmem:[%s1081 + $0x88] sm:%s1074]
                %1152 = vst [vmem:[%s1082 + $0x108] sm:%s1074] %v1151
                %v1153 = vld [vmem:[%s1081 + $0x8c] sm:%s1074]
                %1154 = vst [vmem:[%s1082 + $0x10c] sm:%s1074] %v1153
                %v1155 = vld [vmem:[%s1081 + $0x90] sm:%s1074]
                %1156 = vst [vmem:[%s1082 + $0x110] sm:%s1074] %v1155
                %v1157 = vld [vmem:[%s1081 + $0x94] sm:%s1074]
                %1158 = vst [vmem:[%s1082 + $0x114] sm:%s1074] %v1157
                %v1159 = vld [vmem:[%s1081 + $0x98] sm:%s1074]
                %1160 = vst [vmem:[%s1082 + $0x118] sm:%s1074] %v1159
                %v1161 = vld [vmem:[%s1081 + $0x9c] sm:%s1074]
                %1162 = vst [vmem:[%s1082 + $0x11c] sm:%s1074] %v1161
                %v1163 = vld [vmem:[%s1081 + $0xa0] sm:%s1074]
                %1164 = vst [vmem:[%s1082 + $0x140] sm:%s1074] %v1163
                %v1165 = vld [vmem:[%s1081 + $0xa4] sm:%s1074]
                %1166 = vst [vmem:[%s1082 + $0x144] sm:%s1074] %v1165
                %v1167 = vld [vmem:[%s1081 + $0xa8] sm:%s1074]
                %1168 = vst [vmem:[%s1082 + $0x148] sm:%s1074] %v1167
                %v1169 = vld [vmem:[%s1081 + $0xac] sm:%s1074]
                %1170 = vst [vmem:[%s1082 + $0x14c] sm:%s1074] %v1169
                %v1171 = vld [vmem:[%s1081 + $0xb0] sm:%s1074]
                %1172 = vst [vmem:[%s1082 + $0x150] sm:%s1074] %v1171
                %v1173 = vld [vmem:[%s1081 + $0xb4] sm:%s1074]
                %1174 = vst [vmem:[%s1082 + $0x154] sm:%s1074] %v1173
                %v1175 = vld [vmem:[%s1081 + $0xb8] sm:%s1074]
                %1176 = vst [vmem:[%s1082 + $0x158] sm:%s1074] %v1175
                %v1177 = vld [vmem:[%s1081 + $0xbc] sm:%s1074]
                %1178 = vst [vmem:[%s1082 + $0x15c] sm:%s1074] %v1177
              $region69: #{graph_wavenet_forward.12} parent=63 // loop_footer
                %s1080 = sadd.s32 1, %s1076
              $region70: #{graph_wavenet_forward.12} parent=63 // loop_footer_branch
                %1075 = sbr.rel target = $region66
              $region71: #{graph_wavenet_forward.12} parent=63 // loop_exit
                _
            $region64: #{graph_wavenet_forward.12} parent=55 // pred_fallthru
              _
          $region56: #{graph_wavenet_forward.12} parent=51 // pred_fallthru
            _
          %1295 = vnop
        $region52: #{graph_wavenet_forward.12} parent=39 // pred_fallthru
          _
      $region40: #{graph_wavenet_forward.12} parent=5 // pred_fallthru
        _
      %p1296 = scmp.le.s32.totalorder 2, %s14
      // Predicated region
      $region90: #{graph_wavenet_forward.12} parent=5 // pred_check
        %p1297 = pneg %p1296
      $region91: #{graph_wavenet_forward.12} parent=5 // pred_check_branch
        %1299 = sbr.rel (%p1297) target = $region93
      $region92: #{graph_wavenet_forward.12} parent=5 // pred_region
        %s1300 = ssub.s32 %s14, 2
        // Predicated region
        $region94: #{graph_wavenet_forward.12} parent=92 // pred_check
          %p1301 = pneg %p153
        $region95: #{graph_wavenet_forward.12} parent=92 // pred_check_branch
          %1303 = sbr.rel (%p1301) target = $region97
        $region96: #{graph_wavenet_forward.12} parent=92 // pred_region
          %s1304 = smul.u32 8, %s20
          %p1305 = scmp.lt.s32.totalorder %s1304, 15
          %s1306 = scalar_select %p1305, %s1304, 15
          %s1307 = smul.addr %s1306, 8
          %s1308 = scalar_lea.vmem %s5, %s1307
        $region97: #{graph_wavenet_forward.12} parent=92 // pred_fallthru
          _
        // Predicated region
        $region98: #{graph_wavenet_forward.12} parent=92 // pred_check
          %p1309 = pneg %p179
        $region99: #{graph_wavenet_forward.12} parent=92 // pred_check_branch
          %1311 = sbr.rel (%p1309) target = $region101
        $region100: #{graph_wavenet_forward.12} parent=92 // pred_region
          %s1312 = smul.u32 8, %s20
          %p1313 = scmp.lt.s32.totalorder %s1312, 15
          %s1314 = scalar_select %p1313, %s1312, 15
          %s1315 = smul.addr %s1314, 8
          %s1316 = scalar_lea.vmem %s6, %s1315
        $region101: #{graph_wavenet_forward.12} parent=92 // pred_fallthru
          _
        // Predicated region
        $region102: #{graph_wavenet_forward.12} parent=92 // pred_check
          %p1317 = pneg %p205
        $region103: #{graph_wavenet_forward.12} parent=92 // pred_check_branch
          %1319 = sbr.rel (%p1317) target = $region105
        $region104: #{graph_wavenet_forward.12} parent=92 // pred_region
          %s1320 = sand.u32 %s190, 1
          %s1321 = sand.u32 %s190, 1
          %s1322 = smul.addr %s1321, 192
          %s1323 = scalar_lea.vmem [#allocation2], %s1322
        $region105: #{graph_wavenet_forward.12} parent=92 // pred_fallthru
          _
      $region93: #{graph_wavenet_forward.12} parent=5 // pred_fallthru
        _
    $region6: #{graph_wavenet_forward.12} parent=1 // loop_footer
      %s18 = sadd.s32 1, %s14
    $region7: #{graph_wavenet_forward.12} parent=1 // loop_footer_branch
      %13 = sbr.rel target = $region3
    $region8: #{graph_wavenet_forward.12} parent=1 // loop_exit
      _

// kernel: graph_wavenet_forward.13
$region0: #{graph_wavenet_forward.13}
  #allocation0 [shape = 'u32[]', space=smem, size = 0x4, offset = 0x4, fixed_abs, tag = 'smem constant byte address 0x4 - core index']
  #allocation1 [shape = 'u32[72,128]{1,0:T(1,128)}', space=vmem, size = 0x9000, scoped, tag = 'internal scratch']
  %s0 = inlined_call_operand.vmem [shape: bf16[3,8,8], index: 0, kind: input, shape index: {}]
  %s1 = inlined_call_operand.vmem [shape: f32[8,256], index: 1, kind: input, shape index: {}]
  %s2 = inlined_call_operand.vmem [shape: bf16[6,8,256], index: 2, kind: input, shape index: {}]
  %s3 = inlined_call_operand.vmem [shape: f32[1,256], index: 3, kind: input, shape index: {}]
  %s4 = inlined_call_operand.vmem [shape: f32[1,256], index: 4, kind: input, shape index: {}]
  %s5 = inlined_call_operand.vmem [shape: f32[8,256], index: 5, kind: output, shape index: {}]
  %s6 = sld [smem:[#allocation0]]
  $region94: #{graph_wavenet_forward.13} parent=0
    _
  %s8 = ssub.s32 1, %s6
  %s9 = scalar_select 0, %s8, %s6
  $region1: #{graph_wavenet_forward.13} parent=0
    #allocation2 [shape = 'u8[24576]{0}', space=vmem, size = 0x6000, scoped, tag = 'input window, operand 2']
    loop: start=0, step=1, limit=4
    $region2: #{graph_wavenet_forward.13} parent=1 // loop_pre_header
      _
    $region3: #{graph_wavenet_forward.13} parent=1 // loop_header
      %s11 = sphi 0, %s15
      %p12 = scmp.ge.s32.totalorder %s11, 4
      %s19 = sphi 0, %s19
      %s21 = sphi 0, %s19
      %s22 = sphi 0, %s21
      %s36 = sphi 0, %s22
      %s42 = sphi 0, %s44
      %s45 = sphi 0, %s42
      %s46 = sphi 0, %s45
      %s62 = sphi 0, %s46
      %s68 = sphi 0, %s70
      %s71 = sphi 0, %s68
      %s72 = sphi 0, %s71
      %s88 = sphi 0, %s72
      %s94 = sphi 0, %s96
      %s97 = sphi 0, %s94
      %s98 = sphi 0, %s97
      %s114 = sphi 0, %s98
      %s120 = sphi 0, %s122
      %s123 = sphi 0, %s120
      %s124 = sphi 0, %s123
      %s140 = sphi 0, %s124
      %s146 = sphi 0, %s148
      %s149 = sphi 0, %s146
      %s150 = sphi 0, %s149
      %s166 = sphi 0, %s150
    $region4: #{graph_wavenet_forward.13} parent=1 // loop_header_branch
      %14 = sbr.rel (%p12) target = $region8
    $region5: #{graph_wavenet_forward.13} parent=1 // loop_body
      %s16 = ssub.s32 %s11, 1
      %s17 = ssub.s32 %s11, 2
      %s18 = sadd.s32 %s11, 1
      %s20 = sadd.s32 %s19, 1
      %p23 = scmp.eq.s32.totalorder %s11, 1
      %p24 = scmp.ne.s32.totalorder %s19, %s21
      %p25 = scmp.eq.s32.totalorder %s11, 0
      %p26 = por %p24, %p25
      %p27 = scmp.ne.s32.totalorder %s19, %s21
      %p28 = scmp.eq.s32.totalorder %s16, 1
      %p29 = por %p27, %p28
      %p30 = scmp.ne.s32.totalorder %s21, %s22
      %p31 = scmp.eq.s32.totalorder %s16, 0
      %p32 = por %p30, %p31
      %p33 = scmp.ne.s32.totalorder %s21, %s22
      %p34 = scmp.eq.s32.totalorder %s17, 1
      %p35 = por %p33, %p34
      %p37 = scmp.ne.s32.totalorder %s22, %s36
      %p38 = scmp.eq.s32.totalorder %s17, 0
      %p39 = por %p37, %p38
      %s40 = ssub.s32 %s11, %s18
      %p41 = scmp.eq.s32.totalorder %s40, 0
      %s43 = sadd.s32 %s42, 1
      %s44 = scalar_select %p41, %s42, %s43
      %p47 = pneg %p41
      %p48 = scmp.eq.s32.totalorder %s11, 1
      %p49 = por %p47, %p48
      %p50 = scmp.ne.s32.totalorder %s42, %s45
      %p51 = scmp.eq.s32.totalorder %s11, 0
      %p52 = por %p50, %p51
      %p53 = scmp.ne.s32.totalorder %s42, %s45
      %p54 = scmp.eq.s32.totalorder %s16, 1
      %p55 = por %p53, %p54
      %p56 = scmp.ne.s32.totalorder %s45, %s46
      %p57 = scmp.eq.s32.totalorder %s16, 0
      %p58 = por %p56, %p57
      %p59 = scmp.ne.s32.totalorder %s45, %s46
      %p60 = scmp.eq.s32.totalorder %s17, 1
      %p61 = por %p59, %p60
      %p63 = scmp.ne.s32.totalorder %s46, %s62
      %p64 = scmp.eq.s32.totalorder %s17, 0
      %p65 = por %p63, %p64
      %s66 = ssub.s32 %s11, %s18
      %p67 = scmp.eq.s32.totalorder %s66, 0
      %s69 = sadd.s32 %s68, 1
      %s70 = scalar_select %p67, %s68, %s69
      %p73 = pneg %p67
      %p74 = scmp.eq.s32.totalorder %s11, 1
      %p75 = por %p73, %p74
      %p76 = scmp.ne.s32.totalorder %s68, %s71
      %p77 = scmp.eq.s32.totalorder %s11, 0
      %p78 = por %p76, %p77
      %p79 = scmp.ne.s32.totalorder %s68, %s71
      %p80 = scmp.eq.s32.totalorder %s16, 1
      %p81 = por %p79, %p80
      %p82 = scmp.ne.s32.totalorder %s71, %s72
      %p83 = scmp.eq.s32.totalorder %s16, 0
      %p84 = por %p82, %p83
      %p85 = scmp.ne.s32.totalorder %s71, %s72
      %p86 = scmp.eq.s32.totalorder %s17, 1
      %p87 = por %p85, %p86
      %p89 = scmp.ne.s32.totalorder %s72, %s88
      %p90 = scmp.eq.s32.totalorder %s17, 0
      %p91 = por %p89, %p90
      %s92 = ssub.s32 %s11, %s18
      %p93 = scmp.eq.s32.totalorder %s92, 0
      %s95 = sadd.s32 %s94, 1
      %s96 = scalar_select %p93, %s94, %s95
      %p99 = pneg %p93
      %p100 = scmp.eq.s32.totalorder %s11, 1
      %p101 = por %p99, %p100
      %p102 = scmp.ne.s32.totalorder %s94, %s97
      %p103 = scmp.eq.s32.totalorder %s11, 0
      %p104 = por %p102, %p103
      %p105 = scmp.ne.s32.totalorder %s94, %s97
      %p106 = scmp.eq.s32.totalorder %s16, 1
      %p107 = por %p105, %p106
      %p108 = scmp.ne.s32.totalorder %s97, %s98
      %p109 = scmp.eq.s32.totalorder %s16, 0
      %p110 = por %p108, %p109
      %p111 = scmp.ne.s32.totalorder %s97, %s98
      %p112 = scmp.eq.s32.totalorder %s17, 1
      %p113 = por %p111, %p112
      %p115 = scmp.ne.s32.totalorder %s98, %s114
      %p116 = scmp.eq.s32.totalorder %s17, 0
      %p117 = por %p115, %p116
      %s118 = ssub.s32 %s11, %s18
      %p119 = scmp.eq.s32.totalorder %s118, 0
      %s121 = sadd.s32 %s120, 1
      %s122 = scalar_select %p119, %s120, %s121
      %p125 = pneg %p119
      %p126 = scmp.eq.s32.totalorder %s11, 1
      %p127 = por %p125, %p126
      %p128 = scmp.ne.s32.totalorder %s120, %s123
      %p129 = scmp.eq.s32.totalorder %s11, 0
      %p130 = por %p128, %p129
      %p131 = scmp.ne.s32.totalorder %s120, %s123
      %p132 = scmp.eq.s32.totalorder %s16, 1
      %p133 = por %p131, %p132
      %p134 = scmp.ne.s32.totalorder %s123, %s124
      %p135 = scmp.eq.s32.totalorder %s16, 0
      %p136 = por %p134, %p135
      %p137 = scmp.ne.s32.totalorder %s123, %s124
      %p138 = scmp.eq.s32.totalorder %s17, 1
      %p139 = por %p137, %p138
      %p141 = scmp.ne.s32.totalorder %s124, %s140
      %p142 = scmp.eq.s32.totalorder %s17, 0
      %p143 = por %p141, %p142
      %s144 = ssub.s32 %s11, %s18
      %p145 = scmp.eq.s32.totalorder %s144, 0
      %s147 = sadd.s32 %s146, 1
      %s148 = scalar_select %p145, %s146, %s147
      %p151 = pneg %p145
      %p152 = scmp.eq.s32.totalorder %s11, 1
      %p153 = por %p151, %p152
      %p154 = scmp.ne.s32.totalorder %s146, %s149
      %p155 = scmp.eq.s32.totalorder %s11, 0
      %p156 = por %p154, %p155
      %p157 = scmp.ne.s32.totalorder %s146, %s149
      %p158 = scmp.eq.s32.totalorder %s16, 1
      %p159 = por %p157, %p158
      %p160 = scmp.ne.s32.totalorder %s149, %s150
      %p161 = scmp.eq.s32.totalorder %s16, 0
      %p162 = por %p160, %p161
      %p163 = scmp.ne.s32.totalorder %s149, %s150
      %p164 = scmp.eq.s32.totalorder %s17, 1
      %p165 = por %p163, %p164
      %p167 = scmp.ne.s32.totalorder %s150, %s166
      %p168 = scmp.eq.s32.totalorder %s17, 0
      %p169 = por %p167, %p168
      %p170 = scmp.le.s32.totalorder 1, %s11
      %p171 = scmp.lt.s32.totalorder %s11, 3
      %p172 = pnand %p170, %p171
      %p173 = pneg %p172
      // Predicated region
      $region9: #{graph_wavenet_forward.13} parent=5 // pred_check
        _
      $region10: #{graph_wavenet_forward.13} parent=5 // pred_check_branch
        %175 = sbr.rel (%p172) target = $region12
      $region11: #{graph_wavenet_forward.13} parent=5 // pred_region
        %s176 = ssub.s32 %s11, 1
        // Predicated region
        $region13: #{graph_wavenet_forward.13} parent=11 // pred_check
          %p177 = pneg %p32
        $region14: #{graph_wavenet_forward.13} parent=11 // pred_check_branch
          %179 = sbr.rel (%p177) target = $region16
        $region15: #{graph_wavenet_forward.13} parent=11 // pred_region
          _
        $region16: #{graph_wavenet_forward.13} parent=11 // pred_fallthru
          _
      $region12: #{graph_wavenet_forward.13} parent=5 // pred_fallthru
        _
      %p180 = scmp.lt.s32.totalorder %s11, 2
      // Predicated region
      $region17: #{graph_wavenet_forward.13} parent=5 // pred_check
        %p181 = pneg %p180
      $region18: #{graph_wavenet_forward.13} parent=5 // pred_check_branch
        %183 = sbr.rel (%p181) target = $region20
      $region19: #{graph_wavenet_forward.13} parent=5 // pred_region
        // Predicated region
        $region21: #{graph_wavenet_forward.13} parent=19 // pred_check
          %p184 = pneg %p52
        $region22: #{graph_wavenet_forward.13} parent=19 // pred_check_branch
          %186 = sbr.rel (%p184) target = $region24
        $region23: #{graph_wavenet_forward.13} parent=19 // pred_region
          %p187 = scmp.lt.s32.totalorder %s11, 1
          %s188 = scalar_select %p187, %s11, 1
          %s189 = smul.addr %s188, 8
          %s190 = scalar_lea.vmem %s1, %s189
        $region24: #{graph_wavenet_forward.13} parent=19 // pred_fallthru
          _
        // Predicated region
        $region25: #{graph_wavenet_forward.13} parent=19 // pred_check
          %p191 = pneg %p78
        $region26: #{graph_wavenet_forward.13} parent=19 // pred_check_branch
          %193 = sbr.rel (%p191) target = $region28
        $region27: #{graph_wavenet_forward.13} parent=19 // pred_region
          %s194 = sand.u32 %s68, 1
          %s195 = sand.u32 %s68, 1
          %s196 = smul.addr %s195, 24
          %s197 = scalar_lea.vmem [#allocation2], %s196
          %s198 = smul.addr %s11, 4
          %s199 = scalar_lea.vmem %s2, %s198
          // Predicated region
          $region29: #{graph_wavenet_forward.13} parent=27 // pred_check
            _
          $region30: #{graph_wavenet_forward.13} parent=27 // pred_check_branch
            %201 = sbr.rel (0) target = $region32
          $region31: #{graph_wavenet_forward.13} parent=27 // pred_region
            // Predicated region
            $region33: #{graph_wavenet_forward.13} parent=31 // pred_check
              _
            $region34: #{graph_wavenet_forward.13} parent=31 // pred_check_branch
              %203 = sbr.rel target = $region36
            $region35: #{graph_wavenet_forward.13} parent=31 // pred_region
              // Predicated region
              $region48: #{graph_wavenet_forward.13} parent=35 // pred_check
                _
              $region49: #{graph_wavenet_forward.13} parent=35 // pred_check_branch
                %229 = sbr.rel (0) target = $region51
              $region50: #{graph_wavenet_forward.13} parent=35 // pred_region
                loop: start=0, step=1, limit=1
                $region52: #{graph_wavenet_forward.13} parent=50 // loop_pre_header
                  _
                $region53: #{graph_wavenet_forward.13} parent=50 // loop_header
                  %s231 = sphi 0, %s235
                  %p232 = scmp.ge.s32.totalorder %s231, 1
                  %s236 = sphi %s199, %s199
                  %s237 = sphi %s197, %s197
                $region54: #{graph_wavenet_forward.13} parent=50 // loop_header_branch
                  %234 = sbr.rel (%p232) target = $region58
                $region55: #{graph_wavenet_forward.13} parent=50 // loop_body
                  _
                $region56: #{graph_wavenet_forward.13} parent=50 // loop_footer
                  %s235 = sadd.s32 1, %s231
                $region57: #{graph_wavenet_forward.13} parent=50 // loop_footer_branch
                  %230 = sbr.rel target = $region53
                $region58: #{graph_wavenet_forward.13} parent=50 // loop_exit
                  _
                %s239 = ssub.s32 16, 1
                loop: start=0, step=1, limit=1
                $region59: #{graph_wavenet_forward.13} parent=50 // loop_pre_header
                  _
                $region60: #{graph_wavenet_forward.13} parent=50 // loop_header
                  %s241 = sphi 0, %s245
                  %p242 = scmp.ge.s32.totalorder %s241, 1
                  %s246 = sphi %s199, %s199
                  %s247 = sphi %s197, %s197
                $region61: #{graph_wavenet_forward.13} parent=50 // loop_header_branch
                  %244 = sbr.rel (%p242) target = $region65
                $region62: #{graph_wavenet_forward.13} parent=50 // loop_body
                  %v248 = vld [vmem:[%s246] sm:%s239]
                  %249 = vst [vmem:[%s247] sm:%s239] %v248
                  %v250 = vld [vmem:[%s246 + $0x8] sm:%s239]
                  %251 = vst [vmem:[%s247 + $0x4] sm:%s239] %v250
                  %v252 = vld [vmem:[%s246 + $0x10] sm:%s239]
                  %253 = vst [vmem:[%s247 + $0x8] sm:%s239] %v252
                  %v254 = vld [vmem:[%s246 + $0x18] sm:%s239]
                  %255 = vst [vmem:[%s247 + $0xc] sm:%s239] %v254
                  %v256 = vld [vmem:[%s246 + $0x20] sm:%s239]
                  %257 = vst [vmem:[%s247 + $0x10] sm:%s239] %v256
                  %v258 = vld [vmem:[%s246 + $0x28] sm:%s239]
                  %259 = vst [vmem:[%s247 + $0x14] sm:%s239] %v258
                $region63: #{graph_wavenet_forward.13} parent=50 // loop_footer
                  %s245 = sadd.s32 1, %s241
                $region64: #{graph_wavenet_forward.13} parent=50 // loop_footer_branch
                  %240 = sbr.rel target = $region60
                $region65: #{graph_wavenet_forward.13} parent=50 // loop_exit
                  _
              $region51: #{graph_wavenet_forward.13} parent=35 // pred_fallthru
                _
            $region36: #{graph_wavenet_forward.13} parent=31 // pred_fallthru
              _
            // Predicated region
            $region37: #{graph_wavenet_forward.13} parent=31 // pred_check
              _
            $region38: #{graph_wavenet_forward.13} parent=31 // pred_check_branch
              %205 = sbr.rel (0) target = $region40
            $region39: #{graph_wavenet_forward.13} parent=31 // pred_region
              %s207 = ssub.s32 16, 1
              loop: start=0, step=1, limit=1
              $region41: #{graph_wavenet_forward.13} parent=39 // loop_pre_header
                _
              $region42: #{graph_wavenet_forward.13} parent=39 // loop_header
                %s209 = sphi 0, %s213
                %p210 = scmp.ge.s32.totalorder %s209, 1
                %s214 = sphi %s199, %s199
                %s215 = sphi %s197, %s197
              $region43: #{graph_wavenet_forward.13} parent=39 // loop_header_branch
                %212 = sbr.rel (%p210) target = $region47
              $region44: #{graph_wavenet_forward.13} parent=39 // loop_body
                %v216 = vld [vmem:[%s214] sm:%s207]
                %217 = vst [vmem:[%s215] sm:%s207] %v216
                %v218 = vld [vmem:[%s214 + $0x8] sm:%s207]
                %219 = vst [vmem:[%s215 + $0x4] sm:%s207] %v218
                %v220 = vld [vmem:[%s214 + $0x10] sm:%s207]
                %221 = vst [vmem:[%s215 + $0x8] sm:%s207] %v220
                %v222 = vld [vmem:[%s214 + $0x18] sm:%s207]
                %223 = vst [vmem:[%s215 + $0xc] sm:%s207] %v222
                %v224 = vld [vmem:[%s214 + $0x20] sm:%s207]
                %225 = vst [vmem:[%s215 + $0x10] sm:%s207] %v224
                %v226 = vld [vmem:[%s214 + $0x28] sm:%s207]
                %227 = vst [vmem:[%s215 + $0x14] sm:%s207] %v226
              $region45: #{graph_wavenet_forward.13} parent=39 // loop_footer
                %s213 = sadd.s32 1, %s209
              $region46: #{graph_wavenet_forward.13} parent=39 // loop_footer_branch
                %208 = sbr.rel target = $region42
              $region47: #{graph_wavenet_forward.13} parent=39 // loop_exit
                _
            $region40: #{graph_wavenet_forward.13} parent=31 // pred_fallthru
              _
          $region32: #{graph_wavenet_forward.13} parent=27 // pred_fallthru
            _
          %260 = vnop
        $region28: #{graph_wavenet_forward.13} parent=19 // pred_fallthru
          _
        // Predicated region
        $region66: #{graph_wavenet_forward.13} parent=19 // pred_check
          %p261 = pneg %p104
        $region67: #{graph_wavenet_forward.13} parent=19 // pred_check_branch
          %263 = sbr.rel (%p261) target = $region69
        $region68: #{graph_wavenet_forward.13} parent=19 // pred_region
          %p264 = scmp.lt.s32.totalorder %s11, 1
          %s265 = scalar_select %p264, %s11, 1
          %s266 = scalar_lea.vmem %s3, %s265
        $region69: #{graph_wavenet_forward.13} parent=19 // pred_fallthru
          _
        // Predicated region
        $region70: #{graph_wavenet_forward.13} parent=19 // pred_check
          %p267 = pneg %p130
        $region71: #{graph_wavenet_forward.13} parent=19 // pred_check_branch
          %269 = sbr.rel (%p267) target = $region73
        $region72: #{graph_wavenet_forward.13} parent=19 // pred_region
          %p270 = scmp.lt.s32.totalorder %s11, 1
          %s271 = scalar_select %p270, %s11, 1
          %s272 = scalar_lea.vmem %s4, %s271
        $region73: #{graph_wavenet_forward.13} parent=19 // pred_fallthru
          _
      $region20: #{graph_wavenet_forward.13} parent=5 // pred_fallthru
        _
      %p273 = scmp.le.s32.totalorder 1, %s11
      %p274 = scmp.lt.s32.totalorder %s11, 3
      %p275 = pnand %p273, %p274
      %p276 = pneg %p275
      // Predicated region
      $region74: #{graph_wavenet_forward.13} parent=5 // pred_check
        _
      $region75: #{graph_wavenet_forward.13} parent=5 // pred_check_branch
        %278 = sbr.rel (%p275) target = $region77
      $region76: #{graph_wavenet_forward.13} parent=5 // pred_region
        %s279 = ssub.s32 %s11, 1
        %s280 = sand.u32 %s71, 1
        %s281 = sand.u32 %s71, 1
        %s282 = smul.addr %s281, 24
        %s283 = scalar_lea.vmem [#allocation2], %s282
        // Predicated region
        $region78: #{graph_wavenet_forward.13} parent=76 // pred_check
          %p284 = pneg %p84
        $region79: #{graph_wavenet_forward.13} parent=76 // pred_check_branch
          %286 = sbr.rel (%p284) target = $region81
        $region80: #{graph_wavenet_forward.13} parent=76 // pred_region
          _
        $region81: #{graph_wavenet_forward.13} parent=76 // pred_fallthru
          _
        %p287 = pneg %p32
        %p288 = pneg %p29
        %p289 = scmp.lt.s32.totalorder %s16, 1
        %s290 = scalar_select %p289, %s16, 1
        %s291 = smul.addr %s290, 8
        %s292 = scalar_lea.vmem %s1, %s291
        %p293 = pneg %p58
        %p294 = pneg %p55
        %s295 = sand.u32 %s71, 1
        %s296 = sand.u32 %s71, 1
        %s297 = smul.addr %s296, 24
        %s298 = scalar_lea.vmem [#allocation2], %s297
        %p299 = pneg %p84
        %p300 = pneg %p81
        %p301 = scmp.lt.s32.totalorder %s16, 1
        %s302 = scalar_select %p301, %s16, 1
        %s303 = scalar_lea.vmem %s3, %s302
        %p304 = pneg %p110
        %p305 = pneg %p107
        %p306 = scmp.lt.s32.totalorder %s16, 1
        %s307 = scalar_select %p306, %s16, 1
        %s308 = scalar_lea.vmem %s4, %s307
        %p309 = pneg %p136
        %p310 = pneg %p133
        %p311 = pneg %p162
        %p312 = pneg %p159
        %p313 = scmp.lt.s32.totalorder %s16, 1
        %s314 = scalar_select %p313, %s16, 1
        %s315 = smul.addr %s314, 8
        %s316 = scalar_lea.vmem %s5, %s315
        %p317 = scmp.lt.s32.totalorder %s16, 1
        %s318 = scalar_select %p317, %s16, 1
        %s319 = smul.addr %s318, 8
        %s320 = scalar_lea.vmem %s1, %s319
        %p321 = scmp.lt.s32.totalorder %s16, 1
        %s322 = scalar_select %p321, %s16, 1
        %s323 = scalar_lea.vmem %s3, %s322
        %p324 = scmp.lt.s32.totalorder %s16, 1
        %s325 = scalar_select %p324, %s16, 1
        %s326 = scalar_lea.vmem %s4, %s325
        %p327 = scmp.lt.s32.totalorder %s16, 1
        %s328 = scalar_select %p327, %s16, 1
        %s329 = smul.addr %s328, 8
        %s330 = scalar_lea.vmem %s5, %s329
        %v332 = vld [vmem:[%s320] sm:$0xff]
        %v333 = vld [vmem:[%s0] sm:$0xf]
        %s334 = scalar_lea.vmem %s283, 4 [#allocation2]
        %v335 = vld [vmem:[%s334] sm:$0xf]
        %v336 = vld [vmem:[%s283] sm:$0xf]
        %vm337 = vcmask 64512
        %v339 = vsel %vm337, %v333, 0
        %vm341 = vcmask 1043456
        %v343 = vsel %vm341, %v335, 0
        %345 = vmatpush.bf16.msra.mxu0 0
        %346 = vmatpush.bf16.msra.mxu0 0
        %347 = vmatpush.bf16.msra.mxu0 0
        %348 = vmatpush.bf16.msra.mxu0 0
        %349 = vmatpush.bf16.msra.mxu0 0
        %350 = vmatpush.bf16.msra.mxu0 0
        %351 = vmatpush.bf16.msra.mxu0 0
        %352 = vmatpush.bf16.msra.mxu0 %v343
        %353 = vmatmul.bf16.gmra.mxu0 %v339
        %v354 = vpop.f32.mrf.mxu0
        %v355 = vadd.f32 0.0, %v354
        %v356 = vpop.f32.mrf.mxu0
        %357 = vdwg.mxu0
        %v358 = vunpack.c.l.bf16 %v336
        %v359 = vadd.f32 %v358, %v355
        %v360 = vpack.c.bf16 %v359, %v359
        %v362 = vsel %vm341, %v360, 0
        %364 = vmatpush.bf16.msra.mxu0 0
        %365 = vmatpush.bf16.msra.mxu0 0
        %366 = vmatpush.bf16.msra.mxu0 0
        %367 = vmatpush.bf16.msra.mxu0 0
        %368 = vmatpush.bf16.msra.mxu0 0
        %369 = vmatpush.bf16.msra.mxu0 0
        %370 = vmatpush.bf16.msra.mxu0 0
        %371 = vmatpush.bf16.msra.mxu0 %v362
        %372 = vmatmul.bf16.gmra.mxu0 %v339
        %v373 = vpop.f32.mrf.mxu0
        %v374 = vadd.f32 0.0, %v373
        %v375 = vpop.f32.mrf.mxu0
        %376 = vdwg.mxu0
        %v377 = vadd.f32 %v332, %v374
        %s378 = scalar_lea.vmem %s0, 4
        %v379 = vld [vmem:[%s378] sm:$0xf]
        %s380 = scalar_lea.vmem %s283, 12 [#allocation2]
        %v381 = vld [vmem:[%s380] sm:$0xf]
        %s382 = scalar_lea.vmem %s283, 8 [#allocation2]
        %v383 = vld [vmem:[%s382] sm:$0xf]
        %v385 = vsel %vm337, %v379, 0
        %v388 = vsel %vm341, %v381, 0
        %390 = vmatpush.bf16.msra.mxu0 0
        %391 = vmatpush.bf16.msra.mxu0 0
        %392 = vmatpush.bf16.msra.mxu0 0
        %393 = vmatpush.bf16.msra.mxu0 0
        %394 = vmatpush.bf16.msra.mxu0 0
        %395 = vmatpush.bf16.msra.mxu0 0
        %396 = vmatpush.bf16.msra.mxu0 0
        %397 = vmatpush.bf16.msra.mxu0 %v388
        %398 = vmatmul.bf16.gmra.mxu0 %v385
        %v399 = vpop.f32.mrf.mxu0
        %v400 = vadd.f32 0.0, %v399
        %v401 = vpop.f32.mrf.mxu0
        %402 = vdwg.mxu0
        %v403 = vunpack.c.l.bf16 %v383
        %v404 = vadd.f32 %v403, %v400
        %v405 = vpack.c.bf16 %v404, %v404
        %v407 = vsel %vm341, %v405, 0
        %409 = vmatpush.bf16.msra.mxu0 0
        %410 = vmatpush.bf16.msra.mxu0 0
        %411 = vmatpush.bf16.msra.mxu0 0
        %412 = vmatpush.bf16.msra.mxu0 0
        %413 = vmatpush.bf16.msra.mxu0 0
        %414 = vmatpush.bf16.msra.mxu0 0
        %415 = vmatpush.bf16.msra.mxu0 0
        %416 = vmatpush.bf16.msra.mxu0 %v407
        %417 = vmatmul.bf16.gmra.mxu0 %v385
        %v418 = vpop.f32.mrf.mxu0
        %v419 = vadd.f32 0.0, %v418
        %v420 = vpop.f32.mrf.mxu0
        %421 = vdwg.mxu0
        %v422 = vadd.f32 %v377, %v419
        %s423 = scalar_lea.vmem %s0, 8
        %v424 = vld [vmem:[%s423] sm:$0xf]
        %s425 = scalar_lea.vmem %s283, 20 [#allocation2]
        %v426 = vld [vmem:[%s425] sm:$0xf]
        %s427 = scalar_lea.vmem %s283, 16 [#allocation2]
        %v428 = vld [vmem:[%s427] sm:$0xf]
        %v430 = vsel %vm337, %v424, 0
        %v433 = vsel %vm341, %v426, 0
        %435 = vmatpush.bf16.msra.mxu0 0
        %436 = vmatpush.bf16.msra.mxu0 0
        %437 = vmatpush.bf16.msra.mxu0 0
        %438 = vmatpush.bf16.msra.mxu0 0
        %439 = vmatpush.bf16.msra.mxu0 0
        %440 = vmatpush.bf16.msra.mxu0 0
        %441 = vmatpush.bf16.msra.mxu0 0
        %442 = vmatpush.bf16.msra.mxu0 %v433
        %443 = vmatmul.bf16.gmra.mxu0 %v430
        %v444 = vpop.f32.mrf.mxu0
        %v445 = vadd.f32 0.0, %v444
        %v446 = vpop.f32.mrf.mxu0
        %447 = vdwg.mxu0
        %v448 = vunpack.c.l.bf16 %v428
        %v449 = vadd.f32 %v448, %v445
        %v450 = vpack.c.bf16 %v449, %v449
        %v452 = vsel %vm341, %v450, 0
        %454 = vmatpush.bf16.msra.mxu0 0
        %455 = vmatpush.bf16.msra.mxu0 0
        %456 = vmatpush.bf16.msra.mxu0 0
        %457 = vmatpush.bf16.msra.mxu0 0
        %458 = vmatpush.bf16.msra.mxu0 0
        %459 = vmatpush.bf16.msra.mxu0 0
        %460 = vmatpush.bf16.msra.mxu0 0
        %461 = vmatpush.bf16.msra.mxu0 %v452
        %462 = vmatmul.bf16.gmra.mxu0 %v430
        %v463 = vpop.f32.mrf.mxu0
        %v464 = vadd.f32 0.0, %v463
        %v465 = vpop.f32.mrf.mxu0
        %466 = vdwg.mxu0
        %v467 = vadd.f32 %v422, %v464
        %v468 = vld [vmem:[%s323] sm:$0x1]
        %v470 = vperm.slane %v468, 0
        %v472 = vmul.f32 %v467, %v470
        %v473 = vld [vmem:[%s326] sm:$0x1]
        %v475 = vperm.slane %v473, 0
        %v477 = vadd.f32 %v472, %v475
        %478 = vst [vmem:[%s330] sm:$0xff] %v477
        %p479 = scmp.lt.s32.totalorder %s16, 1
        %s480 = scalar_select %p479, %s16, 1
        %s481 = smul.addr %s480, 8
        %s482 = scalar_lea.vmem %s5, %s481
        // Predicated region
        $region82: #{graph_wavenet_forward.13} parent=76 // pred_check
          %p483 = pneg %p159
        $region83: #{graph_wavenet_forward.13} parent=76 // pred_check_branch
          %485 = sbr.rel (%p483) target = $region85
        $region84: #{graph_wavenet_forward.13} parent=76 // pred_region
          _
        $region85: #{graph_wavenet_forward.13} parent=76 // pred_fallthru
          _
      $region77: #{graph_wavenet_forward.13} parent=5 // pred_fallthru
        _
      %p486 = scmp.le.s32.totalorder 2, %s11
      // Predicated region
      $region86: #{graph_wavenet_forward.13} parent=5 // pred_check
        %p487 = pneg %p486
      $region87: #{graph_wavenet_forward.13} parent=5 // pred_check_branch
        %489 = sbr.rel (%p487) target = $region89
      $region88: #{graph_wavenet_forward.13} parent=5 // pred_region
        %s490 = ssub.s32 %s11, 2
        // Predicated region
        $region90: #{graph_wavenet_forward.13} parent=88 // pred_check
          %p491 = pneg %p165
        $region91: #{graph_wavenet_forward.13} parent=88 // pred_check_branch
          %493 = sbr.rel (%p491) target = $region93
        $region92: #{graph_wavenet_forward.13} parent=88 // pred_region
          %p494 = scmp.lt.s32.totalorder %s17, 1
          %s495 = scalar_select %p494, %s17, 1
          %s496 = smul.addr %s495, 8
          %s497 = scalar_lea.vmem %s5, %s496
        $region93: #{graph_wavenet_forward.13} parent=88 // pred_fallthru
          _
      $region89: #{graph_wavenet_forward.13} parent=5 // pred_fallthru
        _
    $region6: #{graph_wavenet_forward.13} parent=1 // loop_footer
      %s15 = sadd.s32 1, %s11
    $region7: #{graph_wavenet_forward.13} parent=1 // loop_footer_branch
      %10 = sbr.rel target = $region3
    $region8: #{graph_wavenet_forward.13} parent=1 // loop_exit
      _

// kernel: graph_wavenet_forward.16
$region0: #{graph_wavenet_forward.16}
  #allocation0 [shape = 'u32[]', space=smem, size = 0x4, offset = 0x4, fixed_abs, tag = 'smem constant byte address 0x4 - core index']
  #allocation1 [shape = 'u32[72,128]{1,0:T(1,128)}', space=vmem, size = 0x9000, scoped, tag = 'internal scratch']
  %s0 = inlined_call_operand.vmem [shape: f32[128,16], index: 0, kind: input, shape index: {}]
  %s1 = inlined_call_operand.vmem [shape: f32[128,32], index: 1, kind: input, shape index: {}, may-alias: {1,6}]
  %s2 = inlined_call_operand.vmem [shape: bf16[32,32], index: 2, kind: input, shape index: {}]
  %s3 = inlined_call_operand.vmem [shape: f32[1,32], index: 3, kind: input, shape index: {}]
  %s4 = inlined_call_operand.vmem [shape: bf16[16,144], index: 4, kind: input, shape index: {}]
  %s5 = inlined_call_operand.vmem [shape: f32[1,144], index: 5, kind: input, shape index: {}]
  %s6 = inlined_call_operand.vmem [shape: f32[128,32], index: 6, kind: output, shape index: {0}, may-alias: {1,6}]
  %s7 = inlined_call_operand.vmem [shape: f32[128,16], index: 7, kind: output, shape index: {1}]
  %s8 = inlined_call_operand.vmem [shape: bf16[6,128,16], index: 8, kind: output, shape index: {2}]
  %9 = xla_tuple %s6, %s7, %s8
  %s10 = sld [smem:[#allocation0]]
  $region110: #{graph_wavenet_forward.16} parent=0
    _
  %s12 = ssub.s32 1, %s10
  %s13 = scalar_select 0, %s12, %s10
  $region1: #{graph_wavenet_forward.16} parent=0
    #allocation2 [shape = 'u8[196608]{0}', space=vmem, size = 0x30000, scoped, tag = 'output window, operand 2']
    loop: start=0, step=1, limit=4
    $region2: #{graph_wavenet_forward.16} parent=1 // loop_pre_header
      _
    $region3: #{graph_wavenet_forward.16} parent=1 // loop_header
      %s15 = sphi 0, %s19
      %p16 = scmp.ge.s32.totalorder %s15, 4
      %s25 = sphi 0, %s27
      %s28 = sphi 0, %s25
      %s29 = sphi 0, %s28
      %s45 = sphi 0, %s29
      %s51 = sphi 0, %s53
      %s54 = sphi 0, %s51
      %s55 = sphi 0, %s54
      %s71 = sphi 0, %s55
      %s75 = sphi 0, %s75
      %s77 = sphi 0, %s75
      %s78 = sphi 0, %s77
      %s92 = sphi 0, %s78
      %s96 = sphi 0, %s96
      %s98 = sphi 0, %s96
      %s99 = sphi 0, %s98
      %s113 = sphi 0, %s99
      %s117 = sphi 0, %s117
      %s119 = sphi 0, %s117
      %s120 = sphi 0, %s119
      %s134 = sphi 0, %s120
      %s138 = sphi 0, %s138
      %s140 = sphi 0, %s138
      %s141 = sphi 0, %s140
      %s155 = sphi 0, %s141
      %s161 = sphi 0, %s163
      %s164 = sphi 0, %s161
      %s165 = sphi 0, %s164
      %s181 = sphi 0, %s165
      %s187 = sphi 0, %s189
      %s190 = sphi 0, %s187
      %s191 = sphi 0, %s190
      %s207 = sphi 0, %s191
      %s213 = sphi 0, %s215
      %s216 = sphi 0, %s213
      %s217 = sphi 0, %s216
      %s233 = sphi 0, %s217
    $region4: #{graph_wavenet_forward.16} parent=1 // loop_header_branch
      %18 = sbr.rel (%p16) target = $region8
    $region5: #{graph_wavenet_forward.16} parent=1 // loop_body
      %s20 = ssub.s32 %s15, 1
      %s21 = ssub.s32 %s15, 2
      %s22 = sadd.s32 %s15, 1
      %s23 = ssub.s32 %s15, %s22
      %p24 = scmp.eq.s32.totalorder %s23, 0
      %s26 = sadd.s32 %s25, 1
      %s27 = scalar_select %p24, %s25, %s26
      %p30 = pneg %p24
      %p31 = scmp.eq.s32.totalorder %s15, 1
      %p32 = por %p30, %p31
      %p33 = scmp.ne.s32.totalorder %s25, %s28
      %p34 = scmp.eq.s32.totalorder %s15, 0
      %p35 = por %p33, %p34
      %p36 = scmp.ne.s32.totalorder %s25, %s28
      %p37 = scmp.eq.s32.totalorder %s20, 1
      %p38 = por %p36, %p37
      %p39 = scmp.ne.s32.totalorder %s28, %s29
      %p40 = scmp.eq.s32.totalorder %s20, 0
      %p41 = por %p39, %p40
      %p42 = scmp.ne.s32.totalorder %s28, %s29
      %p43 = scmp.eq.s32.totalorder %s21, 1
      %p44 = por %p42, %p43
      %p46 = scmp.ne.s32.totalorder %s29, %s45
      %p47 = scmp.eq.s32.totalorder %s21, 0
      %p48 = por %p46, %p47
      %s49 = ssub.s32 %s15, %s22
      %p50 = scmp.eq.s32.totalorder %s49, 0
      %s52 = sadd.s32 %s51, 1
      %s53 = scalar_select %p50, %s51, %s52
      %p56 = pneg %p50
      %p57 = scmp.eq.s32.totalorder %s15, 1
      %p58 = por %p56, %p57
      %p59 = scmp.ne.s32.totalorder %s51, %s54
      %p60 = scmp.eq.s32.totalorder %s15, 0
      %p61 = por %p59, %p60
      %p62 = scmp.ne.s32.totalorder %s51, %s54
      %p63 = scmp.eq.s32.totalorder %s20, 1
      %p64 = por %p62, %p63
      %p65 = scmp.ne.s32.totalorder %s54, %s55
      %p66 = scmp.eq.s32.totalorder %s20, 0
      %p67 = por %p65, %p66
      %p68 = scmp.ne.s32.totalorder %s54, %s55
      %p69 = scmp.eq.s32.totalorder %s21, 1
      %p70 = por %p68, %p69
      %p72 = scmp.ne.s32.totalorder %s55, %s71
      %p73 = scmp.eq.s32.totalorder %s21, 0
      %p74 = por %p72, %p73
      %s76 = sadd.s32 %s75, 1
      %p79 = scmp.eq.s32.totalorder %s15, 1
      %p80 = scmp.ne.s32.totalorder %s75, %s77
      %p81 = scmp.eq.s32.totalorder %s15, 0
      %p82 = por %p80, %p81
      %p83 = scmp.ne.s32.totalorder %s75, %s77
      %p84 = scmp.eq.s32.totalorder %s20, 1
      %p85 = por %p83, %p84
      %p86 = scmp.ne.s32.totalorder %s77, %s78
      %p87 = scmp.eq.s32.totalorder %s20, 0
      %p88 = por %p86, %p87
      %p89 = scmp.ne.s32.totalorder %s77, %s78
      %p90 = scmp.eq.s32.totalorder %s21, 1
      %p91 = por %p89, %p90
      %p93 = scmp.ne.s32.totalorder %s78, %s92
      %p94 = scmp.eq.s32.totalorder %s21, 0
      %p95 = por %p93, %p94
      %s97 = sadd.s32 %s96, 1
      %p100 = scmp.eq.s32.totalorder %s15, 1
      %p101 = scmp.ne.s32.totalorder %s96, %s98
      %p102 = scmp.eq.s32.totalorder %s15, 0
      %p103 = por %p101, %p102
      %p104 = scmp.ne.s32.totalorder %s96, %s98
      %p105 = scmp.eq.s32.totalorder %s20, 1
      %p106 = por %p104, %p105
      %p107 = scmp.ne.s32.totalorder %s98, %s99
      %p108 = scmp.eq.s32.totalorder %s20, 0
      %p109 = por %p107, %p108
      %p110 = scmp.ne.s32.totalorder %s98, %s99
      %p111 = scmp.eq.s32.totalorder %s21, 1
      %p112 = por %p110, %p111
      %p114 = scmp.ne.s32.totalorder %s99, %s113
      %p115 = scmp.eq.s32.totalorder %s21, 0
      %p116 = por %p114, %p115
      %s118 = sadd.s32 %s117, 1
      %p121 = scmp.eq.s32.totalorder %s15, 1
      %p122 = scmp.ne.s32.totalorder %s117, %s119
      %p123 = scmp.eq.s32.totalorder %s15, 0
      %p124 = por %p122, %p123
      %p125 = scmp.ne.s32.totalorder %s117, %s119
      %p126 = scmp.eq.s32.totalorder %s20, 1
      %p127 = por %p125, %p126
      %p128 = scmp.ne.s32.totalorder %s119, %s120
      %p129 = scmp.eq.s32.totalorder %s20, 0
      %p130 = por %p128, %p129
      %p131 = scmp.ne.s32.totalorder %s119, %s120
      %p132 = scmp.eq.s32.totalorder %s21, 1
      %p133 = por %p131, %p132
      %p135 = scmp.ne.s32.totalorder %s120, %s134
      %p136 = scmp.eq.s32.totalorder %s21, 0
      %p137 = por %p135, %p136
      %s139 = sadd.s32 %s138, 1
      %p142 = scmp.eq.s32.totalorder %s15, 1
      %p143 = scmp.ne.s32.totalorder %s138, %s140
      %p144 = scmp.eq.s32.totalorder %s15, 0
      %p145 = por %p143, %p144
      %p146 = scmp.ne.s32.totalorder %s138, %s140
      %p147 = scmp.eq.s32.totalorder %s20, 1
      %p148 = por %p146, %p147
      %p149 = scmp.ne.s32.totalorder %s140, %s141
      %p150 = scmp.eq.s32.totalorder %s20, 0
      %p151 = por %p149, %p150
      %p152 = scmp.ne.s32.totalorder %s140, %s141
      %p153 = scmp.eq.s32.totalorder %s21, 1
      %p154 = por %p152, %p153
      %p156 = scmp.ne.s32.totalorder %s141, %s155
      %p157 = scmp.eq.s32.totalorder %s21, 0
      %p158 = por %p156, %p157
      %s159 = ssub.s32 %s15, %s22
      %p160 = scmp.eq.s32.totalorder %s159, 0
      %s162 = sadd.s32 %s161, 1
      %s163 = scalar_select %p160, %s161, %s162
      %p166 = pneg %p160
      %p167 = scmp.eq.s32.totalorder %s15, 1
      %p168 = por %p166, %p167
      %p169 = scmp.ne.s32.totalorder %s161, %s164
      %p170 = scmp.eq.s32.totalorder %s15, 0
      %p171 = por %p169, %p170
      %p172 = scmp.ne.s32.totalorder %s161, %s164
      %p173 = scmp.eq.s32.totalorder %s20, 1
      %p174 = por %p172, %p173
      %p175 = scmp.ne.s32.totalorder %s164, %s165
      %p176 = scmp.eq.s32.totalorder %s20, 0
      %p177 = por %p175, %p176
      %p178 = scmp.ne.s32.totalorder %s164, %s165
      %p179 = scmp.eq.s32.totalorder %s21, 1
      %p180 = por %p178, %p179
      %p182 = scmp.ne.s32.totalorder %s165, %s181
      %p183 = scmp.eq.s32.totalorder %s21, 0
      %p184 = por %p182, %p183
      %s185 = ssub.s32 %s15, %s22
      %p186 = scmp.eq.s32.totalorder %s185, 0
      %s188 = sadd.s32 %s187, 1
      %s189 = scalar_select %p186, %s187, %s188
      %p192 = pneg %p186
      %p193 = scmp.eq.s32.totalorder %s15, 1
      %p194 = por %p192, %p193
      %p195 = scmp.ne.s32.totalorder %s187, %s190
      %p196 = scmp.eq.s32.totalorder %s15, 0
      %p197 = por %p195, %p196
      %p198 = scmp.ne.s32.totalorder %s187, %s190
      %p199 = scmp.eq.s32.totalorder %s20, 1
      %p200 = por %p198, %p199
      %p201 = scmp.ne.s32.totalorder %s190, %s191
      %p202 = scmp.eq.s32.totalorder %s20, 0
      %p203 = por %p201, %p202
      %p204 = scmp.ne.s32.totalorder %s190, %s191
      %p205 = scmp.eq.s32.totalorder %s21, 1
      %p206 = por %p204, %p205
      %p208 = scmp.ne.s32.totalorder %s191, %s207
      %p209 = scmp.eq.s32.totalorder %s21, 0
      %p210 = por %p208, %p209
      %s211 = ssub.s32 %s15, %s22
      %p212 = scmp.eq.s32.totalorder %s211, 0
      %s214 = sadd.s32 %s213, 1
      %s215 = scalar_select %p212, %s213, %s214
      %p218 = pneg %p212
      %p219 = scmp.eq.s32.totalorder %s15, 1
      %p220 = por %p218, %p219
      %p221 = scmp.ne.s32.totalorder %s213, %s216
      %p222 = scmp.eq.s32.totalorder %s15, 0
      %p223 = por %p221, %p222
      %p224 = scmp.ne.s32.totalorder %s213, %s216
      %p225 = scmp.eq.s32.totalorder %s20, 1
      %p226 = por %p224, %p225
      %p227 = scmp.ne.s32.totalorder %s216, %s217
      %p228 = scmp.eq.s32.totalorder %s20, 0
      %p229 = por %p227, %p228
      %p230 = scmp.ne.s32.totalorder %s216, %s217
      %p231 = scmp.eq.s32.totalorder %s21, 1
      %p232 = por %p230, %p231
      %p234 = scmp.ne.s32.totalorder %s217, %s233
      %p235 = scmp.eq.s32.totalorder %s21, 0
      %p236 = por %p234, %p235
      %p237 = scmp.le.s32.totalorder 1, %s15
      %p238 = scmp.lt.s32.totalorder %s15, 3
      %p239 = pnand %p237, %p238
      %p240 = pneg %p239
      // Predicated region
      $region9: #{graph_wavenet_forward.16} parent=5 // pred_check
        _
      $region10: #{graph_wavenet_forward.16} parent=5 // pred_check_branch
        %242 = sbr.rel (%p239) target = $region12
      $region11: #{graph_wavenet_forward.16} parent=5 // pred_region
        %s243 = ssub.s32 %s15, 1
        // Predicated region
        $region13: #{graph_wavenet_forward.16} parent=11 // pred_check
          %p244 = pneg %p88
        $region14: #{graph_wavenet_forward.16} parent=11 // pred_check_branch
          %246 = sbr.rel (%p244) target = $region16
        $region15: #{graph_wavenet_forward.16} parent=11 // pred_region
          _
        $region16: #{graph_wavenet_forward.16} parent=11 // pred_fallthru
          _
        // Predicated region
        $region17: #{graph_wavenet_forward.16} parent=11 // pred_check
          %p247 = pneg %p109
        $region18: #{graph_wavenet_forward.16} parent=11 // pred_check_branch
          %249 = sbr.rel (%p247) target = $region20
        $region19: #{graph_wavenet_forward.16} parent=11 // pred_region
          _
        $region20: #{graph_wavenet_forward.16} parent=11 // pred_fallthru
          _
        // Predicated region
        $region21: #{graph_wavenet_forward.16} parent=11 // pred_check
          %p250 = pneg %p130
        $region22: #{graph_wavenet_forward.16} parent=11 // pred_check_branch
          %252 = sbr.rel (%p250) target = $region24
        $region23: #{graph_wavenet_forward.16} parent=11 // pred_region
          _
        $region24: #{graph_wavenet_forward.16} parent=11 // pred_fallthru
          _
        // Predicated region
        $region25: #{graph_wavenet_forward.16} parent=11 // pred_check
          %p253 = pneg %p151
        $region26: #{graph_wavenet_forward.16} parent=11 // pred_check_branch
          %255 = sbr.rel (%p253) target = $region28
        $region27: #{graph_wavenet_forward.16} parent=11 // pred_region
          _
        $region28: #{graph_wavenet_forward.16} parent=11 // pred_fallthru
          _
      $region12: #{graph_wavenet_forward.16} parent=5 // pred_fallthru
        _
      %p256 = scmp.lt.s32.totalorder %s15, 2
      // Predicated region
      $region29: #{graph_wavenet_forward.16} parent=5 // pred_check
        %p257 = pneg %p256
      $region30: #{graph_wavenet_forward.16} parent=5 // pred_check_branch
        %259 = sbr.rel (%p257) target = $region32
      $region31: #{graph_wavenet_forward.16} parent=5 // pred_region
        // Predicated region
        $region33: #{graph_wavenet_forward.16} parent=31 // pred_check
          %p260 = pneg %p35
        $region34: #{graph_wavenet_forward.16} parent=31 // pred_check_branch
          %262 = sbr.rel (%p260) target = $region36
        $region35: #{graph_wavenet_forward.16} parent=31 // pred_region
          %s263 = smul.u32 8, %s15
          %p264 = scmp.lt.s32.totalorder %s263, 15
          %s265 = scalar_select %p264, %s263, 15
          %s266 = smul.addr %s265, 8
          %s267 = scalar_lea.vmem %s0, %s266
          %s268 = smul.u32 8, %s15
        $region36: #{graph_wavenet_forward.16} parent=31 // pred_fallthru
          _
        // Predicated region
        $region37: #{graph_wavenet_forward.16} parent=31 // pred_check
          %p269 = pneg %p61
        $region38: #{graph_wavenet_forward.16} parent=31 // pred_check_branch
          %271 = sbr.rel (%p269) target = $region40
        $region39: #{graph_wavenet_forward.16} parent=31 // pred_region
          %s272 = smul.u32 8, %s15
          %p273 = scmp.lt.s32.totalorder %s272, 15
          %s274 = scalar_select %p273, %s272, 15
          %s275 = smul.addr %s274, 8
          %s276 = scalar_lea.vmem %s1, %s275
          %s277 = smul.u32 8, %s15
        $region40: #{graph_wavenet_forward.16} parent=31 // pred_fallthru
          _
      $region32: #{graph_wavenet_forward.16} parent=5 // pred_fallthru
        _
      %p278 = scmp.le.s32.totalorder 1, %s15
      %p279 = scmp.lt.s32.totalorder %s15, 3
      %p280 = pnand %p278, %p279
      %p281 = pneg %p280
      // Predicated region
      $region41: #{graph_wavenet_forward.16} parent=5 // pred_check
        _
      $region42: #{graph_wavenet_forward.16} parent=5 // pred_check_branch
        %283 = sbr.rel (%p280) target = $region44
      $region43: #{graph_wavenet_forward.16} parent=5 // pred_region
        %s284 = ssub.s32 %s15, 1
        %s285 = smul.u32 8, %s20
        %p286 = scmp.lt.s32.totalorder %s285, 15
        %s287 = scalar_select %p286, %s285, 15
        %s288 = smul.addr %s287, 8
        %s289 = scalar_lea.vmem %s0, %s288
        %p290 = pneg %p41
        %p291 = pneg %p38
        %s292 = smul.u32 8, %s20
        %p293 = scmp.lt.s32.totalorder %s292, 15
        %s294 = scalar_select %p293, %s292, 15
        %s295 = smul.addr %s294, 8
        %s296 = scalar_lea.vmem %s1, %s295
        %p297 = pneg %p67
        %p298 = pneg %p64
        %p299 = pneg %p88
        %p300 = pneg %p85
        %p301 = pneg %p109
        %p302 = pneg %p106
        %p303 = pneg %p130
        %p304 = pneg %p127
        %p305 = pneg %p151
        %p306 = pneg %p148
        %p307 = pneg %p177
        %p308 = pneg %p174
        %s309 = smul.u32 8, %s20
        %p310 = scmp.lt.s32.totalorder %s309, 15
        %s311 = scalar_select %p310, %s309, 15
        %s312 = smul.addr %s311, 8
        %s313 = scalar_lea.vmem %s6, %s312
        %p314 = pneg %p203
        %p315 = pneg %p200
        %s316 = smul.u32 8, %s20
        %p317 = scmp.lt.s32.totalorder %s316, 15
        %s318 = scalar_select %p317, %s316, 15
        %s319 = smul.addr %s318, 8
        %s320 = scalar_lea.vmem %s7, %s319
        %p321 = pneg %p229
        %p322 = pneg %p226
        %s323 = sand.u32 %s216, 1
        %s324 = sand.u32 %s216, 1
        %s325 = smul.addr %s324, 192
        %s326 = scalar_lea.vmem [#allocation2], %s325
        %s327 = smul.u32 8, %s20
        %p328 = scmp.lt.s32.totalorder %s327, 15
        %s329 = scalar_select %p328, %s327, 15
        %s330 = smul.addr %s329, 8
        %s331 = scalar_lea.vmem %s0, %s330
        %s332 = smul.u32 8, %s20
        %s333 = smul.u32 8, %s20
        %p334 = scmp.lt.s32.totalorder %s333, 15
        %s335 = scalar_select %p334, %s333, 15
        %s336 = smul.addr %s335, 8
        %s337 = scalar_lea.vmem %s1, %s336
        %s338 = smul.u32 8, %s20
        %s339 = smul.u32 8, %s20
        %p340 = scmp.lt.s32.totalorder %s339, 15
        %s341 = scalar_select %p340, %s339, 15
        %s342 = smul.addr %s341, 8
        %s343 = scalar_lea.vmem %s6, %s342
        %s344 = smul.u32 8, %s20
        %s345 = smul.u32 8, %s20
        %p346 = scmp.lt.s32.totalorder %s345, 15
        %s347 = scalar_select %p346, %s345, 15
        %s348 = smul.addr %s347, 8
        %s349 = scalar_lea.vmem %s7, %s348
        %s350 = smul.u32 8, %s20
        %s351 = smul.u32 8, %s20
        %v353 = vld [vmem:[%s331] sm:$0xff]
        %v354 = vld [vmem:[%s331 + $0x8] sm:$0xff]
        %v355 = vld [vmem:[%s331 + $0x10] sm:$0xff]
        %v356 = vld [vmem:[%s331 + $0x18] sm:$0xff]
        %v357 = vld [vmem:[%s331 + $0x20] sm:$0xff]
        %v358 = vld [vmem:[%s331 + $0x28] sm:$0xff]
        %v359 = vld [vmem:[%s331 + $0x30] sm:$0xff]
        %v360 = vld [vmem:[%s331 + $0x38] sm:$0x7f]
        %v361 = vld [vmem:[%s331 + $0x1] sm:$0xff]
        %v362 = vld [vmem:[%s331 + $0x9] sm:$0xff]
        %v363 = vld [vmem:[%s331 + $0x11] sm:$0xff]
        %v364 = vld [vmem:[%s331 + $0x19] sm:$0xff]
        %v365 = vld [vmem:[%s331 + $0x21] sm:$0xff]
        %v366 = vld [vmem:[%s331 + $0x29] sm:$0xff]
        %v367 = vld [vmem:[%s331 + $0x31] sm:$0xff]
        %v368 = vld [vmem:[%s331 + $0x39] sm:$0x7f]
        %377 = vrot.lane.b32.xlu0 %v361, 16
        %v378 = vpop.permute.xlu0 %377
        %379 = vrot.lane.b32.xlu0 %v362, 16
        %v380 = vpop.permute.xlu0 %379
        %381 = vrot.lane.b32.xlu0 %v363, 16
        %v382 = vpop.permute.xlu0 %381
        %383 = vrot.lane.b32.xlu0 %v364, 16
        %v384 = vpop.permute.xlu0 %383
        %385 = vrot.lane.b32.xlu0 %v365, 16
        %v386 = vpop.permute.xlu0 %385
        %387 = vrot.lane.b32.xlu0 %v366, 16
        %v388 = vpop.permute.xlu0 %387
        %389 = vrot.lane.b32.xlu0 %v367, 16
        %v390 = vpop.permute.xlu0 %389
        %391 = vrot.lane.b32.xlu0 %v368, 16
        %v392 = vpop.permute.xlu0 %391
        %vm401 = vcmask 130048
        %v402 = vsel %vm401, %v353, %v378
        %v403 = vsel %vm401, %v354, %v380
        %v404 = vsel %vm401, %v355, %v382
        %v405 = vsel %vm401, %v356, %v384
        %v406 = vsel %vm401, %v357, %v386
        %v407 = vsel %vm401, %v358, %v388
        %v408 = vsel %vm401, %v359, %v390
        %v409 = vsel %vm401, %v360, %v392
        %v410 = vpack.c.bf16 %v403, %v402
        %v411 = vpack.c.bf16 %v405, %v404
        %v412 = vpack.c.bf16 %v407, %v406
        %v413 = vpack.c.bf16 %v409, %v408
        %v414 = vld [vmem:[%s2] sm:$0xf]
        %v415 = vld [vmem:[%s2 + $0x4] sm:$0xf]
        %v416 = vld [vmem:[%s2 + $0x8] sm:$0xf]
        %v417 = vld [vmem:[%s2 + $0xc] sm:$0xf]
        %v418 = vld [vmem:[%s3] sm:$0x1]
        %v420 = vperm.slane %v418, 0
        %v426 = vunpack.c.l.b16 %v414
        %v427 = vunpack.c.l.b16 %v415
        %v428 = vunpack.c.l.b16 %v416
        %v429 = vunpack.c.l.b16 %v417
        %v430 = vpack.c.b16 %v427, %v426
        %v431 = vpack.c.b16 %v429, %v428
        %vm434 = vcmask 261120
        %v436 = vsel %vm434, %v410, 0
        %v439 = vsel %vm434, %v411, 0
        %v442 = vsel %vm434, %v412, 0
        %v445 = vsel %vm434, %v413, 0
        %447 = vmatpush.bf16.msra.mxu0 0
        %448 = vmatpush.bf16.msra.mxu0 0
        %449 = vmatpush.bf16.msra.mxu0 0
        %450 = vmatpush.bf16.msra.mxu0 0
        %451 = vmatpush.bf16.msra.mxu0 0
        %452 = vmatpush.bf16.msra.mxu0 0
        %453 = vmatpush.bf16.msra.mxu0 %v431
        %454 = vmatpush.bf16.msra.mxu0 %v430
        %455 = vmatmul.bf16.gmra.mxu0 %v436
        %v456 = vpop.f32.mrf.mxu0
        %v457 = vadd.f32 %v420, %v456
        %v458 = vpop.f32.mrf.mxu0
        %v459 = vadd.f32 %v420, %v458
        %460 = vmatmul.bf16.gmra.mxu0 %v439
        %v461 = vpop.f32.mrf.mxu0
        %v462 = vadd.f32 %v420, %v461
        %v463 = vpop.f32.mrf.mxu0
        %v464 = vadd.f32 %v420, %v463
        %465 = vmatmul.bf16.gmra.mxu0 %v442
        %v466 = vpop.f32.mrf.mxu0
        %v467 = vadd.f32 %v420, %v466
        %v468 = vpop.f32.mrf.mxu0
        %v469 = vadd.f32 %v420, %v468
        %470 = vmatmul.bf16.gmra.mxu0 %v445
        %v471 = vpop.f32.mrf.mxu0
        %v472 = vadd.f32 %v420, %v471
        %v473 = vpop.f32.mrf.mxu0
        %v474 = vadd.f32 %v420, %v473
        %475 = vdwg.mxu0
        %v476 = vtanh.pop %v457
        %v477 = vtanh.pop %v459
        %v478 = vtanh.pop %v462
        %v479 = vtanh.pop %v464
        %v480 = vtanh.pop %v467
        %v481 = vtanh.pop %v469
        %v482 = vtanh.pop %v472
        %v483 = vtanh.pop %v474
        %v484 = vxor.u32 %v457, 2147483648
        %v485 = vxor.u32 %v459, 2147483648
        %v486 = vxor.u32 %v462, 2147483648
        %v487 = vxor.u32 %v464, 2147483648
        %v488 = vxor.u32 %v467, 2147483648
        %v489 = vxor.u32 %v469, 2147483648
        %v490 = vxor.u32 %v472, 2147483648
        %v491 = vxor.u32 %v474, 2147483648
        %v492 = vmul.f32 %v484, 1.442695
        %v493 = vpow.pop %v492
        %v494 = vmul.f32 %v485, 1.442695
        %v495 = vpow.pop %v494
        %v496 = vmul.f32 %v486, 1.442695
        %v497 = vpow.pop %v496
        %v498 = vmul.f32 %v487, 1.442695
        %v499 = vpow.pop %v498
        %v500 = vmul.f32 %v488, 1.442695
        %v501 = vpow.pop %v500
        %v502 = vmul.f32 %v489, 1.442695
        %v503 = vpow.pop %v502
        %v504 = vmul.f32 %v490, 1.442695
        %v505 = vpow.pop %v504
        %v506 = vmul.f32 %v491, 1.442695
        %v507 = vpow.pop %v506
        %v508 = vadd.f32 %v493, 1.0
        %v509 = vadd.f32 %v495, 1.0
        %v510 = vadd.f32 %v497, 1.0
        %v511 = vadd.f32 %v499, 1.0
        %v512 = vadd.f32 %v501, 1.0
        %v513 = vadd.f32 %v503, 1.0
        %v514 = vadd.f32 %v505, 1.0
        %v515 = vadd.f32 %v507, 1.0
        %v516 = vrcp.pop %v508
        %v517 = vmul.f32 %v508, %v516
        %v518 = vsub.f32 1.0, %v517
        %v519 = vmul.f32 %v516, %v518
        %v520 = vadd.f32 %v516, %v519
        %vm521 = vweird.f32 %v508
        %vm522 = vweird.f32 %v516
        %vm523 = vmor %vm521, %vm522
        %v524 = vsel %vm523, %v516, %v520
        %v525 = vand.u32 2147483647, %v508
        %vm526 = vcmp.eq.f32.partialorder %v525, 8.507059e+37
        %v527 = vand.u32 %v508, 2147483648
        %v528 = vor.u32 1.1754944e-38, %v527
        %v529 = vsel %vm526, %v528, %v524
        %v530 = vmul.f32 1.0, %v529
        %v531 = vrcp.pop %v509
        %v532 = vmul.f32 %v509, %v531
        %v533 = vsub.f32 1.0, %v532
        %v534 = vmul.f32 %v531, %v533
        %v535 = vadd.f32 %v531, %v534
        %vm536 = vweird.f32 %v509
        %vm537 = vweird.f32 %v531
        %vm538 = vmor %vm536, %vm537
        %v539 = vsel %vm538, %v531, %v535
        %v540 = vand.u32 2147483647, %v509
        %vm541 = vcmp.eq.f32.partialorder %v540, 8.507059e+37
        %v542 = vand.u32 %v509, 2147483648
        %v543 = vor.u32 1.1754944e-38, %v542
        %v544 = vsel %vm541, %v543, %v539
        %v545 = vmul.f32 1.0, %v544
        %v546 = vrcp.pop %v510
        %v547 = vmul.f32 %v510, %v546
        %v548 = vsub.f32 1.0, %v547
        %v549 = vmul.f32 %v546, %v548
        %v550 = vadd.f32 %v546, %v549
        %vm551 = vweird.f32 %v510
        %vm552 = vweird.f32 %v546
        %vm553 = vmor %vm551, %vm552
        %v554 = vsel %vm553, %v546, %v550
        %v555 = vand.u32 2147483647, %v510
        %vm556 = vcmp.eq.f32.partialorder %v555, 8.507059e+37
        %v557 = vand.u32 %v510, 2147483648
        %v558 = vor.u32 1.1754944e-38, %v557
        %v559 = vsel %vm556, %v558, %v554
        %v560 = vmul.f32 1.0, %v559
        %v561 = vrcp.pop %v511
        %v562 = vmul.f32 %v511, %v561
        %v563 = vsub.f32 1.0, %v562
        %v564 = vmul.f32 %v561, %v563
        %v565 = vadd.f32 %v561, %v564
        %vm566 = vweird.f32 %v511
        %vm567 = vweird.f32 %v561
        %vm568 = vmor %vm566, %vm567
        %v569 = vsel %vm568, %v561, %v565
        %v570 = vand.u32 2147483647, %v511
        %vm571 = vcmp.eq.f32.partialorder %v570, 8.507059e+37
        %v572 = vand.u32 %v511, 2147483648
        %v573 = vor.u32 1.1754944e-38, %v572
        %v574 = vsel %vm571, %v573, %v569
        %v575 = vmul.f32 1.0, %v574
        %v576 = vrcp.pop %v512
        %v577 = vmul.f32 %v512, %v576
        %v578 = vsub.f32 1.0, %v577
        %v579 = vmul.f32 %v576, %v578
        %v580 = vadd.f32 %v576, %v579
        %vm581 = vweird.f32 %v512
        %vm582 = vweird.f32 %v576
        %vm583 = vmor %vm581, %vm582
        %v584 = vsel %vm583, %v576, %v580
        %v585 = vand.u32 2147483647, %v512
        %vm586 = vcmp.eq.f32.partialorder %v585, 8.507059e+37
        %v587 = vand.u32 %v512, 2147483648
        %v588 = vor.u32 1.1754944e-38, %v587
        %v589 = vsel %vm586, %v588, %v584
        %v590 = vmul.f32 1.0, %v589
        %v591 = vrcp.pop %v513
        %v592 = vmul.f32 %v513, %v591
        %v593 = vsub.f32 1.0, %v592
        %v594 = vmul.f32 %v591, %v593
        %v595 = vadd.f32 %v591, %v594
        %vm596 = vweird.f32 %v513
        %vm597 = vweird.f32 %v591
        %vm598 = vmor %vm596, %vm597
        %v599 = vsel %vm598, %v591, %v595
        %v600 = vand.u32 2147483647, %v513
        %vm601 = vcmp.eq.f32.partialorder %v600, 8.507059e+37
        %v602 = vand.u32 %v513, 2147483648
        %v603 = vor.u32 1.1754944e-38, %v602
        %v604 = vsel %vm601, %v603, %v599
        %v605 = vmul.f32 1.0, %v604
        %v606 = vrcp.pop %v514
        %v607 = vmul.f32 %v514, %v606
        %v608 = vsub.f32 1.0, %v607
        %v609 = vmul.f32 %v606, %v608
        %v610 = vadd.f32 %v606, %v609
        %vm611 = vweird.f32 %v514
        %vm612 = vweird.f32 %v606
        %vm613 = vmor %vm611, %vm612
        %v614 = vsel %vm613, %v606, %v610
        %v615 = vand.u32 2147483647, %v514
        %vm616 = vcmp.eq.f32.partialorder %v615, 8.507059e+37
        %v617 = vand.u32 %v514, 2147483648
        %v618 = vor.u32 1.1754944e-38, %v617
        %v619 = vsel %vm616, %v618, %v614
        %v620 = vmul.f32 1.0, %v619
        %v621 = vrcp.pop %v515
        %v622 = vmul.f32 %v515, %v621
        %v623 = vsub.f32 1.0, %v622
        %v624 = vmul.f32 %v621, %v623
        %v625 = vadd.f32 %v621, %v624
        %vm626 = vweird.f32 %v515
        %vm627 = vweird.f32 %v621
        %vm628 = vmor %vm626, %vm627
        %v629 = vsel %vm628, %v621, %v625
        %v630 = vand.u32 2147483647, %v515
        %vm631 = vcmp.eq.f32.partialorder %v630, 8.507059e+37
        %v632 = vand.u32 %v515, 2147483648
        %v633 = vor.u32 1.1754944e-38, %v632
        %v634 = vsel %vm631, %v633, %v629
        %v635 = vmul.f32 1.0, %v634
        %644 = vrot.lane.b32.xlu0 %v530, 112
        %v645 = vpop.permute.xlu0 %644
        %646 = vrot.lane.b32.xlu0 %v545, 112
        %v647 = vpop.permute.xlu0 %646
        %648 = vrot.lane.b32.xlu0 %v560, 112
        %v649 = vpop.permute.xlu0 %648
        %650 = vrot.lane.b32.xlu0 %v575, 112
        %v651 = vpop.permute.xlu0 %650
        %652 = vrot.lane.b32.xlu0 %v590, 112
        %v653 = vpop.permute.xlu0 %652
        %654 = vrot.lane.b32.xlu0 %v605, 112
        %v655 = vpop.permute.xlu0 %654
        %656 = vrot.lane.b32.xlu0 %v620, 112
        %v657 = vpop.permute.xlu0 %656
        %658 = vrot.lane.b32.xlu0 %v635, 112
        %v659 = vpop.permute.xlu0 %658
        %v668 = vmul.f32 %v476, %v645
        %v669 = vmul.f32 %v477, %v647
        %v670 = vmul.f32 %v478, %v649
        %v671 = vmul.f32 %v479, %v651
        %v672 = vmul.f32 %v480, %v653
        %v673 = vmul.f32 %v481, %v655
        %v674 = vmul.f32 %v482, %v657
        %v675 = vmul.f32 %v483, %v659
        %v676 = vpack.c.bf16 %v669, %v668
        %v677 = vpack.c.bf16 %v671, %v670
        %v678 = vpack.c.bf16 %v673, %v672
        %v679 = vpack.c.bf16 %v675, %v674
        %v680 = vld [vmem:[%s4] sm:$0xff]
        %v681 = vld [vmem:[%s4 + $0x8] sm:$0xff]
        %v682 = vld [vmem:[%s5] sm:$0x3]
        %v684 = vperm.slane %v682, 0
        %v685 = vperm.slane %v682, 1
        %v690 = vunpack.c.l.b16 %v680
        %v691 = vunpack.c.h.b16 %v680
        %v692 = vunpack.c.l.b16 %v681
        %v693 = vunpack.c.h.b16 %v681
        %v694 = vpack.c.b16 %v692, %v690
        %v695 = vpack.c.b16 %v693, %v691
        %v699 = vsel %vm401, %v676, 0
        %v702 = vsel %vm401, %v677, 0
        %v705 = vsel %vm401, %v678, 0
        %v708 = vsel %vm401, %v679, 0
        %710 = vmatpush.bf16.msra.mxu0 0
        %711 = vmatpush.bf16.msra.mxu0 0
        %712 = vmatpush.bf16.msra.mxu0 0
        %713 = vmatpush.bf16.msra.mxu0 0
        %714 = vmatpush.bf16.msra.mxu0 0
        %715 = vmatpush.bf16.msra.mxu0 0
        %716 = vmatpush.bf16.msra.mxu0 0
        %717 = vmatpush.bf16.msra.mxu0 %v694
        %718 = vmatmul.bf16.gmra.mxu0 %v699
        %v719 = vpop.f32.mrf.mxu0
        %v720 = vadd.f32 %v684, %v719
        %v721 = vpop.f32.mrf.mxu0
        %v722 = vadd.f32 %v684, %v721
        %723 = vmatmul.bf16.gmra.mxu0 %v702
        %v724 = vpop.f32.mrf.mxu0
        %v725 = vadd.f32 %v684, %v724
        %v726 = vpop.f32.mrf.mxu0
        %v727 = vadd.f32 %v684, %v726
        %728 = vmatmul.bf16.gmra.mxu0 %v705
        %v729 = vpop.f32.mrf.mxu0
        %v730 = vadd.f32 %v684, %v729
        %v731 = vpop.f32.mrf.mxu0
        %v732 = vadd.f32 %v684, %v731
        %733 = vmatmul.bf16.gmra.mxu0 %v708
        %v734 = vpop.f32.mrf.mxu0
        %v735 = vadd.f32 %v684, %v734
        %v736 = vpop.f32.mrf.mxu0
        %v737 = vadd.f32 %v684, %v736
        %738 = vdwg.mxu0
        %739 = vmatpush.bf16.msra.mxu0 0
        %740 = vmatpush.bf16.msra.mxu0 0
        %741 = vmatpush.bf16.msra.mxu0 0
        %742 = vmatpush.bf16.msra.mxu0 0
        %743 = vmatpush.bf16.msra.mxu0 0
        %744 = vmatpush.bf16.msra.mxu0 0
        %745 = vmatpush.bf16.msra.mxu0 0
        %746 = vmatpush.bf16.msra.mxu0 %v695
        %747 = vmatmul.bf16.gmra.mxu0 %v699
        %v748 = vpop.f32.mrf.mxu0
        %v749 = vadd.f32 %v685, %v748
        %v750 = vpop.f32.mrf.mxu0
        %v751 = vadd.f32 %v685, %v750
        %752 = vmatmul.bf16.gmra.mxu0 %v702
        %v753 = vpop.f32.mrf.mxu0
        %v754 = vadd.f32 %v685, %v753
        %v755 = vpop.f32.mrf.mxu0
        %v756 = vadd.f32 %v685, %v755
        %757 = vmatmul.bf16.gmra.mxu0 %v705
        %v758 = vpop.f32.mrf.mxu0
        %v759 = vadd.f32 %v685, %v758
        %v760 = vpop.f32.mrf.mxu0
        %v761 = vadd.f32 %v685, %v760
        %762 = vmatmul.bf16.gmra.mxu0 %v708
        %v763 = vpop.f32.mrf.mxu0
        %v764 = vadd.f32 %v685, %v763
        %v765 = vpop.f32.mrf.mxu0
        %v766 = vadd.f32 %v685, %v765
        %767 = vdwg.mxu0
        %v768 = vld [vmem:[%s337 + $0x1] sm:$0xff]
        %v769 = vld [vmem:[%s337 + $0x9] sm:$0xff]
        %v770 = vld [vmem:[%s337 + $0x11] sm:$0xff]
        %v771 = vld [vmem:[%s337 + $0x19] sm:$0xff]
        %v772 = vld [vmem:[%s337 + $0x21] sm:$0xff]
        %v773 = vld [vmem:[%s337 + $0x29] sm:$0xff]
        %v774 = vld [vmem:[%s337 + $0x31] sm:$0xff]
        %v775 = vld [vmem:[%s337 + $0x39] sm:$0x7f]
        %v776 = vadd.f32 %v720, %v768
        %v777 = vadd.f32 %v722, %v769
        %v778 = vadd.f32 %v725, %v770
        %v779 = vadd.f32 %v727, %v771
        %v780 = vadd.f32 %v730, %v772
        %v781 = vadd.f32 %v732, %v773
        %v782 = vadd.f32 %v735, %v774
        %v783 = vadd.f32 %v737, %v775
        %784 = vst.msk [vmem:[%s343] sm:$0xff] %vm434, %v776
        %785 = vst.msk [vmem:[%s343 + $0x8] sm:$0xff] %vm434, %v777
        %786 = vst.msk [vmem:[%s343 + $0x10] sm:$0xff] %vm434, %v778
        %787 = vst.msk [vmem:[%s343 + $0x18] sm:$0xff] %vm434, %v779
        %788 = vst.msk [vmem:[%s343 + $0x20] sm:$0xff] %vm434, %v780
        %789 = vst.msk [vmem:[%s343 + $0x28] sm:$0xff] %vm434, %v781
        %790 = vst.msk [vmem:[%s343 + $0x30] sm:$0xff] %vm434, %v782
        %vm791 = vcmask 260096
        %792 = vst.msk [vmem:[%s343 + $0x38] sm:$0x7f] %vm791, %v783
        %793 = vrot.lane.b32.xlu0 %v361, 32
        %v794 = vpop.permute.xlu0 %793
        %795 = vrot.lane.b32.xlu0 %v362, 32
        %v796 = vpop.permute.xlu0 %795
        %797 = vrot.lane.b32.xlu0 %v363, 32
        %v798 = vpop.permute.xlu0 %797
        %799 = vrot.lane.b32.xlu0 %v364, 32
        %v800 = vpop.permute.xlu0 %799
        %801 = vrot.lane.b32.xlu0 %v365, 32
        %v802 = vpop.permute.xlu0 %801
        %803 = vrot.lane.b32.xlu0 %v366, 32
        %v804 = vpop.permute.xlu0 %803
        %805 = vrot.lane.b32.xlu0 %v367, 32
        %v806 = vpop.permute.xlu0 %805
        %807 = vrot.lane.b32.xlu0 %v368, 32
        %v808 = vpop.permute.xlu0 %807
        %v817 = vadd.f32 %v720, %v794
        %v818 = vadd.f32 %v722, %v796
        %v819 = vadd.f32 %v725, %v798
        %v820 = vadd.f32 %v727, %v800
        %v821 = vadd.f32 %v730, %v802
        %v822 = vadd.f32 %v732, %v804
        %v823 = vadd.f32 %v735, %v806
        %v824 = vadd.f32 %v737, %v808
        %833 = vrot.lane.b32.xlu0 %v817, 96
        %v834 = vpop.permute.xlu0 %833
        %835 = vrot.lane.b32.xlu0 %v818, 96
        %v836 = vpop.permute.xlu0 %835
        %837 = vrot.lane.b32.xlu0 %v819, 96
        %v838 = vpop.permute.xlu0 %837
        %839 = vrot.lane.b32.xlu0 %v820, 96
        %v840 = vpop.permute.xlu0 %839
        %841 = vrot.lane.b32.xlu0 %v821, 96
        %v842 = vpop.permute.xlu0 %841
        %843 = vrot.lane.b32.xlu0 %v822, 96
        %v844 = vpop.permute.xlu0 %843
        %845 = vrot.lane.b32.xlu0 %v823, 96
        %v846 = vpop.permute.xlu0 %845
        %847 = vrot.lane.b32.xlu0 %v824, 96
        %v848 = vpop.permute.xlu0 %847
        %857 = vst.msk [vmem:[%s349] sm:$0xff] %vm401, %v834
        %858 = vst.msk [vmem:[%s349 + $0x8] sm:$0xff] %vm401, %v836
        %859 = vst.msk [vmem:[%s349 + $0x10] sm:$0xff] %vm401, %v838
        %860 = vst.msk [vmem:[%s349 + $0x18] sm:$0xff] %vm401, %v840
        %861 = vst.msk [vmem:[%s349 + $0x20] sm:$0xff] %vm401, %v842
        %862 = vst.msk [vmem:[%s349 + $0x28] sm:$0xff] %vm401, %v844
        %863 = vst.msk [vmem:[%s349 + $0x30] sm:$0xff] %vm401, %v846
        %vm864 = vcmask 129024
        %865 = vst.msk [vmem:[%s349 + $0x38] sm:$0x7f] %vm864, %v848
        %v866 = vpack.c.bf16 %v720, %v720
        %v867 = vpack.c.bf16 %v722, %v722
        %v868 = vpack.c.bf16 %v725, %v725
        %v869 = vpack.c.bf16 %v727, %v727
        %v870 = vpack.c.bf16 %v730, %v730
        %v871 = vpack.c.bf16 %v732, %v732
        %v872 = vpack.c.bf16 %v735, %v735
        %v873 = vpack.c.bf16 %v737, %v737
        %882 = vrot.lane.b32.xlu0 %v866, 80
        %v883 = vpop.permute.xlu0 %882
        %884 = vrot.lane.b32.xlu0 %v867, 80
        %v885 = vpop.permute.xlu0 %884
        %886 = vrot.lane.b32.xlu0 %v868, 80
        %v887 = vpop.permute.xlu0 %886
        %888 = vrot.lane.b32.xlu0 %v869, 80
        %v889 = vpop.permute.xlu0 %888
        %890 = vrot.lane.b32.xlu0 %v870, 80
        %v891 = vpop.permute.xlu0 %890
        %892 = vrot.lane.b32.xlu0 %v871, 80
        %v893 = vpop.permute.xlu0 %892
        %894 = vrot.lane.b32.xlu0 %v872, 80
        %v895 = vpop.permute.xlu0 %894
        %896 = vrot.lane.b32.xlu0 %v873, 80
        %v897 = vpop.permute.xlu0 %896
        %vm906 = vcmask 125952
        %907 = vst.msk [vmem:[%s326] sm:$0xf] %vm906, %v883
        %908 = vst.msk [vmem:[%s326 + $0x4] sm:$0xf] %vm906, %v885
        %909 = vst.msk [vmem:[%s326 + $0x8] sm:$0xf] %vm906, %v887
        %910 = vst.msk [vmem:[%s326 + $0xc] sm:$0xf] %vm906, %v889
        %911 = vst.msk [vmem:[%s326 + $0x10] sm:$0xf] %vm906, %v891
        %912 = vst.msk [vmem:[%s326 + $0x14] sm:$0xf] %vm906, %v893
        %913 = vst.msk [vmem:[%s326 + $0x18] sm:$0xf] %vm906, %v895
        %vm914 = vcmask 125952
        %vm915 = vsmask.f32 3328
        %vm916 = vmand %vm914, %vm915
        %v917 = vld [vmem:[%s326 + $0x1c] sm:$0xf]
        %v918 = vsel %vm916, %v897, %v917
        %919 = vst [vmem:[%s326 + $0x1c] sm:$0xf] %v918
        %920 = vrot.lane.b32.xlu0 %v866, 64
        %v921 = vpop.permute.xlu0 %920
        %922 = vrot.lane.b32.xlu0 %v867, 64
        %v923 = vpop.permute.xlu0 %922
        %924 = vrot.lane.b32.xlu0 %v868, 64
        %v925 = vpop.permute.xlu0 %924
        %926 = vrot.lane.b32.xlu0 %v869, 64
        %v927 = vpop.permute.xlu0 %926
        %928 = vrot.lane.b32.xlu0 %v870, 64
        %v929 = vpop.permute.xlu0 %928
        %930 = vrot.lane.b32.xlu0 %v871, 64
        %v931 = vpop.permute.xlu0 %930
        %932 = vrot.lane.b32.xlu0 %v872, 64
        %v933 = vpop.permute.xlu0 %932
        %934 = vrot.lane.b32.xlu0 %v873, 64
        %v935 = vpop.permute.xlu0 %934
        %s944 = scalar_lea.vmem %s326, 32 [#allocation2]
        %945 = vst.msk [vmem:[%s944] sm:$0xf] %vm906, %v921
        %946 = vst.msk [vmem:[%s944 + $0x4] sm:$0xf] %vm906, %v923
        %947 = vst.msk [vmem:[%s944 + $0x8] sm:$0xf] %vm906, %v925
        %948 = vst.msk [vmem:[%s944 + $0xc] sm:$0xf] %vm906, %v927
        %949 = vst.msk [vmem:[%s944 + $0x10] sm:$0xf] %vm906, %v929
        %950 = vst.msk [vmem:[%s944 + $0x14] sm:$0xf] %vm906, %v931
        %951 = vst.msk [vmem:[%s944 + $0x18] sm:$0xf] %vm906, %v933
        %v952 = vld [vmem:[%s944 + $0x1c] sm:$0xf]
        %v953 = vsel %vm916, %v935, %v952
        %954 = vst [vmem:[%s944 + $0x1c] sm:$0xf] %v953
        %955 = vrot.lane.b32.xlu0 %v866, 48
        %v956 = vpop.permute.xlu0 %955
        %957 = vrot.lane.b32.xlu0 %v867, 48
        %v958 = vpop.permute.xlu0 %957
        %959 = vrot.lane.b32.xlu0 %v868, 48
        %v960 = vpop.permute.xlu0 %959
        %961 = vrot.lane.b32.xlu0 %v869, 48
        %v962 = vpop.permute.xlu0 %961
        %963 = vrot.lane.b32.xlu0 %v870, 48
        %v964 = vpop.permute.xlu0 %963
        %965 = vrot.lane.b32.xlu0 %v871, 48
        %v966 = vpop.permute.xlu0 %965
        %967 = vrot.lane.b32.xlu0 %v872, 48
        %v968 = vpop.permute.xlu0 %967
        %969 = vrot.lane.b32.xlu0 %v873, 48
        %v970 = vpop.permute.xlu0 %969
        %s979 = scalar_lea.vmem %s326, 64 [#allocation2]
        %980 = vst.msk [vmem:[%s979] sm:$0xf] %vm906, %v956
        %981 = vst.msk [vmem:[%s979 + $0x4] sm:$0xf] %vm906, %v958
        %982 = vst.msk [vmem:[%s979 + $0x8] sm:$0xf] %vm906, %v960
        %983 = vst.msk [vmem:[%s979 + $0xc] sm:$0xf] %vm906, %v962
        %984 = vst.msk [vmem:[%s979 + $0x10] sm:$0xf] %vm906, %v964
        %985 = vst.msk [vmem:[%s979 + $0x14] sm:$0xf] %vm906, %v966
        %986 = vst.msk [vmem:[%s979 + $0x18] sm:$0xf] %vm906, %v968
        %v987 = vld [vmem:[%s979 + $0x1c] sm:$0xf]
        %v988 = vsel %vm916, %v970, %v987
        %989 = vst [vmem:[%s979 + $0x1c] sm:$0xf] %v988
        %990 = vrot.lane.b32.xlu0 %v866, 32
        %v991 = vpop.permute.xlu0 %990
        %992 = vrot.lane.b32.xlu0 %v867, 32
        %v993 = vpop.permute.xlu0 %992
        %994 = vrot.lane.b32.xlu0 %v868, 32
        %v995 = vpop.permute.xlu0 %994
        %996 = vrot.lane.b32.xlu0 %v869, 32
        %v997 = vpop.permute.xlu0 %996
        %998 = vrot.lane.b32.xlu0 %v870, 32
        %v999 = vpop.permute.xlu0 %998
        %1000 = vrot.lane.b32.xlu0 %v871, 32
        %v1001 = vpop.permute.xlu0 %1000
        %1002 = vrot.lane.b32.xlu0 %v872, 32
        %v1003 = vpop.permute.xlu0 %1002
        %1004 = vrot.lane.b32.xlu0 %v873, 32
        %v1005 = vpop.permute.xlu0 %1004
        %s1014 = scalar_lea.vmem %s326, 96 [#allocation2]
        %1015 = vst.msk [vmem:[%s1014] sm:$0xf] %vm906, %v991
        %1016 = vst.msk [vmem:[%s1014 + $0x4] sm:$0xf] %vm906, %v993
        %1017 = vst.msk [vmem:[%s1014 + $0x8] sm:$0xf] %vm906, %v995
        %1018 = vst.msk [vmem:[%s1014 + $0xc] sm:$0xf] %vm906, %v997
        %1019 = vst.msk [vmem:[%s1014 + $0x10] sm:$0xf] %vm906, %v999
        %1020 = vst.msk [vmem:[%s1014 + $0x14] sm:$0xf] %vm906, %v1001
        %1021 = vst.msk [vmem:[%s1014 + $0x18] sm:$0xf] %vm906, %v1003
        %v1022 = vld [vmem:[%s1014 + $0x1c] sm:$0xf]
        %v1023 = vsel %vm916, %v1005, %v1022
        %1024 = vst [vmem:[%s1014 + $0x1c] sm:$0xf] %v1023
        %1025 = vrot.lane.b32.xlu0 %v866, 16
        %v1026 = vpop.permute.xlu0 %1025
        %1027 = vrot.lane.b32.xlu0 %v867, 16
        %v1028 = vpop.permute.xlu0 %1027
        %1029 = vrot.lane.b32.xlu0 %v868, 16
        %v1030 = vpop.permute.xlu0 %1029
        %1031 = vrot.lane.b32.xlu0 %v869, 16
        %v1032 = vpop.permute.xlu0 %1031
        %1033 = vrot.lane.b32.xlu0 %v870, 16
        %v1034 = vpop.permute.xlu0 %1033
        %1035 = vrot.lane.b32.xlu0 %v871, 16
        %v1036 = vpop.permute.xlu0 %1035
        %1037 = vrot.lane.b32.xlu0 %v872, 16
        %v1038 = vpop.permute.xlu0 %1037
        %1039 = vrot.lane.b32.xlu0 %v873, 16
        %v1040 = vpop.permute.xlu0 %1039
        %s1049 = scalar_lea.vmem %s326, 128 [#allocation2]
        %1050 = vst.msk [vmem:[%s1049] sm:$0xf] %vm906, %v1026
        %1051 = vst.msk [vmem:[%s1049 + $0x4] sm:$0xf] %vm906, %v1028
        %1052 = vst.msk [vmem:[%s1049 + $0x8] sm:$0xf] %vm906, %v1030
        %1053 = vst.msk [vmem:[%s1049 + $0xc] sm:$0xf] %vm906, %v1032
        %1054 = vst.msk [vmem:[%s1049 + $0x10] sm:$0xf] %vm906, %v1034
        %1055 = vst.msk [vmem:[%s1049 + $0x14] sm:$0xf] %vm906, %v1036
        %1056 = vst.msk [vmem:[%s1049 + $0x18] sm:$0xf] %vm906, %v1038
        %v1057 = vld [vmem:[%s1049 + $0x1c] sm:$0xf]
        %v1058 = vsel %vm916, %v1040, %v1057
        %1059 = vst [vmem:[%s1049 + $0x1c] sm:$0xf] %v1058
        %v1060 = vpack.c.bf16 %v749, %v749
        %v1061 = vpack.c.bf16 %v751, %v751
        %v1062 = vpack.c.bf16 %v754, %v754
        %v1063 = vpack.c.bf16 %v756, %v756
        %v1064 = vpack.c.bf16 %v759, %v759
        %v1065 = vpack.c.bf16 %v761, %v761
        %v1066 = vpack.c.bf16 %v764, %v764
        %v1067 = vpack.c.bf16 %v766, %v766
        %s1068 = scalar_lea.vmem %s326, 160 [#allocation2]
        %1069 = vst.msk [vmem:[%s1068] sm:$0xf] %vm906, %v1060
        %1070 = vst.msk [vmem:[%s1068 + $0x4] sm:$0xf] %vm906, %v1061
        %1071 = vst.msk [vmem:[%s1068 + $0x8] sm:$0xf] %vm906, %v1062
        %1072 = vst.msk [vmem:[%s1068 + $0xc] sm:$0xf] %vm906, %v1063
        %1073 = vst.msk [vmem:[%s1068 + $0x10] sm:$0xf] %vm906, %v1064
        %1074 = vst.msk [vmem:[%s1068 + $0x14] sm:$0xf] %vm906, %v1065
        %1075 = vst.msk [vmem:[%s1068 + $0x18] sm:$0xf] %vm906, %v1066
        %v1076 = vld [vmem:[%s1068 + $0x1c] sm:$0xf]
        %v1077 = vsel %vm916, %v1067, %v1076
        %1078 = vst [vmem:[%s1068 + $0x1c] sm:$0xf] %v1077
        %vm1079 = vcmask 253952
        %1080 = vst.msk [vmem:[%s343 + $0x3f] sm:$0x1] %vm1079, 0.0
        %vm1081 = vcmask 122880
        %1082 = vst.msk [vmem:[%s349 + $0x3f] sm:$0x1] %vm1081, 0.0
        %vm1083 = vcmask 125955
        %vm1084 = vsmask.f32 7950
        %vm1085 = vmand %vm1083, %vm1084
        %v1086 = vld [vmem:[%s326 + $0x1c] sm:$0x8]
        %v1087 = vsel %vm1085, 0, %v1086
        %1088 = vst [vmem:[%s326 + $0x1c] sm:$0x8] %v1087
        %v1089 = vld [vmem:[%s944 + $0x1c] sm:$0x8]
        %v1090 = vsel %vm1085, 0, %v1089
        %1091 = vst [vmem:[%s944 + $0x1c] sm:$0x8] %v1090
        %v1092 = vld [vmem:[%s979 + $0x1c] sm:$0x8]
        %v1093 = vsel %vm1085, 0, %v1092
        %1094 = vst [vmem:[%s979 + $0x1c] sm:$0x8] %v1093
        %v1095 = vld [vmem:[%s1014 + $0x1c] sm:$0x8]
        %v1096 = vsel %vm1085, 0, %v1095
        %1097 = vst [vmem:[%s1014 + $0x1c] sm:$0x8] %v1096
        %v1098 = vld [vmem:[%s1049 + $0x1c] sm:$0x8]
        %v1099 = vsel %vm1085, 0, %v1098
        %1100 = vst [vmem:[%s1049 + $0x1c] sm:$0x8] %v1099
        %v1101 = vld [vmem:[%s1068 + $0x1c] sm:$0x8]
        %v1102 = vsel %vm1085, 0, %v1101
        %1103 = vst [vmem:[%s1068 + $0x1c] sm:$0x8] %v1102
        %s1104 = smul.u32 8, %s20
        %p1105 = scmp.lt.s32.totalorder %s1104, 15
        %s1106 = scalar_select %p1105, %s1104, 15
        %s1107 = smul.addr %s1106, 8
        %s1108 = scalar_lea.vmem %s6, %s1107
        %s1109 = smul.u32 8, %s20
        %p1110 = scmp.lt.s32.totalorder %s1109, 15
        %s1111 = scalar_select %p1110, %s1109, 15
        %s1112 = smul.addr %s1111, 8
        %s1113 = scalar_lea.vmem %s7, %s1112
        %s1114 = sand.u32 %s216, 1
        %s1115 = sand.u32 %s216, 1
        %s1116 = smul.addr %s1115, 192
        %s1117 = scalar_lea.vmem [#allocation2], %s1116
        // Predicated region
        $region45: #{graph_wavenet_forward.16} parent=43 // pred_check
          %p1118 = pneg %p174
        $region46: #{graph_wavenet_forward.16} parent=43 // pred_check_branch
          %1120 = sbr.rel (%p1118) target = $region48
        $region47: #{graph_wavenet_forward.16} parent=43 // pred_region
          %s1121 = smul.u32 8, %s20
        $region48: #{graph_wavenet_forward.16} parent=43 // pred_fallthru
          _
        // Predicated region
        $region49: #{graph_wavenet_forward.16} parent=43 // pred_check
          %p1122 = pneg %p200
        $region50: #{graph_wavenet_forward.16} parent=43 // pred_check_branch
          %1124 = sbr.rel (%p1122) target = $region52
        $region51: #{graph_wavenet_forward.16} parent=43 // pred_region
          %s1125 = smul.u32 8, %s20
        $region52: #{graph_wavenet_forward.16} parent=43 // pred_fallthru
          _
        // Predicated region
        $region53: #{graph_wavenet_forward.16} parent=43 // pred_check
          %p1126 = pneg %p226
        $region54: #{graph_wavenet_forward.16} parent=43 // pred_check_branch
          %1128 = sbr.rel (%p1126) target = $region56
        $region55: #{graph_wavenet_forward.16} parent=43 // pred_region
          %s1129 = smul.u32 8, %s20
          %s1130 = smul.addr %s1129, 4
          %s1131 = scalar_lea.vmem %s8, %s1130
          // Predicated region
          $region57: #{graph_wavenet_forward.16} parent=55 // pred_check
            _
          $region58: #{graph_wavenet_forward.16} parent=55 // pred_check_branch
            %1133 = sbr.rel (0) target = $region60
          $region59: #{graph_wavenet_forward.16} parent=55 // pred_region
            // Predicated region
            $region61: #{graph_wavenet_forward.16} parent=59 // pred_check
              _
            $region62: #{graph_wavenet_forward.16} parent=59 // pred_check_branch
              %1135 = sbr.rel target = $region64
            $region63: #{graph_wavenet_forward.16} parent=59 // pred_region
              // Predicated region
              $region76: #{graph_wavenet_forward.16} parent=63 // pred_check
                _
              $region77: #{graph_wavenet_forward.16} parent=63 // pred_check_branch
                %1245 = sbr.rel (0) target = $region79
              $region78: #{graph_wavenet_forward.16} parent=63 // pred_region
                loop: start=0, step=1, limit=1
                $region80: #{graph_wavenet_forward.16} parent=78 // loop_pre_header
                  _
                $region81: #{graph_wavenet_forward.16} parent=78 // loop_header
                  %s1247 = sphi 0, %s1251
                  %p1248 = scmp.ge.s32.totalorder %s1247, 1
                  %s1252 = sphi %s1117, %s1117
                  %s1253 = sphi %s1131, %s1131
                $region82: #{graph_wavenet_forward.16} parent=78 // loop_header_branch
                  %1250 = sbr.rel (%p1248) target = $region86
                $region83: #{graph_wavenet_forward.16} parent=78 // loop_body
                  _
                $region84: #{graph_wavenet_forward.16} parent=78 // loop_footer
                  %s1251 = sadd.s32 1, %s1247
                $region85: #{graph_wavenet_forward.16} parent=78 // loop_footer_branch
                  %1246 = sbr.rel target = $region81
                $region86: #{graph_wavenet_forward.16} parent=78 // loop_exit
                  _
                %s1255 = ssub.s32 16, 1
                loop: start=0, step=1, limit=1
                $region87: #{graph_wavenet_forward.16} parent=78 // loop_pre_header
                  _
                $region88: #{graph_wavenet_forward.16} parent=78 // loop_header
                  %s1257 = sphi 0, %s1261
                  %p1258 = scmp.ge.s32.totalorder %s1257, 1
                  %s1262 = sphi %s1117, %s1117
                  %s1263 = sphi %s1131, %s1131
                $region89: #{graph_wavenet_forward.16} parent=78 // loop_header_branch
                  %1260 = sbr.rel (%p1258) target = $region93
                $region90: #{graph_wavenet_forward.16} parent=78 // loop_body
                  %v1264 = vld [vmem:[%s1262] sm:%s1255]
                  %1265 = vst [vmem:[%s1263] sm:%s1255] %v1264
                  %v1266 = vld [vmem:[%s1262 + $0x4] sm:%s1255]
                  %1267 = vst [vmem:[%s1263 + $0x4] sm:%s1255] %v1266
                  %v1268 = vld [vmem:[%s1262 + $0x8] sm:%s1255]
                  %1269 = vst [vmem:[%s1263 + $0x8] sm:%s1255] %v1268
                  %v1270 = vld [vmem:[%s1262 + $0xc] sm:%s1255]
                  %1271 = vst [vmem:[%s1263 + $0xc] sm:%s1255] %v1270
                  %v1272 = vld [vmem:[%s1262 + $0x10] sm:%s1255]
                  %1273 = vst [vmem:[%s1263 + $0x10] sm:%s1255] %v1272
                  %v1274 = vld [vmem:[%s1262 + $0x14] sm:%s1255]
                  %1275 = vst [vmem:[%s1263 + $0x14] sm:%s1255] %v1274
                  %v1276 = vld [vmem:[%s1262 + $0x18] sm:%s1255]
                  %1277 = vst [vmem:[%s1263 + $0x18] sm:%s1255] %v1276
                  %v1278 = vld [vmem:[%s1262 + $0x1c] sm:%s1255]
                  %1279 = vst [vmem:[%s1263 + $0x1c] sm:%s1255] %v1278
                  %v1280 = vld [vmem:[%s1262 + $0x20] sm:%s1255]
                  %1281 = vst [vmem:[%s1263 + $0x40] sm:%s1255] %v1280
                  %v1282 = vld [vmem:[%s1262 + $0x24] sm:%s1255]
                  %1283 = vst [vmem:[%s1263 + $0x44] sm:%s1255] %v1282
                  %v1284 = vld [vmem:[%s1262 + $0x28] sm:%s1255]
                  %1285 = vst [vmem:[%s1263 + $0x48] sm:%s1255] %v1284
                  %v1286 = vld [vmem:[%s1262 + $0x2c] sm:%s1255]
                  %1287 = vst [vmem:[%s1263 + $0x4c] sm:%s1255] %v1286
                  %v1288 = vld [vmem:[%s1262 + $0x30] sm:%s1255]
                  %1289 = vst [vmem:[%s1263 + $0x50] sm:%s1255] %v1288
                  %v1290 = vld [vmem:[%s1262 + $0x34] sm:%s1255]
                  %1291 = vst [vmem:[%s1263 + $0x54] sm:%s1255] %v1290
                  %v1292 = vld [vmem:[%s1262 + $0x38] sm:%s1255]
                  %1293 = vst [vmem:[%s1263 + $0x58] sm:%s1255] %v1292
                  %v1294 = vld [vmem:[%s1262 + $0x3c] sm:%s1255]
                  %1295 = vst [vmem:[%s1263 + $0x5c] sm:%s1255] %v1294
                  %v1296 = vld [vmem:[%s1262 + $0x40] sm:%s1255]
                  %1297 = vst [vmem:[%s1263 + $0x80] sm:%s1255] %v1296
                  %v1298 = vld [vmem:[%s1262 + $0x44] sm:%s1255]
                  %1299 = vst [vmem:[%s1263 + $0x84] sm:%s1255] %v1298
                  %v1300 = vld [vmem:[%s1262 + $0x48] sm:%s1255]
                  %1301 = vst [vmem:[%s1263 + $0x88] sm:%s1255] %v1300
                  %v1302 = vld [vmem:[%s1262 + $0x4c] sm:%s1255]
                  %1303 = vst [vmem:[%s1263 + $0x8c] sm:%s1255] %v1302
                  %v1304 = vld [vmem:[%s1262 + $0x50] sm:%s1255]
                  %1305 = vst [vmem:[%s1263 + $0x90] sm:%s1255] %v1304
                  %v1306 = vld [vmem:[%s1262 + $0x54] sm:%s1255]
                  %1307 = vst [vmem:[%s1263 + $0x94] sm:%s1255] %v1306
                  %v1308 = vld [vmem:[%s1262 + $0x58] sm:%s1255]
                  %1309 = vst [vmem:[%s1263 + $0x98] sm:%s1255] %v1308
                  %v1310 = vld [vmem:[%s1262 + $0x5c] sm:%s1255]
                  %1311 = vst [vmem:[%s1263 + $0x9c] sm:%s1255] %v1310
                  %v1312 = vld [vmem:[%s1262 + $0x60] sm:%s1255]
                  %1313 = vst [vmem:[%s1263 + $0xc0] sm:%s1255] %v1312
                  %v1314 = vld [vmem:[%s1262 + $0x64] sm:%s1255]
                  %1315 = vst [vmem:[%s1263 + $0xc4] sm:%s1255] %v1314
                  %v1316 = vld [vmem:[%s1262 + $0x68] sm:%s1255]
                  %1317 = vst [vmem:[%s1263 + $0xc8] sm:%s1255] %v1316
                  %v1318 = vld [vmem:[%s1262 + $0x6c] sm:%s1255]
                  %1319 = vst [vmem:[%s1263 + $0xcc] sm:%s1255] %v1318
                  %v1320 = vld [vmem:[%s1262 + $0x70] sm:%s1255]
                  %1321 = vst [vmem:[%s1263 + $0xd0] sm:%s1255] %v1320
                  %v1322 = vld [vmem:[%s1262 + $0x74] sm:%s1255]
                  %1323 = vst [vmem:[%s1263 + $0xd4] sm:%s1255] %v1322
                  %v1324 = vld [vmem:[%s1262 + $0x78] sm:%s1255]
                  %1325 = vst [vmem:[%s1263 + $0xd8] sm:%s1255] %v1324
                  %v1326 = vld [vmem:[%s1262 + $0x7c] sm:%s1255]
                  %1327 = vst [vmem:[%s1263 + $0xdc] sm:%s1255] %v1326
                  %v1328 = vld [vmem:[%s1262 + $0x80] sm:%s1255]
                  %1329 = vst [vmem:[%s1263 + $0x100] sm:%s1255] %v1328
                  %v1330 = vld [vmem:[%s1262 + $0x84] sm:%s1255]
                  %1331 = vst [vmem:[%s1263 + $0x104] sm:%s1255] %v1330
                  %v1332 = vld [vmem:[%s1262 + $0x88] sm:%s1255]
                  %1333 = vst [vmem:[%s1263 + $0x108] sm:%s1255] %v1332
                  %v1334 = vld [vmem:[%s1262 + $0x8c] sm:%s1255]
                  %1335 = vst [vmem:[%s1263 + $0x10c] sm:%s1255] %v1334
                  %v1336 = vld [vmem:[%s1262 + $0x90] sm:%s1255]
                  %1337 = vst [vmem:[%s1263 + $0x110] sm:%s1255] %v1336
                  %v1338 = vld [vmem:[%s1262 + $0x94] sm:%s1255]
                  %1339 = vst [vmem:[%s1263 + $0x114] sm:%s1255] %v1338
                  %v1340 = vld [vmem:[%s1262 + $0x98] sm:%s1255]
                  %1341 = vst [vmem:[%s1263 + $0x118] sm:%s1255] %v1340
                  %v1342 = vld [vmem:[%s1262 + $0x9c] sm:%s1255]
                  %1343 = vst [vmem:[%s1263 + $0x11c] sm:%s1255] %v1342
                  %v1344 = vld [vmem:[%s1262 + $0xa0] sm:%s1255]
                  %1345 = vst [vmem:[%s1263 + $0x140] sm:%s1255] %v1344
                  %v1346 = vld [vmem:[%s1262 + $0xa4] sm:%s1255]
                  %1347 = vst [vmem:[%s1263 + $0x144] sm:%s1255] %v1346
                  %v1348 = vld [vmem:[%s1262 + $0xa8] sm:%s1255]
                  %1349 = vst [vmem:[%s1263 + $0x148] sm:%s1255] %v1348
                  %v1350 = vld [vmem:[%s1262 + $0xac] sm:%s1255]
                  %1351 = vst [vmem:[%s1263 + $0x14c] sm:%s1255] %v1350
                  %v1352 = vld [vmem:[%s1262 + $0xb0] sm:%s1255]
                  %1353 = vst [vmem:[%s1263 + $0x150] sm:%s1255] %v1352
                  %v1354 = vld [vmem:[%s1262 + $0xb4] sm:%s1255]
                  %1355 = vst [vmem:[%s1263 + $0x154] sm:%s1255] %v1354
                  %v1356 = vld [vmem:[%s1262 + $0xb8] sm:%s1255]
                  %1357 = vst [vmem:[%s1263 + $0x158] sm:%s1255] %v1356
                  %v1358 = vld [vmem:[%s1262 + $0xbc] sm:%s1255]
                  %1359 = vst [vmem:[%s1263 + $0x15c] sm:%s1255] %v1358
                $region91: #{graph_wavenet_forward.16} parent=78 // loop_footer
                  %s1261 = sadd.s32 1, %s1257
                $region92: #{graph_wavenet_forward.16} parent=78 // loop_footer_branch
                  %1256 = sbr.rel target = $region88
                $region93: #{graph_wavenet_forward.16} parent=78 // loop_exit
                  _
              $region79: #{graph_wavenet_forward.16} parent=63 // pred_fallthru
                _
            $region64: #{graph_wavenet_forward.16} parent=59 // pred_fallthru
              _
            // Predicated region
            $region65: #{graph_wavenet_forward.16} parent=59 // pred_check
              _
            $region66: #{graph_wavenet_forward.16} parent=59 // pred_check_branch
              %1137 = sbr.rel (0) target = $region68
            $region67: #{graph_wavenet_forward.16} parent=59 // pred_region
              %s1139 = ssub.s32 16, 1
              loop: start=0, step=1, limit=1
              $region69: #{graph_wavenet_forward.16} parent=67 // loop_pre_header
                _
              $region70: #{graph_wavenet_forward.16} parent=67 // loop_header
                %s1141 = sphi 0, %s1145
                %p1142 = scmp.ge.s32.totalorder %s1141, 1
                %s1146 = sphi %s1117, %s1117
                %s1147 = sphi %s1131, %s1131
              $region71: #{graph_wavenet_forward.16} parent=67 // loop_header_branch
                %1144 = sbr.rel (%p1142) target = $region75
              $region72: #{graph_wavenet_forward.16} parent=67 // loop_body
                %v1148 = vld [vmem:[%s1146] sm:%s1139]
                %1149 = vst [vmem:[%s1147] sm:%s1139] %v1148
                %v1150 = vld [vmem:[%s1146 + $0x4] sm:%s1139]
                %1151 = vst [vmem:[%s1147 + $0x4] sm:%s1139] %v1150
                %v1152 = vld [vmem:[%s1146 + $0x8] sm:%s1139]
                %1153 = vst [vmem:[%s1147 + $0x8] sm:%s1139] %v1152
                %v1154 = vld [vmem:[%s1146 + $0xc] sm:%s1139]
                %1155 = vst [vmem:[%s1147 + $0xc] sm:%s1139] %v1154
                %v1156 = vld [vmem:[%s1146 + $0x10] sm:%s1139]
                %1157 = vst [vmem:[%s1147 + $0x10] sm:%s1139] %v1156
                %v1158 = vld [vmem:[%s1146 + $0x14] sm:%s1139]
                %1159 = vst [vmem:[%s1147 + $0x14] sm:%s1139] %v1158
                %v1160 = vld [vmem:[%s1146 + $0x18] sm:%s1139]
                %1161 = vst [vmem:[%s1147 + $0x18] sm:%s1139] %v1160
                %v1162 = vld [vmem:[%s1146 + $0x1c] sm:%s1139]
                %1163 = vst [vmem:[%s1147 + $0x1c] sm:%s1139] %v1162
                %v1164 = vld [vmem:[%s1146 + $0x20] sm:%s1139]
                %1165 = vst [vmem:[%s1147 + $0x40] sm:%s1139] %v1164
                %v1166 = vld [vmem:[%s1146 + $0x24] sm:%s1139]
                %1167 = vst [vmem:[%s1147 + $0x44] sm:%s1139] %v1166
                %v1168 = vld [vmem:[%s1146 + $0x28] sm:%s1139]
                %1169 = vst [vmem:[%s1147 + $0x48] sm:%s1139] %v1168
                %v1170 = vld [vmem:[%s1146 + $0x2c] sm:%s1139]
                %1171 = vst [vmem:[%s1147 + $0x4c] sm:%s1139] %v1170
                %v1172 = vld [vmem:[%s1146 + $0x30] sm:%s1139]
                %1173 = vst [vmem:[%s1147 + $0x50] sm:%s1139] %v1172
                %v1174 = vld [vmem:[%s1146 + $0x34] sm:%s1139]
                %1175 = vst [vmem:[%s1147 + $0x54] sm:%s1139] %v1174
                %v1176 = vld [vmem:[%s1146 + $0x38] sm:%s1139]
                %1177 = vst [vmem:[%s1147 + $0x58] sm:%s1139] %v1176
                %v1178 = vld [vmem:[%s1146 + $0x3c] sm:%s1139]
                %1179 = vst [vmem:[%s1147 + $0x5c] sm:%s1139] %v1178
                %v1180 = vld [vmem:[%s1146 + $0x40] sm:%s1139]
                %1181 = vst [vmem:[%s1147 + $0x80] sm:%s1139] %v1180
                %v1182 = vld [vmem:[%s1146 + $0x44] sm:%s1139]
                %1183 = vst [vmem:[%s1147 + $0x84] sm:%s1139] %v1182
                %v1184 = vld [vmem:[%s1146 + $0x48] sm:%s1139]
                %1185 = vst [vmem:[%s1147 + $0x88] sm:%s1139] %v1184
                %v1186 = vld [vmem:[%s1146 + $0x4c] sm:%s1139]
                %1187 = vst [vmem:[%s1147 + $0x8c] sm:%s1139] %v1186
                %v1188 = vld [vmem:[%s1146 + $0x50] sm:%s1139]
                %1189 = vst [vmem:[%s1147 + $0x90] sm:%s1139] %v1188
                %v1190 = vld [vmem:[%s1146 + $0x54] sm:%s1139]
                %1191 = vst [vmem:[%s1147 + $0x94] sm:%s1139] %v1190
                %v1192 = vld [vmem:[%s1146 + $0x58] sm:%s1139]
                %1193 = vst [vmem:[%s1147 + $0x98] sm:%s1139] %v1192
                %v1194 = vld [vmem:[%s1146 + $0x5c] sm:%s1139]
                %1195 = vst [vmem:[%s1147 + $0x9c] sm:%s1139] %v1194
                %v1196 = vld [vmem:[%s1146 + $0x60] sm:%s1139]
                %1197 = vst [vmem:[%s1147 + $0xc0] sm:%s1139] %v1196
                %v1198 = vld [vmem:[%s1146 + $0x64] sm:%s1139]
                %1199 = vst [vmem:[%s1147 + $0xc4] sm:%s1139] %v1198
                %v1200 = vld [vmem:[%s1146 + $0x68] sm:%s1139]
                %1201 = vst [vmem:[%s1147 + $0xc8] sm:%s1139] %v1200
                %v1202 = vld [vmem:[%s1146 + $0x6c] sm:%s1139]
                %1203 = vst [vmem:[%s1147 + $0xcc] sm:%s1139] %v1202
                %v1204 = vld [vmem:[%s1146 + $0x70] sm:%s1139]
                %1205 = vst [vmem:[%s1147 + $0xd0] sm:%s1139] %v1204
                %v1206 = vld [vmem:[%s1146 + $0x74] sm:%s1139]
                %1207 = vst [vmem:[%s1147 + $0xd4] sm:%s1139] %v1206
                %v1208 = vld [vmem:[%s1146 + $0x78] sm:%s1139]
                %1209 = vst [vmem:[%s1147 + $0xd8] sm:%s1139] %v1208
                %v1210 = vld [vmem:[%s1146 + $0x7c] sm:%s1139]
                %1211 = vst [vmem:[%s1147 + $0xdc] sm:%s1139] %v1210
                %v1212 = vld [vmem:[%s1146 + $0x80] sm:%s1139]
                %1213 = vst [vmem:[%s1147 + $0x100] sm:%s1139] %v1212
                %v1214 = vld [vmem:[%s1146 + $0x84] sm:%s1139]
                %1215 = vst [vmem:[%s1147 + $0x104] sm:%s1139] %v1214
                %v1216 = vld [vmem:[%s1146 + $0x88] sm:%s1139]
                %1217 = vst [vmem:[%s1147 + $0x108] sm:%s1139] %v1216
                %v1218 = vld [vmem:[%s1146 + $0x8c] sm:%s1139]
                %1219 = vst [vmem:[%s1147 + $0x10c] sm:%s1139] %v1218
                %v1220 = vld [vmem:[%s1146 + $0x90] sm:%s1139]
                %1221 = vst [vmem:[%s1147 + $0x110] sm:%s1139] %v1220
                %v1222 = vld [vmem:[%s1146 + $0x94] sm:%s1139]
                %1223 = vst [vmem:[%s1147 + $0x114] sm:%s1139] %v1222
                %v1224 = vld [vmem:[%s1146 + $0x98] sm:%s1139]
                %1225 = vst [vmem:[%s1147 + $0x118] sm:%s1139] %v1224
                %v1226 = vld [vmem:[%s1146 + $0x9c] sm:%s1139]
                %1227 = vst [vmem:[%s1147 + $0x11c] sm:%s1139] %v1226
                %v1228 = vld [vmem:[%s1146 + $0xa0] sm:%s1139]
                %1229 = vst [vmem:[%s1147 + $0x140] sm:%s1139] %v1228
                %v1230 = vld [vmem:[%s1146 + $0xa4] sm:%s1139]
                %1231 = vst [vmem:[%s1147 + $0x144] sm:%s1139] %v1230
                %v1232 = vld [vmem:[%s1146 + $0xa8] sm:%s1139]
                %1233 = vst [vmem:[%s1147 + $0x148] sm:%s1139] %v1232
                %v1234 = vld [vmem:[%s1146 + $0xac] sm:%s1139]
                %1235 = vst [vmem:[%s1147 + $0x14c] sm:%s1139] %v1234
                %v1236 = vld [vmem:[%s1146 + $0xb0] sm:%s1139]
                %1237 = vst [vmem:[%s1147 + $0x150] sm:%s1139] %v1236
                %v1238 = vld [vmem:[%s1146 + $0xb4] sm:%s1139]
                %1239 = vst [vmem:[%s1147 + $0x154] sm:%s1139] %v1238
                %v1240 = vld [vmem:[%s1146 + $0xb8] sm:%s1139]
                %1241 = vst [vmem:[%s1147 + $0x158] sm:%s1139] %v1240
                %v1242 = vld [vmem:[%s1146 + $0xbc] sm:%s1139]
                %1243 = vst [vmem:[%s1147 + $0x15c] sm:%s1139] %v1242
              $region73: #{graph_wavenet_forward.16} parent=67 // loop_footer
                %s1145 = sadd.s32 1, %s1141
              $region74: #{graph_wavenet_forward.16} parent=67 // loop_footer_branch
                %1140 = sbr.rel target = $region70
              $region75: #{graph_wavenet_forward.16} parent=67 // loop_exit
                _
            $region68: #{graph_wavenet_forward.16} parent=59 // pred_fallthru
              _
          $region60: #{graph_wavenet_forward.16} parent=55 // pred_fallthru
            _
          %1360 = vnop
        $region56: #{graph_wavenet_forward.16} parent=43 // pred_fallthru
          _
      $region44: #{graph_wavenet_forward.16} parent=5 // pred_fallthru
        _
      %p1361 = scmp.le.s32.totalorder 2, %s15
      // Predicated region
      $region94: #{graph_wavenet_forward.16} parent=5 // pred_check
        %p1362 = pneg %p1361
      $region95: #{graph_wavenet_forward.16} parent=5 // pred_check_branch
        %1364 = sbr.rel (%p1362) target = $region97
      $region96: #{graph_wavenet_forward.16} parent=5 // pred_region
        %s1365 = ssub.s32 %s15, 2
        // Predicated region
        $region98: #{graph_wavenet_forward.16} parent=96 // pred_check
          %p1366 = pneg %p180
        $region99: #{graph_wavenet_forward.16} parent=96 // pred_check_branch
          %1368 = sbr.rel (%p1366) target = $region101
        $region100: #{graph_wavenet_forward.16} parent=96 // pred_region
          %s1369 = smul.u32 8, %s21
          %p1370 = scmp.lt.s32.totalorder %s1369, 15
          %s1371 = scalar_select %p1370, %s1369, 15
          %s1372 = smul.addr %s1371, 8
          %s1373 = scalar_lea.vmem %s6, %s1372
        $region101: #{graph_wavenet_forward.16} parent=96 // pred_fallthru
          _
        // Predicated region
        $region102: #{graph_wavenet_forward.16} parent=96 // pred_check
          %p1374 = pneg %p206
        $region103: #{graph_wavenet_forward.16} parent=96 // pred_check_branch
          %1376 = sbr.rel (%p1374) target = $region105
        $region104: #{graph_wavenet_forward.16} parent=96 // pred_region
          %s1377 = smul.u32 8, %s21
          %p1378 = scmp.lt.s32.totalorder %s1377, 15
          %s1379 = scalar_select %p1378, %s1377, 15
          %s1380 = smul.addr %s1379, 8
          %s1381 = scalar_lea.vmem %s7, %s1380
        $region105: #{graph_wavenet_forward.16} parent=96 // pred_fallthru
          _
        // Predicated region
        $region106: #{graph_wavenet_forward.16} parent=96 // pred_check
          %p1382 = pneg %p232
        $region107: #{graph_wavenet_forward.16} parent=96 // pred_check_branch
          %1384 = sbr.rel (%p1382) target = $region109
        $region108: #{graph_wavenet_forward.16} parent=96 // pred_region
          %s1385 = sand.u32 %s217, 1
          %s1386 = sand.u32 %s217, 1
          %s1387 = smul.addr %s1386, 192
          %s1388 = scalar_lea.vmem [#allocation2], %s1387
        $region109: #{graph_wavenet_forward.16} parent=96 // pred_fallthru
          _
      $region97: #{graph_wavenet_forward.16} parent=5 // pred_fallthru
        _
    $region6: #{graph_wavenet_forward.16} parent=1 // loop_footer
      %s19 = sadd.s32 1, %s15
    $region7: #{graph_wavenet_forward.16} parent=1 // loop_footer_branch
      %14 = sbr.rel target = $region3
    $region8: #{graph_wavenet_forward.16} parent=1 // loop_exit
      _

// kernel: graph_wavenet_forward.14
$region0: #{graph_wavenet_forward.14}
  #allocation0 [shape = 'u32[]', space=smem, size = 0x4, offset = 0x4, fixed_abs, tag = 'smem constant byte address 0x4 - core index']
  #allocation1 [shape = 'u32[72,128]{1,0:T(1,128)}', space=vmem, size = 0x9000, scoped, tag = 'internal scratch']
  %s0 = inlined_call_operand.vmem [shape: f32[128,16], index: 0, kind: input, shape index: {}]
  %s1 = inlined_call_operand.vmem [shape: f32[128,32], index: 1, kind: input, shape index: {}, may-alias: {1,6}]
  %s2 = inlined_call_operand.vmem [shape: bf16[32,32], index: 2, kind: input, shape index: {}]
  %s3 = inlined_call_operand.vmem [shape: f32[1,32], index: 3, kind: input, shape index: {}]
  %s4 = inlined_call_operand.vmem [shape: bf16[16,144], index: 4, kind: input, shape index: {}]
  %s5 = inlined_call_operand.vmem [shape: f32[1,144], index: 5, kind: input, shape index: {}]
  %s6 = inlined_call_operand.vmem [shape: f32[128,32], index: 6, kind: output, shape index: {0}, may-alias: {1,6}]
  %s7 = inlined_call_operand.vmem [shape: f32[128,16], index: 7, kind: output, shape index: {1}]
  %s8 = inlined_call_operand.vmem [shape: bf16[6,128,16], index: 8, kind: output, shape index: {2}]
  %9 = xla_tuple %s6, %s7, %s8
  %s10 = sld [smem:[#allocation0]]
  $region110: #{graph_wavenet_forward.14} parent=0
    _
  %s12 = ssub.s32 1, %s10
  %s13 = scalar_select 0, %s12, %s10
  $region1: #{graph_wavenet_forward.14} parent=0
    #allocation2 [shape = 'u8[196608]{0}', space=vmem, size = 0x30000, scoped, tag = 'output window, operand 2']
    loop: start=0, step=1, limit=4
    $region2: #{graph_wavenet_forward.14} parent=1 // loop_pre_header
      _
    $region3: #{graph_wavenet_forward.14} parent=1 // loop_header
      %s15 = sphi 0, %s19
      %p16 = scmp.ge.s32.totalorder %s15, 4
      %s25 = sphi 0, %s27
      %s28 = sphi 0, %s25
      %s29 = sphi 0, %s28
      %s45 = sphi 0, %s29
      %s51 = sphi 0, %s53
      %s54 = sphi 0, %s51
      %s55 = sphi 0, %s54
      %s71 = sphi 0, %s55
      %s75 = sphi 0, %s75
      %s77 = sphi 0, %s75
      %s78 = sphi 0, %s77
      %s92 = sphi 0, %s78
      %s96 = sphi 0, %s96
      %s98 = sphi 0, %s96
      %s99 = sphi 0, %s98
      %s113 = sphi 0, %s99
      %s117 = sphi 0, %s117
      %s119 = sphi 0, %s117
      %s120 = sphi 0, %s119
      %s134 = sphi 0, %s120
      %s138 = sphi 0, %s138
      %s140 = sphi 0, %s138
      %s141 = sphi 0, %s140
      %s155 = sphi 0, %s141
      %s161 = sphi 0, %s163
      %s164 = sphi 0, %s161
      %s165 = sphi 0, %s164
      %s181 = sphi 0, %s165
      %s187 = sphi 0, %s189
      %s190 = sphi 0, %s187
      %s191 = sphi 0, %s190
      %s207 = sphi 0, %s191
      %s213 = sphi 0, %s215
      %s216 = sphi 0, %s213
      %s217 = sphi 0, %s216
      %s233 = sphi 0, %s217
    $region4: #{graph_wavenet_forward.14} parent=1 // loop_header_branch
      %18 = sbr.rel (%p16) target = $region8
    $region5: #{graph_wavenet_forward.14} parent=1 // loop_body
      %s20 = ssub.s32 %s15, 1
      %s21 = ssub.s32 %s15, 2
      %s22 = sadd.s32 %s15, 1
      %s23 = ssub.s32 %s15, %s22
      %p24 = scmp.eq.s32.totalorder %s23, 0
      %s26 = sadd.s32 %s25, 1
      %s27 = scalar_select %p24, %s25, %s26
      %p30 = pneg %p24
      %p31 = scmp.eq.s32.totalorder %s15, 1
      %p32 = por %p30, %p31
      %p33 = scmp.ne.s32.totalorder %s25, %s28
      %p34 = scmp.eq.s32.totalorder %s15, 0
      %p35 = por %p33, %p34
      %p36 = scmp.ne.s32.totalorder %s25, %s28
      %p37 = scmp.eq.s32.totalorder %s20, 1
      %p38 = por %p36, %p37
      %p39 = scmp.ne.s32.totalorder %s28, %s29
      %p40 = scmp.eq.s32.totalorder %s20, 0
      %p41 = por %p39, %p40
      %p42 = scmp.ne.s32.totalorder %s28, %s29
      %p43 = scmp.eq.s32.totalorder %s21, 1
      %p44 = por %p42, %p43
      %p46 = scmp.ne.s32.totalorder %s29, %s45
      %p47 = scmp.eq.s32.totalorder %s21, 0
      %p48 = por %p46, %p47
      %s49 = ssub.s32 %s15, %s22
      %p50 = scmp.eq.s32.totalorder %s49, 0
      %s52 = sadd.s32 %s51, 1
      %s53 = scalar_select %p50, %s51, %s52
      %p56 = pneg %p50
      %p57 = scmp.eq.s32.totalorder %s15, 1
      %p58 = por %p56, %p57
      %p59 = scmp.ne.s32.totalorder %s51, %s54
      %p60 = scmp.eq.s32.totalorder %s15, 0
      %p61 = por %p59, %p60
      %p62 = scmp.ne.s32.totalorder %s51, %s54
      %p63 = scmp.eq.s32.totalorder %s20, 1
      %p64 = por %p62, %p63
      %p65 = scmp.ne.s32.totalorder %s54, %s55
      %p66 = scmp.eq.s32.totalorder %s20, 0
      %p67 = por %p65, %p66
      %p68 = scmp.ne.s32.totalorder %s54, %s55
      %p69 = scmp.eq.s32.totalorder %s21, 1
      %p70 = por %p68, %p69
      %p72 = scmp.ne.s32.totalorder %s55, %s71
      %p73 = scmp.eq.s32.totalorder %s21, 0
      %p74 = por %p72, %p73
      %s76 = sadd.s32 %s75, 1
      %p79 = scmp.eq.s32.totalorder %s15, 1
      %p80 = scmp.ne.s32.totalorder %s75, %s77
      %p81 = scmp.eq.s32.totalorder %s15, 0
      %p82 = por %p80, %p81
      %p83 = scmp.ne.s32.totalorder %s75, %s77
      %p84 = scmp.eq.s32.totalorder %s20, 1
      %p85 = por %p83, %p84
      %p86 = scmp.ne.s32.totalorder %s77, %s78
      %p87 = scmp.eq.s32.totalorder %s20, 0
      %p88 = por %p86, %p87
      %p89 = scmp.ne.s32.totalorder %s77, %s78
      %p90 = scmp.eq.s32.totalorder %s21, 1
      %p91 = por %p89, %p90
      %p93 = scmp.ne.s32.totalorder %s78, %s92
      %p94 = scmp.eq.s32.totalorder %s21, 0
      %p95 = por %p93, %p94
      %s97 = sadd.s32 %s96, 1
      %p100 = scmp.eq.s32.totalorder %s15, 1
      %p101 = scmp.ne.s32.totalorder %s96, %s98
      %p102 = scmp.eq.s32.totalorder %s15, 0
      %p103 = por %p101, %p102
      %p104 = scmp.ne.s32.totalorder %s96, %s98
      %p105 = scmp.eq.s32.totalorder %s20, 1
      %p106 = por %p104, %p105
      %p107 = scmp.ne.s32.totalorder %s98, %s99
      %p108 = scmp.eq.s32.totalorder %s20, 0
      %p109 = por %p107, %p108
      %p110 = scmp.ne.s32.totalorder %s98, %s99
      %p111 = scmp.eq.s32.totalorder %s21, 1
      %p112 = por %p110, %p111
      %p114 = scmp.ne.s32.totalorder %s99, %s113
      %p115 = scmp.eq.s32.totalorder %s21, 0
      %p116 = por %p114, %p115
      %s118 = sadd.s32 %s117, 1
      %p121 = scmp.eq.s32.totalorder %s15, 1
      %p122 = scmp.ne.s32.totalorder %s117, %s119
      %p123 = scmp.eq.s32.totalorder %s15, 0
      %p124 = por %p122, %p123
      %p125 = scmp.ne.s32.totalorder %s117, %s119
      %p126 = scmp.eq.s32.totalorder %s20, 1
      %p127 = por %p125, %p126
      %p128 = scmp.ne.s32.totalorder %s119, %s120
      %p129 = scmp.eq.s32.totalorder %s20, 0
      %p130 = por %p128, %p129
      %p131 = scmp.ne.s32.totalorder %s119, %s120
      %p132 = scmp.eq.s32.totalorder %s21, 1
      %p133 = por %p131, %p132
      %p135 = scmp.ne.s32.totalorder %s120, %s134
      %p136 = scmp.eq.s32.totalorder %s21, 0
      %p137 = por %p135, %p136
      %s139 = sadd.s32 %s138, 1
      %p142 = scmp.eq.s32.totalorder %s15, 1
      %p143 = scmp.ne.s32.totalorder %s138, %s140
      %p144 = scmp.eq.s32.totalorder %s15, 0
      %p145 = por %p143, %p144
      %p146 = scmp.ne.s32.totalorder %s138, %s140
      %p147 = scmp.eq.s32.totalorder %s20, 1
      %p148 = por %p146, %p147
      %p149 = scmp.ne.s32.totalorder %s140, %s141
      %p150 = scmp.eq.s32.totalorder %s20, 0
      %p151 = por %p149, %p150
      %p152 = scmp.ne.s32.totalorder %s140, %s141
      %p153 = scmp.eq.s32.totalorder %s21, 1
      %p154 = por %p152, %p153
      %p156 = scmp.ne.s32.totalorder %s141, %s155
      %p157 = scmp.eq.s32.totalorder %s21, 0
      %p158 = por %p156, %p157
      %s159 = ssub.s32 %s15, %s22
      %p160 = scmp.eq.s32.totalorder %s159, 0
      %s162 = sadd.s32 %s161, 1
      %s163 = scalar_select %p160, %s161, %s162
      %p166 = pneg %p160
      %p167 = scmp.eq.s32.totalorder %s15, 1
      %p168 = por %p166, %p167
      %p169 = scmp.ne.s32.totalorder %s161, %s164
      %p170 = scmp.eq.s32.totalorder %s15, 0
      %p171 = por %p169, %p170
      %p172 = scmp.ne.s32.totalorder %s161, %s164
      %p173 = scmp.eq.s32.totalorder %s20, 1
      %p174 = por %p172, %p173
      %p175 = scmp.ne.s32.totalorder %s164, %s165
      %p176 = scmp.eq.s32.totalorder %s20, 0
      %p177 = por %p175, %p176
      %p178 = scmp.ne.s32.totalorder %s164, %s165
      %p179 = scmp.eq.s32.totalorder %s21, 1
      %p180 = por %p178, %p179
      %p182 = scmp.ne.s32.totalorder %s165, %s181
      %p183 = scmp.eq.s32.totalorder %s21, 0
      %p184 = por %p182, %p183
      %s185 = ssub.s32 %s15, %s22
      %p186 = scmp.eq.s32.totalorder %s185, 0
      %s188 = sadd.s32 %s187, 1
      %s189 = scalar_select %p186, %s187, %s188
      %p192 = pneg %p186
      %p193 = scmp.eq.s32.totalorder %s15, 1
      %p194 = por %p192, %p193
      %p195 = scmp.ne.s32.totalorder %s187, %s190
      %p196 = scmp.eq.s32.totalorder %s15, 0
      %p197 = por %p195, %p196
      %p198 = scmp.ne.s32.totalorder %s187, %s190
      %p199 = scmp.eq.s32.totalorder %s20, 1
      %p200 = por %p198, %p199
      %p201 = scmp.ne.s32.totalorder %s190, %s191
      %p202 = scmp.eq.s32.totalorder %s20, 0
      %p203 = por %p201, %p202
      %p204 = scmp.ne.s32.totalorder %s190, %s191
      %p205 = scmp.eq.s32.totalorder %s21, 1
      %p206 = por %p204, %p205
      %p208 = scmp.ne.s32.totalorder %s191, %s207
      %p209 = scmp.eq.s32.totalorder %s21, 0
      %p210 = por %p208, %p209
      %s211 = ssub.s32 %s15, %s22
      %p212 = scmp.eq.s32.totalorder %s211, 0
      %s214 = sadd.s32 %s213, 1
      %s215 = scalar_select %p212, %s213, %s214
      %p218 = pneg %p212
      %p219 = scmp.eq.s32.totalorder %s15, 1
      %p220 = por %p218, %p219
      %p221 = scmp.ne.s32.totalorder %s213, %s216
      %p222 = scmp.eq.s32.totalorder %s15, 0
      %p223 = por %p221, %p222
      %p224 = scmp.ne.s32.totalorder %s213, %s216
      %p225 = scmp.eq.s32.totalorder %s20, 1
      %p226 = por %p224, %p225
      %p227 = scmp.ne.s32.totalorder %s216, %s217
      %p228 = scmp.eq.s32.totalorder %s20, 0
      %p229 = por %p227, %p228
      %p230 = scmp.ne.s32.totalorder %s216, %s217
      %p231 = scmp.eq.s32.totalorder %s21, 1
      %p232 = por %p230, %p231
      %p234 = scmp.ne.s32.totalorder %s217, %s233
      %p235 = scmp.eq.s32.totalorder %s21, 0
      %p236 = por %p234, %p235
      %p237 = scmp.le.s32.totalorder 1, %s15
      %p238 = scmp.lt.s32.totalorder %s15, 3
      %p239 = pnand %p237, %p238
      %p240 = pneg %p239
      // Predicated region
      $region9: #{graph_wavenet_forward.14} parent=5 // pred_check
        _
      $region10: #{graph_wavenet_forward.14} parent=5 // pred_check_branch
        %242 = sbr.rel (%p239) target = $region12
      $region11: #{graph_wavenet_forward.14} parent=5 // pred_region
        %s243 = ssub.s32 %s15, 1
        // Predicated region
        $region13: #{graph_wavenet_forward.14} parent=11 // pred_check
          %p244 = pneg %p88
        $region14: #{graph_wavenet_forward.14} parent=11 // pred_check_branch
          %246 = sbr.rel (%p244) target = $region16
        $region15: #{graph_wavenet_forward.14} parent=11 // pred_region
          _
        $region16: #{graph_wavenet_forward.14} parent=11 // pred_fallthru
          _
        // Predicated region
        $region17: #{graph_wavenet_forward.14} parent=11 // pred_check
          %p247 = pneg %p109
        $region18: #{graph_wavenet_forward.14} parent=11 // pred_check_branch
          %249 = sbr.rel (%p247) target = $region20
        $region19: #{graph_wavenet_forward.14} parent=11 // pred_region
          _
        $region20: #{graph_wavenet_forward.14} parent=11 // pred_fallthru
          _
        // Predicated region
        $region21: #{graph_wavenet_forward.14} parent=11 // pred_check
          %p250 = pneg %p130
        $region22: #{graph_wavenet_forward.14} parent=11 // pred_check_branch
          %252 = sbr.rel (%p250) target = $region24
        $region23: #{graph_wavenet_forward.14} parent=11 // pred_region
          _
        $region24: #{graph_wavenet_forward.14} parent=11 // pred_fallthru
          _
        // Predicated region
        $region25: #{graph_wavenet_forward.14} parent=11 // pred_check
          %p253 = pneg %p151
        $region26: #{graph_wavenet_forward.14} parent=11 // pred_check_branch
          %255 = sbr.rel (%p253) target = $region28
        $region27: #{graph_wavenet_forward.14} parent=11 // pred_region
          _
        $region28: #{graph_wavenet_forward.14} parent=11 // pred_fallthru
          _
      $region12: #{graph_wavenet_forward.14} parent=5 // pred_fallthru
        _
      %p256 = scmp.lt.s32.totalorder %s15, 2
      // Predicated region
      $region29: #{graph_wavenet_forward.14} parent=5 // pred_check
        %p257 = pneg %p256
      $region30: #{graph_wavenet_forward.14} parent=5 // pred_check_branch
        %259 = sbr.rel (%p257) target = $region32
      $region31: #{graph_wavenet_forward.14} parent=5 // pred_region
        // Predicated region
        $region33: #{graph_wavenet_forward.14} parent=31 // pred_check
          %p260 = pneg %p35
        $region34: #{graph_wavenet_forward.14} parent=31 // pred_check_branch
          %262 = sbr.rel (%p260) target = $region36
        $region35: #{graph_wavenet_forward.14} parent=31 // pred_region
          %s263 = smul.u32 8, %s15
          %p264 = scmp.lt.s32.totalorder %s263, 15
          %s265 = scalar_select %p264, %s263, 15
          %s266 = smul.addr %s265, 8
          %s267 = scalar_lea.vmem %s0, %s266
          %s268 = smul.u32 8, %s15
        $region36: #{graph_wavenet_forward.14} parent=31 // pred_fallthru
          _
        // Predicated region
        $region37: #{graph_wavenet_forward.14} parent=31 // pred_check
          %p269 = pneg %p61
        $region38: #{graph_wavenet_forward.14} parent=31 // pred_check_branch
          %271 = sbr.rel (%p269) target = $region40
        $region39: #{graph_wavenet_forward.14} parent=31 // pred_region
          %s272 = smul.u32 8, %s15
          %p273 = scmp.lt.s32.totalorder %s272, 15
          %s274 = scalar_select %p273, %s272, 15
          %s275 = smul.addr %s274, 8
          %s276 = scalar_lea.vmem %s1, %s275
          %s277 = smul.u32 8, %s15
        $region40: #{graph_wavenet_forward.14} parent=31 // pred_fallthru
          _
      $region32: #{graph_wavenet_forward.14} parent=5 // pred_fallthru
        _
      %p278 = scmp.le.s32.totalorder 1, %s15
      %p279 = scmp.lt.s32.totalorder %s15, 3
      %p280 = pnand %p278, %p279
      %p281 = pneg %p280
      // Predicated region
      $region41: #{graph_wavenet_forward.14} parent=5 // pred_check
        _
      $region42: #{graph_wavenet_forward.14} parent=5 // pred_check_branch
        %283 = sbr.rel (%p280) target = $region44
      $region43: #{graph_wavenet_forward.14} parent=5 // pred_region
        %s284 = ssub.s32 %s15, 1
        %s285 = smul.u32 8, %s20
        %p286 = scmp.lt.s32.totalorder %s285, 15
        %s287 = scalar_select %p286, %s285, 15
        %s288 = smul.addr %s287, 8
        %s289 = scalar_lea.vmem %s0, %s288
        %p290 = pneg %p41
        %p291 = pneg %p38
        %s292 = smul.u32 8, %s20
        %p293 = scmp.lt.s32.totalorder %s292, 15
        %s294 = scalar_select %p293, %s292, 15
        %s295 = smul.addr %s294, 8
        %s296 = scalar_lea.vmem %s1, %s295
        %p297 = pneg %p67
        %p298 = pneg %p64
        %p299 = pneg %p88
        %p300 = pneg %p85
        %p301 = pneg %p109
        %p302 = pneg %p106
        %p303 = pneg %p130
        %p304 = pneg %p127
        %p305 = pneg %p151
        %p306 = pneg %p148
        %p307 = pneg %p177
        %p308 = pneg %p174
        %s309 = smul.u32 8, %s20
        %p310 = scmp.lt.s32.totalorder %s309, 15
        %s311 = scalar_select %p310, %s309, 15
        %s312 = smul.addr %s311, 8
        %s313 = scalar_lea.vmem %s6, %s312
        %p314 = pneg %p203
        %p315 = pneg %p200
        %s316 = smul.u32 8, %s20
        %p317 = scmp.lt.s32.totalorder %s316, 15
        %s318 = scalar_select %p317, %s316, 15
        %s319 = smul.addr %s318, 8
        %s320 = scalar_lea.vmem %s7, %s319
        %p321 = pneg %p229
        %p322 = pneg %p226
        %s323 = sand.u32 %s216, 1
        %s324 = sand.u32 %s216, 1
        %s325 = smul.addr %s324, 192
        %s326 = scalar_lea.vmem [#allocation2], %s325
        %s327 = smul.u32 8, %s20
        %p328 = scmp.lt.s32.totalorder %s327, 15
        %s329 = scalar_select %p328, %s327, 15
        %s330 = smul.addr %s329, 8
        %s331 = scalar_lea.vmem %s0, %s330
        %s332 = smul.u32 8, %s20
        %s333 = smul.u32 8, %s20
        %p334 = scmp.lt.s32.totalorder %s333, 15
        %s335 = scalar_select %p334, %s333, 15
        %s336 = smul.addr %s335, 8
        %s337 = scalar_lea.vmem %s1, %s336
        %s338 = smul.u32 8, %s20
        %s339 = smul.u32 8, %s20
        %p340 = scmp.lt.s32.totalorder %s339, 15
        %s341 = scalar_select %p340, %s339, 15
        %s342 = smul.addr %s341, 8
        %s343 = scalar_lea.vmem %s6, %s342
        %s344 = smul.u32 8, %s20
        %s345 = smul.u32 8, %s20
        %p346 = scmp.lt.s32.totalorder %s345, 15
        %s347 = scalar_select %p346, %s345, 15
        %s348 = smul.addr %s347, 8
        %s349 = scalar_lea.vmem %s7, %s348
        %s350 = smul.u32 8, %s20
        %s351 = smul.u32 8, %s20
        %v353 = vld [vmem:[%s331] sm:$0xff]
        %v354 = vld [vmem:[%s331 + $0x8] sm:$0xff]
        %v355 = vld [vmem:[%s331 + $0x10] sm:$0xff]
        %v356 = vld [vmem:[%s331 + $0x18] sm:$0xff]
        %v357 = vld [vmem:[%s331 + $0x20] sm:$0xff]
        %v358 = vld [vmem:[%s331 + $0x28] sm:$0xff]
        %v359 = vld [vmem:[%s331 + $0x30] sm:$0xff]
        %v360 = vld [vmem:[%s331 + $0x38] sm:$0x3f]
        %v361 = vld [vmem:[%s331 + $0x2] sm:$0xff]
        %v362 = vld [vmem:[%s331 + $0xa] sm:$0xff]
        %v363 = vld [vmem:[%s331 + $0x12] sm:$0xff]
        %v364 = vld [vmem:[%s331 + $0x1a] sm:$0xff]
        %v365 = vld [vmem:[%s331 + $0x22] sm:$0xff]
        %v366 = vld [vmem:[%s331 + $0x2a] sm:$0xff]
        %v367 = vld [vmem:[%s331 + $0x32] sm:$0xff]
        %v368 = vld [vmem:[%s331 + $0x3a] sm:$0x3f]
        %377 = vrot.lane.b32.xlu0 %v361, 16
        %v378 = vpop.permute.xlu0 %377
        %379 = vrot.lane.b32.xlu0 %v362, 16
        %v380 = vpop.permute.xlu0 %379
        %381 = vrot.lane.b32.xlu0 %v363, 16
        %v382 = vpop.permute.xlu0 %381
        %383 = vrot.lane.b32.xlu0 %v364, 16
        %v384 = vpop.permute.xlu0 %383
        %385 = vrot.lane.b32.xlu0 %v365, 16
        %v386 = vpop.permute.xlu0 %385
        %387 = vrot.lane.b32.xlu0 %v366, 16
        %v388 = vpop.permute.xlu0 %387
        %389 = vrot.lane.b32.xlu0 %v367, 16
        %v390 = vpop.permute.xlu0 %389
        %391 = vrot.lane.b32.xlu0 %v368, 16
        %v392 = vpop.permute.xlu0 %391
        %vm401 = vcmask 130048
        %v402 = vsel %vm401, %v353, %v378
        %v403 = vsel %vm401, %v354, %v380
        %v404 = vsel %vm401, %v355, %v382
        %v405 = vsel %vm401, %v356, %v384
        %v406 = vsel %vm401, %v357, %v386
        %v407 = vsel %vm401, %v358, %v388
        %v408 = vsel %vm401, %v359, %v390
        %v409 = vsel %vm401, %v360, %v392
        %v410 = vpack.c.bf16 %v403, %v402
        %v411 = vpack.c.bf16 %v405, %v404
        %v412 = vpack.c.bf16 %v407, %v406
        %v413 = vpack.c.bf16 %v409, %v408
        %v414 = vld [vmem:[%s2] sm:$0xf]
        %v415 = vld [vmem:[%s2 + $0x4] sm:$0xf]
        %v416 = vld [vmem:[%s2 + $0x8] sm:$0xf]
        %v417 = vld [vmem:[%s2 + $0xc] sm:$0xf]
        %v418 = vld [vmem:[%s3] sm:$0x1]
        %v420 = vperm.slane %v418, 0
        %v426 = vunpack.c.l.b16 %v414
        %v427 = vunpack.c.l.b16 %v415
        %v428 = vunpack.c.l.b16 %v416
        %v429 = vunpack.c.l.b16 %v417
        %v430 = vpack.c.b16 %v427, %v426
        %v431 = vpack.c.b16 %v429, %v428
        %vm434 = vcmask 261120
        %v436 = vsel %vm434, %v410, 0
        %v439 = vsel %vm434, %v411, 0
        %v442 = vsel %vm434, %v412, 0
        %v445 = vsel %vm434, %v413, 0
        %447 = vmatpush.bf16.msra.mxu0 0
        %448 = vmatpush.bf16.msra.mxu0 0
        %449 = vmatpush.bf16.msra.mxu0 0
        %450 = vmatpush.bf16.msra.mxu0 0
        %451 = vmatpush.bf16.msra.mxu0 0
        %452 = vmatpush.bf16.msra.mxu0 0
        %453 = vmatpush.bf16.msra.mxu0 %v431
        %454 = vmatpush.bf16.msra.mxu0 %v430
        %455 = vmatmul.bf16.gmra.mxu0 %v436
        %v456 = vpop.f32.mrf.mxu0
        %v457 = vadd.f32 %v420, %v456
        %v458 = vpop.f32.mrf.mxu0
        %v459 = vadd.f32 %v420, %v458
        %460 = vmatmul.bf16.gmra.mxu0 %v439
        %v461 = vpop.f32.mrf.mxu0
        %v462 = vadd.f32 %v420, %v461
        %v463 = vpop.f32.mrf.mxu0
        %v464 = vadd.f32 %v420, %v463
        %465 = vmatmul.bf16.gmra.mxu0 %v442
        %v466 = vpop.f32.mrf.mxu0
        %v467 = vadd.f32 %v420, %v466
        %v468 = vpop.f32.mrf.mxu0
        %v469 = vadd.f32 %v420, %v468
        %470 = vmatmul.bf16.gmra.mxu0 %v445
        %v471 = vpop.f32.mrf.mxu0
        %v472 = vadd.f32 %v420, %v471
        %v473 = vpop.f32.mrf.mxu0
        %v474 = vadd.f32 %v420, %v473
        %475 = vdwg.mxu0
        %v476 = vtanh.pop %v457
        %v477 = vtanh.pop %v459
        %v478 = vtanh.pop %v462
        %v479 = vtanh.pop %v464
        %v480 = vtanh.pop %v467
        %v481 = vtanh.pop %v469
        %v482 = vtanh.pop %v472
        %v483 = vtanh.pop %v474
        %v484 = vxor.u32 %v457, 2147483648
        %v485 = vxor.u32 %v459, 2147483648
        %v486 = vxor.u32 %v462, 2147483648
        %v487 = vxor.u32 %v464, 2147483648
        %v488 = vxor.u32 %v467, 2147483648
        %v489 = vxor.u32 %v469, 2147483648
        %v490 = vxor.u32 %v472, 2147483648
        %v491 = vxor.u32 %v474, 2147483648
        %v492 = vmul.f32 %v484, 1.442695
        %v493 = vpow.pop %v492
        %v494 = vmul.f32 %v485, 1.442695
        %v495 = vpow.pop %v494
        %v496 = vmul.f32 %v486, 1.442695
        %v497 = vpow.pop %v496
        %v498 = vmul.f32 %v487, 1.442695
        %v499 = vpow.pop %v498
        %v500 = vmul.f32 %v488, 1.442695
        %v501 = vpow.pop %v500
        %v502 = vmul.f32 %v489, 1.442695
        %v503 = vpow.pop %v502
        %v504 = vmul.f32 %v490, 1.442695
        %v505 = vpow.pop %v504
        %v506 = vmul.f32 %v491, 1.442695
        %v507 = vpow.pop %v506
        %v508 = vadd.f32 %v493, 1.0
        %v509 = vadd.f32 %v495, 1.0
        %v510 = vadd.f32 %v497, 1.0
        %v511 = vadd.f32 %v499, 1.0
        %v512 = vadd.f32 %v501, 1.0
        %v513 = vadd.f32 %v503, 1.0
        %v514 = vadd.f32 %v505, 1.0
        %v515 = vadd.f32 %v507, 1.0
        %v516 = vrcp.pop %v508
        %v517 = vmul.f32 %v508, %v516
        %v518 = vsub.f32 1.0, %v517
        %v519 = vmul.f32 %v516, %v518
        %v520 = vadd.f32 %v516, %v519
        %vm521 = vweird.f32 %v508
        %vm522 = vweird.f32 %v516
        %vm523 = vmor %vm521, %vm522
        %v524 = vsel %vm523, %v516, %v520
        %v525 = vand.u32 2147483647, %v508
        %vm526 = vcmp.eq.f32.partialorder %v525, 8.507059e+37
        %v527 = vand.u32 %v508, 2147483648
        %v528 = vor.u32 1.1754944e-38, %v527
        %v529 = vsel %vm526, %v528, %v524
        %v530 = vmul.f32 1.0, %v529
        %v531 = vrcp.pop %v509
        %v532 = vmul.f32 %v509, %v531
        %v533 = vsub.f32 1.0, %v532
        %v534 = vmul.f32 %v531, %v533
        %v535 = vadd.f32 %v531, %v534
        %vm536 = vweird.f32 %v509
        %vm537 = vweird.f32 %v531
        %vm538 = vmor %vm536, %vm537
        %v539 = vsel %vm538, %v531, %v535
        %v540 = vand.u32 2147483647, %v509
        %vm541 = vcmp.eq.f32.partialorder %v540, 8.507059e+37
        %v542 = vand.u32 %v509, 2147483648
        %v543 = vor.u32 1.1754944e-38, %v542
        %v544 = vsel %vm541, %v543, %v539
        %v545 = vmul.f32 1.0, %v544
        %v546 = vrcp.pop %v510
        %v547 = vmul.f32 %v510, %v546
        %v548 = vsub.f32 1.0, %v547
        %v549 = vmul.f32 %v546, %v548
        %v550 = vadd.f32 %v546, %v549
        %vm551 = vweird.f32 %v510
        %vm552 = vweird.f32 %v546
        %vm553 = vmor %vm551, %vm552
        %v554 = vsel %vm553, %v546, %v550
        %v555 = vand.u32 2147483647, %v510
        %vm556 = vcmp.eq.f32.partialorder %v555, 8.507059e+37
        %v557 = vand.u32 %v510, 2147483648
        %v558 = vor.u32 1.1754944e-38, %v557
        %v559 = vsel %vm556, %v558, %v554
        %v560 = vmul.f32 1.0, %v559
        %v561 = vrcp.pop %v511
        %v562 = vmul.f32 %v511, %v561
        %v563 = vsub.f32 1.0, %v562
        %v564 = vmul.f32 %v561, %v563
        %v565 = vadd.f32 %v561, %v564
        %vm566 = vweird.f32 %v511
        %vm567 = vweird.f32 %v561
        %vm568 = vmor %vm566, %vm567
        %v569 = vsel %vm568, %v561, %v565
        %v570 = vand.u32 2147483647, %v511
        %vm571 = vcmp.eq.f32.partialorder %v570, 8.507059e+37
        %v572 = vand.u32 %v511, 2147483648
        %v573 = vor.u32 1.1754944e-38, %v572
        %v574 = vsel %vm571, %v573, %v569
        %v575 = vmul.f32 1.0, %v574
        %v576 = vrcp.pop %v512
        %v577 = vmul.f32 %v512, %v576
        %v578 = vsub.f32 1.0, %v577
        %v579 = vmul.f32 %v576, %v578
        %v580 = vadd.f32 %v576, %v579
        %vm581 = vweird.f32 %v512
        %vm582 = vweird.f32 %v576
        %vm583 = vmor %vm581, %vm582
        %v584 = vsel %vm583, %v576, %v580
        %v585 = vand.u32 2147483647, %v512
        %vm586 = vcmp.eq.f32.partialorder %v585, 8.507059e+37
        %v587 = vand.u32 %v512, 2147483648
        %v588 = vor.u32 1.1754944e-38, %v587
        %v589 = vsel %vm586, %v588, %v584
        %v590 = vmul.f32 1.0, %v589
        %v591 = vrcp.pop %v513
        %v592 = vmul.f32 %v513, %v591
        %v593 = vsub.f32 1.0, %v592
        %v594 = vmul.f32 %v591, %v593
        %v595 = vadd.f32 %v591, %v594
        %vm596 = vweird.f32 %v513
        %vm597 = vweird.f32 %v591
        %vm598 = vmor %vm596, %vm597
        %v599 = vsel %vm598, %v591, %v595
        %v600 = vand.u32 2147483647, %v513
        %vm601 = vcmp.eq.f32.partialorder %v600, 8.507059e+37
        %v602 = vand.u32 %v513, 2147483648
        %v603 = vor.u32 1.1754944e-38, %v602
        %v604 = vsel %vm601, %v603, %v599
        %v605 = vmul.f32 1.0, %v604
        %v606 = vrcp.pop %v514
        %v607 = vmul.f32 %v514, %v606
        %v608 = vsub.f32 1.0, %v607
        %v609 = vmul.f32 %v606, %v608
        %v610 = vadd.f32 %v606, %v609
        %vm611 = vweird.f32 %v514
        %vm612 = vweird.f32 %v606
        %vm613 = vmor %vm611, %vm612
        %v614 = vsel %vm613, %v606, %v610
        %v615 = vand.u32 2147483647, %v514
        %vm616 = vcmp.eq.f32.partialorder %v615, 8.507059e+37
        %v617 = vand.u32 %v514, 2147483648
        %v618 = vor.u32 1.1754944e-38, %v617
        %v619 = vsel %vm616, %v618, %v614
        %v620 = vmul.f32 1.0, %v619
        %v621 = vrcp.pop %v515
        %v622 = vmul.f32 %v515, %v621
        %v623 = vsub.f32 1.0, %v622
        %v624 = vmul.f32 %v621, %v623
        %v625 = vadd.f32 %v621, %v624
        %vm626 = vweird.f32 %v515
        %vm627 = vweird.f32 %v621
        %vm628 = vmor %vm626, %vm627
        %v629 = vsel %vm628, %v621, %v625
        %v630 = vand.u32 2147483647, %v515
        %vm631 = vcmp.eq.f32.partialorder %v630, 8.507059e+37
        %v632 = vand.u32 %v515, 2147483648
        %v633 = vor.u32 1.1754944e-38, %v632
        %v634 = vsel %vm631, %v633, %v629
        %v635 = vmul.f32 1.0, %v634
        %644 = vrot.lane.b32.xlu0 %v530, 112
        %v645 = vpop.permute.xlu0 %644
        %646 = vrot.lane.b32.xlu0 %v545, 112
        %v647 = vpop.permute.xlu0 %646
        %648 = vrot.lane.b32.xlu0 %v560, 112
        %v649 = vpop.permute.xlu0 %648
        %650 = vrot.lane.b32.xlu0 %v575, 112
        %v651 = vpop.permute.xlu0 %650
        %652 = vrot.lane.b32.xlu0 %v590, 112
        %v653 = vpop.permute.xlu0 %652
        %654 = vrot.lane.b32.xlu0 %v605, 112
        %v655 = vpop.permute.xlu0 %654
        %656 = vrot.lane.b32.xlu0 %v620, 112
        %v657 = vpop.permute.xlu0 %656
        %658 = vrot.lane.b32.xlu0 %v635, 112
        %v659 = vpop.permute.xlu0 %658
        %v668 = vmul.f32 %v476, %v645
        %v669 = vmul.f32 %v477, %v647
        %v670 = vmul.f32 %v478, %v649
        %v671 = vmul.f32 %v479, %v651
        %v672 = vmul.f32 %v480, %v653
        %v673 = vmul.f32 %v481, %v655
        %v674 = vmul.f32 %v482, %v657
        %v675 = vmul.f32 %v483, %v659
        %v676 = vpack.c.bf16 %v669, %v668
        %v677 = vpack.c.bf16 %v671, %v670
        %v678 = vpack.c.bf16 %v673, %v672
        %v679 = vpack.c.bf16 %v675, %v674
        %v680 = vld [vmem:[%s4] sm:$0xff]
        %v681 = vld [vmem:[%s4 + $0x8] sm:$0xff]
        %v682 = vld [vmem:[%s5] sm:$0x3]
        %v684 = vperm.slane %v682, 0
        %v685 = vperm.slane %v682, 1
        %v690 = vunpack.c.l.b16 %v680
        %v691 = vunpack.c.h.b16 %v680
        %v692 = vunpack.c.l.b16 %v681
        %v693 = vunpack.c.h.b16 %v681
        %v694 = vpack.c.b16 %v692, %v690
        %v695 = vpack.c.b16 %v693, %v691
        %v699 = vsel %vm401, %v676, 0
        %v702 = vsel %vm401, %v677, 0
        %v705 = vsel %vm401, %v678, 0
        %v708 = vsel %vm401, %v679, 0
        %710 = vmatpush.bf16.msra.mxu0 0
        %711 = vmatpush.bf16.msra.mxu0 0
        %712 = vmatpush.bf16.msra.mxu0 0
        %713 = vmatpush.bf16.msra.mxu0 0
        %714 = vmatpush.bf16.msra.mxu0 0
        %715 = vmatpush.bf16.msra.mxu0 0
        %716 = vmatpush.bf16.msra.mxu0 0
        %717 = vmatpush.bf16.msra.mxu0 %v694
        %718 = vmatmul.bf16.gmra.mxu0 %v699
        %v719 = vpop.f32.mrf.mxu0
        %v720 = vadd.f32 %v684, %v719
        %v721 = vpop.f32.mrf.mxu0
        %v722 = vadd.f32 %v684, %v721
        %723 = vmatmul.bf16.gmra.mxu0 %v702
        %v724 = vpop.f32.mrf.mxu0
        %v725 = vadd.f32 %v684, %v724
        %v726 = vpop.f32.mrf.mxu0
        %v727 = vadd.f32 %v684, %v726
        %728 = vmatmul.bf16.gmra.mxu0 %v705
        %v729 = vpop.f32.mrf.mxu0
        %v730 = vadd.f32 %v684, %v729
        %v731 = vpop.f32.mrf.mxu0
        %v732 = vadd.f32 %v684, %v731
        %733 = vmatmul.bf16.gmra.mxu0 %v708
        %v734 = vpop.f32.mrf.mxu0
        %v735 = vadd.f32 %v684, %v734
        %v736 = vpop.f32.mrf.mxu0
        %v737 = vadd.f32 %v684, %v736
        %738 = vdwg.mxu0
        %739 = vmatpush.bf16.msra.mxu0 0
        %740 = vmatpush.bf16.msra.mxu0 0
        %741 = vmatpush.bf16.msra.mxu0 0
        %742 = vmatpush.bf16.msra.mxu0 0
        %743 = vmatpush.bf16.msra.mxu0 0
        %744 = vmatpush.bf16.msra.mxu0 0
        %745 = vmatpush.bf16.msra.mxu0 0
        %746 = vmatpush.bf16.msra.mxu0 %v695
        %747 = vmatmul.bf16.gmra.mxu0 %v699
        %v748 = vpop.f32.mrf.mxu0
        %v749 = vadd.f32 %v685, %v748
        %v750 = vpop.f32.mrf.mxu0
        %v751 = vadd.f32 %v685, %v750
        %752 = vmatmul.bf16.gmra.mxu0 %v702
        %v753 = vpop.f32.mrf.mxu0
        %v754 = vadd.f32 %v685, %v753
        %v755 = vpop.f32.mrf.mxu0
        %v756 = vadd.f32 %v685, %v755
        %757 = vmatmul.bf16.gmra.mxu0 %v705
        %v758 = vpop.f32.mrf.mxu0
        %v759 = vadd.f32 %v685, %v758
        %v760 = vpop.f32.mrf.mxu0
        %v761 = vadd.f32 %v685, %v760
        %762 = vmatmul.bf16.gmra.mxu0 %v708
        %v763 = vpop.f32.mrf.mxu0
        %v764 = vadd.f32 %v685, %v763
        %v765 = vpop.f32.mrf.mxu0
        %v766 = vadd.f32 %v685, %v765
        %767 = vdwg.mxu0
        %v768 = vld [vmem:[%s337 + $0x2] sm:$0xff]
        %v769 = vld [vmem:[%s337 + $0xa] sm:$0xff]
        %v770 = vld [vmem:[%s337 + $0x12] sm:$0xff]
        %v771 = vld [vmem:[%s337 + $0x1a] sm:$0xff]
        %v772 = vld [vmem:[%s337 + $0x22] sm:$0xff]
        %v773 = vld [vmem:[%s337 + $0x2a] sm:$0xff]
        %v774 = vld [vmem:[%s337 + $0x32] sm:$0xff]
        %v775 = vld [vmem:[%s337 + $0x3a] sm:$0x3f]
        %v776 = vadd.f32 %v720, %v768
        %v777 = vadd.f32 %v722, %v769
        %v778 = vadd.f32 %v725, %v770
        %v779 = vadd.f32 %v727, %v771
        %v780 = vadd.f32 %v730, %v772
        %v781 = vadd.f32 %v732, %v773
        %v782 = vadd.f32 %v735, %v774
        %v783 = vadd.f32 %v737, %v775
        %784 = vst.msk [vmem:[%s343] sm:$0xff] %vm434, %v776
        %785 = vst.msk [vmem:[%s343 + $0x8] sm:$0xff] %vm434, %v777
        %786 = vst.msk [vmem:[%s343 + $0x10] sm:$0xff] %vm434, %v778
        %787 = vst.msk [vmem:[%s343 + $0x18] sm:$0xff] %vm434, %v779
        %788 = vst.msk [vmem:[%s343 + $0x20] sm:$0xff] %vm434, %v780
        %789 = vst.msk [vmem:[%s343 + $0x28] sm:$0xff] %vm434, %v781
        %790 = vst.msk [vmem:[%s343 + $0x30] sm:$0xff] %vm434, %v782
        %vm791 = vcmask 259072
        %792 = vst.msk [vmem:[%s343 + $0x38] sm:$0x3f] %vm791, %v783
        %793 = vrot.lane.b32.xlu0 %v361, 32
        %v794 = vpop.permute.xlu0 %793
        %795 = vrot.lane.b32.xlu0 %v362, 32
        %v796 = vpop.permute.xlu0 %795
        %797 = vrot.lane.b32.xlu0 %v363, 32
        %v798 = vpop.permute.xlu0 %797
        %799 = vrot.lane.b32.xlu0 %v364, 32
        %v800 = vpop.permute.xlu0 %799
        %801 = vrot.lane.b32.xlu0 %v365, 32
        %v802 = vpop.permute.xlu0 %801
        %803 = vrot.lane.b32.xlu0 %v366, 32
        %v804 = vpop.permute.xlu0 %803
        %805 = vrot.lane.b32.xlu0 %v367, 32
        %v806 = vpop.permute.xlu0 %805
        %807 = vrot.lane.b32.xlu0 %v368, 32
        %v808 = vpop.permute.xlu0 %807
        %v817 = vadd.f32 %v720, %v794
        %v818 = vadd.f32 %v722, %v796
        %v819 = vadd.f32 %v725, %v798
        %v820 = vadd.f32 %v727, %v800
        %v821 = vadd.f32 %v730, %v802
        %v822 = vadd.f32 %v732, %v804
        %v823 = vadd.f32 %v735, %v806
        %v824 = vadd.f32 %v737, %v808
        %833 = vrot.lane.b32.xlu0 %v817, 96
        %v834 = vpop.permute.xlu0 %833
        %835 = vrot.lane.b32.xlu0 %v818, 96
        %v836 = vpop.permute.xlu0 %835
        %837 = vrot.lane.b32.xlu0 %v819, 96
        %v838 = vpop.permute.xlu0 %837
        %839 = vrot.lane.b32.xlu0 %v820, 96
        %v840 = vpop.permute.xlu0 %839
        %841 = vrot.lane.b32.xlu0 %v821, 96
        %v842 = vpop.permute.xlu0 %841
        %843 = vrot.lane.b32.xlu0 %v822, 96
        %v844 = vpop.permute.xlu0 %843
        %845 = vrot.lane.b32.xlu0 %v823, 96
        %v846 = vpop.permute.xlu0 %845
        %847 = vrot.lane.b32.xlu0 %v824, 96
        %v848 = vpop.permute.xlu0 %847
        %857 = vst.msk [vmem:[%s349] sm:$0xff] %vm401, %v834
        %858 = vst.msk [vmem:[%s349 + $0x8] sm:$0xff] %vm401, %v836
        %859 = vst.msk [vmem:[%s349 + $0x10] sm:$0xff] %vm401, %v838
        %860 = vst.msk [vmem:[%s349 + $0x18] sm:$0xff] %vm401, %v840
        %861 = vst.msk [vmem:[%s349 + $0x20] sm:$0xff] %vm401, %v842
        %862 = vst.msk [vmem:[%s349 + $0x28] sm:$0xff] %vm401, %v844
        %863 = vst.msk [vmem:[%s349 + $0x30] sm:$0xff] %vm401, %v846
        %vm864 = vcmask 128000
        %865 = vst.msk [vmem:[%s349 + $0x38] sm:$0x3f] %vm864, %v848
        %v866 = vpack.c.bf16 %v720, %v720
        %v867 = vpack.c.bf16 %v722, %v722
        %v868 = vpack.c.bf16 %v725, %v725
        %v869 = vpack.c.bf16 %v727, %v727
        %v870 = vpack.c.bf16 %v730, %v730
        %v871 = vpack.c.bf16 %v732, %v732
        %v872 = vpack.c.bf16 %v735, %v735
        %v873 = vpack.c.bf16 %v737, %v737
        %882 = vrot.lane.b32.xlu0 %v866, 80
        %v883 = vpop.permute.xlu0 %882
        %884 = vrot.lane.b32.xlu0 %v867, 80
        %v885 = vpop.permute.xlu0 %884
        %886 = vrot.lane.b32.xlu0 %v868, 80
        %v887 = vpop.permute.xlu0 %886
        %888 = vrot.lane.b32.xlu0 %v869, 80
        %v889 = vpop.permute.xlu0 %888
        %890 = vrot.lane.b32.xlu0 %v870, 80
        %v891 = vpop.permute.xlu0 %890
        %892 = vrot.lane.b32.xlu0 %v871, 80
        %v893 = vpop.permute.xlu0 %892
        %894 = vrot.lane.b32.xlu0 %v872, 80
        %v895 = vpop.permute.xlu0 %894
        %896 = vrot.lane.b32.xlu0 %v873, 80
        %v897 = vpop.permute.xlu0 %896
        %vm906 = vcmask 125952
        %907 = vst.msk [vmem:[%s326] sm:$0xf] %vm906, %v883
        %908 = vst.msk [vmem:[%s326 + $0x4] sm:$0xf] %vm906, %v885
        %909 = vst.msk [vmem:[%s326 + $0x8] sm:$0xf] %vm906, %v887
        %910 = vst.msk [vmem:[%s326 + $0xc] sm:$0xf] %vm906, %v889
        %911 = vst.msk [vmem:[%s326 + $0x10] sm:$0xf] %vm906, %v891
        %912 = vst.msk [vmem:[%s326 + $0x14] sm:$0xf] %vm906, %v893
        %913 = vst.msk [vmem:[%s326 + $0x18] sm:$0xf] %vm906, %v895
        %vm914 = vcmask 124928
        %915 = vst.msk [vmem:[%s326 + $0x1c] sm:$0x7] %vm914, %v897
        %916 = vrot.lane.b32.xlu0 %v866, 64
        %v917 = vpop.permute.xlu0 %916
        %918 = vrot.lane.b32.xlu0 %v867, 64
        %v919 = vpop.permute.xlu0 %918
        %920 = vrot.lane.b32.xlu0 %v868, 64
        %v921 = vpop.permute.xlu0 %920
        %922 = vrot.lane.b32.xlu0 %v869, 64
        %v923 = vpop.permute.xlu0 %922
        %924 = vrot.lane.b32.xlu0 %v870, 64
        %v925 = vpop.permute.xlu0 %924
        %926 = vrot.lane.b32.xlu0 %v871, 64
        %v927 = vpop.permute.xlu0 %926
        %928 = vrot.lane.b32.xlu0 %v872, 64
        %v929 = vpop.permute.xlu0 %928
        %930 = vrot.lane.b32.xlu0 %v873, 64
        %v931 = vpop.permute.xlu0 %930
        %s940 = scalar_lea.vmem %s326, 32 [#allocation2]
        %941 = vst.msk [vmem:[%s940] sm:$0xf] %vm906, %v917
        %942 = vst.msk [vmem:[%s940 + $0x4] sm:$0xf] %vm906, %v919
        %943 = vst.msk [vmem:[%s940 + $0x8] sm:$0xf] %vm906, %v921
        %944 = vst.msk [vmem:[%s940 + $0xc] sm:$0xf] %vm906, %v923
        %945 = vst.msk [vmem:[%s940 + $0x10] sm:$0xf] %vm906, %v925
        %946 = vst.msk [vmem:[%s940 + $0x14] sm:$0xf] %vm906, %v927
        %947 = vst.msk [vmem:[%s940 + $0x18] sm:$0xf] %vm906, %v929
        %948 = vst.msk [vmem:[%s940 + $0x1c] sm:$0x7] %vm914, %v931
        %949 = vrot.lane.b32.xlu0 %v866, 48
        %v950 = vpop.permute.xlu0 %949
        %951 = vrot.lane.b32.xlu0 %v867, 48
        %v952 = vpop.permute.xlu0 %951
        %953 = vrot.lane.b32.xlu0 %v868, 48
        %v954 = vpop.permute.xlu0 %953
        %955 = vrot.lane.b32.xlu0 %v869, 48
        %v956 = vpop.permute.xlu0 %955
        %957 = vrot.lane.b32.xlu0 %v870, 48
        %v958 = vpop.permute.xlu0 %957
        %959 = vrot.lane.b32.xlu0 %v871, 48
        %v960 = vpop.permute.xlu0 %959
        %961 = vrot.lane.b32.xlu0 %v872, 48
        %v962 = vpop.permute.xlu0 %961
        %963 = vrot.lane.b32.xlu0 %v873, 48
        %v964 = vpop.permute.xlu0 %963
        %s973 = scalar_lea.vmem %s326, 64 [#allocation2]
        %974 = vst.msk [vmem:[%s973] sm:$0xf] %vm906, %v950
        %975 = vst.msk [vmem:[%s973 + $0x4] sm:$0xf] %vm906, %v952
        %976 = vst.msk [vmem:[%s973 + $0x8] sm:$0xf] %vm906, %v954
        %977 = vst.msk [vmem:[%s973 + $0xc] sm:$0xf] %vm906, %v956
        %978 = vst.msk [vmem:[%s973 + $0x10] sm:$0xf] %vm906, %v958
        %979 = vst.msk [vmem:[%s973 + $0x14] sm:$0xf] %vm906, %v960
        %980 = vst.msk [vmem:[%s973 + $0x18] sm:$0xf] %vm906, %v962
        %981 = vst.msk [vmem:[%s973 + $0x1c] sm:$0x7] %vm914, %v964
        %982 = vrot.lane.b32.xlu0 %v866, 32
        %v983 = vpop.permute.xlu0 %982
        %984 = vrot.lane.b32.xlu0 %v867, 32
        %v985 = vpop.permute.xlu0 %984
        %986 = vrot.lane.b32.xlu0 %v868, 32
        %v987 = vpop.permute.xlu0 %986
        %988 = vrot.lane.b32.xlu0 %v869, 32
        %v989 = vpop.permute.xlu0 %988
        %990 = vrot.lane.b32.xlu0 %v870, 32
        %v991 = vpop.permute.xlu0 %990
        %992 = vrot.lane.b32.xlu0 %v871, 32
        %v993 = vpop.permute.xlu0 %992
        %994 = vrot.lane.b32.xlu0 %v872, 32
        %v995 = vpop.permute.xlu0 %994
        %996 = vrot.lane.b32.xlu0 %v873, 32
        %v997 = vpop.permute.xlu0 %996
        %s1006 = scalar_lea.vmem %s326, 96 [#allocation2]
        %1007 = vst.msk [vmem:[%s1006] sm:$0xf] %vm906, %v983
        %1008 = vst.msk [vmem:[%s1006 + $0x4] sm:$0xf] %vm906, %v985
        %1009 = vst.msk [vmem:[%s1006 + $0x8] sm:$0xf] %vm906, %v987
        %1010 = vst.msk [vmem:[%s1006 + $0xc] sm:$0xf] %vm906, %v989
        %1011 = vst.msk [vmem:[%s1006 + $0x10] sm:$0xf] %vm906, %v991
        %1012 = vst.msk [vmem:[%s1006 + $0x14] sm:$0xf] %vm906, %v993
        %1013 = vst.msk [vmem:[%s1006 + $0x18] sm:$0xf] %vm906, %v995
        %1014 = vst.msk [vmem:[%s1006 + $0x1c] sm:$0x7] %vm914, %v997
        %1015 = vrot.lane.b32.xlu0 %v866, 16
        %v1016 = vpop.permute.xlu0 %1015
        %1017 = vrot.lane.b32.xlu0 %v867, 16
        %v1018 = vpop.permute.xlu0 %1017
        %1019 = vrot.lane.b32.xlu0 %v868, 16
        %v1020 = vpop.permute.xlu0 %1019
        %1021 = vrot.lane.b32.xlu0 %v869, 16
        %v1022 = vpop.permute.xlu0 %1021
        %1023 = vrot.lane.b32.xlu0 %v870, 16
        %v1024 = vpop.permute.xlu0 %1023
        %1025 = vrot.lane.b32.xlu0 %v871, 16
        %v1026 = vpop.permute.xlu0 %1025
        %1027 = vrot.lane.b32.xlu0 %v872, 16
        %v1028 = vpop.permute.xlu0 %1027
        %1029 = vrot.lane.b32.xlu0 %v873, 16
        %v1030 = vpop.permute.xlu0 %1029
        %s1039 = scalar_lea.vmem %s326, 128 [#allocation2]
        %1040 = vst.msk [vmem:[%s1039] sm:$0xf] %vm906, %v1016
        %1041 = vst.msk [vmem:[%s1039 + $0x4] sm:$0xf] %vm906, %v1018
        %1042 = vst.msk [vmem:[%s1039 + $0x8] sm:$0xf] %vm906, %v1020
        %1043 = vst.msk [vmem:[%s1039 + $0xc] sm:$0xf] %vm906, %v1022
        %1044 = vst.msk [vmem:[%s1039 + $0x10] sm:$0xf] %vm906, %v1024
        %1045 = vst.msk [vmem:[%s1039 + $0x14] sm:$0xf] %vm906, %v1026
        %1046 = vst.msk [vmem:[%s1039 + $0x18] sm:$0xf] %vm906, %v1028
        %1047 = vst.msk [vmem:[%s1039 + $0x1c] sm:$0x7] %vm914, %v1030
        %v1048 = vpack.c.bf16 %v749, %v749
        %v1049 = vpack.c.bf16 %v751, %v751
        %v1050 = vpack.c.bf16 %v754, %v754
        %v1051 = vpack.c.bf16 %v756, %v756
        %v1052 = vpack.c.bf16 %v759, %v759
        %v1053 = vpack.c.bf16 %v761, %v761
        %v1054 = vpack.c.bf16 %v764, %v764
        %v1055 = vpack.c.bf16 %v766, %v766
        %s1056 = scalar_lea.vmem %s326, 160 [#allocation2]
        %1057 = vst.msk [vmem:[%s1056] sm:$0xf] %vm906, %v1048
        %1058 = vst.msk [vmem:[%s1056 + $0x4] sm:$0xf] %vm906, %v1049
        %1059 = vst.msk [vmem:[%s1056 + $0x8] sm:$0xf] %vm906, %v1050
        %1060 = vst.msk [vmem:[%s1056 + $0xc] sm:$0xf] %vm906, %v1051
        %1061 = vst.msk [vmem:[%s1056 + $0x10] sm:$0xf] %vm906, %v1052
        %1062 = vst.msk [vmem:[%s1056 + $0x14] sm:$0xf] %vm906, %v1053
        %1063 = vst.msk [vmem:[%s1056 + $0x18] sm:$0xf] %vm906, %v1054
        %1064 = vst.msk [vmem:[%s1056 + $0x1c] sm:$0x7] %vm914, %v1055
        %vm1065 = vcmask 254976
        %1066 = vst.msk [vmem:[%s343 + $0x3e] sm:$0x3] %vm1065, 0.0
        %vm1067 = vcmask 123904
        %1068 = vst.msk [vmem:[%s349 + $0x3e] sm:$0x3] %vm1067, 0.0
        %vm1069 = vcmask 125955
        %1070 = vst.msk [vmem:[%s326 + $0x1c] sm:$0x8] %vm1069, 0
        %1071 = vst.msk [vmem:[%s940 + $0x1c] sm:$0x8] %vm1069, 0
        %1072 = vst.msk [vmem:[%s973 + $0x1c] sm:$0x8] %vm1069, 0
        %1073 = vst.msk [vmem:[%s1006 + $0x1c] sm:$0x8] %vm1069, 0
        %1074 = vst.msk [vmem:[%s1039 + $0x1c] sm:$0x8] %vm1069, 0
        %1075 = vst.msk [vmem:[%s1056 + $0x1c] sm:$0x8] %vm1069, 0
        %s1076 = smul.u32 8, %s20
        %p1077 = scmp.lt.s32.totalorder %s1076, 15
        %s1078 = scalar_select %p1077, %s1076, 15
        %s1079 = smul.addr %s1078, 8
        %s1080 = scalar_lea.vmem %s6, %s1079
        %s1081 = smul.u32 8, %s20
        %p1082 = scmp.lt.s32.totalorder %s1081, 15
        %s1083 = scalar_select %p1082, %s1081, 15
        %s1084 = smul.addr %s1083, 8
        %s1085 = scalar_lea.vmem %s7, %s1084
        %s1086 = sand.u32 %s216, 1
        %s1087 = sand.u32 %s216, 1
        %s1088 = smul.addr %s1087, 192
        %s1089 = scalar_lea.vmem [#allocation2], %s1088
        // Predicated region
        $region45: #{graph_wavenet_forward.14} parent=43 // pred_check
          %p1090 = pneg %p174
        $region46: #{graph_wavenet_forward.14} parent=43 // pred_check_branch
          %1092 = sbr.rel (%p1090) target = $region48
        $region47: #{graph_wavenet_forward.14} parent=43 // pred_region
          %s1093 = smul.u32 8, %s20
        $region48: #{graph_wavenet_forward.14} parent=43 // pred_fallthru
          _
        // Predicated region
        $region49: #{graph_wavenet_forward.14} parent=43 // pred_check
          %p1094 = pneg %p200
        $region50: #{graph_wavenet_forward.14} parent=43 // pred_check_branch
          %1096 = sbr.rel (%p1094) target = $region52
        $region51: #{graph_wavenet_forward.14} parent=43 // pred_region
          %s1097 = smul.u32 8, %s20
        $region52: #{graph_wavenet_forward.14} parent=43 // pred_fallthru
          _
        // Predicated region
        $region53: #{graph_wavenet_forward.14} parent=43 // pred_check
          %p1098 = pneg %p226
        $region54: #{graph_wavenet_forward.14} parent=43 // pred_check_branch
          %1100 = sbr.rel (%p1098) target = $region56
        $region55: #{graph_wavenet_forward.14} parent=43 // pred_region
          %s1101 = smul.u32 8, %s20
          %s1102 = smul.addr %s1101, 4
          %s1103 = scalar_lea.vmem %s8, %s1102
          // Predicated region
          $region57: #{graph_wavenet_forward.14} parent=55 // pred_check
            _
          $region58: #{graph_wavenet_forward.14} parent=55 // pred_check_branch
            %1105 = sbr.rel (0) target = $region60
          $region59: #{graph_wavenet_forward.14} parent=55 // pred_region
            // Predicated region
            $region61: #{graph_wavenet_forward.14} parent=59 // pred_check
              _
            $region62: #{graph_wavenet_forward.14} parent=59 // pred_check_branch
              %1107 = sbr.rel target = $region64
            $region63: #{graph_wavenet_forward.14} parent=59 // pred_region
              // Predicated region
              $region76: #{graph_wavenet_forward.14} parent=63 // pred_check
                _
              $region77: #{graph_wavenet_forward.14} parent=63 // pred_check_branch
                %1217 = sbr.rel (0) target = $region79
              $region78: #{graph_wavenet_forward.14} parent=63 // pred_region
                loop: start=0, step=1, limit=1
                $region80: #{graph_wavenet_forward.14} parent=78 // loop_pre_header
                  _
                $region81: #{graph_wavenet_forward.14} parent=78 // loop_header
                  %s1219 = sphi 0, %s1223
                  %p1220 = scmp.ge.s32.totalorder %s1219, 1
                  %s1224 = sphi %s1089, %s1089
                  %s1225 = sphi %s1103, %s1103
                $region82: #{graph_wavenet_forward.14} parent=78 // loop_header_branch
                  %1222 = sbr.rel (%p1220) target = $region86
                $region83: #{graph_wavenet_forward.14} parent=78 // loop_body
                  _
                $region84: #{graph_wavenet_forward.14} parent=78 // loop_footer
                  %s1223 = sadd.s32 1, %s1219
                $region85: #{graph_wavenet_forward.14} parent=78 // loop_footer_branch
                  %1218 = sbr.rel target = $region81
                $region86: #{graph_wavenet_forward.14} parent=78 // loop_exit
                  _
                %s1227 = ssub.s32 16, 1
                loop: start=0, step=1, limit=1
                $region87: #{graph_wavenet_forward.14} parent=78 // loop_pre_header
                  _
                $region88: #{graph_wavenet_forward.14} parent=78 // loop_header
                  %s1229 = sphi 0, %s1233
                  %p1230 = scmp.ge.s32.totalorder %s1229, 1
                  %s1234 = sphi %s1089, %s1089
                  %s1235 = sphi %s1103, %s1103
                $region89: #{graph_wavenet_forward.14} parent=78 // loop_header_branch
                  %1232 = sbr.rel (%p1230) target = $region93
                $region90: #{graph_wavenet_forward.14} parent=78 // loop_body
                  %v1236 = vld [vmem:[%s1234] sm:%s1227]
                  %1237 = vst [vmem:[%s1235] sm:%s1227] %v1236
                  %v1238 = vld [vmem:[%s1234 + $0x4] sm:%s1227]
                  %1239 = vst [vmem:[%s1235 + $0x4] sm:%s1227] %v1238
                  %v1240 = vld [vmem:[%s1234 + $0x8] sm:%s1227]
                  %1241 = vst [vmem:[%s1235 + $0x8] sm:%s1227] %v1240
                  %v1242 = vld [vmem:[%s1234 + $0xc] sm:%s1227]
                  %1243 = vst [vmem:[%s1235 + $0xc] sm:%s1227] %v1242
                  %v1244 = vld [vmem:[%s1234 + $0x10] sm:%s1227]
                  %1245 = vst [vmem:[%s1235 + $0x10] sm:%s1227] %v1244
                  %v1246 = vld [vmem:[%s1234 + $0x14] sm:%s1227]
                  %1247 = vst [vmem:[%s1235 + $0x14] sm:%s1227] %v1246
                  %v1248 = vld [vmem:[%s1234 + $0x18] sm:%s1227]
                  %1249 = vst [vmem:[%s1235 + $0x18] sm:%s1227] %v1248
                  %v1250 = vld [vmem:[%s1234 + $0x1c] sm:%s1227]
                  %1251 = vst [vmem:[%s1235 + $0x1c] sm:%s1227] %v1250
                  %v1252 = vld [vmem:[%s1234 + $0x20] sm:%s1227]
                  %1253 = vst [vmem:[%s1235 + $0x40] sm:%s1227] %v1252
                  %v1254 = vld [vmem:[%s1234 + $0x24] sm:%s1227]
                  %1255 = vst [vmem:[%s1235 + $0x44] sm:%s1227] %v1254
                  %v1256 = vld [vmem:[%s1234 + $0x28] sm:%s1227]
                  %1257 = vst [vmem:[%s1235 + $0x48] sm:%s1227] %v1256
                  %v1258 = vld [vmem:[%s1234 + $0x2c] sm:%s1227]
                  %1259 = vst [vmem:[%s1235 + $0x4c] sm:%s1227] %v1258
                  %v1260 = vld [vmem:[%s1234 + $0x30] sm:%s1227]
                  %1261 = vst [vmem:[%s1235 + $0x50] sm:%s1227] %v1260
                  %v1262 = vld [vmem:[%s1234 + $0x34] sm:%s1227]
                  %1263 = vst [vmem:[%s1235 + $0x54] sm:%s1227] %v1262
                  %v1264 = vld [vmem:[%s1234 + $0x38] sm:%s1227]
                  %1265 = vst [vmem:[%s1235 + $0x58] sm:%s1227] %v1264
                  %v1266 = vld [vmem:[%s1234 + $0x3c] sm:%s1227]
                  %1267 = vst [vmem:[%s1235 + $0x5c] sm:%s1227] %v1266
                  %v1268 = vld [vmem:[%s1234 + $0x40] sm:%s1227]
                  %1269 = vst [vmem:[%s1235 + $0x80] sm:%s1227] %v1268
                  %v1270 = vld [vmem:[%s1234 + $0x44] sm:%s1227]
                  %1271 = vst [vmem:[%s1235 + $0x84] sm:%s1227] %v1270
                  %v1272 = vld [vmem:[%s1234 + $0x48] sm:%s1227]
                  %1273 = vst [vmem:[%s1235 + $0x88] sm:%s1227] %v1272
                  %v1274 = vld [vmem:[%s1234 + $0x4c] sm:%s1227]
                  %1275 = vst [vmem:[%s1235 + $0x8c] sm:%s1227] %v1274
                  %v1276 = vld [vmem:[%s1234 + $0x50] sm:%s1227]
                  %1277 = vst [vmem:[%s1235 + $0x90] sm:%s1227] %v1276
                  %v1278 = vld [vmem:[%s1234 + $0x54] sm:%s1227]
                  %1279 = vst [vmem:[%s1235 + $0x94] sm:%s1227] %v1278
                  %v1280 = vld [vmem:[%s1234 + $0x58] sm:%s1227]
                  %1281 = vst [vmem:[%s1235 + $0x98] sm:%s1227] %v1280
                  %v1282 = vld [vmem:[%s1234 + $0x5c] sm:%s1227]
                  %1283 = vst [vmem:[%s1235 + $0x9c] sm:%s1227] %v1282
                  %v1284 = vld [vmem:[%s1234 + $0x60] sm:%s1227]
                  %1285 = vst [vmem:[%s1235 + $0xc0] sm:%s1227] %v1284
                  %v1286 = vld [vmem:[%s1234 + $0x64] sm:%s1227]
                  %1287 = vst [vmem:[%s1235 + $0xc4] sm:%s1227] %v1286
                  %v1288 = vld [vmem:[%s1234 + $0x68] sm:%s1227]
                  %1289 = vst [vmem:[%s1235 + $0xc8] sm:%s1227] %v1288
                  %v1290 = vld [vmem:[%s1234 + $0x6c] sm:%s1227]
                  %1291 = vst [vmem:[%s1235 + $0xcc] sm:%s1227] %v1290
                  %v1292 = vld [vmem:[%s1234 + $0x70] sm:%s1227]
                  %1293 = vst [vmem:[%s1235 + $0xd0] sm:%s1227] %v1292
                  %v1294 = vld [vmem:[%s1234 + $0x74] sm:%s1227]
                  %1295 = vst [vmem:[%s1235 + $0xd4] sm:%s1227] %v1294
                  %v1296 = vld [vmem:[%s1234 + $0x78] sm:%s1227]
                  %1297 = vst [vmem:[%s1235 + $0xd8] sm:%s1227] %v1296
                  %v1298 = vld [vmem:[%s1234 + $0x7c] sm:%s1227]
                  %1299 = vst [vmem:[%s1235 + $0xdc] sm:%s1227] %v1298
                  %v1300 = vld [vmem:[%s1234 + $0x80] sm:%s1227]
                  %1301 = vst [vmem:[%s1235 + $0x100] sm:%s1227] %v1300
                  %v1302 = vld [vmem:[%s1234 + $0x84] sm:%s1227]
                  %1303 = vst [vmem:[%s1235 + $0x104] sm:%s1227] %v1302
                  %v1304 = vld [vmem:[%s1234 + $0x88] sm:%s1227]
                  %1305 = vst [vmem:[%s1235 + $0x108] sm:%s1227] %v1304
                  %v1306 = vld [vmem:[%s1234 + $0x8c] sm:%s1227]
                  %1307 = vst [vmem:[%s1235 + $0x10c] sm:%s1227] %v1306
                  %v1308 = vld [vmem:[%s1234 + $0x90] sm:%s1227]
                  %1309 = vst [vmem:[%s1235 + $0x110] sm:%s1227] %v1308
                  %v1310 = vld [vmem:[%s1234 + $0x94] sm:%s1227]
                  %1311 = vst [vmem:[%s1235 + $0x114] sm:%s1227] %v1310
                  %v1312 = vld [vmem:[%s1234 + $0x98] sm:%s1227]
                  %1313 = vst [vmem:[%s1235 + $0x118] sm:%s1227] %v1312
                  %v1314 = vld [vmem:[%s1234 + $0x9c] sm:%s1227]
                  %1315 = vst [vmem:[%s1235 + $0x11c] sm:%s1227] %v1314
                  %v1316 = vld [vmem:[%s1234 + $0xa0] sm:%s1227]
                  %1317 = vst [vmem:[%s1235 + $0x140] sm:%s1227] %v1316
                  %v1318 = vld [vmem:[%s1234 + $0xa4] sm:%s1227]
                  %1319 = vst [vmem:[%s1235 + $0x144] sm:%s1227] %v1318
                  %v1320 = vld [vmem:[%s1234 + $0xa8] sm:%s1227]
                  %1321 = vst [vmem:[%s1235 + $0x148] sm:%s1227] %v1320
                  %v1322 = vld [vmem:[%s1234 + $0xac] sm:%s1227]
                  %1323 = vst [vmem:[%s1235 + $0x14c] sm:%s1227] %v1322
                  %v1324 = vld [vmem:[%s1234 + $0xb0] sm:%s1227]
                  %1325 = vst [vmem:[%s1235 + $0x150] sm:%s1227] %v1324
                  %v1326 = vld [vmem:[%s1234 + $0xb4] sm:%s1227]
                  %1327 = vst [vmem:[%s1235 + $0x154] sm:%s1227] %v1326
                  %v1328 = vld [vmem:[%s1234 + $0xb8] sm:%s1227]
                  %1329 = vst [vmem:[%s1235 + $0x158] sm:%s1227] %v1328
                  %v1330 = vld [vmem:[%s1234 + $0xbc] sm:%s1227]
                  %1331 = vst [vmem:[%s1235 + $0x15c] sm:%s1227] %v1330
                $region91: #{graph_wavenet_forward.14} parent=78 // loop_footer
                  %s1233 = sadd.s32 1, %s1229
                $region92: #{graph_wavenet_forward.14} parent=78 // loop_footer_branch
                  %1228 = sbr.rel target = $region88
                $region93: #{graph_wavenet_forward.14} parent=78 // loop_exit
                  _
              $region79: #{graph_wavenet_forward.14} parent=63 // pred_fallthru
                _
            $region64: #{graph_wavenet_forward.14} parent=59 // pred_fallthru
              _
            // Predicated region
            $region65: #{graph_wavenet_forward.14} parent=59 // pred_check
              _
            $region66: #{graph_wavenet_forward.14} parent=59 // pred_check_branch
              %1109 = sbr.rel (0) target = $region68
            $region67: #{graph_wavenet_forward.14} parent=59 // pred_region
              %s1111 = ssub.s32 16, 1
              loop: start=0, step=1, limit=1
              $region69: #{graph_wavenet_forward.14} parent=67 // loop_pre_header
                _
              $region70: #{graph_wavenet_forward.14} parent=67 // loop_header
                %s1113 = sphi 0, %s1117
                %p1114 = scmp.ge.s32.totalorder %s1113, 1
                %s1118 = sphi %s1089, %s1089
                %s1119 = sphi %s1103, %s1103
              $region71: #{graph_wavenet_forward.14} parent=67 // loop_header_branch
                %1116 = sbr.rel (%p1114) target = $region75
              $region72: #{graph_wavenet_forward.14} parent=67 // loop_body
                %v1120 = vld [vmem:[%s1118] sm:%s1111]
                %1121 = vst [vmem:[%s1119] sm:%s1111] %v1120
                %v1122 = vld [vmem:[%s1118 + $0x4] sm:%s1111]
                %1123 = vst [vmem:[%s1119 + $0x4] sm:%s1111] %v1122
                %v1124 = vld [vmem:[%s1118 + $0x8] sm:%s1111]
                %1125 = vst [vmem:[%s1119 + $0x8] sm:%s1111] %v1124
                %v1126 = vld [vmem:[%s1118 + $0xc] sm:%s1111]
                %1127 = vst [vmem:[%s1119 + $0xc] sm:%s1111] %v1126
                %v1128 = vld [vmem:[%s1118 + $0x10] sm:%s1111]
                %1129 = vst [vmem:[%s1119 + $0x10] sm:%s1111] %v1128
                %v1130 = vld [vmem:[%s1118 + $0x14] sm:%s1111]
                %1131 = vst [vmem:[%s1119 + $0x14] sm:%s1111] %v1130
                %v1132 = vld [vmem:[%s1118 + $0x18] sm:%s1111]
                %1133 = vst [vmem:[%s1119 + $0x18] sm:%s1111] %v1132
                %v1134 = vld [vmem:[%s1118 + $0x1c] sm:%s1111]
                %1135 = vst [vmem:[%s1119 + $0x1c] sm:%s1111] %v1134
                %v1136 = vld [vmem:[%s1118 + $0x20] sm:%s1111]
                %1137 = vst [vmem:[%s1119 + $0x40] sm:%s1111] %v1136
                %v1138 = vld [vmem:[%s1118 + $0x24] sm:%s1111]
                %1139 = vst [vmem:[%s1119 + $0x44] sm:%s1111] %v1138
                %v1140 = vld [vmem:[%s1118 + $0x28] sm:%s1111]
                %1141 = vst [vmem:[%s1119 + $0x48] sm:%s1111] %v1140
                %v1142 = vld [vmem:[%s1118 + $0x2c] sm:%s1111]
                %1143 = vst [vmem:[%s1119 + $0x4c] sm:%s1111] %v1142
                %v1144 = vld [vmem:[%s1118 + $0x30] sm:%s1111]
                %1145 = vst [vmem:[%s1119 + $0x50] sm:%s1111] %v1144
                %v1146 = vld [vmem:[%s1118 + $0x34] sm:%s1111]
                %1147 = vst [vmem:[%s1119 + $0x54] sm:%s1111] %v1146
                %v1148 = vld [vmem:[%s1118 + $0x38] sm:%s1111]
                %1149 = vst [vmem:[%s1119 + $0x58] sm:%s1111] %v1148
                %v1150 = vld [vmem:[%s1118 + $0x3c] sm:%s1111]
                %1151 = vst [vmem:[%s1119 + $0x5c] sm:%s1111] %v1150
                %v1152 = vld [vmem:[%s1118 + $0x40] sm:%s1111]
                %1153 = vst [vmem:[%s1119 + $0x80] sm:%s1111] %v1152
                %v1154 = vld [vmem:[%s1118 + $0x44] sm:%s1111]
                %1155 = vst [vmem:[%s1119 + $0x84] sm:%s1111] %v1154
                %v1156 = vld [vmem:[%s1118 + $0x48] sm:%s1111]
                %1157 = vst [vmem:[%s1119 + $0x88] sm:%s1111] %v1156
                %v1158 = vld [vmem:[%s1118 + $0x4c] sm:%s1111]
                %1159 = vst [vmem:[%s1119 + $0x8c] sm:%s1111] %v1158
                %v1160 = vld [vmem:[%s1118 + $0x50] sm:%s1111]
                %1161 = vst [vmem:[%s1119 + $0x90] sm:%s1111] %v1160
                %v1162 = vld [vmem:[%s1118 + $0x54] sm:%s1111]
                %1163 = vst [vmem:[%s1119 + $0x94] sm:%s1111] %v1162
                %v1164 = vld [vmem:[%s1118 + $0x58] sm:%s1111]
                %1165 = vst [vmem:[%s1119 + $0x98] sm:%s1111] %v1164
                %v1166 = vld [vmem:[%s1118 + $0x5c] sm:%s1111]
                %1167 = vst [vmem:[%s1119 + $0x9c] sm:%s1111] %v1166
                %v1168 = vld [vmem:[%s1118 + $0x60] sm:%s1111]
                %1169 = vst [vmem:[%s1119 + $0xc0] sm:%s1111] %v1168
                %v1170 = vld [vmem:[%s1118 + $0x64] sm:%s1111]
                %1171 = vst [vmem:[%s1119 + $0xc4] sm:%s1111] %v1170
                %v1172 = vld [vmem:[%s1118 + $0x68] sm:%s1111]
                %1173 = vst [vmem:[%s1119 + $0xc8] sm:%s1111] %v1172
                %v1174 = vld [vmem:[%s1118 + $0x6c] sm:%s1111]
                %1175 = vst [vmem:[%s1119 + $0xcc] sm:%s1111] %v1174
                %v1176 = vld [vmem:[%s1118 + $0x70] sm:%s1111]
                %1177 = vst [vmem:[%s1119 + $0xd0] sm:%s1111] %v1176
                %v1178 = vld [vmem:[%s1118 + $0x74] sm:%s1111]
                %1179 = vst [vmem:[%s1119 + $0xd4] sm:%s1111] %v1178
                %v1180 = vld [vmem:[%s1118 + $0x78] sm:%s1111]
                %1181 = vst [vmem:[%s1119 + $0xd8] sm:%s1111] %v1180
                %v1182 = vld [vmem:[%s1118 + $0x7c] sm:%s1111]
                %1183 = vst [vmem:[%s1119 + $0xdc] sm:%s1111] %v1182
                %v1184 = vld [vmem:[%s1118 + $0x80] sm:%s1111]
                %1185 = vst [vmem:[%s1119 + $0x100] sm:%s1111] %v1184
                %v1186 = vld [vmem:[%s1118 + $0x84] sm:%s1111]
                %1187 = vst [vmem:[%s1119 + $0x104] sm:%s1111] %v1186
                %v1188 = vld [vmem:[%s1118 + $0x88] sm:%s1111]
                %1189 = vst [vmem:[%s1119 + $0x108] sm:%s1111] %v1188
                %v1190 = vld [vmem:[%s1118 + $0x8c] sm:%s1111]
                %1191 = vst [vmem:[%s1119 + $0x10c] sm:%s1111] %v1190
                %v1192 = vld [vmem:[%s1118 + $0x90] sm:%s1111]
                %1193 = vst [vmem:[%s1119 + $0x110] sm:%s1111] %v1192
                %v1194 = vld [vmem:[%s1118 + $0x94] sm:%s1111]
                %1195 = vst [vmem:[%s1119 + $0x114] sm:%s1111] %v1194
                %v1196 = vld [vmem:[%s1118 + $0x98] sm:%s1111]
                %1197 = vst [vmem:[%s1119 + $0x118] sm:%s1111] %v1196
                %v1198 = vld [vmem:[%s1118 + $0x9c] sm:%s1111]
                %1199 = vst [vmem:[%s1119 + $0x11c] sm:%s1111] %v1198
                %v1200 = vld [vmem:[%s1118 + $0xa0] sm:%s1111]
                %1201 = vst [vmem:[%s1119 + $0x140] sm:%s1111] %v1200
                %v1202 = vld [vmem:[%s1118 + $0xa4] sm:%s1111]
                %1203 = vst [vmem:[%s1119 + $0x144] sm:%s1111] %v1202
                %v1204 = vld [vmem:[%s1118 + $0xa8] sm:%s1111]
                %1205 = vst [vmem:[%s1119 + $0x148] sm:%s1111] %v1204
                %v1206 = vld [vmem:[%s1118 + $0xac] sm:%s1111]
                %1207 = vst [vmem:[%s1119 + $0x14c] sm:%s1111] %v1206
                %v1208 = vld [vmem:[%s1118 + $0xb0] sm:%s1111]
                %1209 = vst [vmem:[%s1119 + $0x150] sm:%s1111] %v1208
                %v1210 = vld [vmem:[%s1118 + $0xb4] sm:%s1111]
                %1211 = vst [vmem:[%s1119 + $0x154] sm:%s1111] %v1210
                %v1212 = vld [vmem:[%s1118 + $0xb8] sm:%s1111]
                %1213 = vst [vmem:[%s1119 + $0x158] sm:%s1111] %v1212
                %v1214 = vld [vmem:[%s1118 + $0xbc] sm:%s1111]
                %1215 = vst [vmem:[%s1119 + $0x15c] sm:%s1111] %v1214
              $region73: #{graph_wavenet_forward.14} parent=67 // loop_footer
                %s1117 = sadd.s32 1, %s1113
              $region74: #{graph_wavenet_forward.14} parent=67 // loop_footer_branch
                %1112 = sbr.rel target = $region70
              $region75: #{graph_wavenet_forward.14} parent=67 // loop_exit
                _
            $region68: #{graph_wavenet_forward.14} parent=59 // pred_fallthru
              _
          $region60: #{graph_wavenet_forward.14} parent=55 // pred_fallthru
            _
          %1332 = vnop
        $region56: #{graph_wavenet_forward.14} parent=43 // pred_fallthru
          _
      $region44: #{graph_wavenet_forward.14} parent=5 // pred_fallthru
        _
      %p1333 = scmp.le.s32.totalorder 2, %s15
      // Predicated region
      $region94: #{graph_wavenet_forward.14} parent=5 // pred_check
        %p1334 = pneg %p1333
      $region95: #{graph_wavenet_forward.14} parent=5 // pred_check_branch
        %1336 = sbr.rel (%p1334) target = $region97
      $region96: #{graph_wavenet_forward.14} parent=5 // pred_region
        %s1337 = ssub.s32 %s15, 2
        // Predicated region
        $region98: #{graph_wavenet_forward.14} parent=96 // pred_check
          %p1338 = pneg %p180
        $region99: #{graph_wavenet_forward.14} parent=96 // pred_check_branch
          %1340 = sbr.rel (%p1338) target = $region101
        $region100: #{graph_wavenet_forward.14} parent=96 // pred_region
          %s1341 = smul.u32 8, %s21
          %p1342 = scmp.lt.s32.totalorder %s1341, 15
          %s1343 = scalar_select %p1342, %s1341, 15
          %s1344 = smul.addr %s1343, 8
          %s1345 = scalar_lea.vmem %s6, %s1344
        $region101: #{graph_wavenet_forward.14} parent=96 // pred_fallthru
          _
        // Predicated region
        $region102: #{graph_wavenet_forward.14} parent=96 // pred_check
          %p1346 = pneg %p206
        $region103: #{graph_wavenet_forward.14} parent=96 // pred_check_branch
          %1348 = sbr.rel (%p1346) target = $region105
        $region104: #{graph_wavenet_forward.14} parent=96 // pred_region
          %s1349 = smul.u32 8, %s21
          %p1350 = scmp.lt.s32.totalorder %s1349, 15
          %s1351 = scalar_select %p1350, %s1349, 15
          %s1352 = smul.addr %s1351, 8
          %s1353 = scalar_lea.vmem %s7, %s1352
        $region105: #{graph_wavenet_forward.14} parent=96 // pred_fallthru
          _
        // Predicated region
        $region106: #{graph_wavenet_forward.14} parent=96 // pred_check
          %p1354 = pneg %p232
        $region107: #{graph_wavenet_forward.14} parent=96 // pred_check_branch
          %1356 = sbr.rel (%p1354) target = $region109
        $region108: #{graph_wavenet_forward.14} parent=96 // pred_region
          %s1357 = sand.u32 %s217, 1
          %s1358 = sand.u32 %s217, 1
          %s1359 = smul.addr %s1358, 192
          %s1360 = scalar_lea.vmem [#allocation2], %s1359
        $region109: #{graph_wavenet_forward.14} parent=96 // pred_fallthru
          _
      $region97: #{graph_wavenet_forward.14} parent=5 // pred_fallthru
        _
    $region6: #{graph_wavenet_forward.14} parent=1 // loop_footer
      %s19 = sadd.s32 1, %s15
    $region7: #{graph_wavenet_forward.14} parent=1 // loop_footer_branch
      %14 = sbr.rel target = $region3
    $region8: #{graph_wavenet_forward.14} parent=1 // loop_exit
      _

// kernel: graph_wavenet_forward.19
$region0: #{graph_wavenet_forward.19}
  #allocation0 [shape = 'u32[]', space=smem, size = 0x4, offset = 0x4, fixed_abs, tag = 'smem constant byte address 0x4 - core index']
  #allocation1 [shape = 'u32[72,128]{1,0:T(1,128)}', space=vmem, size = 0x9000, scoped, tag = 'internal scratch']
  %s0 = inlined_call_operand.vmem [shape: f32[128,32], index: 0, kind: input, shape index: {}]
  %s1 = inlined_call_operand.vmem [shape: bf16[32,64], index: 1, kind: input, shape index: {}]
  %s2 = inlined_call_operand.vmem [shape: f32[1,64], index: 2, kind: input, shape index: {}]
  %s3 = inlined_call_operand.vmem [shape: bf16[64,4], index: 3, kind: input, shape index: {}]
  %s4 = inlined_call_operand.vmem [shape: f32[1,4], index: 4, kind: input, shape index: {}]
  %s5 = inlined_call_operand.vmem [shape: f32[128,4], index: 5, kind: output, shape index: {}]
  %s6 = sld [smem:[#allocation0]]
  $region53: #{graph_wavenet_forward.19} parent=0
    _
  %s8 = ssub.s32 1, %s6
  %s9 = scalar_select 0, %s8, %s6
  loop: start=0, step=1, limit=4
  $region2: #{graph_wavenet_forward.19} parent=0 // loop_pre_header
    _
  $region3: #{graph_wavenet_forward.19} parent=0 // loop_header
    %s11 = sphi 0, %s15
    %p12 = scmp.ge.s32.totalorder %s11, 4
    %s21 = sphi 0, %s23
    %s24 = sphi 0, %s21
    %s25 = sphi 0, %s24
    %s41 = sphi 0, %s25
    %s45 = sphi 0, %s45
    %s47 = sphi 0, %s45
    %s48 = sphi 0, %s47
    %s62 = sphi 0, %s48
    %s66 = sphi 0, %s66
    %s68 = sphi 0, %s66
    %s69 = sphi 0, %s68
    %s83 = sphi 0, %s69
    %s87 = sphi 0, %s87
    %s89 = sphi 0, %s87
    %s90 = sphi 0, %s89
    %s104 = sphi 0, %s90
    %s108 = sphi 0, %s108
    %s110 = sphi 0, %s108
    %s111 = sphi 0, %s110
    %s125 = sphi 0, %s111
    %s131 = sphi 0, %s133
    %s134 = sphi 0, %s131
    %s135 = sphi 0, %s134
    %s151 = sphi 0, %s135
  $region4: #{graph_wavenet_forward.19} parent=0 // loop_header_branch
    %14 = sbr.rel (%p12) target = $region8
  $region5: #{graph_wavenet_forward.19} parent=0 // loop_body
    %s16 = ssub.s32 %s11, 1
    %s17 = ssub.s32 %s11, 2
    %s18 = sadd.s32 %s11, 1
    %s19 = ssub.s32 %s11, %s18
    %p20 = scmp.eq.s32.totalorder %s19, 0
    %s22 = sadd.s32 %s21, 1
    %s23 = scalar_select %p20, %s21, %s22
    %p26 = pneg %p20
    %p27 = scmp.eq.s32.totalorder %s11, 1
    %p28 = por %p26, %p27
    %p29 = scmp.ne.s32.totalorder %s21, %s24
    %p30 = scmp.eq.s32.totalorder %s11, 0
    %p31 = por %p29, %p30
    %p32 = scmp.ne.s32.totalorder %s21, %s24
    %p33 = scmp.eq.s32.totalorder %s16, 1
    %p34 = por %p32, %p33
    %p35 = scmp.ne.s32.totalorder %s24, %s25
    %p36 = scmp.eq.s32.totalorder %s16, 0
    %p37 = por %p35, %p36
    %p38 = scmp.ne.s32.totalorder %s24, %s25
    %p39 = scmp.eq.s32.totalorder %s17, 1
    %p40 = por %p38, %p39
    %p42 = scmp.ne.s32.totalorder %s25, %s41
    %p43 = scmp.eq.s32.totalorder %s17, 0
    %p44 = por %p42, %p43
    %s46 = sadd.s32 %s45, 1
    %p49 = scmp.eq.s32.totalorder %s11, 1
    %p50 = scmp.ne.s32.totalorder %s45, %s47
    %p51 = scmp.eq.s32.totalorder %s11, 0
    %p52 = por %p50, %p51
    %p53 = scmp.ne.s32.totalorder %s45, %s47
    %p54 = scmp.eq.s32.totalorder %s16, 1
    %p55 = por %p53, %p54
    %p56 = scmp.ne.s32.totalorder %s47, %s48
    %p57 = scmp.eq.s32.totalorder %s16, 0
    %p58 = por %p56, %p57
    %p59 = scmp.ne.s32.totalorder %s47, %s48
    %p60 = scmp.eq.s32.totalorder %s17, 1
    %p61 = por %p59, %p60
    %p63 = scmp.ne.s32.totalorder %s48, %s62
    %p64 = scmp.eq.s32.totalorder %s17, 0
    %p65 = por %p63, %p64
    %s67 = sadd.s32 %s66, 1
    %p70 = scmp.eq.s32.totalorder %s11, 1
    %p71 = scmp.ne.s32.totalorder %s66, %s68
    %p72 = scmp.eq.s32.totalorder %s11, 0
    %p73 = por %p71, %p72
    %p74 = scmp.ne.s32.totalorder %s66, %s68
    %p75 = scmp.eq.s32.totalorder %s16, 1
    %p76 = por %p74, %p75
    %p77 = scmp.ne.s32.totalorder %s68, %s69
    %p78 = scmp.eq.s32.totalorder %s16, 0
    %p79 = por %p77, %p78
    %p80 = scmp.ne.s32.totalorder %s68, %s69
    %p81 = scmp.eq.s32.totalorder %s17, 1
    %p82 = por %p80, %p81
    %p84 = scmp.ne.s32.totalorder %s69, %s83
    %p85 = scmp.eq.s32.totalorder %s17, 0
    %p86 = por %p84, %p85
    %s88 = sadd.s32 %s87, 1
    %p91 = scmp.eq.s32.totalorder %s11, 1
    %p92 = scmp.ne.s32.totalorder %s87, %s89
    %p93 = scmp.eq.s32.totalorder %s11, 0
    %p94 = por %p92, %p93
    %p95 = scmp.ne.s32.totalorder %s87, %s89
    %p96 = scmp.eq.s32.totalorder %s16, 1
    %p97 = por %p95, %p96
    %p98 = scmp.ne.s32.totalorder %s89, %s90
    %p99 = scmp.eq.s32.totalorder %s16, 0
    %p100 = por %p98, %p99
    %p101 = scmp.ne.s32.totalorder %s89, %s90
    %p102 = scmp.eq.s32.totalorder %s17, 1
    %p103 = por %p101, %p102
    %p105 = scmp.ne.s32.totalorder %s90, %s104
    %p106 = scmp.eq.s32.totalorder %s17, 0
    %p107 = por %p105, %p106
    %s109 = sadd.s32 %s108, 1
    %p112 = scmp.eq.s32.totalorder %s11, 1
    %p113 = scmp.ne.s32.totalorder %s108, %s110
    %p114 = scmp.eq.s32.totalorder %s11, 0
    %p115 = por %p113, %p114
    %p116 = scmp.ne.s32.totalorder %s108, %s110
    %p117 = scmp.eq.s32.totalorder %s16, 1
    %p118 = por %p116, %p117
    %p119 = scmp.ne.s32.totalorder %s110, %s111
    %p120 = scmp.eq.s32.totalorder %s16, 0
    %p121 = por %p119, %p120
    %p122 = scmp.ne.s32.totalorder %s110, %s111
    %p123 = scmp.eq.s32.totalorder %s17, 1
    %p124 = por %p122, %p123
    %p126 = scmp.ne.s32.totalorder %s111, %s125
    %p127 = scmp.eq.s32.totalorder %s17, 0
    %p128 = por %p126, %p127
    %s129 = ssub.s32 %s11, %s18
    %p130 = scmp.eq.s32.totalorder %s129, 0
    %s132 = sadd.s32 %s131, 1
    %s133 = scalar_select %p130, %s131, %s132
    %p136 = pneg %p130
    %p137 = scmp.eq.s32.totalorder %s11, 1
    %p138 = por %p136, %p137
    %p139 = scmp.ne.s32.totalorder %s131, %s134
    %p140 = scmp.eq.s32.totalorder %s11, 0
    %p141 = por %p139, %p140
    %p142 = scmp.ne.s32.totalorder %s131, %s134
    %p143 = scmp.eq.s32.totalorder %s16, 1
    %p144 = por %p142, %p143
    %p145 = scmp.ne.s32.totalorder %s134, %s135
    %p146 = scmp.eq.s32.totalorder %s16, 0
    %p147 = por %p145, %p146
    %p148 = scmp.ne.s32.totalorder %s134, %s135
    %p149 = scmp.eq.s32.totalorder %s17, 1
    %p150 = por %p148, %p149
    %p152 = scmp.ne.s32.totalorder %s135, %s151
    %p153 = scmp.eq.s32.totalorder %s17, 0
    %p154 = por %p152, %p153
    %p155 = scmp.le.s32.totalorder 1, %s11
    %p156 = scmp.lt.s32.totalorder %s11, 3
    %p157 = pnand %p155, %p156
    %p158 = pneg %p157
    // Predicated region
    $region9: #{graph_wavenet_forward.19} parent=5 // pred_check
      _
    $region10: #{graph_wavenet_forward.19} parent=5 // pred_check_branch
      %160 = sbr.rel (%p157) target = $region12
    $region11: #{graph_wavenet_forward.19} parent=5 // pred_region
      %s161 = ssub.s32 %s11, 1
      // Predicated region
      $region13: #{graph_wavenet_forward.19} parent=11 // pred_check
        %p162 = pneg %p58
      $region14: #{graph_wavenet_forward.19} parent=11 // pred_check_branch
        %164 = sbr.rel (%p162) target = $region16
      $region15: #{graph_wavenet_forward.19} parent=11 // pred_region
        _
      $region16: #{graph_wavenet_forward.19} parent=11 // pred_fallthru
        _
      // Predicated region
      $region17: #{graph_wavenet_forward.19} parent=11 // pred_check
        %p165 = pneg %p79
      $region18: #{graph_wavenet_forward.19} parent=11 // pred_check_branch
        %167 = sbr.rel (%p165) target = $region20
      $region19: #{graph_wavenet_forward.19} parent=11 // pred_region
        _
      $region20: #{graph_wavenet_forward.19} parent=11 // pred_fallthru
        _
      // Predicated region
      $region21: #{graph_wavenet_forward.19} parent=11 // pred_check
        %p168 = pneg %p100
      $region22: #{graph_wavenet_forward.19} parent=11 // pred_check_branch
        %170 = sbr.rel (%p168) target = $region24
      $region23: #{graph_wavenet_forward.19} parent=11 // pred_region
        _
      $region24: #{graph_wavenet_forward.19} parent=11 // pred_fallthru
        _
      // Predicated region
      $region25: #{graph_wavenet_forward.19} parent=11 // pred_check
        %p171 = pneg %p121
      $region26: #{graph_wavenet_forward.19} parent=11 // pred_check_branch
        %173 = sbr.rel (%p171) target = $region28
      $region27: #{graph_wavenet_forward.19} parent=11 // pred_region
        _
      $region28: #{graph_wavenet_forward.19} parent=11 // pred_fallthru
        _
    $region12: #{graph_wavenet_forward.19} parent=5 // pred_fallthru
      _
    %p174 = scmp.lt.s32.totalorder %s11, 2
    // Predicated region
    $region29: #{graph_wavenet_forward.19} parent=5 // pred_check
      %p175 = pneg %p174
    $region30: #{graph_wavenet_forward.19} parent=5 // pred_check_branch
      %177 = sbr.rel (%p175) target = $region32
    $region31: #{graph_wavenet_forward.19} parent=5 // pred_region
      // Predicated region
      $region33: #{graph_wavenet_forward.19} parent=31 // pred_check
        %p178 = pneg %p31
      $region34: #{graph_wavenet_forward.19} parent=31 // pred_check_branch
        %180 = sbr.rel (%p178) target = $region36
      $region35: #{graph_wavenet_forward.19} parent=31 // pred_region
        %s181 = smul.u32 8, %s11
        %p182 = scmp.lt.s32.totalorder %s181, 15
        %s183 = scalar_select %p182, %s181, 15
        %s184 = smul.addr %s183, 8
        %s185 = scalar_lea.vmem %s0, %s184
        %s186 = smul.u32 8, %s11
      $region36: #{graph_wavenet_forward.19} parent=31 // pred_fallthru
        _
    $region32: #{graph_wavenet_forward.19} parent=5 // pred_fallthru
      _
    %p187 = scmp.le.s32.totalorder 1, %s11
    %p188 = scmp.lt.s32.totalorder %s11, 3
    %p189 = pnand %p187, %p188
    %p190 = pneg %p189
    // Predicated region
    $region37: #{graph_wavenet_forward.19} parent=5 // pred_check
      _
    $region38: #{graph_wavenet_forward.19} parent=5 // pred_check_branch
      %192 = sbr.rel (%p189) target = $region40
    $region39: #{graph_wavenet_forward.19} parent=5 // pred_region
      %s193 = ssub.s32 %s11, 1
      %s194 = smul.u32 8, %s16
      %p195 = scmp.lt.s32.totalorder %s194, 15
      %s196 = scalar_select %p195, %s194, 15
      %s197 = smul.addr %s196, 8
      %s198 = scalar_lea.vmem %s0, %s197
      %p199 = pneg %p37
      %p200 = pneg %p34
      %p201 = pneg %p58
      %p202 = pneg %p55
      %p203 = pneg %p79
      %p204 = pneg %p76
      %p205 = pneg %p100
      %p206 = pneg %p97
      %p207 = pneg %p121
      %p208 = pneg %p118
      %p209 = pneg %p147
      %p210 = pneg %p144
      %s211 = smul.u32 8, %s16
      %p212 = scmp.lt.s32.totalorder %s211, 15
      %s213 = scalar_select %p212, %s211, 15
      %s214 = smul.addr %s213, 8
      %s215 = scalar_lea.vmem %s5, %s214
      %s216 = smul.u32 8, %s16
      %p217 = scmp.lt.s32.totalorder %s216, 15
      %s218 = scalar_select %p217, %s216, 15
      %s219 = smul.addr %s218, 8
      %s220 = scalar_lea.vmem %s0, %s219
      %s221 = smul.u32 8, %s16
      %s222 = smul.u32 8, %s16
      %p223 = scmp.lt.s32.totalorder %s222, 15
      %s224 = scalar_select %p223, %s222, 15
      %s225 = smul.addr %s224, 8
      %s226 = scalar_lea.vmem %s5, %s225
      %s227 = smul.u32 8, %s16
      %v229 = vld [vmem:[%s220] sm:$0xff]
      %v230 = vld [vmem:[%s220 + $0x8] sm:$0xff]
      %v231 = vld [vmem:[%s220 + $0x10] sm:$0xff]
      %v232 = vld [vmem:[%s220 + $0x18] sm:$0xff]
      %v233 = vld [vmem:[%s220 + $0x20] sm:$0xff]
      %v234 = vld [vmem:[%s220 + $0x28] sm:$0xff]
      %v235 = vld [vmem:[%s220 + $0x30] sm:$0xff]
      %v236 = vld [vmem:[%s220 + $0x38] sm:$0xff]
      %v237 = vmax.f32 %v229, 0.0
      %v238 = vmax.f32 %v230, 0.0
      %v239 = vmax.f32 %v231, 0.0
      %v240 = vmax.f32 %v232, 0.0
      %v241 = vmax.f32 %v233, 0.0
      %v242 = vmax.f32 %v234, 0.0
      %v243 = vmax.f32 %v235, 0.0
      %v244 = vmax.f32 %v236, 0.0
      %v245 = vpack.c.bf16 %v238, %v237
      %v246 = vpack.c.bf16 %v240, %v239
      %v247 = vpack.c.bf16 %v242, %v241
      %v248 = vpack.c.bf16 %v244, %v243
      %v249 = vld [vmem:[%s1] sm:$0xf]
      %v250 = vld [vmem:[%s1 + $0x4] sm:$0xf]
      %v251 = vld [vmem:[%s1 + $0x8] sm:$0xf]
      %v252 = vld [vmem:[%s1 + $0xc] sm:$0xf]
      %v253 = vld [vmem:[%s2] sm:$0x1]
      %v255 = vperm.slane %v253, 0
      %v261 = vunpack.c.l.b16 %v249
      %v262 = vunpack.c.l.b16 %v250
      %v263 = vunpack.c.l.b16 %v251
      %v264 = vunpack.c.l.b16 %v252
      %v265 = vpack.c.b16 %v262, %v261
      %v266 = vpack.c.b16 %v264, %v263
      %vm269 = vcmask 261120
      %v271 = vsel %vm269, %v245, 0
      %v274 = vsel %vm269, %v246, 0
      %v277 = vsel %vm269, %v247, 0
      %v280 = vsel %vm269, %v248, 0
      %282 = vmatpush.bf16.msra.mxu0 0
      %283 = vmatpush.bf16.msra.mxu0 0
      %284 = vmatpush.bf16.msra.mxu0 0
      %285 = vmatpush.bf16.msra.mxu0 0
      %286 = vmatpush.bf16.msra.mxu0 0
      %287 = vmatpush.bf16.msra.mxu0 0
      %288 = vmatpush.bf16.msra.mxu0 %v266
      %289 = vmatpush.bf16.msra.mxu0 %v265
      %290 = vmatmul.bf16.gmra.mxu0 %v271
      %v291 = vpop.f32.mrf.mxu0
      %v292 = vadd.f32 %v255, %v291
      %v293 = vpop.f32.mrf.mxu0
      %v294 = vadd.f32 %v255, %v293
      %295 = vmatmul.bf16.gmra.mxu0 %v274
      %v296 = vpop.f32.mrf.mxu0
      %v297 = vadd.f32 %v255, %v296
      %v298 = vpop.f32.mrf.mxu0
      %v299 = vadd.f32 %v255, %v298
      %300 = vmatmul.bf16.gmra.mxu0 %v277
      %v301 = vpop.f32.mrf.mxu0
      %v302 = vadd.f32 %v255, %v301
      %v303 = vpop.f32.mrf.mxu0
      %v304 = vadd.f32 %v255, %v303
      %305 = vmatmul.bf16.gmra.mxu0 %v280
      %v306 = vpop.f32.mrf.mxu0
      %v307 = vadd.f32 %v255, %v306
      %v308 = vpop.f32.mrf.mxu0
      %v309 = vadd.f32 %v255, %v308
      %310 = vdwg.mxu0
      %v311 = vmax.f32 %v292, 0.0
      %v312 = vmax.f32 %v294, 0.0
      %v313 = vmax.f32 %v297, 0.0
      %v314 = vmax.f32 %v299, 0.0
      %v315 = vmax.f32 %v302, 0.0
      %v316 = vmax.f32 %v304, 0.0
      %v317 = vmax.f32 %v307, 0.0
      %v318 = vmax.f32 %v309, 0.0
      %v319 = vpack.c.bf16 %v312, %v311
      %v320 = vpack.c.bf16 %v314, %v313
      %v321 = vpack.c.bf16 %v316, %v315
      %v322 = vpack.c.bf16 %v318, %v317
      %v323 = vld [vmem:[%s3] sm:$0xf]
      %v324 = vld [vmem:[%s3 + $0x4] sm:$0xf]
      %v325 = vld [vmem:[%s3 + $0x8] sm:$0xf]
      %v326 = vld [vmem:[%s3 + $0xc] sm:$0xf]
      %v327 = vld [vmem:[%s3 + $0x10] sm:$0xf]
      %v328 = vld [vmem:[%s3 + $0x14] sm:$0xf]
      %v329 = vld [vmem:[%s3 + $0x18] sm:$0xf]
      %v330 = vld [vmem:[%s3 + $0x1c] sm:$0xf]
      %v331 = vld [vmem:[%s4] sm:$0x1]
      %v333 = vperm.slane %v331, 0
      %v343 = vunpack.c.l.b16 %v323
      %v344 = vunpack.c.l.b16 %v324
      %v345 = vunpack.c.l.b16 %v325
      %v346 = vunpack.c.l.b16 %v326
      %v347 = vunpack.c.l.b16 %v327
      %v348 = vunpack.c.l.b16 %v328
      %v349 = vunpack.c.l.b16 %v329
      %v350 = vunpack.c.l.b16 %v330
      %v351 = vpack.c.b16 %v344, %v343
      %v352 = vpack.c.b16 %v346, %v345
      %v353 = vpack.c.b16 %v348, %v347
      %v354 = vpack.c.b16 %v350, %v349
      %vm359 = vcmask 523264
      %v361 = vsel %vm359, %v319, 0
      %v364 = vsel %vm359, %v320, 0
      %v367 = vsel %vm359, %v321, 0
      %v370 = vsel %vm359, %v322, 0
      %372 = vmatpush.bf16.msra.mxu0 0
      %373 = vmatpush.bf16.msra.mxu0 0
      %374 = vmatpush.bf16.msra.mxu0 0
      %375 = vmatpush.bf16.msra.mxu0 0
      %376 = vmatpush.bf16.msra.mxu0 %v354
      %377 = vmatpush.bf16.msra.mxu0 %v353
      %378 = vmatpush.bf16.msra.mxu0 %v352
      %379 = vmatpush.bf16.msra.mxu0 %v351
      %380 = vmatmul.bf16.gmra.mxu0 %v361
      %v381 = vpop.f32.mrf.mxu0
      %v382 = vadd.f32 %v333, %v381
      %v383 = vpop.f32.mrf.mxu0
      %v384 = vadd.f32 %v333, %v383
      %385 = vmatmul.bf16.gmra.mxu0 %v364
      %v386 = vpop.f32.mrf.mxu0
      %v387 = vadd.f32 %v333, %v386
      %v388 = vpop.f32.mrf.mxu0
      %v389 = vadd.f32 %v333, %v388
      %390 = vmatmul.bf16.gmra.mxu0 %v367
      %v391 = vpop.f32.mrf.mxu0
      %v392 = vadd.f32 %v333, %v391
      %v393 = vpop.f32.mrf.mxu0
      %v394 = vadd.f32 %v333, %v393
      %395 = vmatmul.bf16.gmra.mxu0 %v370
      %v396 = vpop.f32.mrf.mxu0
      %v397 = vadd.f32 %v333, %v396
      %v398 = vpop.f32.mrf.mxu0
      %v399 = vadd.f32 %v333, %v398
      %400 = vdwg.mxu0
      %vm401 = vcmask 31744
      %402 = vst.msk [vmem:[%s226] sm:$0xff] %vm401, %v382
      %403 = vst.msk [vmem:[%s226 + $0x8] sm:$0xff] %vm401, %v384
      %404 = vst.msk [vmem:[%s226 + $0x10] sm:$0xff] %vm401, %v387
      %405 = vst.msk [vmem:[%s226 + $0x18] sm:$0xff] %vm401, %v389
      %406 = vst.msk [vmem:[%s226 + $0x20] sm:$0xff] %vm401, %v392
      %407 = vst.msk [vmem:[%s226 + $0x28] sm:$0xff] %vm401, %v394
      %408 = vst.msk [vmem:[%s226 + $0x30] sm:$0xff] %vm401, %v397
      %409 = vst.msk [vmem:[%s226 + $0x38] sm:$0xff] %vm401, %v399
      %s410 = smul.u32 8, %s16
      %p411 = scmp.lt.s32.totalorder %s410, 15
      %s412 = scalar_select %p411, %s410, 15
      %s413 = smul.addr %s412, 8
      %s414 = scalar_lea.vmem %s5, %s413
      // Predicated region
      $region41: #{graph_wavenet_forward.19} parent=39 // pred_check
        %p415 = pneg %p144
      $region42: #{graph_wavenet_forward.19} parent=39 // pred_check_branch
        %417 = sbr.rel (%p415) target = $region44
      $region43: #{graph_wavenet_forward.19} parent=39 // pred_region
        %s418 = smul.u32 8, %s16
      $region44: #{graph_wavenet_forward.19} parent=39 // pred_fallthru
        _
    $region40: #{graph_wavenet_forward.19} parent=5 // pred_fallthru
      _
    %p419 = scmp.le.s32.totalorder 2, %s11
    // Predicated region
    $region45: #{graph_wavenet_forward.19} parent=5 // pred_check
      %p420 = pneg %p419
    $region46: #{graph_wavenet_forward.19} parent=5 // pred_check_branch
      %422 = sbr.rel (%p420) target = $region48
    $region47: #{graph_wavenet_forward.19} parent=5 // pred_region
      %s423 = ssub.s32 %s11, 2
      // Predicated region
      $region49: #{graph_wavenet_forward.19} parent=47 // pred_check
        %p424 = pneg %p150
      $region50: #{graph_wavenet_forward.19} parent=47 // pred_check_branch
        %426 = sbr.rel (%p424) target = $region52
      $region51: #{graph_wavenet_forward.19} parent=47 // pred_region
        %s427 = smul.u32 8, %s17
        %p428 = scmp.lt.s32.totalorder %s427, 15
        %s429 = scalar_select %p428, %s427, 15
        %s430 = smul.addr %s429, 8
        %s431 = scalar_lea.vmem %s5, %s430
      $region52: #{graph_wavenet_forward.19} parent=47 // pred_fallthru
        _
    $region48: #{graph_wavenet_forward.19} parent=5 // pred_fallthru
      _
  $region6: #{graph_wavenet_forward.19} parent=0 // loop_footer
    %s15 = sadd.s32 1, %s11
  $region7: #{graph_wavenet_forward.19} parent=0 // loop_footer_branch
    %10 = sbr.rel target = $region3
  $region8: #{graph_wavenet_forward.19} parent=0 // loop_exit
    _

// kernel: graph_wavenet_forward.18
$region0: #{graph_wavenet_forward.18}
  #allocation0 [shape = 'u32[]', space=smem, size = 0x4, offset = 0x4, fixed_abs, tag = 'smem constant byte address 0x4 - core index']
  #allocation1 [shape = 'u32[72,128]{1,0:T(1,128)}', space=vmem, size = 0x9000, scoped, tag = 'internal scratch']
  #allocation6 [shape = 's32[]', space=sflag, size = 0x4, offset = 0, fixed_abs, tag = 'sflag constant byte address 0x0 - dummy sync flag']
  %s0 = inlined_call_operand.vmem [shape: f32[128,16], index: 0, kind: input, shape index: {}]
  %s1 = inlined_call_operand.vmem [shape: f32[128,32], index: 1, kind: input, shape index: {}, may-alias: {1,6}]
  %s2 = inlined_call_operand.vmem [shape: bf16[32,32], index: 2, kind: input, shape index: {}]
  %s3 = inlined_call_operand.vmem [shape: f32[1,32], index: 3, kind: input, shape index: {}]
  %s4 = inlined_call_operand.vmem [shape: bf16[16,144], index: 4, kind: input, shape index: {}]
  %s5 = inlined_call_operand.vmem [shape: f32[1,144], index: 5, kind: input, shape index: {}]
  %s6 = inlined_call_operand.vmem [shape: f32[128,32], index: 6, kind: output, shape index: {0}, may-alias: {1,6}]
  %s7 = inlined_call_operand.hbm [shape: f32[128,16], index: 7, kind: output, shape index: {1}]
  %s8 = inlined_call_operand.hbm [shape: bf16[6,128,16], index: 8, kind: output, shape index: {2}]
  %9 = xla_tuple %s6, %s7, %s8
  %s10 = sld [smem:[#allocation0]]
  $region73: #{graph_wavenet_forward.18} parent=0
    _
  %s12 = ssub.s32 1, %s10
  %s13 = scalar_select 0, %s12, %s10
  $region1: #{graph_wavenet_forward.18} parent=0
    #allocation2 [shape = 'u8[65536]{0}', space=vmem, size = 0x10000, scoped, tag = 'output window, operand 1']
    #allocation3 [shape = 's32[2]{0}', space=sflag, size = 0x8, scoped, tag = 'scoped memory for graph_wavenet_forward.18']
    #allocation4 [shape = 'u8[196608]{0}', space=vmem, size = 0x30000, scoped, tag = 'output window, operand 2']
    #allocation5 [shape = 's32[2]{0}', space=sflag, size = 0x8, scoped, tag = 'scoped memory for graph_wavenet_forward.18']
    %14 = vsyncpa [#allocation3], 0
    %s15 = scalar_lea.sflag [#allocation3], 1
    %16 = vsyncpa %s15, 0
    %17 = vsyncpa [#allocation5], 0
    %s18 = scalar_lea.sflag [#allocation5], 1
    %19 = vsyncpa %s18, 0
    loop: start=0, step=1, limit=4
    $region2: #{graph_wavenet_forward.18} parent=1 // loop_pre_header
      _
    $region3: #{graph_wavenet_forward.18} parent=1 // loop_header
      %s21 = sphi 0, %s25
      %p22 = scmp.ge.s32.totalorder %s21, 4
      %s31 = sphi 0, %s33
      %s34 = sphi 0, %s31
      %s35 = sphi 0, %s34
      %s51 = sphi 0, %s35
      %s57 = sphi 0, %s59
      %s60 = sphi 0, %s57
      %s61 = sphi 0, %s60
      %s77 = sphi 0, %s61
      %s81 = sphi 0, %s81
      %s83 = sphi 0, %s81
      %s84 = sphi 0, %s83
      %s98 = sphi 0, %s84
      %s102 = sphi 0, %s102
      %s104 = sphi 0, %s102
      %s105 = sphi 0, %s104
      %s119 = sphi 0, %s105
      %s123 = sphi 0, %s123
      %s125 = sphi 0, %s123
      %s126 = sphi 0, %s125
      %s140 = sphi 0, %s126
      %s144 = sphi 0, %s144
      %s146 = sphi 0, %s144
      %s147 = sphi 0, %s146
      %s161 = sphi 0, %s147
      %s167 = sphi 0, %s169
      %s170 = sphi 0, %s167
      %s171 = sphi 0, %s170
      %s187 = sphi 0, %s171
      %s193 = sphi 0, %s195
      %s196 = sphi 0, %s193
      %s197 = sphi 0, %s196
      %s213 = sphi 0, %s197
      %s219 = sphi 0, %s221
      %s222 = sphi 0, %s219
      %s223 = sphi 0, %s222
      %s239 = sphi 0, %s223
    $region4: #{graph_wavenet_forward.18} parent=1 // loop_header_branch
      %24 = sbr.rel (%p22) target = $region8
    $region5: #{graph_wavenet_forward.18} parent=1 // loop_body
      %s26 = ssub.s32 %s21, 1
      %s27 = ssub.s32 %s21, 2
      %s28 = sadd.s32 %s21, 1
      %s29 = ssub.s32 %s21, %s28
      %p30 = scmp.eq.s32.totalorder %s29, 0
      %s32 = sadd.s32 %s31, 1
      %s33 = scalar_select %p30, %s31, %s32
      %p36 = pneg %p30
      %p37 = scmp.eq.s32.totalorder %s21, 1
      %p38 = por %p36, %p37
      %p39 = scmp.ne.s32.totalorder %s31, %s34
      %p40 = scmp.eq.s32.totalorder %s21, 0
      %p41 = por %p39, %p40
      %p42 = scmp.ne.s32.totalorder %s31, %s34
      %p43 = scmp.eq.s32.totalorder %s26, 1
      %p44 = por %p42, %p43
      %p45 = scmp.ne.s32.totalorder %s34, %s35
      %p46 = scmp.eq.s32.totalorder %s26, 0
      %p47 = por %p45, %p46
      %p48 = scmp.ne.s32.totalorder %s34, %s35
      %p49 = scmp.eq.s32.totalorder %s27, 1
      %p50 = por %p48, %p49
      %p52 = scmp.ne.s32.totalorder %s35, %s51
      %p53 = scmp.eq.s32.totalorder %s27, 0
      %p54 = por %p52, %p53
      %s55 = ssub.s32 %s21, %s28
      %p56 = scmp.eq.s32.totalorder %s55, 0
      %s58 = sadd.s32 %s57, 1
      %s59 = scalar_select %p56, %s57, %s58
      %p62 = pneg %p56
      %p63 = scmp.eq.s32.totalorder %s21, 1
      %p64 = por %p62, %p63
      %p65 = scmp.ne.s32.totalorder %s57, %s60
      %p66 = scmp.eq.s32.totalorder %s21, 0
      %p67 = por %p65, %p66
      %p68 = scmp.ne.s32.totalorder %s57, %s60
      %p69 = scmp.eq.s32.totalorder %s26, 1
      %p70 = por %p68, %p69
      %p71 = scmp.ne.s32.totalorder %s60, %s61
      %p72 = scmp.eq.s32.totalorder %s26, 0
      %p73 = por %p71, %p72
      %p74 = scmp.ne.s32.totalorder %s60, %s61
      %p75 = scmp.eq.s32.totalorder %s27, 1
      %p76 = por %p74, %p75
      %p78 = scmp.ne.s32.totalorder %s61, %s77
      %p79 = scmp.eq.s32.totalorder %s27, 0
      %p80 = por %p78, %p79
      %s82 = sadd.s32 %s81, 1
      %p85 = scmp.eq.s32.totalorder %s21, 1
      %p86 = scmp.ne.s32.totalorder %s81, %s83
      %p87 = scmp.eq.s32.totalorder %s21, 0
      %p88 = por %p86, %p87
      %p89 = scmp.ne.s32.totalorder %s81, %s83
      %p90 = scmp.eq.s32.totalorder %s26, 1
      %p91 = por %p89, %p90
      %p92 = scmp.ne.s32.totalorder %s83, %s84
      %p93 = scmp.eq.s32.totalorder %s26, 0
      %p94 = por %p92, %p93
      %p95 = scmp.ne.s32.totalorder %s83, %s84
      %p96 = scmp.eq.s32.totalorder %s27, 1
      %p97 = por %p95, %p96
      %p99 = scmp.ne.s32.totalorder %s84, %s98
      %p100 = scmp.eq.s32.totalorder %s27, 0
      %p101 = por %p99, %p100
      %s103 = sadd.s32 %s102, 1
      %p106 = scmp.eq.s32.totalorder %s21, 1
      %p107 = scmp.ne.s32.totalorder %s102, %s104
      %p108 = scmp.eq.s32.totalorder %s21, 0
      %p109 = por %p107, %p108
      %p110 = scmp.ne.s32.totalorder %s102, %s104
      %p111 = scmp.eq.s32.totalorder %s26, 1
      %p112 = por %p110, %p111
      %p113 = scmp.ne.s32.totalorder %s104, %s105
      %p114 = scmp.eq.s32.totalorder %s26, 0
      %p115 = por %p113, %p114
      %p116 = scmp.ne.s32.totalorder %s104, %s105
      %p117 = scmp.eq.s32.totalorder %s27, 1
      %p118 = por %p116, %p117
      %p120 = scmp.ne.s32.totalorder %s105, %s119
      %p121 = scmp.eq.s32.totalorder %s27, 0
      %p122 = por %p120, %p121
      %s124 = sadd.s32 %s123, 1
      %p127 = scmp.eq.s32.totalorder %s21, 1
      %p128 = scmp.ne.s32.totalorder %s123, %s125
      %p129 = scmp.eq.s32.totalorder %s21, 0
      %p130 = por %p128, %p129
      %p131 = scmp.ne.s32.totalorder %s123, %s125
      %p132 = scmp.eq.s32.totalorder %s26, 1
      %p133 = por %p131, %p132
      %p134 = scmp.ne.s32.totalorder %s125, %s126
      %p135 = scmp.eq.s32.totalorder %s26, 0
      %p136 = por %p134, %p135
      %p137 = scmp.ne.s32.totalorder %s125, %s126
      %p138 = scmp.eq.s32.totalorder %s27, 1
      %p139 = por %p137, %p138
      %p141 = scmp.ne.s32.totalorder %s126, %s140
      %p142 = scmp.eq.s32.totalorder %s27, 0
      %p143 = por %p141, %p142
      %s145 = sadd.s32 %s144, 1
      %p148 = scmp.eq.s32.totalorder %s21, 1
      %p149 = scmp.ne.s32.totalorder %s144, %s146
      %p150 = scmp.eq.s32.totalorder %s21, 0
      %p151 = por %p149, %p150
      %p152 = scmp.ne.s32.totalorder %s144, %s146
      %p153 = scmp.eq.s32.totalorder %s26, 1
      %p154 = por %p152, %p153
      %p155 = scmp.ne.s32.totalorder %s146, %s147
      %p156 = scmp.eq.s32.totalorder %s26, 0
      %p157 = por %p155, %p156
      %p158 = scmp.ne.s32.totalorder %s146, %s147
      %p159 = scmp.eq.s32.totalorder %s27, 1
      %p160 = por %p158, %p159
      %p162 = scmp.ne.s32.totalorder %s147, %s161
      %p163 = scmp.eq.s32.totalorder %s27, 0
      %p164 = por %p162, %p163
      %s165 = ssub.s32 %s21, %s28
      %p166 = scmp.eq.s32.totalorder %s165, 0
      %s168 = sadd.s32 %s167, 1
      %s169 = scalar_select %p166, %s167, %s168
      %p172 = pneg %p166
      %p173 = scmp.eq.s32.totalorder %s21, 1
      %p174 = por %p172, %p173
      %p175 = scmp.ne.s32.totalorder %s167, %s170
      %p176 = scmp.eq.s32.totalorder %s21, 0
      %p177 = por %p175, %p176
      %p178 = scmp.ne.s32.totalorder %s167, %s170
      %p179 = scmp.eq.s32.totalorder %s26, 1
      %p180 = por %p178, %p179
      %p181 = scmp.ne.s32.totalorder %s170, %s171
      %p182 = scmp.eq.s32.totalorder %s26, 0
      %p183 = por %p181, %p182
      %p184 = scmp.ne.s32.totalorder %s170, %s171
      %p185 = scmp.eq.s32.totalorder %s27, 1
      %p186 = por %p184, %p185
      %p188 = scmp.ne.s32.totalorder %s171, %s187
      %p189 = scmp.eq.s32.totalorder %s27, 0
      %p190 = por %p188, %p189
      %s191 = ssub.s32 %s21, %s28
      %p192 = scmp.eq.s32.totalorder %s191, 0
      %s194 = sadd.s32 %s193, 1
      %s195 = scalar_select %p192, %s193, %s194
      %p198 = pneg %p192
      %p199 = scmp.eq.s32.totalorder %s21, 1
      %p200 = por %p198, %p199
      %p201 = scmp.ne.s32.totalorder %s193, %s196
      %p202 = scmp.eq.s32.totalorder %s21, 0
      %p203 = por %p201, %p202
      %p204 = scmp.ne.s32.totalorder %s193, %s196
      %p205 = scmp.eq.s32.totalorder %s26, 1
      %p206 = por %p204, %p205
      %p207 = scmp.ne.s32.totalorder %s196, %s197
      %p208 = scmp.eq.s32.totalorder %s26, 0
      %p209 = por %p207, %p208
      %p210 = scmp.ne.s32.totalorder %s196, %s197
      %p211 = scmp.eq.s32.totalorder %s27, 1
      %p212 = por %p210, %p211
      %p214 = scmp.ne.s32.totalorder %s197, %s213
      %p215 = scmp.eq.s32.totalorder %s27, 0
      %p216 = por %p214, %p215
      %s217 = ssub.s32 %s21, %s28
      %p218 = scmp.eq.s32.totalorder %s217, 0
      %s220 = sadd.s32 %s219, 1
      %s221 = scalar_select %p218, %s219, %s220
      %p224 = pneg %p218
      %p225 = scmp.eq.s32.totalorder %s21, 1
      %p226 = por %p224, %p225
      %p227 = scmp.ne.s32.totalorder %s219, %s222
      %p228 = scmp.eq.s32.totalorder %s21, 0
      %p229 = por %p227, %p228
      %p230 = scmp.ne.s32.totalorder %s219, %s222
      %p231 = scmp.eq.s32.totalorder %s26, 1
      %p232 = por %p230, %p231
      %p233 = scmp.ne.s32.totalorder %s222, %s223
      %p234 = scmp.eq.s32.totalorder %s26, 0
      %p235 = por %p233, %p234
      %p236 = scmp.ne.s32.totalorder %s222, %s223
      %p237 = scmp.eq.s32.totalorder %s27, 1
      %p238 = por %p236, %p237
      %p240 = scmp.ne.s32.totalorder %s223, %s239
      %p241 = scmp.eq.s32.totalorder %s27, 0
      %p242 = por %p240, %p241
      %p243 = scmp.le.s32.totalorder 1, %s21
      %p244 = scmp.lt.s32.totalorder %s21, 3
      %p245 = pnand %p243, %p244
      %p246 = pneg %p245
      // Predicated region
      $region9: #{graph_wavenet_forward.18} parent=5 // pred_check
        _
      $region10: #{graph_wavenet_forward.18} parent=5 // pred_check_branch
        %248 = sbr.rel (%p245) target = $region12
      $region11: #{graph_wavenet_forward.18} parent=5 // pred_region
        %s249 = ssub.s32 %s21, 1
        // Predicated region
        $region13: #{graph_wavenet_forward.18} parent=11 // pred_check
          %p250 = pneg %p94
        $region14: #{graph_wavenet_forward.18} parent=11 // pred_check_branch
          %252 = sbr.rel (%p250) target = $region16
        $region15: #{graph_wavenet_forward.18} parent=11 // pred_region
          _
        $region16: #{graph_wavenet_forward.18} parent=11 // pred_fallthru
          _
        // Predicated region
        $region17: #{graph_wavenet_forward.18} parent=11 // pred_check
          %p253 = pneg %p115
        $region18: #{graph_wavenet_forward.18} parent=11 // pred_check_branch
          %255 = sbr.rel (%p253) target = $region20
        $region19: #{graph_wavenet_forward.18} parent=11 // pred_region
          _
        $region20: #{graph_wavenet_forward.18} parent=11 // pred_fallthru
          _
        // Predicated region
        $region21: #{graph_wavenet_forward.18} parent=11 // pred_check
          %p256 = pneg %p136
        $region22: #{graph_wavenet_forward.18} parent=11 // pred_check_branch
          %258 = sbr.rel (%p256) target = $region24
        $region23: #{graph_wavenet_forward.18} parent=11 // pred_region
          _
        $region24: #{graph_wavenet_forward.18} parent=11 // pred_fallthru
          _
        // Predicated region
        $region25: #{graph_wavenet_forward.18} parent=11 // pred_check
          %p259 = pneg %p157
        $region26: #{graph_wavenet_forward.18} parent=11 // pred_check_branch
          %261 = sbr.rel (%p259) target = $region28
        $region27: #{graph_wavenet_forward.18} parent=11 // pred_region
          _
        $region28: #{graph_wavenet_forward.18} parent=11 // pred_fallthru
          _
      $region12: #{graph_wavenet_forward.18} parent=5 // pred_fallthru
        _
      %p262 = scmp.lt.s32.totalorder %s21, 2
      // Predicated region
      $region29: #{graph_wavenet_forward.18} parent=5 // pred_check
        %p263 = pneg %p262
      $region30: #{graph_wavenet_forward.18} parent=5 // pred_check_branch
        %265 = sbr.rel (%p263) target = $region32
      $region31: #{graph_wavenet_forward.18} parent=5 // pred_region
        // Predicated region
        $region33: #{graph_wavenet_forward.18} parent=31 // pred_check
          %p266 = pneg %p41
        $region34: #{graph_wavenet_forward.18} parent=31 // pred_check_branch
          %268 = sbr.rel (%p266) target = $region36
        $region35: #{graph_wavenet_forward.18} parent=31 // pred_region
          %s269 = smul.u32 8, %s21
          %p270 = scmp.lt.s32.totalorder %s269, 15
          %s271 = scalar_select %p270, %s269, 15
          %s272 = smul.addr %s271, 8
          %s273 = scalar_lea.vmem %s0, %s272
          %s274 = smul.u32 8, %s21
        $region36: #{graph_wavenet_forward.18} parent=31 // pred_fallthru
          _
        // Predicated region
        $region37: #{graph_wavenet_forward.18} parent=31 // pred_check
          %p275 = pneg %p67
        $region38: #{graph_wavenet_forward.18} parent=31 // pred_check_branch
          %277 = sbr.rel (%p275) target = $region40
        $region39: #{graph_wavenet_forward.18} parent=31 // pred_region
          %s278 = smul.u32 8, %s21
          %p279 = scmp.lt.s32.totalorder %s278, 15
          %s280 = scalar_select %p279, %s278, 15
          %s281 = smul.addr %s280, 8
          %s282 = scalar_lea.vmem %s1, %s281
          %s283 = smul.u32 8, %s21
        $region40: #{graph_wavenet_forward.18} parent=31 // pred_fallthru
          _
      $region32: #{graph_wavenet_forward.18} parent=5 // pred_fallthru
        _
      %p284 = scmp.le.s32.totalorder 1, %s21
      %p285 = scmp.lt.s32.totalorder %s21, 3
      %p286 = pnand %p284, %p285
      %p287 = pneg %p286
      // Predicated region
      $region41: #{graph_wavenet_forward.18} parent=5 // pred_check
        _
      $region42: #{graph_wavenet_forward.18} parent=5 // pred_check_branch
        %289 = sbr.rel (%p286) target = $region44
      $region43: #{graph_wavenet_forward.18} parent=5 // pred_region
        %s290 = ssub.s32 %s21, 1
        %s291 = smul.u32 8, %s26
        %p292 = scmp.lt.s32.totalorder %s291, 15
        %s293 = scalar_select %p292, %s291, 15
        %s294 = smul.addr %s293, 8
        %s295 = scalar_lea.vmem %s0, %s294
        %p296 = pneg %p47
        %p297 = pneg %p44
        %s298 = smul.u32 8, %s26
        %p299 = scmp.lt.s32.totalorder %s298, 15
        %s300 = scalar_select %p299, %s298, 15
        %s301 = smul.addr %s300, 8
        %s302 = scalar_lea.vmem %s1, %s301
        %p303 = pneg %p73
        %p304 = pneg %p70
        %p305 = pneg %p94
        %p306 = pneg %p91
        %p307 = pneg %p115
        %p308 = pneg %p112
        %p309 = pneg %p136
        %p310 = pneg %p133
        %p311 = pneg %p157
        %p312 = pneg %p154
        %p313 = pneg %p183
        %p314 = pneg %p180
        %s315 = smul.u32 8, %s26
        %p316 = scmp.lt.s32.totalorder %s315, 15
        %s317 = scalar_select %p316, %s315, 15
        %s318 = smul.addr %s317, 8
        %s319 = scalar_lea.vmem %s6, %s318
        %p320 = pneg %p209
        %p321 = pneg %p206
        %s322 = sand.u32 %s196, 1
        %s323 = scalar_lea.sflag [#allocation3], %s322
        %s324 = sand.u32 %s196, 1
        %s325 = smul.addr %s324, 64
        %s326 = scalar_lea.vmem [#allocation2], %s325
        %p327 = pneg %p235
        %p328 = pneg %p232
        %s329 = sand.u32 %s222, 1
        %s330 = scalar_lea.sflag [#allocation5], %s329
        %s331 = sand.u32 %s222, 1
        %s332 = smul.addr %s331, 192
        %s333 = scalar_lea.vmem [#allocation4], %s332
        %s334 = smul.u32 8, %s26
        %p335 = scmp.lt.s32.totalorder %s334, 15
        %s336 = scalar_select %p335, %s334, 15
        %s337 = smul.addr %s336, 8
        %s338 = scalar_lea.vmem %s0, %s337
        %s339 = smul.u32 8, %s26
        %s340 = smul.u32 8, %s26
        %p341 = scmp.lt.s32.totalorder %s340, 15
        %s342 = scalar_select %p341, %s340, 15
        %s343 = smul.addr %s342, 8
        %s344 = scalar_lea.vmem %s1, %s343
        %s345 = smul.u32 8, %s26
        %s346 = smul.u32 8, %s26
        %p347 = scmp.lt.s32.totalorder %s346, 15
        %s348 = scalar_select %p347, %s346, 15
        %s349 = smul.addr %s348, 8
        %s350 = scalar_lea.vmem %s6, %s349
        %s351 = smul.u32 8, %s26
        %s352 = smul.u32 8, %s26
        %s353 = smul.u32 8, %s26
        %v355 = vld [vmem:[%s338] sm:$0xff]
        %v356 = vld [vmem:[%s338 + $0x8] sm:$0xff]
        %v357 = vld [vmem:[%s338 + $0x10] sm:$0xff]
        %v358 = vld [vmem:[%s338 + $0x18] sm:$0xff]
        %v359 = vld [vmem:[%s338 + $0x20] sm:$0xff]
        %v360 = vld [vmem:[%s338 + $0x28] sm:$0xff]
        %v361 = vld [vmem:[%s338 + $0x30] sm:$0xff]
        %v362 = vld [vmem:[%s338 + $0x38] sm:$0x3f]
        %v363 = vld [vmem:[%s338 + $0x2] sm:$0xff]
        %v364 = vld [vmem:[%s338 + $0xa] sm:$0xff]
        %v365 = vld [vmem:[%s338 + $0x12] sm:$0xff]
        %v366 = vld [vmem:[%s338 + $0x1a] sm:$0xff]
        %v367 = vld [vmem:[%s338 + $0x22] sm:$0xff]
        %v368 = vld [vmem:[%s338 + $0x2a] sm:$0xff]
        %v369 = vld [vmem:[%s338 + $0x32] sm:$0xff]
        %v370 = vld [vmem:[%s338 + $0x3a] sm:$0x3f]
        %379 = vrot.lane.b32.xlu0 %v363, 16
        %v380 = vpop.permute.xlu0 %379
        %381 = vrot.lane.b32.xlu0 %v364, 16
        %v382 = vpop.permute.xlu0 %381
        %383 = vrot.lane.b32.xlu0 %v365, 16
        %v384 = vpop.permute.xlu0 %383
        %385 = vrot.lane.b32.xlu0 %v366, 16
        %v386 = vpop.permute.xlu0 %385
        %387 = vrot.lane.b32.xlu0 %v367, 16
        %v388 = vpop.permute.xlu0 %387
        %389 = vrot.lane.b32.xlu0 %v368, 16
        %v390 = vpop.permute.xlu0 %389
        %391 = vrot.lane.b32.xlu0 %v369, 16
        %v392 = vpop.permute.xlu0 %391
        %393 = vrot.lane.b32.xlu0 %v370, 16
        %v394 = vpop.permute.xlu0 %393
        %vm403 = vcmask 130048
        %v404 = vsel %vm403, %v355, %v380
        %v405 = vsel %vm403, %v356, %v382
        %v406 = vsel %vm403, %v357, %v384
        %v407 = vsel %vm403, %v358, %v386
        %v408 = vsel %vm403, %v359, %v388
        %v409 = vsel %vm403, %v360, %v390
        %v410 = vsel %vm403, %v361, %v392
        %v411 = vsel %vm403, %v362, %v394
        %v412 = vpack.c.bf16 %v405, %v404
        %v413 = vpack.c.bf16 %v407, %v406
        %v414 = vpack.c.bf16 %v409, %v408
        %v415 = vpack.c.bf16 %v411, %v410
        %v416 = vld [vmem:[%s2] sm:$0xf]
        %v417 = vld [vmem:[%s2 + $0x4] sm:$0xf]
        %v418 = vld [vmem:[%s2 + $0x8] sm:$0xf]
        %v419 = vld [vmem:[%s2 + $0xc] sm:$0xf]
        %v420 = vld [vmem:[%s3] sm:$0x1]
        %v422 = vperm.slane %v420, 0
        %v428 = vunpack.c.l.b16 %v416
        %v429 = vunpack.c.l.b16 %v417
        %v430 = vunpack.c.l.b16 %v418
        %v431 = vunpack.c.l.b16 %v419
        %v432 = vpack.c.b16 %v429, %v428
        %v433 = vpack.c.b16 %v431, %v430
        %vm436 = vcmask 261120
        %v438 = vsel %vm436, %v412, 0
        %v441 = vsel %vm436, %v413, 0
        %v444 = vsel %vm436, %v414, 0
        %v447 = vsel %vm436, %v415, 0
        %449 = vmatpush.bf16.msra.mxu0 0
        %450 = vmatpush.bf16.msra.mxu0 0
        %451 = vmatpush.bf16.msra.mxu0 0
        %452 = vmatpush.bf16.msra.mxu0 0
        %453 = vmatpush.bf16.msra.mxu0 0
        %454 = vmatpush.bf16.msra.mxu0 0
        %455 = vmatpush.bf16.msra.mxu0 %v433
        %456 = vmatpush.bf16.msra.mxu0 %v432
        %457 = vmatmul.bf16.gmra.mxu0 %v438
        %v458 = vpop.f32.mrf.mxu0
        %v459 = vadd.f32 %v422, %v458
        %v460 = vpop.f32.mrf.mxu0
        %v461 = vadd.f32 %v422, %v460
        %462 = vmatmul.bf16.gmra.mxu0 %v441
        %v463 = vpop.f32.mrf.mxu0
        %v464 = vadd.f32 %v422, %v463
        %v465 = vpop.f32.mrf.mxu0
        %v466 = vadd.f32 %v422, %v465
        %467 = vmatmul.bf16.gmra.mxu0 %v444
        %v468 = vpop.f32.mrf.mxu0
        %v469 = vadd.f32 %v422, %v468
        %v470 = vpop.f32.mrf.mxu0
        %v471 = vadd.f32 %v422, %v470
        %472 = vmatmul.bf16.gmra.mxu0 %v447
        %v473 = vpop.f32.mrf.mxu0
        %v474 = vadd.f32 %v422, %v473
        %v475 = vpop.f32.mrf.mxu0
        %v476 = vadd.f32 %v422, %v475
        %477 = vdwg.mxu0
        %v478 = vtanh.pop %v459
        %v479 = vtanh.pop %v461
        %v480 = vtanh.pop %v464
        %v481 = vtanh.pop %v466
        %v482 = vtanh.pop %v469
        %v483 = vtanh.pop %v471
        %v484 = vtanh.pop %v474
        %v485 = vtanh.pop %v476
        %v486 = vxor.u32 %v459, 2147483648
        %v487 = vxor.u32 %v461, 2147483648
        %v488 = vxor.u32 %v464, 2147483648
        %v489 = vxor.u32 %v466, 2147483648
        %v490 = vxor.u32 %v469, 2147483648
        %v491 = vxor.u32 %v471, 2147483648
        %v492 = vxor.u32 %v474, 2147483648
        %v493 = vxor.u32 %v476, 2147483648
        %v494 = vmul.f32 %v486, 1.442695
        %v495 = vpow.pop %v494
        %v496 = vmul.f32 %v487, 1.442695
        %v497 = vpow.pop %v496
        %v498 = vmul.f32 %v488, 1.442695
        %v499 = vpow.pop %v498
        %v500 = vmul.f32 %v489, 1.442695
        %v501 = vpow.pop %v500
        %v502 = vmul.f32 %v490, 1.442695
        %v503 = vpow.pop %v502
        %v504 = vmul.f32 %v491, 1.442695
        %v505 = vpow.pop %v504
        %v506 = vmul.f32 %v492, 1.442695
        %v507 = vpow.pop %v506
        %v508 = vmul.f32 %v493, 1.442695
        %v509 = vpow.pop %v508
        %v510 = vadd.f32 %v495, 1.0
        %v511 = vadd.f32 %v497, 1.0
        %v512 = vadd.f32 %v499, 1.0
        %v513 = vadd.f32 %v501, 1.0
        %v514 = vadd.f32 %v503, 1.0
        %v515 = vadd.f32 %v505, 1.0
        %v516 = vadd.f32 %v507, 1.0
        %v517 = vadd.f32 %v509, 1.0
        %v518 = vrcp.pop %v510
        %v519 = vmul.f32 %v510, %v518
        %v520 = vsub.f32 1.0, %v519
        %v521 = vmul.f32 %v518, %v520
        %v522 = vadd.f32 %v518, %v521
        %vm523 = vweird.f32 %v510
        %vm524 = vweird.f32 %v518
        %vm525 = vmor %vm523, %vm524
        %v526 = vsel %vm525, %v518, %v522
        %v527 = vand.u32 2147483647, %v510
        %vm528 = vcmp.eq.f32.partialorder %v527, 8.507059e+37
        %v529 = vand.u32 %v510, 2147483648
        %v530 = vor.u32 1.1754944e-38, %v529
        %v531 = vsel %vm528, %v530, %v526
        %v532 = vmul.f32 1.0, %v531
        %v533 = vrcp.pop %v511
        %v534 = vmul.f32 %v511, %v533
        %v535 = vsub.f32 1.0, %v534
        %v536 = vmul.f32 %v533, %v535
        %v537 = vadd.f32 %v533, %v536
        %vm538 = vweird.f32 %v511
        %vm539 = vweird.f32 %v533
        %vm540 = vmor %vm538, %vm539
        %v541 = vsel %vm540, %v533, %v537
        %v542 = vand.u32 2147483647, %v511
        %vm543 = vcmp.eq.f32.partialorder %v542, 8.507059e+37
        %v544 = vand.u32 %v511, 2147483648
        %v545 = vor.u32 1.1754944e-38, %v544
        %v546 = vsel %vm543, %v545, %v541
        %v547 = vmul.f32 1.0, %v546
        %v548 = vrcp.pop %v512
        %v549 = vmul.f32 %v512, %v548
        %v550 = vsub.f32 1.0, %v549
        %v551 = vmul.f32 %v548, %v550
        %v552 = vadd.f32 %v548, %v551
        %vm553 = vweird.f32 %v512
        %vm554 = vweird.f32 %v548
        %vm555 = vmor %vm553, %vm554
        %v556 = vsel %vm555, %v548, %v552
        %v557 = vand.u32 2147483647, %v512
        %vm558 = vcmp.eq.f32.partialorder %v557, 8.507059e+37
        %v559 = vand.u32 %v512, 2147483648
        %v560 = vor.u32 1.1754944e-38, %v559
        %v561 = vsel %vm558, %v560, %v556
        %v562 = vmul.f32 1.0, %v561
        %v563 = vrcp.pop %v513
        %v564 = vmul.f32 %v513, %v563
        %v565 = vsub.f32 1.0, %v564
        %v566 = vmul.f32 %v563, %v565
        %v567 = vadd.f32 %v563, %v566
        %vm568 = vweird.f32 %v513
        %vm569 = vweird.f32 %v563
        %vm570 = vmor %vm568, %vm569
        %v571 = vsel %vm570, %v563, %v567
        %v572 = vand.u32 2147483647, %v513
        %vm573 = vcmp.eq.f32.partialorder %v572, 8.507059e+37
        %v574 = vand.u32 %v513, 2147483648
        %v575 = vor.u32 1.1754944e-38, %v574
        %v576 = vsel %vm573, %v575, %v571
        %v577 = vmul.f32 1.0, %v576
        %v578 = vrcp.pop %v514
        %v579 = vmul.f32 %v514, %v578
        %v580 = vsub.f32 1.0, %v579
        %v581 = vmul.f32 %v578, %v580
        %v582 = vadd.f32 %v578, %v581
        %vm583 = vweird.f32 %v514
        %vm584 = vweird.f32 %v578
        %vm585 = vmor %vm583, %vm584
        %v586 = vsel %vm585, %v578, %v582
        %v587 = vand.u32 2147483647, %v514
        %vm588 = vcmp.eq.f32.partialorder %v587, 8.507059e+37
        %v589 = vand.u32 %v514, 2147483648
        %v590 = vor.u32 1.1754944e-38, %v589
        %v591 = vsel %vm588, %v590, %v586
        %v592 = vmul.f32 1.0, %v591
        %v593 = vrcp.pop %v515
        %v594 = vmul.f32 %v515, %v593
        %v595 = vsub.f32 1.0, %v594
        %v596 = vmul.f32 %v593, %v595
        %v597 = vadd.f32 %v593, %v596
        %vm598 = vweird.f32 %v515
        %vm599 = vweird.f32 %v593
        %vm600 = vmor %vm598, %vm599
        %v601 = vsel %vm600, %v593, %v597
        %v602 = vand.u32 2147483647, %v515
        %vm603 = vcmp.eq.f32.partialorder %v602, 8.507059e+37
        %v604 = vand.u32 %v515, 2147483648
        %v605 = vor.u32 1.1754944e-38, %v604
        %v606 = vsel %vm603, %v605, %v601
        %v607 = vmul.f32 1.0, %v606
        %v608 = vrcp.pop %v516
        %v609 = vmul.f32 %v516, %v608
        %v610 = vsub.f32 1.0, %v609
        %v611 = vmul.f32 %v608, %v610
        %v612 = vadd.f32 %v608, %v611
        %vm613 = vweird.f32 %v516
        %vm614 = vweird.f32 %v608
        %vm615 = vmor %vm613, %vm614
        %v616 = vsel %vm615, %v608, %v612
        %v617 = vand.u32 2147483647, %v516
        %vm618 = vcmp.eq.f32.partialorder %v617, 8.507059e+37
        %v619 = vand.u32 %v516, 2147483648
        %v620 = vor.u32 1.1754944e-38, %v619
        %v621 = vsel %vm618, %v620, %v616
        %v622 = vmul.f32 1.0, %v621
        %v623 = vrcp.pop %v517
        %v624 = vmul.f32 %v517, %v623
        %v625 = vsub.f32 1.0, %v624
        %v626 = vmul.f32 %v623, %v625
        %v627 = vadd.f32 %v623, %v626
        %vm628 = vweird.f32 %v517
        %vm629 = vweird.f32 %v623
        %vm630 = vmor %vm628, %vm629
        %v631 = vsel %vm630, %v623, %v627
        %v632 = vand.u32 2147483647, %v517
        %vm633 = vcmp.eq.f32.partialorder %v632, 8.507059e+37
        %v634 = vand.u32 %v517, 2147483648
        %v635 = vor.u32 1.1754944e-38, %v634
        %v636 = vsel %vm633, %v635, %v631
        %v637 = vmul.f32 1.0, %v636
        %646 = vrot.lane.b32.xlu0 %v532, 112
        %v647 = vpop.permute.xlu0 %646
        %648 = vrot.lane.b32.xlu0 %v547, 112
        %v649 = vpop.permute.xlu0 %648
        %650 = vrot.lane.b32.xlu0 %v562, 112
        %v651 = vpop.permute.xlu0 %650
        %652 = vrot.lane.b32.xlu0 %v577, 112
        %v653 = vpop.permute.xlu0 %652
        %654 = vrot.lane.b32.xlu0 %v592, 112
        %v655 = vpop.permute.xlu0 %654
        %656 = vrot.lane.b32.xlu0 %v607, 112
        %v657 = vpop.permute.xlu0 %656
        %658 = vrot.lane.b32.xlu0 %v622, 112
        %v659 = vpop.permute.xlu0 %658
        %660 = vrot.lane.b32.xlu0 %v637, 112
        %v661 = vpop.permute.xlu0 %660
        %v670 = vmul.f32 %v478, %v647
        %v671 = vmul.f32 %v479, %v649
        %v672 = vmul.f32 %v480, %v651
        %v673 = vmul.f32 %v481, %v653
        %v674 = vmul.f32 %v482, %v655
        %v675 = vmul.f32 %v483, %v657
        %v676 = vmul.f32 %v484, %v659
        %v677 = vmul.f32 %v485, %v661
        %v678 = vpack.c.bf16 %v671, %v670
        %v679 = vpack.c.bf16 %v673, %v672
        %v680 = vpack.c.bf16 %v675, %v674
        %v681 = vpack.c.bf16 %v677, %v676
        %v682 = vld [vmem:[%s4] sm:$0xff]
        %v683 = vld [vmem:[%s4 + $0x8] sm:$0xff]
        %v684 = vld [vmem:[%s5] sm:$0x3]
        %v686 = vperm.slane %v684, 0
        %v687 = vperm.slane %v684, 1
        %v692 = vunpack.c.l.b16 %v682
        %v693 = vunpack.c.h.b16 %v682
        %v694 = vunpack.c.l.b16 %v683
        %v695 = vunpack.c.h.b16 %v683
        %v696 = vpack.c.b16 %v694, %v692
        %v697 = vpack.c.b16 %v695, %v693
        %v701 = vsel %vm403, %v678, 0
        %v704 = vsel %vm403, %v679, 0
        %v707 = vsel %vm403, %v680, 0
        %v710 = vsel %vm403, %v681, 0
        %712 = vmatpush.bf16.msra.mxu0 0
        %713 = vmatpush.bf16.msra.mxu0 0
        %714 = vmatpush.bf16.msra.mxu0 0
        %715 = vmatpush.bf16.msra.mxu0 0
        %716 = vmatpush.bf16.msra.mxu0 0
        %717 = vmatpush.bf16.msra.mxu0 0
        %718 = vmatpush.bf16.msra.mxu0 0
        %719 = vmatpush.bf16.msra.mxu0 %v696
        %720 = vmatmul.bf16.gmra.mxu0 %v701
        %v721 = vpop.f32.mrf.mxu0
        %v722 = vadd.f32 %v686, %v721
        %v723 = vpop.f32.mrf.mxu0
        %v724 = vadd.f32 %v686, %v723
        %725 = vmatmul.bf16.gmra.mxu0 %v704
        %v726 = vpop.f32.mrf.mxu0
        %v727 = vadd.f32 %v686, %v726
        %v728 = vpop.f32.mrf.mxu0
        %v729 = vadd.f32 %v686, %v728
        %730 = vmatmul.bf16.gmra.mxu0 %v707
        %v731 = vpop.f32.mrf.mxu0
        %v732 = vadd.f32 %v686, %v731
        %v733 = vpop.f32.mrf.mxu0
        %v734 = vadd.f32 %v686, %v733
        %735 = vmatmul.bf16.gmra.mxu0 %v710
        %v736 = vpop.f32.mrf.mxu0
        %v737 = vadd.f32 %v686, %v736
        %v738 = vpop.f32.mrf.mxu0
        %v739 = vadd.f32 %v686, %v738
        %740 = vdwg.mxu0
        %741 = vmatpush.bf16.msra.mxu0 0
        %742 = vmatpush.bf16.msra.mxu0 0
        %743 = vmatpush.bf16.msra.mxu0 0
        %744 = vmatpush.bf16.msra.mxu0 0
        %745 = vmatpush.bf16.msra.mxu0 0
        %746 = vmatpush.bf16.msra.mxu0 0
        %747 = vmatpush.bf16.msra.mxu0 0
        %748 = vmatpush.bf16.msra.mxu0 %v697
        %749 = vmatmul.bf16.gmra.mxu0 %v701
        %v750 = vpop.f32.mrf.mxu0
        %v751 = vadd.f32 %v687, %v750
        %v752 = vpop.f32.mrf.mxu0
        %v753 = vadd.f32 %v687, %v752
        %754 = vmatmul.bf16.gmra.mxu0 %v704
        %v755 = vpop.f32.mrf.mxu0
        %v756 = vadd.f32 %v687, %v755
        %v757 = vpop.f32.mrf.mxu0
        %v758 = vadd.f32 %v687, %v757
        %759 = vmatmul.bf16.gmra.mxu0 %v707
        %v760 = vpop.f32.mrf.mxu0
        %v761 = vadd.f32 %v687, %v760
        %v762 = vpop.f32.mrf.mxu0
        %v763 = vadd.f32 %v687, %v762
        %764 = vmatmul.bf16.gmra.mxu0 %v710
        %v765 = vpop.f32.mrf.mxu0
        %v766 = vadd.f32 %v687, %v765
        %v767 = vpop.f32.mrf.mxu0
        %v768 = vadd.f32 %v687, %v767
        %769 = vdwg.mxu0
        %v770 = vld [vmem:[%s344 + $0x2] sm:$0xff]
        %v771 = vld [vmem:[%s344 + $0xa] sm:$0xff]
        %v772 = vld [vmem:[%s344 + $0x12] sm:$0xff]
        %v773 = vld [vmem:[%s344 + $0x1a] sm:$0xff]
        %v774 = vld [vmem:[%s344 + $0x22] sm:$0xff]
        %v775 = vld [vmem:[%s344 + $0x2a] sm:$0xff]
        %v776 = vld [vmem:[%s344 + $0x32] sm:$0xff]
        %v777 = vld [vmem:[%s344 + $0x3a] sm:$0x3f]
        %v778 = vadd.f32 %v722, %v770
        %v779 = vadd.f32 %v724, %v771
        %v780 = vadd.f32 %v727, %v772
        %v781 = vadd.f32 %v729, %v773
        %v782 = vadd.f32 %v732, %v774
        %v783 = vadd.f32 %v734, %v775
        %v784 = vadd.f32 %v737, %v776
        %v785 = vadd.f32 %v739, %v777
        %786 = vst.msk [vmem:[%s350] sm:$0xff] %vm436, %v778
        %787 = vst.msk [vmem:[%s350 + $0x8] sm:$0xff] %vm436, %v779
        %788 = vst.msk [vmem:[%s350 + $0x10] sm:$0xff] %vm436, %v780
        %789 = vst.msk [vmem:[%s350 + $0x18] sm:$0xff] %vm436, %v781
        %790 = vst.msk [vmem:[%s350 + $0x20] sm:$0xff] %vm436, %v782
        %791 = vst.msk [vmem:[%s350 + $0x28] sm:$0xff] %vm436, %v783
        %792 = vst.msk [vmem:[%s350 + $0x30] sm:$0xff] %vm436, %v784
        %vm793 = vcmask 259072
        %794 = vst.msk [vmem:[%s350 + $0x38] sm:$0x3f] %vm793, %v785
        %795 = vrot.lane.b32.xlu0 %v363, 32
        %v796 = vpop.permute.xlu0 %795
        %797 = vrot.lane.b32.xlu0 %v364, 32
        %v798 = vpop.permute.xlu0 %797
        %799 = vrot.lane.b32.xlu0 %v365, 32
        %v800 = vpop.permute.xlu0 %799
        %801 = vrot.lane.b32.xlu0 %v366, 32
        %v802 = vpop.permute.xlu0 %801
        %803 = vrot.lane.b32.xlu0 %v367, 32
        %v804 = vpop.permute.xlu0 %803
        %805 = vrot.lane.b32.xlu0 %v368, 32
        %v806 = vpop.permute.xlu0 %805
        %807 = vrot.lane.b32.xlu0 %v369, 32
        %v808 = vpop.permute.xlu0 %807
        %809 = vrot.lane.b32.xlu0 %v370, 32
        %v810 = vpop.permute.xlu0 %809
        %v819 = vadd.f32 %v722, %v796
        %v820 = vadd.f32 %v724, %v798
        %v821 = vadd.f32 %v727, %v800
        %v822 = vadd.f32 %v729, %v802
        %v823 = vadd.f32 %v732, %v804
        %v824 = vadd.f32 %v734, %v806
        %v825 = vadd.f32 %v737, %v808
        %v826 = vadd.f32 %v739, %v810
        %835 = vrot.lane.b32.xlu0 %v819, 96
        %v836 = vpop.permute.xlu0 %835
        %837 = vrot.lane.b32.xlu0 %v820, 96
        %v838 = vpop.permute.xlu0 %837
        %839 = vrot.lane.b32.xlu0 %v821, 96
        %v840 = vpop.permute.xlu0 %839
        %841 = vrot.lane.b32.xlu0 %v822, 96
        %v842 = vpop.permute.xlu0 %841
        %843 = vrot.lane.b32.xlu0 %v823, 96
        %v844 = vpop.permute.xlu0 %843
        %845 = vrot.lane.b32.xlu0 %v824, 96
        %v846 = vpop.permute.xlu0 %845
        %847 = vrot.lane.b32.xlu0 %v825, 96
        %v848 = vpop.permute.xlu0 %847
        %849 = vrot.lane.b32.xlu0 %v826, 96
        %v850 = vpop.permute.xlu0 %849
        %859 = vst.msk [vmem:[%s326] sm:$0xff] %vm403, %v836
        %860 = vst.msk [vmem:[%s326 + $0x8] sm:$0xff] %vm403, %v838
        %861 = vst.msk [vmem:[%s326 + $0x10] sm:$0xff] %vm403, %v840
        %862 = vst.msk [vmem:[%s326 + $0x18] sm:$0xff] %vm403, %v842
        %863 = vst.msk [vmem:[%s326 + $0x20] sm:$0xff] %vm403, %v844
        %864 = vst.msk [vmem:[%s326 + $0x28] sm:$0xff] %vm403, %v846
        %865 = vst.msk [vmem:[%s326 + $0x30] sm:$0xff] %vm403, %v848
        %vm866 = vcmask 128000
        %867 = vst.msk [vmem:[%s326 + $0x38] sm:$0x3f] %vm866, %v850
        %v868 = vpack.c.bf16 %v722, %v722
        %v869 = vpack.c.bf16 %v724, %v724
        %v870 = vpack.c.bf16 %v727, %v727
        %v871 = vpack.c.bf16 %v729, %v729
        %v872 = vpack.c.bf16 %v732, %v732
        %v873 = vpack.c.bf16 %v734, %v734
        %v874 = vpack.c.bf16 %v737, %v737
        %v875 = vpack.c.bf16 %v739, %v739
        %884 = vrot.lane.b32.xlu0 %v868, 80
        %v885 = vpop.permute.xlu0 %884
        %886 = vrot.lane.b32.xlu0 %v869, 80
        %v887 = vpop.permute.xlu0 %886
        %888 = vrot.lane.b32.xlu0 %v870, 80
        %v889 = vpop.permute.xlu0 %888
        %890 = vrot.lane.b32.xlu0 %v871, 80
        %v891 = vpop.permute.xlu0 %890
        %892 = vrot.lane.b32.xlu0 %v872, 80
        %v893 = vpop.permute.xlu0 %892
        %894 = vrot.lane.b32.xlu0 %v873, 80
        %v895 = vpop.permute.xlu0 %894
        %896 = vrot.lane.b32.xlu0 %v874, 80
        %v897 = vpop.permute.xlu0 %896
        %898 = vrot.lane.b32.xlu0 %v875, 80
        %v899 = vpop.permute.xlu0 %898
        %vm908 = vcmask 125952
        %909 = vst.msk [vmem:[%s333] sm:$0xf] %vm908, %v885
        %910 = vst.msk [vmem:[%s333 + $0x4] sm:$0xf] %vm908, %v887
        %911 = vst.msk [vmem:[%s333 + $0x8] sm:$0xf] %vm908, %v889
        %912 = vst.msk [vmem:[%s333 + $0xc] sm:$0xf] %vm908, %v891
        %913 = vst.msk [vmem:[%s333 + $0x10] sm:$0xf] %vm908, %v893
        %914 = vst.msk [vmem:[%s333 + $0x14] sm:$0xf] %vm908, %v895
        %915 = vst.msk [vmem:[%s333 + $0x18] sm:$0xf] %vm908, %v897
        %vm916 = vcmask 124928
        %917 = vst.msk [vmem:[%s333 + $0x1c] sm:$0x7] %vm916, %v899
        %918 = vrot.lane.b32.xlu0 %v868, 64
        %v919 = vpop.permute.xlu0 %918
        %920 = vrot.lane.b32.xlu0 %v869, 64
        %v921 = vpop.permute.xlu0 %920
        %922 = vrot.lane.b32.xlu0 %v870, 64
        %v923 = vpop.permute.xlu0 %922
        %924 = vrot.lane.b32.xlu0 %v871, 64
        %v925 = vpop.permute.xlu0 %924
        %926 = vrot.lane.b32.xlu0 %v872, 64
        %v927 = vpop.permute.xlu0 %926
        %928 = vrot.lane.b32.xlu0 %v873, 64
        %v929 = vpop.permute.xlu0 %928
        %930 = vrot.lane.b32.xlu0 %v874, 64
        %v931 = vpop.permute.xlu0 %930
        %932 = vrot.lane.b32.xlu0 %v875, 64
        %v933 = vpop.permute.xlu0 %932
        %s942 = scalar_lea.vmem %s333, 32 [#allocation4]
        %943 = vst.msk [vmem:[%s942] sm:$0xf] %vm908, %v919
        %944 = vst.msk [vmem:[%s942 + $0x4] sm:$0xf] %vm908, %v921
        %945 = vst.msk [vmem:[%s942 + $0x8] sm:$0xf] %vm908, %v923
        %946 = vst.msk [vmem:[%s942 + $0xc] sm:$0xf] %vm908, %v925
        %947 = vst.msk [vmem:[%s942 + $0x10] sm:$0xf] %vm908, %v927
        %948 = vst.msk [vmem:[%s942 + $0x14] sm:$0xf] %vm908, %v929
        %949 = vst.msk [vmem:[%s942 + $0x18] sm:$0xf] %vm908, %v931
        %950 = vst.msk [vmem:[%s942 + $0x1c] sm:$0x7] %vm916, %v933
        %951 = vrot.lane.b32.xlu0 %v868, 48
        %v952 = vpop.permute.xlu0 %951
        %953 = vrot.lane.b32.xlu0 %v869, 48
        %v954 = vpop.permute.xlu0 %953
        %955 = vrot.lane.b32.xlu0 %v870, 48
        %v956 = vpop.permute.xlu0 %955
        %957 = vrot.lane.b32.xlu0 %v871, 48
        %v958 = vpop.permute.xlu0 %957
        %959 = vrot.lane.b32.xlu0 %v872, 48
        %v960 = vpop.permute.xlu0 %959
        %961 = vrot.lane.b32.xlu0 %v873, 48
        %v962 = vpop.permute.xlu0 %961
        %963 = vrot.lane.b32.xlu0 %v874, 48
        %v964 = vpop.permute.xlu0 %963
        %965 = vrot.lane.b32.xlu0 %v875, 48
        %v966 = vpop.permute.xlu0 %965
        %s975 = scalar_lea.vmem %s333, 64 [#allocation4]
        %976 = vst.msk [vmem:[%s975] sm:$0xf] %vm908, %v952
        %977 = vst.msk [vmem:[%s975 + $0x4] sm:$0xf] %vm908, %v954
        %978 = vst.msk [vmem:[%s975 + $0x8] sm:$0xf] %vm908, %v956
        %979 = vst.msk [vmem:[%s975 + $0xc] sm:$0xf] %vm908, %v958
        %980 = vst.msk [vmem:[%s975 + $0x10] sm:$0xf] %vm908, %v960
        %981 = vst.msk [vmem:[%s975 + $0x14] sm:$0xf] %vm908, %v962
        %982 = vst.msk [vmem:[%s975 + $0x18] sm:$0xf] %vm908, %v964
        %983 = vst.msk [vmem:[%s975 + $0x1c] sm:$0x7] %vm916, %v966
        %984 = vrot.lane.b32.xlu0 %v868, 32
        %v985 = vpop.permute.xlu0 %984
        %986 = vrot.lane.b32.xlu0 %v869, 32
        %v987 = vpop.permute.xlu0 %986
        %988 = vrot.lane.b32.xlu0 %v870, 32
        %v989 = vpop.permute.xlu0 %988
        %990 = vrot.lane.b32.xlu0 %v871, 32
        %v991 = vpop.permute.xlu0 %990
        %992 = vrot.lane.b32.xlu0 %v872, 32
        %v993 = vpop.permute.xlu0 %992
        %994 = vrot.lane.b32.xlu0 %v873, 32
        %v995 = vpop.permute.xlu0 %994
        %996 = vrot.lane.b32.xlu0 %v874, 32
        %v997 = vpop.permute.xlu0 %996
        %998 = vrot.lane.b32.xlu0 %v875, 32
        %v999 = vpop.permute.xlu0 %998
        %s1008 = scalar_lea.vmem %s333, 96 [#allocation4]
        %1009 = vst.msk [vmem:[%s1008] sm:$0xf] %vm908, %v985
        %1010 = vst.msk [vmem:[%s1008 + $0x4] sm:$0xf] %vm908, %v987
        %1011 = vst.msk [vmem:[%s1008 + $0x8] sm:$0xf] %vm908, %v989
        %1012 = vst.msk [vmem:[%s1008 + $0xc] sm:$0xf] %vm908, %v991
        %1013 = vst.msk [vmem:[%s1008 + $0x10] sm:$0xf] %vm908, %v993
        %1014 = vst.msk [vmem:[%s1008 + $0x14] sm:$0xf] %vm908, %v995
        %1015 = vst.msk [vmem:[%s1008 + $0x18] sm:$0xf] %vm908, %v997
        %1016 = vst.msk [vmem:[%s1008 + $0x1c] sm:$0x7] %vm916, %v999
        %1017 = vrot.lane.b32.xlu0 %v868, 16
        %v1018 = vpop.permute.xlu0 %1017
        %1019 = vrot.lane.b32.xlu0 %v869, 16
        %v1020 = vpop.permute.xlu0 %1019
        %1021 = vrot.lane.b32.xlu0 %v870, 16
        %v1022 = vpop.permute.xlu0 %1021
        %1023 = vrot.lane.b32.xlu0 %v871, 16
        %v1024 = vpop.permute.xlu0 %1023
        %1025 = vrot.lane.b32.xlu0 %v872, 16
        %v1026 = vpop.permute.xlu0 %1025
        %1027 = vrot.lane.b32.xlu0 %v873, 16
        %v1028 = vpop.permute.xlu0 %1027
        %1029 = vrot.lane.b32.xlu0 %v874, 16
        %v1030 = vpop.permute.xlu0 %1029
        %1031 = vrot.lane.b32.xlu0 %v875, 16
        %v1032 = vpop.permute.xlu0 %1031
        %s1041 = scalar_lea.vmem %s333, 128 [#allocation4]
        %1042 = vst.msk [vmem:[%s1041] sm:$0xf] %vm908, %v1018
        %1043 = vst.msk [vmem:[%s1041 + $0x4] sm:$0xf] %vm908, %v1020
        %1044 = vst.msk [vmem:[%s1041 + $0x8] sm:$0xf] %vm908, %v1022
        %1045 = vst.msk [vmem:[%s1041 + $0xc] sm:$0xf] %vm908, %v1024
        %1046 = vst.msk [vmem:[%s1041 + $0x10] sm:$0xf] %vm908, %v1026
        %1047 = vst.msk [vmem:[%s1041 + $0x14] sm:$0xf] %vm908, %v1028
        %1048 = vst.msk [vmem:[%s1041 + $0x18] sm:$0xf] %vm908, %v1030
        %1049 = vst.msk [vmem:[%s1041 + $0x1c] sm:$0x7] %vm916, %v1032
        %v1050 = vpack.c.bf16 %v751, %v751
        %v1051 = vpack.c.bf16 %v753, %v753
        %v1052 = vpack.c.bf16 %v756, %v756
        %v1053 = vpack.c.bf16 %v758, %v758
        %v1054 = vpack.c.bf16 %v761, %v761
        %v1055 = vpack.c.bf16 %v763, %v763
        %v1056 = vpack.c.bf16 %v766, %v766
        %v1057 = vpack.c.bf16 %v768, %v768
        %s1058 = scalar_lea.vmem %s333, 160 [#allocation4]
        %1059 = vst.msk [vmem:[%s1058] sm:$0xf] %vm908, %v1050
        %1060 = vst.msk [vmem:[%s1058 + $0x4] sm:$0xf] %vm908, %v1051
        %1061 = vst.msk [vmem:[%s1058 + $0x8] sm:$0xf] %vm908, %v1052
        %1062 = vst.msk [vmem:[%s1058 + $0xc] sm:$0xf] %vm908, %v1053
        %1063 = vst.msk [vmem:[%s1058 + $0x10] sm:$0xf] %vm908, %v1054
        %1064 = vst.msk [vmem:[%s1058 + $0x14] sm:$0xf] %vm908, %v1055
        %1065 = vst.msk [vmem:[%s1058 + $0x18] sm:$0xf] %vm908, %v1056
        %1066 = vst.msk [vmem:[%s1058 + $0x1c] sm:$0x7] %vm916, %v1057
        %vm1067 = vcmask 254976
        %1068 = vst.msk [vmem:[%s350 + $0x3e] sm:$0x3] %vm1067, 0.0
        %vm1069 = vcmask 123904
        %1070 = vst.msk [vmem:[%s326 + $0x3e] sm:$0x3] %vm1069, 0.0
        %vm1071 = vcmask 125955
        %1072 = vst.msk [vmem:[%s333 + $0x1c] sm:$0x8] %vm1071, 0
        %1073 = vst.msk [vmem:[%s942 + $0x1c] sm:$0x8] %vm1071, 0
        %1074 = vst.msk [vmem:[%s975 + $0x1c] sm:$0x8] %vm1071, 0
        %1075 = vst.msk [vmem:[%s1008 + $0x1c] sm:$0x8] %vm1071, 0
        %1076 = vst.msk [vmem:[%s1041 + $0x1c] sm:$0x8] %vm1071, 0
        %1077 = vst.msk [vmem:[%s1058 + $0x1c] sm:$0x8] %vm1071, 0
        %s1078 = smul.u32 8, %s26
        %p1079 = scmp.lt.s32.totalorder %s1078, 15
        %s1080 = scalar_select %p1079, %s1078, 15
        %s1081 = smul.addr %s1080, 8
        %s1082 = scalar_lea.vmem %s6, %s1081
        %s1083 = sand.u32 %s196, 1
        %s1084 = scalar_lea.sflag [#allocation3], %s1083
        %s1085 = sand.u32 %s196, 1
        %s1086 = smul.addr %s1085, 64
        %s1087 = scalar_lea.vmem [#allocation2], %s1086
        %s1088 = sand.u32 %s222, 1
        %s1089 = scalar_lea.sflag [#allocation5], %s1088
        %s1090 = sand.u32 %s222, 1
        %s1091 = smul.addr %s1090, 192
        %s1092 = scalar_lea.vmem [#allocation4], %s1091
        // Predicated region
        $region45: #{graph_wavenet_forward.18} parent=43 // pred_check
          %p1093 = pneg %p180
        $region46: #{graph_wavenet_forward.18} parent=43 // pred_check_branch
          %1095 = sbr.rel (%p1093) target = $region48
        $region47: #{graph_wavenet_forward.18} parent=43 // pred_region
          %s1096 = smul.u32 8, %s26
        $region48: #{graph_wavenet_forward.18} parent=43 // pred_fallthru
          _
        // Predicated region
        $region49: #{graph_wavenet_forward.18} parent=43 // pred_check
          %p1097 = pneg %p206
        $region50: #{graph_wavenet_forward.18} parent=43 // pred_check_branch
          %1099 = sbr.rel (%p1097) target = $region52
        $region51: #{graph_wavenet_forward.18} parent=43 // pred_region
          %s1100 = smul.u32 8, %s26
          %1102 = vsyncadd %s1084, 0
          %s1103 = smul.addr %s1100, 8
          %s1104 = scalar_lea.hbm %s7, %s1103
          %s1105 = sshll.u32 %s1087, 4
          %s1106 = int_to_ptr.vmem [resolvable:$true] %s1105
          %s1107 = sshll.u32 %s1104, 4
          %s1108 = int_to_ptr.hbm [resolvable:$true] %s1107
          %1113 = dma.vmem_to_hbm [thread:$0]  %s1106, 1024, %s1108, %s1084, 128, 128, 8
        $region52: #{graph_wavenet_forward.18} parent=43 // pred_fallthru
          _
        // Predicated region
        $region53: #{graph_wavenet_forward.18} parent=43 // pred_check
          %p1114 = pneg %p232
        $region54: #{graph_wavenet_forward.18} parent=43 // pred_check_branch
          %1116 = sbr.rel (%p1114) target = $region56
        $region55: #{graph_wavenet_forward.18} parent=43 // pred_region
          #allocation7 [shape = 'u32[6]{0}', space=smem, size = 0x18, scoped, tag = 'DMA stride descriptor']
          %s1117 = smul.u32 8, %s26
          %1119 = vsyncadd %s1089, 0
          %s1120 = smul.addr %s1117, 4
          %s1121 = scalar_lea.hbm %s8, %s1120
          %s1123 = sshll.u32 1, 14
          %s1124 = sxor.u32 4294967295, %s1123
          %s1127 = sshll.u32 7, 18
          %s1128 = sxor.u32 4294967295, %s1127
          %s1129 = sand.u32 0, %s1128
          %s1131 = sor.u32 %s1129, 0
          %s1132 = sshll.u32 %s1092, 4
          %s1133 = int_to_ptr.vmem [resolvable:$true] %s1132
          %s1134 = sshll.u32 %s1121, 4
          %s1135 = int_to_ptr.hbm [resolvable:$true] %s1134
          %1141 = sst [smem:[#allocation7]] 512
          %s1142 = scalar_lea.smem [#allocation7], 1
          %1143 = sst [smem:[%s1142]] 1024
          %s1144 = scalar_lea.smem [#allocation7], 2
          %1145 = sst [smem:[%s1144]] 8
          %s1146 = scalar_lea.smem [#allocation7], 3
          %1147 = sst [smem:[%s1146]] 64
          %s1148 = scalar_lea.smem [#allocation7], 4
          %1149 = sst [smem:[%s1148]] 64
          %s1150 = scalar_lea.smem [#allocation7], 5
          %1151 = sst [smem:[%s1150]] 4
          %1153 = dma.general %s1133, 3072, %s1135, %s1089, [#allocation6], [#allocation7], %s1131, 0
        $region56: #{graph_wavenet_forward.18} parent=43 // pred_fallthru
          _
      $region44: #{graph_wavenet_forward.18} parent=5 // pred_fallthru
        _
      %p1154 = scmp.le.s32.totalorder 2, %s21
      // Predicated region
      $region57: #{graph_wavenet_forward.18} parent=5 // pred_check
        %p1155 = pneg %p1154
      $region58: #{graph_wavenet_forward.18} parent=5 // pred_check_branch
        %1157 = sbr.rel (%p1155) target = $region60
      $region59: #{graph_wavenet_forward.18} parent=5 // pred_region
        %s1158 = ssub.s32 %s21, 2
        // Predicated region
        $region61: #{graph_wavenet_forward.18} parent=59 // pred_check
          %p1159 = pneg %p186
        $region62: #{graph_wavenet_forward.18} parent=59 // pred_check_branch
          %1161 = sbr.rel (%p1159) target = $region64
        $region63: #{graph_wavenet_forward.18} parent=59 // pred_region
          %s1162 = smul.u32 8, %s27
          %p1163 = scmp.lt.s32.totalorder %s1162, 15
          %s1164 = scalar_select %p1163, %s1162, 15
          %s1165 = smul.addr %s1164, 8
          %s1166 = scalar_lea.vmem %s6, %s1165
        $region64: #{graph_wavenet_forward.18} parent=59 // pred_fallthru
          _
        // Predicated region
        $region65: #{graph_wavenet_forward.18} parent=59 // pred_check
          %p1167 = pneg %p212
        $region66: #{graph_wavenet_forward.18} parent=59 // pred_check_branch
          %1169 = sbr.rel (%p1167) target = $region68
        $region67: #{graph_wavenet_forward.18} parent=59 // pred_region
          %s1170 = sand.u32 %s197, 1
          %s1171 = scalar_lea.sflag [#allocation3], %s1170
          %s1172 = sand.u32 %s197, 1
          %s1173 = smul.addr %s1172, 64
          %s1174 = scalar_lea.vmem [#allocation2], %s1173
          %1176 = dma.done %s1171, 1024
        $region68: #{graph_wavenet_forward.18} parent=59 // pred_fallthru
          _
        // Predicated region
        $region69: #{graph_wavenet_forward.18} parent=59 // pred_check
          %p1177 = pneg %p238
        $region70: #{graph_wavenet_forward.18} parent=59 // pred_check_branch
          %1179 = sbr.rel (%p1177) target = $region72
        $region71: #{graph_wavenet_forward.18} parent=59 // pred_region
          %s1180 = sand.u32 %s223, 1
          %s1181 = scalar_lea.sflag [#allocation5], %s1180
          %s1182 = sand.u32 %s223, 1
          %s1183 = smul.addr %s1182, 192
          %s1184 = scalar_lea.vmem [#allocation4], %s1183
          %1186 = dma.done %s1181, 3072
        $region72: #{graph_wavenet_forward.18} parent=59 // pred_fallthru
          _
      $region60: #{graph_wavenet_forward.18} parent=5 // pred_fallthru
        _
    $region6: #{graph_wavenet_forward.18} parent=1 // loop_footer
      %s25 = sadd.s32 1, %s21
    $region7: #{graph_wavenet_forward.18} parent=1 // loop_footer_branch
      %20 = sbr.rel target = $region3
    $region8: #{graph_wavenet_forward.18} parent=1 // loop_exit
      _
    %1187 = vsyncpa [#allocation3], 1
    %s1188 = scalar_lea.sflag [#allocation3], 1
    %1189 = vsyncpa %s1188, 1
    %1190 = vsyncpa [#allocation5], 1
    %s1191 = scalar_lea.sflag [#allocation5], 1
    %1192 = vsyncpa %s1191, 1

</llo_original>
